<compile_context>
chip_gen: v7x
topology: tpu7x:2x2x1
jax: 0.10.0
libtpu: 0.0.40
codegen_flags: <defaults>
</compile_context>

<pallas_src>
import functools

import jax
import jax.numpy as jnp
from jax import lax
from jax.experimental import pallas as pl
from jax.experimental.pallas import tpu as pltpu


# ---------------------------------------------------------------------------
# Fused Pallas kernel (one grid step == one batch image)
# ---------------------------------------------------------------------------
def _dsampling_kernel(xp_ref, mask_ref, dww_ref, pww_ref, bn_ref,
                      outl_ref, outr_ref, *, c, ho, wo):
    """Fused DSampling forward.

    xp_ref   : (4, Ho+1, Wo+1, C)  zero-padded input, parity-split (space-to-depth)
    mask_ref : (4, Ho+1, Wo+1, C)  1.0 at real pixels, 0.0 at padded positions
    dww_ref  : (2, 9, C)           depthwise 3x3 weights [dw_l1, dw_r2], tap k = dy*3+dx
    pww_ref  : (3, C, C)           block-diag 1x1 weights [pw_r1, pw_l2, pw_r3], (in, out)
    bn_ref   : (10, C)             folded BN (scale, bias) rows (see wrapper ordering)
    outl_ref : (1, Ho, Wo, C)      left-branch output
    outr_ref : (1, Ho, Wo, C)      right-branch output
    """
    x = xp_ref[...]
    mask = mask_ref[...]
    dww = dww_ref[...]
    pww = pww_ref[...]
    bn = bn_ref[...]

    def pwconv(a, widx, bnrow, relu):
        # grouped 1x1 conv as unrolled per-input-channel FMAs + folded BN (+ReLU)
        w = pww[widx]                                    # (C, C) block-diagonal
        acc = a[..., 0:1] * w[0:1]
        for ci in range(1, c):
            acc = acc + a[..., ci:ci + 1] * w[ci:ci + 1]
        y = acc * bn[bnrow:bnrow + 1] + bn[bnrow + 1:bnrow + 2]
        return jnp.maximum(y, 0.0) if relu else y

    def tap(a, dy, dx):
        # 3x3 / stride-2 / pad-1 tap == unit-stride slice of one parity plane
        p = (dy % 2) * 2 + (dx % 2)
        return a[p, dy // 2:dy // 2 + ho, dx // 2:dx // 2 + wo, :]

    def dwconv(a, widx, bnrow):
        # depthwise 3x3 stride-2 as an unrolled 9-tap FMA + folded BN (no activation)
        w = dww[widx]                                    # (9, C)
        acc = tap(a, 0, 0) * w[0:1]
        for k in range(1, 9):
            acc = acc + tap(a, k // 3, k % 3) * w[k:k + 1]
        return acc * bn[bnrow:bnrow + 1] + bn[bnrow + 1:bnrow + 2]

    # left branch: dwconv_l1 (BN) -> conv_l2 (BN, ReLU)
    l1 = dwconv(x, 0, 0)
    outl_ref[0] = pwconv(l1, 1, 2, True)

    # right branch: conv_r1 (BN, ReLU) -> dwconv_r2 (BN) -> conv_r3 (BN, ReLU).
    # conv_r1 is pointwise, so computing it on padded planes and masking the pad
    # positions back to zero reproduces zero-padding of the r1 activation exactly.
    r1 = pwconv(x, 0, 4, True) * mask
    r2 = dwconv(r1, 1, 6)
    outr_ref[0] = pwconv(r2, 2, 8, True)


# ---------------------------------------------------------------------------
# Wrapper-side layout / weight plumbing
# ---------------------------------------------------------------------------
def _dw_weight_k(w_oihw):
    # (C, 1, 3, 3) -> (9, C), tap index k = dy*3 + dx
    return jnp.transpose(w_oihw[:, 0], (1, 2, 0)).reshape(9, -1)


def _pw_blockdiag(w_oihw, groups):
    # (C, C/g, 1, 1) grouped 1x1 weight -> dense block-diagonal (C_in, C_out)
    c = w_oihw.shape[0]
    cg = c // groups
    wg = jnp.transpose(w_oihw[:, :, 0, 0].reshape(groups, cg, cg), (0, 2, 1))  # (g, in, out)
    wbd = jnp.zeros((c, c), w_oihw.dtype)
    for g in range(groups):
        wbd = wbd.at[g * cg:(g + 1) * cg, g * cg:(g + 1) * cg].set(wg[g])
    return wbd


def _space_to_depth(x_pad):
    # (N, 2*Hp, 2*Wp, C) -> (N*4, Hp, Wp, C); plane index = row_parity*2 + col_parity
    n, h2, w2, c = x_pad.shape
    hp, wp = h2 // 2, w2 // 2
    x = x_pad.reshape(n, hp, 2, wp, 2, c)
    x = jnp.transpose(x, (0, 2, 4, 1, 3, 5))            # (N, 2, 2, Hp, Wp, C)
    return x.reshape(n * 4, hp, wp, c)


def dsampling_pallas(x_nchw, p, groups=2):
    n, c, h, w = x_nchw.shape
    assert h % 2 == 0 and w % 2 == 0, "stride-2 downsample expects even spatial dims"
    ho, wo = h // 2, w // 2
    hp, wp = ho + 1, wo + 1

    # TODO(synk): drop this transpose if the producer can supply NHWC directly.
    x = jnp.transpose(x_nchw, (0, 2, 3, 1)).astype(jnp.float32)                 # NHWC
    xp = _space_to_depth(jnp.pad(x, ((0, 0), (1, 1), (1, 1), (0, 0))))          # (4N,Hp,Wp,C)

    mask = jnp.pad(jnp.ones((1, h, w, 1), jnp.float32),
                   ((0, 0), (1, 1), (1, 1), (0, 0)))
    mask = _space_to_depth(jnp.broadcast_to(mask, (1, h + 2, w + 2, c)))        # (4,Hp,Wp,C)

    dww = jnp.stack([_dw_weight_k(p['dw_l1_w']), _dw_weight_k(p['dw_r2_w'])])   # (2,9,C)
    pww = jnp.stack([_pw_blockdiag(p['pw_r1_w'], groups),
                     _pw_blockdiag(p['pw_l2_w'], groups),
                     _pw_blockdiag(p['pw_r3_w'], groups)])                      # (3,C,C)
    # BN rows: 0/1 dw_l1, 2/3 pw_l2, 4/5 pw_r1, 6/7 dw_r2, 8/9 pw_r3 (scale, bias)
    bn = jnp.stack([p['dw_l1_s'], p['dw_l1_b'], p['pw_l2_s'], p['pw_l2_b'],
                    p['pw_r1_s'], p['pw_r1_b'], p['dw_r2_s'], p['dw_r2_b'],
                    p['pw_r3_s'], p['pw_r3_b']])                                # (10,C)

    kernel = functools.partial(_dsampling_kernel, c=c, ho=ho, wo=wo)
    out_l, out_r = pl.pallas_call(
        kernel,
        out_shape=(jax.ShapeDtypeStruct((n, ho, wo, c), jnp.float32),
                   jax.ShapeDtypeStruct((n, ho, wo, c), jnp.float32)),
        grid=(n,),
        in_specs=[
            pl.BlockSpec((4, hp, wp, c), lambda i: (i, 0, 0, 0)),   # padded input planes
            pl.BlockSpec((4, hp, wp, c), lambda i: (0, 0, 0, 0)),   # pad mask (batch-invariant)
            pl.BlockSpec((2, 9, c), lambda i: (0, 0, 0)),           # depthwise weights
            pl.BlockSpec((3, c, c), lambda i: (0, 0, 0)),           # block-diag 1x1 weights
            pl.BlockSpec((10, c), lambda i: (0, 0)),                # folded BN scale/bias
        ],
        out_specs=(pl.BlockSpec((1, ho, wo, c), lambda i: (i, 0, 0, 0)),
                   pl.BlockSpec((1, ho, wo, c), lambda i: (i, 0, 0, 0))),
        compiler_params=pltpu.CompilerParams(
            dimension_semantics=("parallel",),       # batch over both TCs on v7x
            vmem_limit_bytes=32 * 1024 * 1024,       # raise v5e's 16 MiB default; safe on v7x
        ),
    )(xp, mask, dww, pww, bn)

    # concat along channels + channel shuffle (general `groups`) + back to NCHW
    out = jnp.concatenate([out_l, out_r], axis=-1)                  # (N, Ho, Wo, 2C)
    cpg = (2 * c) // groups
    out = out.reshape(n, ho, wo, groups, cpg)
    out = jnp.transpose(out, (0, 1, 2, 4, 3)).reshape(n, ho, wo, 2 * c)
    return jnp.transpose(out, (0, 3, 1, 2))                         # NCHW


# ---------------------------------------------------------------------------
# Deterministic parameter init (BatchNorm folded to eval-mode scale/bias)
# ---------------------------------------------------------------------------
def init_params(key, c, groups=2, eps=1e-5):
    cg = c // groups
    ks = list(jax.random.split(key, 25))

    def bn(k1, k2, k3, k4):
        gamma = 1.0 + 0.1 * jax.random.normal(k1, (c,), jnp.float32)
        beta = 0.1 * jax.random.normal(k2, (c,), jnp.float32)
        mean = 0.1 * jax.random.normal(k3, (c,), jnp.float32)
        var = jax.random.uniform(k4, (c,), jnp.float32, minval=0.5, maxval=1.5)
        scale = gamma / jnp.sqrt(var + eps)
        bias = beta - mean * scale
        return scale, bias

    p = {}
    p['dw_l1_w'] = 0.3 * jax.random.normal(ks[0], (c, 1, 3, 3), jnp.float32)
    p['dw_l1_s'], p['dw_l1_b'] = bn(*ks[1:5])
    p['pw_l2_w'] = 0.3 * jax.random.normal(ks[5], (c, cg, 1, 1), jnp.float32)
    p['pw_l2_s'], p['pw_l2_b'] = bn(*ks[6:10])
    p['pw_r1_w'] = 0.3 * jax.random.normal(ks[10], (c, cg, 1, 1), jnp.float32)
    p['pw_r1_s'], p['pw_r1_b'] = bn(*ks[11:15])
    p['dw_r2_w'] = 0.3 * jax.random.normal(ks[15], (c, 1, 3, 3), jnp.float32)
    p['dw_r2_s'], p['dw_r2_b'] = bn(*ks[16:20])
    p['pw_r3_w'] = 0.3 * jax.random.normal(ks[20], (c, cg, 1, 1), jnp.float32)
    p['pw_r3_s'], p['pw_r3_b'] = bn(*ks[21:25])
    return p


# ---------------------------------------------------------------------------
# Pure-JAX reference (same math, via lax.conv) for validation
# ---------------------------------------------------------------------------
def _bn_conv_ref(x, w, scale, bias, *, stride, padding, groups, relu):
    y = lax.conv_general_dilated(
        x, w, window_strides=(stride, stride),
        padding=[(padding, padding), (padding, padding)],
        feature_group_count=groups,
        dimension_numbers=('NCHW', 'OIHW', 'NCHW'),
        precision=lax.Precision.HIGHEST)
    y = y * scale[None, :, None, None] + bias[None, :, None, None]
    return jnp.maximum(y, 0.0) if relu else y


def dsampling_ref(x, p, groups=2):
    c = x.shape[1]
    out_l = _bn_conv_ref(x, p['dw_l1_w'], p['dw_l1_s'], p['dw_l1_b'],
                         stride=2, padding=1, groups=c, relu=False)
    out_l = _bn_conv_ref(out_l, p['pw_l2_w'], p['pw_l2_s'], p['pw_l2_b'],
                         stride=1, padding=0, groups=groups, relu=True)
    out_r = _bn_conv_ref(x, p['pw_r1_w'], p['pw_r1_s'], p['pw_r1_b'],
                         stride=1, padding=0, groups=groups, relu=True)
    out_r = _bn_conv_ref(out_r, p['dw_r2_w'], p['dw_r2_s'], p['dw_r2_b'],
                         stride=2, padding=1, groups=c, relu=False)
    out_r = _bn_conv_ref(out_r, p['pw_r3_w'], p['pw_r3_s'], p['pw_r3_b'],
                         stride=1, padding=0, groups=groups, relu=True)
    out = jnp.concatenate([out_l, out_r], axis=1)
    n, cc, h, w = out.shape
    cpg = cc // groups
    out = out.reshape(n, groups, cpg, h, w)
    return jnp.transpose(out, (0, 2, 1, 3, 4)).reshape(n, cc, h, w)


if __name__ == "__main__":
    key = jax.random.PRNGKey(0)
    k_x, k_p = jax.random.split(key)
    N, C, H, W = 2, 16, 16, 16
    x = jax.random.normal(k_x, (N, C, H, W), jnp.float32)
    params = init_params(k_p, C, groups=2)

    out = jax.jit(dsampling_pallas)(x, params)
    out = jax.block_until_ready(out)

    assert out.shape == (N, 2 * C, H // 2, W // 2), out.shape
    ref = dsampling_ref(x, params, groups=2)
    err = float(jnp.max(jnp.abs(out - ref)))
    assert err < 1e-3, f"max abs err {err}"
    print("KERNEL_OK")
</pallas_src>

<mosaic_0001>
module attributes {stable_mosaic.version = 11 : i64} {
  func.func @_dsampling_kernel(%arg0: i32, %arg1: memref<4x9x9x16xf32, #tpu.memory_space<vmem>>, %arg2: memref<4x9x9x16xf32, #tpu.memory_space<vmem>>, %arg3: memref<2x9x16xf32, #tpu.memory_space<vmem>>, %arg4: memref<3x16x16xf32, #tpu.memory_space<vmem>>, %arg5: memref<10x16xf32, #tpu.memory_space<vmem>>, %arg6: memref<1x8x8x16xf32, #tpu.memory_space<vmem>>, %arg7: memref<1x8x8x16xf32, #tpu.memory_space<vmem>>) attributes {dimension_semantics = [#tpu.dimension_semantics<parallel>], iteration_bounds = array<i64: 2>, scalar_prefetch = 0 : i64, scratch_operands = 0 : i64, tpu.core_type = #tpu.core_type<tc>, window_params = [{transform_indices = @transform_0, window_bounds = array<i64: 4, 9, 9, 16>}, {pipeline_mode = #tpu.pipeline_mode<synchronous>, transform_indices = @transform_1, window_bounds = array<i64: 4, 9, 9, 16>}, {pipeline_mode = #tpu.pipeline_mode<synchronous>, transform_indices = @transform_2, window_bounds = array<i64: 2, 9, 16>}, {pipeline_mode = #tpu.pipeline_mode<synchronous>, transform_indices = @transform_3, window_bounds = array<i64: 3, 16, 16>}, {pipeline_mode = #tpu.pipeline_mode<synchronous>, transform_indices = @transform_4, window_bounds = array<i64: 10, 16>}, {transform_indices = @transform_5, window_bounds = array<i64: 1, 8, 8, 16>}, {transform_indices = @transform_6, window_bounds = array<i64: 1, 8, 8, 16>}]} {
    %c0 = arith.constant 0 : index
    %c0_0 = arith.constant 0 : index
    %c0_1 = arith.constant 0 : index
    %c0_2 = arith.constant 0 : index
    %0 = vector.load %arg1[%c0, %c0_0, %c0_1, %c0_2] : memref<4x9x9x16xf32, #tpu.memory_space<vmem>>, vector<4x9x9x16xf32>
    %c0_3 = arith.constant 0 : index
    %c0_4 = arith.constant 0 : index
    %c0_5 = arith.constant 0 : index
    %c0_6 = arith.constant 0 : index
    %1 = vector.load %arg2[%c0_3, %c0_4, %c0_5, %c0_6] : memref<4x9x9x16xf32, #tpu.memory_space<vmem>>, vector<4x9x9x16xf32>
    %c0_7 = arith.constant 0 : index
    %c0_8 = arith.constant 0 : index
    %c0_9 = arith.constant 0 : index
    %2 = vector.load %arg3[%c0_7, %c0_8, %c0_9] : memref<2x9x16xf32, #tpu.memory_space<vmem>>, vector<2x9x16xf32>
    %c0_10 = arith.constant 0 : index
    %c0_11 = arith.constant 0 : index
    %c0_12 = arith.constant 0 : index
    %3 = vector.load %arg4[%c0_10, %c0_11, %c0_12] : memref<3x16x16xf32, #tpu.memory_space<vmem>>, vector<3x16x16xf32>
    %c0_13 = arith.constant 0 : index
    %c0_14 = arith.constant 0 : index
    %4 = vector.load %arg5[%c0_13, %c0_14] : memref<10x16xf32, #tpu.memory_space<vmem>>, vector<10x16xf32>
    %5 = vector.extract_strided_slice %2 {offsets = [0, 0, 0], sizes = [1, 9, 16], strides = [1, 1, 1]} : vector<2x9x16xf32> to vector<1x9x16xf32>
    %6 = vector.shape_cast %5 : vector<1x9x16xf32> to vector<9x16xf32>
    %7 = vector.extract_strided_slice %0 {offsets = [0, 0, 0, 0], sizes = [1, 8, 8, 16], strides = [1, 1, 1, 1]} : vector<4x9x9x16xf32> to vector<1x8x8x16xf32>
    %8 = vector.shape_cast %7 : vector<1x8x8x16xf32> to vector<8x8x16xf32>
    %9 = vector.extract_strided_slice %6 {offsets = [0, 0], sizes = [1, 16], strides = [1, 1]} : vector<9x16xf32> to vector<1x16xf32>
    %10 = vector.shape_cast %9 : vector<1x16xf32> to vector<1x1x16xf32>
    %11 = vector.broadcast %10 : vector<1x1x16xf32> to vector<8x8x16xf32>
    %12 = arith.mulf %8, %11 : vector<8x8x16xf32>
    %13 = vector.extract_strided_slice %0 {offsets = [1, 0, 0, 0], sizes = [1, 8, 8, 16], strides = [1, 1, 1, 1]} : vector<4x9x9x16xf32> to vector<1x8x8x16xf32>
    %14 = vector.shape_cast %13 : vector<1x8x8x16xf32> to vector<8x8x16xf32>
    %15 = vector.extract_strided_slice %6 {offsets = [1, 0], sizes = [1, 16], strides = [1, 1]} : vector<9x16xf32> to vector<1x16xf32>
    %16 = vector.shape_cast %15 : vector<1x16xf32> to vector<1x1x16xf32>
    %17 = vector.broadcast %16 : vector<1x1x16xf32> to vector<8x8x16xf32>
    %18 = arith.mulf %14, %17 : vector<8x8x16xf32>
    %19 = arith.addf %12, %18 : vector<8x8x16xf32>
    %20 = vector.extract_strided_slice %0 {offsets = [0, 0, 1, 0], sizes = [1, 8, 8, 16], strides = [1, 1, 1, 1]} : vector<4x9x9x16xf32> to vector<1x8x8x16xf32>
    %21 = vector.shape_cast %20 : vector<1x8x8x16xf32> to vector<8x8x16xf32>
    %22 = vector.extract_strided_slice %6 {offsets = [2, 0], sizes = [1, 16], strides = [1, 1]} : vector<9x16xf32> to vector<1x16xf32>
    %23 = vector.shape_cast %22 : vector<1x16xf32> to vector<1x1x16xf32>
    %24 = vector.broadcast %23 : vector<1x1x16xf32> to vector<8x8x16xf32>
    %25 = arith.mulf %21, %24 : vector<8x8x16xf32>
    %26 = arith.addf %19, %25 : vector<8x8x16xf32>
    %27 = vector.extract_strided_slice %0 {offsets = [2, 0, 0, 0], sizes = [1, 8, 8, 16], strides = [1, 1, 1, 1]} : vector<4x9x9x16xf32> to vector<1x8x8x16xf32>
    %28 = vector.shape_cast %27 : vector<1x8x8x16xf32> to vector<8x8x16xf32>
    %29 = vector.extract_strided_slice %6 {offsets = [3, 0], sizes = [1, 16], strides = [1, 1]} : vector<9x16xf32> to vector<1x16xf32>
    %30 = vector.shape_cast %29 : vector<1x16xf32> to vector<1x1x16xf32>
    %31 = vector.broadcast %30 : vector<1x1x16xf32> to vector<8x8x16xf32>
    %32 = arith.mulf %28, %31 : vector<8x8x16xf32>
    %33 = arith.addf %26, %32 : vector<8x8x16xf32>
    %34 = vector.extract_strided_slice %0 {offsets = [3, 0, 0, 0], sizes = [1, 8, 8, 16], strides = [1, 1, 1, 1]} : vector<4x9x9x16xf32> to vector<1x8x8x16xf32>
    %35 = vector.shape_cast %34 : vector<1x8x8x16xf32> to vector<8x8x16xf32>
    %36 = vector.extract_strided_slice %6 {offsets = [4, 0], sizes = [1, 16], strides = [1, 1]} : vector<9x16xf32> to vector<1x16xf32>
    %37 = vector.shape_cast %36 : vector<1x16xf32> to vector<1x1x16xf32>
    %38 = vector.broadcast %37 : vector<1x1x16xf32> to vector<8x8x16xf32>
    %39 = arith.mulf %35, %38 : vector<8x8x16xf32>
    %40 = arith.addf %33, %39 : vector<8x8x16xf32>
    %41 = vector.extract_strided_slice %0 {offsets = [2, 0, 1, 0], sizes = [1, 8, 8, 16], strides = [1, 1, 1, 1]} : vector<4x9x9x16xf32> to vector<1x8x8x16xf32>
    %42 = vector.shape_cast %41 : vector<1x8x8x16xf32> to vector<8x8x16xf32>
    %43 = vector.extract_strided_slice %6 {offsets = [5, 0], sizes = [1, 16], strides = [1, 1]} : vector<9x16xf32> to vector<1x16xf32>
    %44 = vector.shape_cast %43 : vector<1x16xf32> to vector<1x1x16xf32>
    %45 = vector.broadcast %44 : vector<1x1x16xf32> to vector<8x8x16xf32>
    %46 = arith.mulf %42, %45 : vector<8x8x16xf32>
    %47 = arith.addf %40, %46 : vector<8x8x16xf32>
    %48 = vector.extract_strided_slice %0 {offsets = [0, 1, 0, 0], sizes = [1, 8, 8, 16], strides = [1, 1, 1, 1]} : vector<4x9x9x16xf32> to vector<1x8x8x16xf32>
    %49 = vector.shape_cast %48 : vector<1x8x8x16xf32> to vector<8x8x16xf32>
    %50 = vector.extract_strided_slice %6 {offsets = [6, 0], sizes = [1, 16], strides = [1, 1]} : vector<9x16xf32> to vector<1x16xf32>
    %51 = vector.shape_cast %50 : vector<1x16xf32> to vector<1x1x16xf32>
    %52 = vector.broadcast %51 : vector<1x1x16xf32> to vector<8x8x16xf32>
    %53 = arith.mulf %49, %52 : vector<8x8x16xf32>
    %54 = arith.addf %47, %53 : vector<8x8x16xf32>
    %55 = vector.extract_strided_slice %0 {offsets = [1, 1, 0, 0], sizes = [1, 8, 8, 16], strides = [1, 1, 1, 1]} : vector<4x9x9x16xf32> to vector<1x8x8x16xf32>
    %56 = vector.shape_cast %55 : vector<1x8x8x16xf32> to vector<8x8x16xf32>
    %57 = vector.extract_strided_slice %6 {offsets = [7, 0], sizes = [1, 16], strides = [1, 1]} : vector<9x16xf32> to vector<1x16xf32>
    %58 = vector.shape_cast %57 : vector<1x16xf32> to vector<1x1x16xf32>
    %59 = vector.broadcast %58 : vector<1x1x16xf32> to vector<8x8x16xf32>
    %60 = arith.mulf %56, %59 : vector<8x8x16xf32>
    %61 = arith.addf %54, %60 : vector<8x8x16xf32>
    %62 = vector.extract_strided_slice %0 {offsets = [0, 1, 1, 0], sizes = [1, 8, 8, 16], strides = [1, 1, 1, 1]} : vector<4x9x9x16xf32> to vector<1x8x8x16xf32>
    %63 = vector.shape_cast %62 : vector<1x8x8x16xf32> to vector<8x8x16xf32>
    %64 = vector.extract_strided_slice %6 {offsets = [8, 0], sizes = [1, 16], strides = [1, 1]} : vector<9x16xf32> to vector<1x16xf32>
    %65 = vector.shape_cast %64 : vector<1x16xf32> to vector<1x1x16xf32>
    %66 = vector.broadcast %65 : vector<1x1x16xf32> to vector<8x8x16xf32>
    %67 = arith.mulf %63, %66 : vector<8x8x16xf32>
    %68 = arith.addf %61, %67 : vector<8x8x16xf32>
    %69 = vector.extract_strided_slice %4 {offsets = [0, 0], sizes = [1, 16], strides = [1, 1]} : vector<10x16xf32> to vector<1x16xf32>
    %70 = vector.shape_cast %69 : vector<1x16xf32> to vector<1x1x16xf32>
    %71 = vector.broadcast %70 : vector<1x1x16xf32> to vector<8x8x16xf32>
    %72 = arith.mulf %68, %71 : vector<8x8x16xf32>
    %73 = vector.extract_strided_slice %4 {offsets = [1, 0], sizes = [1, 16], strides = [1, 1]} : vector<10x16xf32> to vector<1x16xf32>
    %74 = vector.shape_cast %73 : vector<1x16xf32> to vector<1x1x16xf32>
    %75 = vector.broadcast %74 : vector<1x1x16xf32> to vector<8x8x16xf32>
    %76 = arith.addf %72, %75 : vector<8x8x16xf32>
    %77 = vector.extract_strided_slice %3 {offsets = [1, 0, 0], sizes = [1, 16, 16], strides = [1, 1, 1]} : vector<3x16x16xf32> to vector<1x16x16xf32>
    %78 = vector.shape_cast %77 : vector<1x16x16xf32> to vector<16x16xf32>
    %79 = vector.extract_strided_slice %76 {offsets = [0, 0, 0], sizes = [8, 8, 1], strides = [1, 1, 1]} : vector<8x8x16xf32> to vector<8x8x1xf32>
    %80 = vector.extract_strided_slice %78 {offsets = [0, 0], sizes = [1, 16], strides = [1, 1]} : vector<16x16xf32> to vector<1x16xf32>
    %81 = vector.shape_cast %80 : vector<1x16xf32> to vector<1x1x16xf32>
    %82 = vector.broadcast %79 : vector<8x8x1xf32> to vector<8x8x16xf32>
    %83 = vector.broadcast %81 : vector<1x1x16xf32> to vector<8x8x16xf32>
    %84 = arith.mulf %82, %83 : vector<8x8x16xf32>
    %85 = vector.extract_strided_slice %76 {offsets = [0, 0, 1], sizes = [8, 8, 1], strides = [1, 1, 1]} : vector<8x8x16xf32> to vector<8x8x1xf32>
    %86 = vector.extract_strided_slice %78 {offsets = [1, 0], sizes = [1, 16], strides = [1, 1]} : vector<16x16xf32> to vector<1x16xf32>
    %87 = vector.shape_cast %86 : vector<1x16xf32> to vector<1x1x16xf32>
    %88 = vector.broadcast %85 : vector<8x8x1xf32> to vector<8x8x16xf32>
    %89 = vector.broadcast %87 : vector<1x1x16xf32> to vector<8x8x16xf32>
    %90 = arith.mulf %88, %89 : vector<8x8x16xf32>
    %91 = arith.addf %84, %90 : vector<8x8x16xf32>
    %92 = vector.extract_strided_slice %76 {offsets = [0, 0, 2], sizes = [8, 8, 1], strides = [1, 1, 1]} : vector<8x8x16xf32> to vector<8x8x1xf32>
    %93 = vector.extract_strided_slice %78 {offsets = [2, 0], sizes = [1, 16], strides = [1, 1]} : vector<16x16xf32> to vector<1x16xf32>
    %94 = vector.shape_cast %93 : vector<1x16xf32> to vector<1x1x16xf32>
    %95 = vector.broadcast %92 : vector<8x8x1xf32> to vector<8x8x16xf32>
    %96 = vector.broadcast %94 : vector<1x1x16xf32> to vector<8x8x16xf32>
    %97 = arith.mulf %95, %96 : vector<8x8x16xf32>
    %98 = arith.addf %91, %97 : vector<8x8x16xf32>
    %99 = vector.extract_strided_slice %76 {offsets = [0, 0, 3], sizes = [8, 8, 1], strides = [1, 1, 1]} : vector<8x8x16xf32> to vector<8x8x1xf32>
    %100 = vector.extract_strided_slice %78 {offsets = [3, 0], sizes = [1, 16], strides = [1, 1]} : vector<16x16xf32> to vector<1x16xf32>
    %101 = vector.shape_cast %100 : vector<1x16xf32> to vector<1x1x16xf32>
    %102 = vector.broadcast %99 : vector<8x8x1xf32> to vector<8x8x16xf32>
    %103 = vector.broadcast %101 : vector<1x1x16xf32> to vector<8x8x16xf32>
    %104 = arith.mulf %102, %103 : vector<8x8x16xf32>
    %105 = arith.addf %98, %104 : vector<8x8x16xf32>
    %106 = vector.extract_strided_slice %76 {offsets = [0, 0, 4], sizes = [8, 8, 1], strides = [1, 1, 1]} : vector<8x8x16xf32> to vector<8x8x1xf32>
    %107 = vector.extract_strided_slice %78 {offsets = [4, 0], sizes = [1, 16], strides = [1, 1]} : vector<16x16xf32> to vector<1x16xf32>
    %108 = vector.shape_cast %107 : vector<1x16xf32> to vector<1x1x16xf32>
    %109 = vector.broadcast %106 : vector<8x8x1xf32> to vector<8x8x16xf32>
    %110 = vector.broadcast %108 : vector<1x1x16xf32> to vector<8x8x16xf32>
    %111 = arith.mulf %109, %110 : vector<8x8x16xf32>
    %112 = arith.addf %105, %111 : vector<8x8x16xf32>
    %113 = vector.extract_strided_slice %76 {offsets = [0, 0, 5], sizes = [8, 8, 1], strides = [1, 1, 1]} : vector<8x8x16xf32> to vector<8x8x1xf32>
    %114 = vector.extract_strided_slice %78 {offsets = [5, 0], sizes = [1, 16], strides = [1, 1]} : vector<16x16xf32> to vector<1x16xf32>
    %115 = vector.shape_cast %114 : vector<1x16xf32> to vector<1x1x16xf32>
    %116 = vector.broadcast %113 : vector<8x8x1xf32> to vector<8x8x16xf32>
    %117 = vector.broadcast %115 : vector<1x1x16xf32> to vector<8x8x16xf32>
    %118 = arith.mulf %116, %117 : vector<8x8x16xf32>
    %119 = arith.addf %112, %118 : vector<8x8x16xf32>
    %120 = vector.extract_strided_slice %76 {offsets = [0, 0, 6], sizes = [8, 8, 1], strides = [1, 1, 1]} : vector<8x8x16xf32> to vector<8x8x1xf32>
    %121 = vector.extract_strided_slice %78 {offsets = [6, 0], sizes = [1, 16], strides = [1, 1]} : vector<16x16xf32> to vector<1x16xf32>
    %122 = vector.shape_cast %121 : vector<1x16xf32> to vector<1x1x16xf32>
    %123 = vector.broadcast %120 : vector<8x8x1xf32> to vector<8x8x16xf32>
    %124 = vector.broadcast %122 : vector<1x1x16xf32> to vector<8x8x16xf32>
    %125 = arith.mulf %123, %124 : vector<8x8x16xf32>
    %126 = arith.addf %119, %125 : vector<8x8x16xf32>
    %127 = vector.extract_strided_slice %76 {offsets = [0, 0, 7], sizes = [8, 8, 1], strides = [1, 1, 1]} : vector<8x8x16xf32> to vector<8x8x1xf32>
    %128 = vector.extract_strided_slice %78 {offsets = [7, 0], sizes = [1, 16], strides = [1, 1]} : vector<16x16xf32> to vector<1x16xf32>
    %129 = vector.shape_cast %128 : vector<1x16xf32> to vector<1x1x16xf32>
    %130 = vector.broadcast %127 : vector<8x8x1xf32> to vector<8x8x16xf32>
    %131 = vector.broadcast %129 : vector<1x1x16xf32> to vector<8x8x16xf32>
    %132 = arith.mulf %130, %131 : vector<8x8x16xf32>
    %133 = arith.addf %126, %132 : vector<8x8x16xf32>
    %134 = vector.extract_strided_slice %76 {offsets = [0, 0, 8], sizes = [8, 8, 1], strides = [1, 1, 1]} : vector<8x8x16xf32> to vector<8x8x1xf32>
    %135 = vector.extract_strided_slice %78 {offsets = [8, 0], sizes = [1, 16], strides = [1, 1]} : vector<16x16xf32> to vector<1x16xf32>
    %136 = vector.shape_cast %135 : vector<1x16xf32> to vector<1x1x16xf32>
    %137 = vector.broadcast %134 : vector<8x8x1xf32> to vector<8x8x16xf32>
    %138 = vector.broadcast %136 : vector<1x1x16xf32> to vector<8x8x16xf32>
    %139 = arith.mulf %137, %138 : vector<8x8x16xf32>
    %140 = arith.addf %133, %139 : vector<8x8x16xf32>
    %141 = vector.extract_strided_slice %76 {offsets = [0, 0, 9], sizes = [8, 8, 1], strides = [1, 1, 1]} : vector<8x8x16xf32> to vector<8x8x1xf32>
    %142 = vector.extract_strided_slice %78 {offsets = [9, 0], sizes = [1, 16], strides = [1, 1]} : vector<16x16xf32> to vector<1x16xf32>
    %143 = vector.shape_cast %142 : vector<1x16xf32> to vector<1x1x16xf32>
    %144 = vector.broadcast %141 : vector<8x8x1xf32> to vector<8x8x16xf32>
    %145 = vector.broadcast %143 : vector<1x1x16xf32> to vector<8x8x16xf32>
    %146 = arith.mulf %144, %145 : vector<8x8x16xf32>
    %147 = arith.addf %140, %146 : vector<8x8x16xf32>
    %148 = vector.extract_strided_slice %76 {offsets = [0, 0, 10], sizes = [8, 8, 1], strides = [1, 1, 1]} : vector<8x8x16xf32> to vector<8x8x1xf32>
    %149 = vector.extract_strided_slice %78 {offsets = [10, 0], sizes = [1, 16], strides = [1, 1]} : vector<16x16xf32> to vector<1x16xf32>
    %150 = vector.shape_cast %149 : vector<1x16xf32> to vector<1x1x16xf32>
    %151 = vector.broadcast %148 : vector<8x8x1xf32> to vector<8x8x16xf32>
    %152 = vector.broadcast %150 : vector<1x1x16xf32> to vector<8x8x16xf32>
    %153 = arith.mulf %151, %152 : vector<8x8x16xf32>
    %154 = arith.addf %147, %153 : vector<8x8x16xf32>
    %155 = vector.extract_strided_slice %76 {offsets = [0, 0, 11], sizes = [8, 8, 1], strides = [1, 1, 1]} : vector<8x8x16xf32> to vector<8x8x1xf32>
    %156 = vector.extract_strided_slice %78 {offsets = [11, 0], sizes = [1, 16], strides = [1, 1]} : vector<16x16xf32> to vector<1x16xf32>
    %157 = vector.shape_cast %156 : vector<1x16xf32> to vector<1x1x16xf32>
    %158 = vector.broadcast %155 : vector<8x8x1xf32> to vector<8x8x16xf32>
    %159 = vector.broadcast %157 : vector<1x1x16xf32> to vector<8x8x16xf32>
    %160 = arith.mulf %158, %159 : vector<8x8x16xf32>
    %161 = arith.addf %154, %160 : vector<8x8x16xf32>
    %162 = vector.extract_strided_slice %76 {offsets = [0, 0, 12], sizes = [8, 8, 1], strides = [1, 1, 1]} : vector<8x8x16xf32> to vector<8x8x1xf32>
    %163 = vector.extract_strided_slice %78 {offsets = [12, 0], sizes = [1, 16], strides = [1, 1]} : vector<16x16xf32> to vector<1x16xf32>
    %164 = vector.shape_cast %163 : vector<1x16xf32> to vector<1x1x16xf32>
    %165 = vector.broadcast %162 : vector<8x8x1xf32> to vector<8x8x16xf32>
    %166 = vector.broadcast %164 : vector<1x1x16xf32> to vector<8x8x16xf32>
    %167 = arith.mulf %165, %166 : vector<8x8x16xf32>
    %168 = arith.addf %161, %167 : vector<8x8x16xf32>
    %169 = vector.extract_strided_slice %76 {offsets = [0, 0, 13], sizes = [8, 8, 1], strides = [1, 1, 1]} : vector<8x8x16xf32> to vector<8x8x1xf32>
    %170 = vector.extract_strided_slice %78 {offsets = [13, 0], sizes = [1, 16], strides = [1, 1]} : vector<16x16xf32> to vector<1x16xf32>
    %171 = vector.shape_cast %170 : vector<1x16xf32> to vector<1x1x16xf32>
    %172 = vector.broadcast %169 : vector<8x8x1xf32> to vector<8x8x16xf32>
    %173 = vector.broadcast %171 : vector<1x1x16xf32> to vector<8x8x16xf32>
    %174 = arith.mulf %172, %173 : vector<8x8x16xf32>
    %175 = arith.addf %168, %174 : vector<8x8x16xf32>
    %176 = vector.extract_strided_slice %76 {offsets = [0, 0, 14], sizes = [8, 8, 1], strides = [1, 1, 1]} : vector<8x8x16xf32> to vector<8x8x1xf32>
    %177 = vector.extract_strided_slice %78 {offsets = [14, 0], sizes = [1, 16], strides = [1, 1]} : vector<16x16xf32> to vector<1x16xf32>
    %178 = vector.shape_cast %177 : vector<1x16xf32> to vector<1x1x16xf32>
    %179 = vector.broadcast %176 : vector<8x8x1xf32> to vector<8x8x16xf32>
    %180 = vector.broadcast %178 : vector<1x1x16xf32> to vector<8x8x16xf32>
    %181 = arith.mulf %179, %180 : vector<8x8x16xf32>
    %182 = arith.addf %175, %181 : vector<8x8x16xf32>
    %183 = vector.extract_strided_slice %76 {offsets = [0, 0, 15], sizes = [8, 8, 1], strides = [1, 1, 1]} : vector<8x8x16xf32> to vector<8x8x1xf32>
    %184 = vector.extract_strided_slice %78 {offsets = [15, 0], sizes = [1, 16], strides = [1, 1]} : vector<16x16xf32> to vector<1x16xf32>
    %185 = vector.shape_cast %184 : vector<1x16xf32> to vector<1x1x16xf32>
    %186 = vector.broadcast %183 : vector<8x8x1xf32> to vector<8x8x16xf32>
    %187 = vector.broadcast %185 : vector<1x1x16xf32> to vector<8x8x16xf32>
    %188 = arith.mulf %186, %187 : vector<8x8x16xf32>
    %189 = arith.addf %182, %188 : vector<8x8x16xf32>
    %190 = vector.extract_strided_slice %4 {offsets = [2, 0], sizes = [1, 16], strides = [1, 1]} : vector<10x16xf32> to vector<1x16xf32>
    %191 = vector.shape_cast %190 : vector<1x16xf32> to vector<1x1x16xf32>
    %192 = vector.broadcast %191 : vector<1x1x16xf32> to vector<8x8x16xf32>
    %193 = arith.mulf %189, %192 : vector<8x8x16xf32>
    %194 = vector.extract_strided_slice %4 {offsets = [3, 0], sizes = [1, 16], strides = [1, 1]} : vector<10x16xf32> to vector<1x16xf32>
    %195 = vector.shape_cast %194 : vector<1x16xf32> to vector<1x1x16xf32>
    %196 = vector.broadcast %195 : vector<1x1x16xf32> to vector<8x8x16xf32>
    %197 = arith.addf %193, %196 : vector<8x8x16xf32>
    %cst = arith.constant 0.000000e+00 : f32
    %198 = vector.broadcast %cst : f32 to vector<8x8x16xf32>
    %199 = arith.maximumf %197, %198 : vector<8x8x16xf32>
    %c0_15 = arith.constant 0 : index
    %c0_16 = arith.constant 0 : index
    %c0_17 = arith.constant 0 : index
    %c0_18 = arith.constant 0 : index
    %200 = vector.load %arg6[%c0_15, %c0_16, %c0_17, %c0_18] : memref<1x8x8x16xf32, #tpu.memory_space<vmem>>, vector<1x8x8x16xf32>
    %201 = vector.shape_cast %200 : vector<1x8x8x16xf32> to vector<8x8x16xf32>
    %202 = vector.shape_cast %199 : vector<8x8x16xf32> to vector<1x8x8x16xf32>
    tpu.vector_store %arg6[%c0_15, %c0_16, %c0_17, %c0_18], %202 {strides = array<i32>} : memref<1x8x8x16xf32, #tpu.memory_space<vmem>>, vector<1x8x8x16xf32>,
    %203 = vector.extract_strided_slice %3 {offsets = [0, 0, 0], sizes = [1, 16, 16], strides = [1, 1, 1]} : vector<3x16x16xf32> to vector<1x16x16xf32>
    %204 = vector.shape_cast %203 : vector<1x16x16xf32> to vector<16x16xf32>
    %205 = vector.extract_strided_slice %0 {offsets = [0, 0, 0, 0], sizes = [4, 9, 9, 1], strides = [1, 1, 1, 1]} : vector<4x9x9x16xf32> to vector<4x9x9x1xf32>
    %206 = vector.extract_strided_slice %204 {offsets = [0, 0], sizes = [1, 16], strides = [1, 1]} : vector<16x16xf32> to vector<1x16xf32>
    %207 = vector.shape_cast %206 : vector<1x16xf32> to vector<1x1x1x16xf32>
    %208 = vector.broadcast %205 : vector<4x9x9x1xf32> to vector<4x9x9x16xf32>
    %209 = vector.broadcast %207 : vector<1x1x1x16xf32> to vector<4x9x9x16xf32>
    %210 = arith.mulf %208, %209 : vector<4x9x9x16xf32>
    %211 = vector.extract_strided_slice %0 {offsets = [0, 0, 0, 1], sizes = [4, 9, 9, 1], strides = [1, 1, 1, 1]} : vector<4x9x9x16xf32> to vector<4x9x9x1xf32>
    %212 = vector.extract_strided_slice %204 {offsets = [1, 0], sizes = [1, 16], strides = [1, 1]} : vector<16x16xf32> to vector<1x16xf32>
    %213 = vector.shape_cast %212 : vector<1x16xf32> to vector<1x1x1x16xf32>
    %214 = vector.broadcast %211 : vector<4x9x9x1xf32> to vector<4x9x9x16xf32>
    %215 = vector.broadcast %213 : vector<1x1x1x16xf32> to vector<4x9x9x16xf32>
    %216 = arith.mulf %214, %215 : vector<4x9x9x16xf32>
    %217 = arith.addf %210, %216 : vector<4x9x9x16xf32>
    %218 = vector.extract_strided_slice %0 {offsets = [0, 0, 0, 2], sizes = [4, 9, 9, 1], strides = [1, 1, 1, 1]} : vector<4x9x9x16xf32> to vector<4x9x9x1xf32>
    %219 = vector.extract_strided_slice %204 {offsets = [2, 0], sizes = [1, 16], strides = [1, 1]} : vector<16x16xf32> to vector<1x16xf32>
    %220 = vector.shape_cast %219 : vector<1x16xf32> to vector<1x1x1x16xf32>
    %221 = vector.broadcast %218 : vector<4x9x9x1xf32> to vector<4x9x9x16xf32>
    %222 = vector.broadcast %220 : vector<1x1x1x16xf32> to vector<4x9x9x16xf32>
    %223 = arith.mulf %221, %222 : vector<4x9x9x16xf32>
    %224 = arith.addf %217, %223 : vector<4x9x9x16xf32>
    %225 = vector.extract_strided_slice %0 {offsets = [0, 0, 0, 3], sizes = [4, 9, 9, 1], strides = [1, 1, 1, 1]} : vector<4x9x9x16xf32> to vector<4x9x9x1xf32>
    %226 = vector.extract_strided_slice %204 {offsets = [3, 0], sizes = [1, 16], strides = [1, 1]} : vector<16x16xf32> to vector<1x16xf32>
    %227 = vector.shape_cast %226 : vector<1x16xf32> to vector<1x1x1x16xf32>
    %228 = vector.broadcast %225 : vector<4x9x9x1xf32> to vector<4x9x9x16xf32>
    %229 = vector.broadcast %227 : vector<1x1x1x16xf32> to vector<4x9x9x16xf32>
    %230 = arith.mulf %228, %229 : vector<4x9x9x16xf32>
    %231 = arith.addf %224, %230 : vector<4x9x9x16xf32>
    %232 = vector.extract_strided_slice %0 {offsets = [0, 0, 0, 4], sizes = [4, 9, 9, 1], strides = [1, 1, 1, 1]} : vector<4x9x9x16xf32> to vector<4x9x9x1xf32>
    %233 = vector.extract_strided_slice %204 {offsets = [4, 0], sizes = [1, 16], strides = [1, 1]} : vector<16x16xf32> to vector<1x16xf32>
    %234 = vector.shape_cast %233 : vector<1x16xf32> to vector<1x1x1x16xf32>
    %235 = vector.broadcast %232 : vector<4x9x9x1xf32> to vector<4x9x9x16xf32>
    %236 = vector.broadcast %234 : vector<1x1x1x16xf32> to vector<4x9x9x16xf32>
    %237 = arith.mulf %235, %236 : vector<4x9x9x16xf32>
    %238 = arith.addf %231, %237 : vector<4x9x9x16xf32>
    %239 = vector.extract_strided_slice %0 {offsets = [0, 0, 0, 5], sizes = [4, 9, 9, 1], strides = [1, 1, 1, 1]} : vector<4x9x9x16xf32> to vector<4x9x9x1xf32>
    %240 = vector.extract_strided_slice %204 {offsets = [5, 0], sizes = [1, 16], strides = [1, 1]} : vector<16x16xf32> to vector<1x16xf32>
    %241 = vector.shape_cast %240 : vector<1x16xf32> to vector<1x1x1x16xf32>
    %242 = vector.broadcast %239 : vector<4x9x9x1xf32> to vector<4x9x9x16xf32>
    %243 = vector.broadcast %241 : vector<1x1x1x16xf32> to vector<4x9x9x16xf32>
    %244 = arith.mulf %242, %243 : vector<4x9x9x16xf32>
    %245 = arith.addf %238, %244 : vector<4x9x9x16xf32>
    %246 = vector.extract_strided_slice %0 {offsets = [0, 0, 0, 6], sizes = [4, 9, 9, 1], strides = [1, 1, 1, 1]} : vector<4x9x9x16xf32> to vector<4x9x9x1xf32>
    %247 = vector.extract_strided_slice %204 {offsets = [6, 0], sizes = [1, 16], strides = [1, 1]} : vector<16x16xf32> to vector<1x16xf32>
    %248 = vector.shape_cast %247 : vector<1x16xf32> to vector<1x1x1x16xf32>
    %249 = vector.broadcast %246 : vector<4x9x9x1xf32> to vector<4x9x9x16xf32>
    %250 = vector.broadcast %248 : vector<1x1x1x16xf32> to vector<4x9x9x16xf32>
    %251 = arith.mulf %249, %250 : vector<4x9x9x16xf32>
    %252 = arith.addf %245, %251 : vector<4x9x9x16xf32>
    %253 = vector.extract_strided_slice %0 {offsets = [0, 0, 0, 7], sizes = [4, 9, 9, 1], strides = [1, 1, 1, 1]} : vector<4x9x9x16xf32> to vector<4x9x9x1xf32>
    %254 = vector.extract_strided_slice %204 {offsets = [7, 0], sizes = [1, 16], strides = [1, 1]} : vector<16x16xf32> to vector<1x16xf32>
    %255 = vector.shape_cast %254 : vector<1x16xf32> to vector<1x1x1x16xf32>
    %256 = vector.broadcast %253 : vector<4x9x9x1xf32> to vector<4x9x9x16xf32>
    %257 = vector.broadcast %255 : vector<1x1x1x16xf32> to vector<4x9x9x16xf32>
    %258 = arith.mulf %256, %257 : vector<4x9x9x16xf32>
    %259 = arith.addf %252, %258 : vector<4x9x9x16xf32>
    %260 = vector.extract_strided_slice %0 {offsets = [0, 0, 0, 8], sizes = [4, 9, 9, 1], strides = [1, 1, 1, 1]} : vector<4x9x9x16xf32> to vector<4x9x9x1xf32>
    %261 = vector.extract_strided_slice %204 {offsets = [8, 0], sizes = [1, 16], strides = [1, 1]} : vector<16x16xf32> to vector<1x16xf32>
    %262 = vector.shape_cast %261 : vector<1x16xf32> to vector<1x1x1x16xf32>
    %263 = vector.broadcast %260 : vector<4x9x9x1xf32> to vector<4x9x9x16xf32>
    %264 = vector.broadcast %262 : vector<1x1x1x16xf32> to vector<4x9x9x16xf32>
    %265 = arith.mulf %263, %264 : vector<4x9x9x16xf32>
    %266 = arith.addf %259, %265 : vector<4x9x9x16xf32>
    %267 = vector.extract_strided_slice %0 {offsets = [0, 0, 0, 9], sizes = [4, 9, 9, 1], strides = [1, 1, 1, 1]} : vector<4x9x9x16xf32> to vector<4x9x9x1xf32>
    %268 = vector.extract_strided_slice %204 {offsets = [9, 0], sizes = [1, 16], strides = [1, 1]} : vector<16x16xf32> to vector<1x16xf32>
    %269 = vector.shape_cast %268 : vector<1x16xf32> to vector<1x1x1x16xf32>
    %270 = vector.broadcast %267 : vector<4x9x9x1xf32> to vector<4x9x9x16xf32>
    %271 = vector.broadcast %269 : vector<1x1x1x16xf32> to vector<4x9x9x16xf32>
    %272 = arith.mulf %270, %271 : vector<4x9x9x16xf32>
    %273 = arith.addf %266, %272 : vector<4x9x9x16xf32>
    %274 = vector.extract_strided_slice %0 {offsets = [0, 0, 0, 10], sizes = [4, 9, 9, 1], strides = [1, 1, 1, 1]} : vector<4x9x9x16xf32> to vector<4x9x9x1xf32>
    %275 = vector.extract_strided_slice %204 {offsets = [10, 0], sizes = [1, 16], strides = [1, 1]} : vector<16x16xf32> to vector<1x16xf32>
    %276 = vector.shape_cast %275 : vector<1x16xf32> to vector<1x1x1x16xf32>
    %277 = vector.broadcast %274 : vector<4x9x9x1xf32> to vector<4x9x9x16xf32>
    %278 = vector.broadcast %276 : vector<1x1x1x16xf32> to vector<4x9x9x16xf32>
    %279 = arith.mulf %277, %278 : vector<4x9x9x16xf32>
    %280 = arith.addf %273, %279 : vector<4x9x9x16xf32>
    %281 = vector.extract_strided_slice %0 {offsets = [0, 0, 0, 11], sizes = [4, 9, 9, 1], strides = [1, 1, 1, 1]} : vector<4x9x9x16xf32> to vector<4x9x9x1xf32>
    %282 = vector.extract_strided_slice %204 {offsets = [11, 0], sizes = [1, 16], strides = [1, 1]} : vector<16x16xf32> to vector<1x16xf32>
    %283 = vector.shape_cast %282 : vector<1x16xf32> to vector<1x1x1x16xf32>
    %284 = vector.broadcast %281 : vector<4x9x9x1xf32> to vector<4x9x9x16xf32>
    %285 = vector.broadcast %283 : vector<1x1x1x16xf32> to vector<4x9x9x16xf32>
    %286 = arith.mulf %284, %285 : vector<4x9x9x16xf32>
    %287 = arith.addf %280, %286 : vector<4x9x9x16xf32>
    %288 = vector.extract_strided_slice %0 {offsets = [0, 0, 0, 12], sizes = [4, 9, 9, 1], strides = [1, 1, 1, 1]} : vector<4x9x9x16xf32> to vector<4x9x9x1xf32>
    %289 = vector.extract_strided_slice %204 {offsets = [12, 0], sizes = [1, 16], strides = [1, 1]} : vector<16x16xf32> to vector<1x16xf32>
    %290 = vector.shape_cast %289 : vector<1x16xf32> to vector<1x1x1x16xf32>
    %291 = vector.broadcast %288 : vector<4x9x9x1xf32> to vector<4x9x9x16xf32>
    %292 = vector.broadcast %290 : vector<1x1x1x16xf32> to vector<4x9x9x16xf32>
    %293 = arith.mulf %291, %292 : vector<4x9x9x16xf32>
    %294 = arith.addf %287, %293 : vector<4x9x9x16xf32>
    %295 = vector.extract_strided_slice %0 {offsets = [0, 0, 0, 13], sizes = [4, 9, 9, 1], strides = [1, 1, 1, 1]} : vector<4x9x9x16xf32> to vector<4x9x9x1xf32>
    %296 = vector.extract_strided_slice %204 {offsets = [13, 0], sizes = [1, 16], strides = [1, 1]} : vector<16x16xf32> to vector<1x16xf32>
    %297 = vector.shape_cast %296 : vector<1x16xf32> to vector<1x1x1x16xf32>
    %298 = vector.broadcast %295 : vector<4x9x9x1xf32> to vector<4x9x9x16xf32>
    %299 = vector.broadcast %297 : vector<1x1x1x16xf32> to vector<4x9x9x16xf32>
    %300 = arith.mulf %298, %299 : vector<4x9x9x16xf32>
    %301 = arith.addf %294, %300 : vector<4x9x9x16xf32>
    %302 = vector.extract_strided_slice %0 {offsets = [0, 0, 0, 14], sizes = [4, 9, 9, 1], strides = [1, 1, 1, 1]} : vector<4x9x9x16xf32> to vector<4x9x9x1xf32>
    %303 = vector.extract_strided_slice %204 {offsets = [14, 0], sizes = [1, 16], strides = [1, 1]} : vector<16x16xf32> to vector<1x16xf32>
    %304 = vector.shape_cast %303 : vector<1x16xf32> to vector<1x1x1x16xf32>
    %305 = vector.broadcast %302 : vector<4x9x9x1xf32> to vector<4x9x9x16xf32>
    %306 = vector.broadcast %304 : vector<1x1x1x16xf32> to vector<4x9x9x16xf32>
    %307 = arith.mulf %305, %306 : vector<4x9x9x16xf32>
    %308 = arith.addf %301, %307 : vector<4x9x9x16xf32>
    %309 = vector.extract_strided_slice %0 {offsets = [0, 0, 0, 15], sizes = [4, 9, 9, 1], strides = [1, 1, 1, 1]} : vector<4x9x9x16xf32> to vector<4x9x9x1xf32>
    %310 = vector.extract_strided_slice %204 {offsets = [15, 0], sizes = [1, 16], strides = [1, 1]} : vector<16x16xf32> to vector<1x16xf32>
    %311 = vector.shape_cast %310 : vector<1x16xf32> to vector<1x1x1x16xf32>
    %312 = vector.broadcast %309 : vector<4x9x9x1xf32> to vector<4x9x9x16xf32>
    %313 = vector.broadcast %311 : vector<1x1x1x16xf32> to vector<4x9x9x16xf32>
    %314 = arith.mulf %312, %313 : vector<4x9x9x16xf32>
    %315 = arith.addf %308, %314 : vector<4x9x9x16xf32>
    %316 = vector.extract_strided_slice %4 {offsets = [4, 0], sizes = [1, 16], strides = [1, 1]} : vector<10x16xf32> to vector<1x16xf32>
    %317 = vector.shape_cast %316 : vector<1x16xf32> to vector<1x1x1x16xf32>
    %318 = vector.broadcast %317 : vector<1x1x1x16xf32> to vector<4x9x9x16xf32>
    %319 = arith.mulf %315, %318 : vector<4x9x9x16xf32>
    %320 = vector.extract_strided_slice %4 {offsets = [5, 0], sizes = [1, 16], strides = [1, 1]} : vector<10x16xf32> to vector<1x16xf32>
    %321 = vector.shape_cast %320 : vector<1x16xf32> to vector<1x1x1x16xf32>
    %322 = vector.broadcast %321 : vector<1x1x1x16xf32> to vector<4x9x9x16xf32>
    %323 = arith.addf %319, %322 : vector<4x9x9x16xf32>
    %cst_19 = arith.constant 0.000000e+00 : f32
    %324 = vector.broadcast %cst_19 : f32 to vector<4x9x9x16xf32>
    %325 = arith.maximumf %323, %324 : vector<4x9x9x16xf32>
    %326 = arith.mulf %325, %1 : vector<4x9x9x16xf32>
    %327 = vector.extract_strided_slice %2 {offsets = [1, 0, 0], sizes = [1, 9, 16], strides = [1, 1, 1]} : vector<2x9x16xf32> to vector<1x9x16xf32>
    %328 = vector.shape_cast %327 : vector<1x9x16xf32> to vector<9x16xf32>
    %329 = vector.extract_strided_slice %326 {offsets = [0, 0, 0, 0], sizes = [1, 8, 8, 16], strides = [1, 1, 1, 1]} : vector<4x9x9x16xf32> to vector<1x8x8x16xf32>
    %330 = vector.shape_cast %329 : vector<1x8x8x16xf32> to vector<8x8x16xf32>
    %331 = vector.extract_strided_slice %328 {offsets = [0, 0], sizes = [1, 16], strides = [1, 1]} : vector<9x16xf32> to vector<1x16xf32>
    %332 = vector.shape_cast %331 : vector<1x16xf32> to vector<1x1x16xf32>
    %333 = vector.broadcast %332 : vector<1x1x16xf32> to vector<8x8x16xf32>
    %334 = arith.mulf %330, %333 : vector<8x8x16xf32>
    %335 = vector.extract_strided_slice %326 {offsets = [1, 0, 0, 0], sizes = [1, 8, 8, 16], strides = [1, 1, 1, 1]} : vector<4x9x9x16xf32> to vector<1x8x8x16xf32>
    %336 = vector.shape_cast %335 : vector<1x8x8x16xf32> to vector<8x8x16xf32>
    %337 = vector.extract_strided_slice %328 {offsets = [1, 0], sizes = [1, 16], strides = [1, 1]} : vector<9x16xf32> to vector<1x16xf32>
    %338 = vector.shape_cast %337 : vector<1x16xf32> to vector<1x1x16xf32>
    %339 = vector.broadcast %338 : vector<1x1x16xf32> to vector<8x8x16xf32>
    %340 = arith.mulf %336, %339 : vector<8x8x16xf32>
    %341 = arith.addf %334, %340 : vector<8x8x16xf32>
    %342 = vector.extract_strided_slice %326 {offsets = [0, 0, 1, 0], sizes = [1, 8, 8, 16], strides = [1, 1, 1, 1]} : vector<4x9x9x16xf32> to vector<1x8x8x16xf32>
    %343 = vector.shape_cast %342 : vector<1x8x8x16xf32> to vector<8x8x16xf32>
    %344 = vector.extract_strided_slice %328 {offsets = [2, 0], sizes = [1, 16], strides = [1, 1]} : vector<9x16xf32> to vector<1x16xf32>
    %345 = vector.shape_cast %344 : vector<1x16xf32> to vector<1x1x16xf32>
    %346 = vector.broadcast %345 : vector<1x1x16xf32> to vector<8x8x16xf32>
    %347 = arith.mulf %343, %346 : vector<8x8x16xf32>
    %348 = arith.addf %341, %347 : vector<8x8x16xf32>
    %349 = vector.extract_strided_slice %326 {offsets = [2, 0, 0, 0], sizes = [1, 8, 8, 16], strides = [1, 1, 1, 1]} : vector<4x9x9x16xf32> to vector<1x8x8x16xf32>
    %350 = vector.shape_cast %349 : vector<1x8x8x16xf32> to vector<8x8x16xf32>
    %351 = vector.extract_strided_slice %328 {offsets = [3, 0], sizes = [1, 16], strides = [1, 1]} : vector<9x16xf32> to vector<1x16xf32>
    %352 = vector.shape_cast %351 : vector<1x16xf32> to vector<1x1x16xf32>
    %353 = vector.broadcast %352 : vector<1x1x16xf32> to vector<8x8x16xf32>
    %354 = arith.mulf %350, %353 : vector<8x8x16xf32>
    %355 = arith.addf %348, %354 : vector<8x8x16xf32>
    %356 = vector.extract_strided_slice %326 {offsets = [3, 0, 0, 0], sizes = [1, 8, 8, 16], strides = [1, 1, 1, 1]} : vector<4x9x9x16xf32> to vector<1x8x8x16xf32>
    %357 = vector.shape_cast %356 : vector<1x8x8x16xf32> to vector<8x8x16xf32>
    %358 = vector.extract_strided_slice %328 {offsets = [4, 0], sizes = [1, 16], strides = [1, 1]} : vector<9x16xf32> to vector<1x16xf32>
    %359 = vector.shape_cast %358 : vector<1x16xf32> to vector<1x1x16xf32>
    %360 = vector.broadcast %359 : vector<1x1x16xf32> to vector<8x8x16xf32>
    %361 = arith.mulf %357, %360 : vector<8x8x16xf32>
    %362 = arith.addf %355, %361 : vector<8x8x16xf32>
    %363 = vector.extract_strided_slice %326 {offsets = [2, 0, 1, 0], sizes = [1, 8, 8, 16], strides = [1, 1, 1, 1]} : vector<4x9x9x16xf32> to vector<1x8x8x16xf32>
    %364 = vector.shape_cast %363 : vector<1x8x8x16xf32> to vector<8x8x16xf32>
    %365 = vector.extract_strided_slice %328 {offsets = [5, 0], sizes = [1, 16], strides = [1, 1]} : vector<9x16xf32> to vector<1x16xf32>
    %366 = vector.shape_cast %365 : vector<1x16xf32> to vector<1x1x16xf32>
    %367 = vector.broadcast %366 : vector<1x1x16xf32> to vector<8x8x16xf32>
    %368 = arith.mulf %364, %367 : vector<8x8x16xf32>
    %369 = arith.addf %362, %368 : vector<8x8x16xf32>
    %370 = vector.extract_strided_slice %326 {offsets = [0, 1, 0, 0], sizes = [1, 8, 8, 16], strides = [1, 1, 1, 1]} : vector<4x9x9x16xf32> to vector<1x8x8x16xf32>
    %371 = vector.shape_cast %370 : vector<1x8x8x16xf32> to vector<8x8x16xf32>
    %372 = vector.extract_strided_slice %328 {offsets = [6, 0], sizes = [1, 16], strides = [1, 1]} : vector<9x16xf32> to vector<1x16xf32>
    %373 = vector.shape_cast %372 : vector<1x16xf32> to vector<1x1x16xf32>
    %374 = vector.broadcast %373 : vector<1x1x16xf32> to vector<8x8x16xf32>
    %375 = arith.mulf %371, %374 : vector<8x8x16xf32>
    %376 = arith.addf %369, %375 : vector<8x8x16xf32>
    %377 = vector.extract_strided_slice %326 {offsets = [1, 1, 0, 0], sizes = [1, 8, 8, 16], strides = [1, 1, 1, 1]} : vector<4x9x9x16xf32> to vector<1x8x8x16xf32>
    %378 = vector.shape_cast %377 : vector<1x8x8x16xf32> to vector<8x8x16xf32>
    %379 = vector.extract_strided_slice %328 {offsets = [7, 0], sizes = [1, 16], strides = [1, 1]} : vector<9x16xf32> to vector<1x16xf32>
    %380 = vector.shape_cast %379 : vector<1x16xf32> to vector<1x1x16xf32>
    %381 = vector.broadcast %380 : vector<1x1x16xf32> to vector<8x8x16xf32>
    %382 = arith.mulf %378, %381 : vector<8x8x16xf32>
    %383 = arith.addf %376, %382 : vector<8x8x16xf32>
    %384 = vector.extract_strided_slice %326 {offsets = [0, 1, 1, 0], sizes = [1, 8, 8, 16], strides = [1, 1, 1, 1]} : vector<4x9x9x16xf32> to vector<1x8x8x16xf32>
    %385 = vector.shape_cast %384 : vector<1x8x8x16xf32> to vector<8x8x16xf32>
    %386 = vector.extract_strided_slice %328 {offsets = [8, 0], sizes = [1, 16], strides = [1, 1]} : vector<9x16xf32> to vector<1x16xf32>
    %387 = vector.shape_cast %386 : vector<1x16xf32> to vector<1x1x16xf32>
    %388 = vector.broadcast %387 : vector<1x1x16xf32> to vector<8x8x16xf32>
    %389 = arith.mulf %385, %388 : vector<8x8x16xf32>
    %390 = arith.addf %383, %389 : vector<8x8x16xf32>
    %391 = vector.extract_strided_slice %4 {offsets = [6, 0], sizes = [1, 16], strides = [1, 1]} : vector<10x16xf32> to vector<1x16xf32>
    %392 = vector.shape_cast %391 : vector<1x16xf32> to vector<1x1x16xf32>
    %393 = vector.broadcast %392 : vector<1x1x16xf32> to vector<8x8x16xf32>
    %394 = arith.mulf %390, %393 : vector<8x8x16xf32>
    %395 = vector.extract_strided_slice %4 {offsets = [7, 0], sizes = [1, 16], strides = [1, 1]} : vector<10x16xf32> to vector<1x16xf32>
    %396 = vector.shape_cast %395 : vector<1x16xf32> to vector<1x1x16xf32>
    %397 = vector.broadcast %396 : vector<1x1x16xf32> to vector<8x8x16xf32>
    %398 = arith.addf %394, %397 : vector<8x8x16xf32>
    %399 = vector.extract_strided_slice %3 {offsets = [2, 0, 0], sizes = [1, 16, 16], strides = [1, 1, 1]} : vector<3x16x16xf32> to vector<1x16x16xf32>
    %400 = vector.shape_cast %399 : vector<1x16x16xf32> to vector<16x16xf32>
    %401 = vector.extract_strided_slice %398 {offsets = [0, 0, 0], sizes = [8, 8, 1], strides = [1, 1, 1]} : vector<8x8x16xf32> to vector<8x8x1xf32>
    %402 = vector.extract_strided_slice %400 {offsets = [0, 0], sizes = [1, 16], strides = [1, 1]} : vector<16x16xf32> to vector<1x16xf32>
    %403 = vector.shape_cast %402 : vector<1x16xf32> to vector<1x1x16xf32>
    %404 = vector.broadcast %401 : vector<8x8x1xf32> to vector<8x8x16xf32>
    %405 = vector.broadcast %403 : vector<1x1x16xf32> to vector<8x8x16xf32>
    %406 = arith.mulf %404, %405 : vector<8x8x16xf32>
    %407 = vector.extract_strided_slice %398 {offsets = [0, 0, 1], sizes = [8, 8, 1], strides = [1, 1, 1]} : vector<8x8x16xf32> to vector<8x8x1xf32>
    %408 = vector.extract_strided_slice %400 {offsets = [1, 0], sizes = [1, 16], strides = [1, 1]} : vector<16x16xf32> to vector<1x16xf32>
    %409 = vector.shape_cast %408 : vector<1x16xf32> to vector<1x1x16xf32>
    %410 = vector.broadcast %407 : vector<8x8x1xf32> to vector<8x8x16xf32>
    %411 = vector.broadcast %409 : vector<1x1x16xf32> to vector<8x8x16xf32>
    %412 = arith.mulf %410, %411 : vector<8x8x16xf32>
    %413 = arith.addf %406, %412 : vector<8x8x16xf32>
    %414 = vector.extract_strided_slice %398 {offsets = [0, 0, 2], sizes = [8, 8, 1], strides = [1, 1, 1]} : vector<8x8x16xf32> to vector<8x8x1xf32>
    %415 = vector.extract_strided_slice %400 {offsets = [2, 0], sizes = [1, 16], strides = [1, 1]} : vector<16x16xf32> to vector<1x16xf32>
    %416 = vector.shape_cast %415 : vector<1x16xf32> to vector<1x1x16xf32>
    %417 = vector.broadcast %414 : vector<8x8x1xf32> to vector<8x8x16xf32>
    %418 = vector.broadcast %416 : vector<1x1x16xf32> to vector<8x8x16xf32>
    %419 = arith.mulf %417, %418 : vector<8x8x16xf32>
    %420 = arith.addf %413, %419 : vector<8x8x16xf32>
    %421 = vector.extract_strided_slice %398 {offsets = [0, 0, 3], sizes = [8, 8, 1], strides = [1, 1, 1]} : vector<8x8x16xf32> to vector<8x8x1xf32>
    %422 = vector.extract_strided_slice %400 {offsets = [3, 0], sizes = [1, 16], strides = [1, 1]} : vector<16x16xf32> to vector<1x16xf32>
    %423 = vector.shape_cast %422 : vector<1x16xf32> to vector<1x1x16xf32>
    %424 = vector.broadcast %421 : vector<8x8x1xf32> to vector<8x8x16xf32>
    %425 = vector.broadcast %423 : vector<1x1x16xf32> to vector<8x8x16xf32>
    %426 = arith.mulf %424, %425 : vector<8x8x16xf32>
    %427 = arith.addf %420, %426 : vector<8x8x16xf32>
    %428 = vector.extract_strided_slice %398 {offsets = [0, 0, 4], sizes = [8, 8, 1], strides = [1, 1, 1]} : vector<8x8x16xf32> to vector<8x8x1xf32>
    %429 = vector.extract_strided_slice %400 {offsets = [4, 0], sizes = [1, 16], strides = [1, 1]} : vector<16x16xf32> to vector<1x16xf32>
    %430 = vector.shape_cast %429 : vector<1x16xf32> to vector<1x1x16xf32>
    %431 = vector.broadcast %428 : vector<8x8x1xf32> to vector<8x8x16xf32>
    %432 = vector.broadcast %430 : vector<1x1x16xf32> to vector<8x8x16xf32>
    %433 = arith.mulf %431, %432 : vector<8x8x16xf32>
    %434 = arith.addf %427, %433 : vector<8x8x16xf32>
    %435 = vector.extract_strided_slice %398 {offsets = [0, 0, 5], sizes = [8, 8, 1], strides = [1, 1, 1]} : vector<8x8x16xf32> to vector<8x8x1xf32>
    %436 = vector.extract_strided_slice %400 {offsets = [5, 0], sizes = [1, 16], strides = [1, 1]} : vector<16x16xf32> to vector<1x16xf32>
    %437 = vector.shape_cast %436 : vector<1x16xf32> to vector<1x1x16xf32>
    %438 = vector.broadcast %435 : vector<8x8x1xf32> to vector<8x8x16xf32>
    %439 = vector.broadcast %437 : vector<1x1x16xf32> to vector<8x8x16xf32>
    %440 = arith.mulf %438, %439 : vector<8x8x16xf32>
    %441 = arith.addf %434, %440 : vector<8x8x16xf32>
    %442 = vector.extract_strided_slice %398 {offsets = [0, 0, 6], sizes = [8, 8, 1], strides = [1, 1, 1]} : vector<8x8x16xf32> to vector<8x8x1xf32>
    %443 = vector.extract_strided_slice %400 {offsets = [6, 0], sizes = [1, 16], strides = [1, 1]} : vector<16x16xf32> to vector<1x16xf32>
    %444 = vector.shape_cast %443 : vector<1x16xf32> to vector<1x1x16xf32>
    %445 = vector.broadcast %442 : vector<8x8x1xf32> to vector<8x8x16xf32>
    %446 = vector.broadcast %444 : vector<1x1x16xf32> to vector<8x8x16xf32>
    %447 = arith.mulf %445, %446 : vector<8x8x16xf32>
    %448 = arith.addf %441, %447 : vector<8x8x16xf32>
    %449 = vector.extract_strided_slice %398 {offsets = [0, 0, 7], sizes = [8, 8, 1], strides = [1, 1, 1]} : vector<8x8x16xf32> to vector<8x8x1xf32>
    %450 = vector.extract_strided_slice %400 {offsets = [7, 0], sizes = [1, 16], strides = [1, 1]} : vector<16x16xf32> to vector<1x16xf32>
    %451 = vector.shape_cast %450 : vector<1x16xf32> to vector<1x1x16xf32>
    %452 = vector.broadcast %449 : vector<8x8x1xf32> to vector<8x8x16xf32>
    %453 = vector.broadcast %451 : vector<1x1x16xf32> to vector<8x8x16xf32>
    %454 = arith.mulf %452, %453 : vector<8x8x16xf32>
    %455 = arith.addf %448, %454 : vector<8x8x16xf32>
    %456 = vector.extract_strided_slice %398 {offsets = [0, 0, 8], sizes = [8, 8, 1], strides = [1, 1, 1]} : vector<8x8x16xf32> to vector<8x8x1xf32>
    %457 = vector.extract_strided_slice %400 {offsets = [8, 0], sizes = [1, 16], strides = [1, 1]} : vector<16x16xf32> to vector<1x16xf32>
    %458 = vector.shape_cast %457 : vector<1x16xf32> to vector<1x1x16xf32>
    %459 = vector.broadcast %456 : vector<8x8x1xf32> to vector<8x8x16xf32>
    %460 = vector.broadcast %458 : vector<1x1x16xf32> to vector<8x8x16xf32>
    %461 = arith.mulf %459, %460 : vector<8x8x16xf32>
    %462 = arith.addf %455, %461 : vector<8x8x16xf32>
    %463 = vector.extract_strided_slice %398 {offsets = [0, 0, 9], sizes = [8, 8, 1], strides = [1, 1, 1]} : vector<8x8x16xf32> to vector<8x8x1xf32>
    %464 = vector.extract_strided_slice %400 {offsets = [9, 0], sizes = [1, 16], strides = [1, 1]} : vector<16x16xf32> to vector<1x16xf32>
    %465 = vector.shape_cast %464 : vector<1x16xf32> to vector<1x1x16xf32>
    %466 = vector.broadcast %463 : vector<8x8x1xf32> to vector<8x8x16xf32>
    %467 = vector.broadcast %465 : vector<1x1x16xf32> to vector<8x8x16xf32>
    %468 = arith.mulf %466, %467 : vector<8x8x16xf32>
    %469 = arith.addf %462, %468 : vector<8x8x16xf32>
    %470 = vector.extract_strided_slice %398 {offsets = [0, 0, 10], sizes = [8, 8, 1], strides = [1, 1, 1]} : vector<8x8x16xf32> to vector<8x8x1xf32>
    %471 = vector.extract_strided_slice %400 {offsets = [10, 0], sizes = [1, 16], strides = [1, 1]} : vector<16x16xf32> to vector<1x16xf32>
    %472 = vector.shape_cast %471 : vector<1x16xf32> to vector<1x1x16xf32>
    %473 = vector.broadcast %470 : vector<8x8x1xf32> to vector<8x8x16xf32>
    %474 = vector.broadcast %472 : vector<1x1x16xf32> to vector<8x8x16xf32>
    %475 = arith.mulf %473, %474 : vector<8x8x16xf32>
    %476 = arith.addf %469, %475 : vector<8x8x16xf32>
    %477 = vector.extract_strided_slice %398 {offsets = [0, 0, 11], sizes = [8, 8, 1], strides = [1, 1, 1]} : vector<8x8x16xf32> to vector<8x8x1xf32>
    %478 = vector.extract_strided_slice %400 {offsets = [11, 0], sizes = [1, 16], strides = [1, 1]} : vector<16x16xf32> to vector<1x16xf32>
    %479 = vector.shape_cast %478 : vector<1x16xf32> to vector<1x1x16xf32>
    %480 = vector.broadcast %477 : vector<8x8x1xf32> to vector<8x8x16xf32>
    %481 = vector.broadcast %479 : vector<1x1x16xf32> to vector<8x8x16xf32>
    %482 = arith.mulf %480, %481 : vector<8x8x16xf32>
    %483 = arith.addf %476, %482 : vector<8x8x16xf32>
    %484 = vector.extract_strided_slice %398 {offsets = [0, 0, 12], sizes = [8, 8, 1], strides = [1, 1, 1]} : vector<8x8x16xf32> to vector<8x8x1xf32>
    %485 = vector.extract_strided_slice %400 {offsets = [12, 0], sizes = [1, 16], strides = [1, 1]} : vector<16x16xf32> to vector<1x16xf32>
    %486 = vector.shape_cast %485 : vector<1x16xf32> to vector<1x1x16xf32>
    %487 = vector.broadcast %484 : vector<8x8x1xf32> to vector<8x8x16xf32>
    %488 = vector.broadcast %486 : vector<1x1x16xf32> to vector<8x8x16xf32>
    %489 = arith.mulf %487, %488 : vector<8x8x16xf32>
    %490 = arith.addf %483, %489 : vector<8x8x16xf32>
    %491 = vector.extract_strided_slice %398 {offsets = [0, 0, 13], sizes = [8, 8, 1], strides = [1, 1, 1]} : vector<8x8x16xf32> to vector<8x8x1xf32>
    %492 = vector.extract_strided_slice %400 {offsets = [13, 0], sizes = [1, 16], strides = [1, 1]} : vector<16x16xf32> to vector<1x16xf32>
    %493 = vector.shape_cast %492 : vector<1x16xf32> to vector<1x1x16xf32>
    %494 = vector.broadcast %491 : vector<8x8x1xf32> to vector<8x8x16xf32>
    %495 = vector.broadcast %493 : vector<1x1x16xf32> to vector<8x8x16xf32>
    %496 = arith.mulf %494, %495 : vector<8x8x16xf32>
    %497 = arith.addf %490, %496 : vector<8x8x16xf32>
    %498 = vector.extract_strided_slice %398 {offsets = [0, 0, 14], sizes = [8, 8, 1], strides = [1, 1, 1]} : vector<8x8x16xf32> to vector<8x8x1xf32>
    %499 = vector.extract_strided_slice %400 {offsets = [14, 0], sizes = [1, 16], strides = [1, 1]} : vector<16x16xf32> to vector<1x16xf32>
    %500 = vector.shape_cast %499 : vector<1x16xf32> to vector<1x1x16xf32>
    %501 = vector.broadcast %498 : vector<8x8x1xf32> to vector<8x8x16xf32>
    %502 = vector.broadcast %500 : vector<1x1x16xf32> to vector<8x8x16xf32>
    %503 = arith.mulf %501, %502 : vector<8x8x16xf32>
    %504 = arith.addf %497, %503 : vector<8x8x16xf32>
    %505 = vector.extract_strided_slice %398 {offsets = [0, 0, 15], sizes = [8, 8, 1], strides = [1, 1, 1]} : vector<8x8x16xf32> to vector<8x8x1xf32>
    %506 = vector.extract_strided_slice %400 {offsets = [15, 0], sizes = [1, 16], strides = [1, 1]} : vector<16x16xf32> to vector<1x16xf32>
    %507 = vector.shape_cast %506 : vector<1x16xf32> to vector<1x1x16xf32>
    %508 = vector.broadcast %505 : vector<8x8x1xf32> to vector<8x8x16xf32>
    %509 = vector.broadcast %507 : vector<1x1x16xf32> to vector<8x8x16xf32>
    %510 = arith.mulf %508, %509 : vector<8x8x16xf32>
    %511 = arith.addf %504, %510 : vector<8x8x16xf32>
    %512 = vector.extract_strided_slice %4 {offsets = [8, 0], sizes = [1, 16], strides = [1, 1]} : vector<10x16xf32> to vector<1x16xf32>
    %513 = vector.shape_cast %512 : vector<1x16xf32> to vector<1x1x16xf32>
    %514 = vector.broadcast %513 : vector<1x1x16xf32> to vector<8x8x16xf32>
    %515 = arith.mulf %511, %514 : vector<8x8x16xf32>
    %516 = vector.extract_strided_slice %4 {offsets = [9, 0], sizes = [1, 16], strides = [1, 1]} : vector<10x16xf32> to vector<1x16xf32>
    %517 = vector.shape_cast %516 : vector<1x16xf32> to vector<1x1x16xf32>
    %518 = vector.broadcast %517 : vector<1x1x16xf32> to vector<8x8x16xf32>
    %519 = arith.addf %515, %518 : vector<8x8x16xf32>
    %cst_20 = arith.constant 0.000000e+00 : f32
    %520 = vector.broadcast %cst_20 : f32 to vector<8x8x16xf32>
    %521 = arith.maximumf %519, %520 : vector<8x8x16xf32>
    %c0_21 = arith.constant 0 : index
    %c0_22 = arith.constant 0 : index
    %c0_23 = arith.constant 0 : index
    %c0_24 = arith.constant 0 : index
    %522 = vector.load %arg7[%c0_21, %c0_22, %c0_23, %c0_24] : memref<1x8x8x16xf32, #tpu.memory_space<vmem>>, vector<1x8x8x16xf32>
    %523 = vector.shape_cast %522 : vector<1x8x8x16xf32> to vector<8x8x16xf32>
    %524 = vector.shape_cast %521 : vector<8x8x16xf32> to vector<1x8x8x16xf32>
    tpu.vector_store %arg7[%c0_21, %c0_22, %c0_23, %c0_24], %524 {strides = array<i32>} : memref<1x8x8x16xf32, #tpu.memory_space<vmem>>, vector<1x8x8x16xf32>,
    return
  }
  func.func @transform_0(%arg0: i32) -> (i32, i32, i32, i32) {
    %c0_i32 = arith.constant 0 : i32
    %c0_i32_0 = arith.constant 0 : i32
    %c0_i32_1 = arith.constant 0 : i32
    %c0_i32_2 = arith.constant 0 : i32
    return %arg0, %c0_i32, %c0_i32_0, %c0_i32_1 : i32, i32, i32, i32
  }
  func.func @transform_1(%arg0: i32) -> (i32, i32, i32, i32) {
    %c0_i32 = arith.constant 0 : i32
    %c0_i32_0 = arith.constant 0 : i32
    %c0_i32_1 = arith.constant 0 : i32
    %c0_i32_2 = arith.constant 0 : i32
    %c0_i32_3 = arith.constant 0 : i32
    return %c0_i32, %c0_i32_0, %c0_i32_1, %c0_i32_2 : i32, i32, i32, i32
  }
  func.func @transform_2(%arg0: i32) -> (i32, i32, i32) {
    %c0_i32 = arith.constant 0 : i32
    %c0_i32_0 = arith.constant 0 : i32
    %c0_i32_1 = arith.constant 0 : i32
    %c0_i32_2 = arith.constant 0 : i32
    return %c0_i32, %c0_i32_0, %c0_i32_1 : i32, i32, i32
  }
  func.func @transform_3(%arg0: i32) -> (i32, i32, i32) {
    %c0_i32 = arith.constant 0 : i32
    %c0_i32_0 = arith.constant 0 : i32
    %c0_i32_1 = arith.constant 0 : i32
    %c0_i32_2 = arith.constant 0 : i32
    return %c0_i32, %c0_i32_0, %c0_i32_1 : i32, i32, i32
  }
  func.func @transform_4(%arg0: i32) -> (i32, i32) {
    %c0_i32 = arith.constant 0 : i32
    %c0_i32_0 = arith.constant 0 : i32
    %c0_i32_1 = arith.constant 0 : i32
    return %c0_i32, %c0_i32_0 : i32, i32
  }
  func.func @transform_5(%arg0: i32) -> (i32, i32, i32, i32) {
    %c0_i32 = arith.constant 0 : i32
    %c0_i32_0 = arith.constant 0 : i32
    %c0_i32_1 = arith.constant 0 : i32
    %c0_i32_2 = arith.constant 0 : i32
    return %arg0, %c0_i32, %c0_i32_0, %c0_i32_1 : i32, i32, i32, i32
  }
  func.func @transform_6(%arg0: i32) -> (i32, i32, i32, i32) {
    %c0_i32 = arith.constant 0 : i32
    %c0_i32_0 = arith.constant 0 : i32
    %c0_i32_1 = arith.constant 0 : i32
    %c0_i32_2 = arith.constant 0 : i32
    return %arg0, %c0_i32, %c0_i32_0, %c0_i32_1 : i32, i32, i32, i32
  }
}

</mosaic_0001>

<llo_original>
// kernel: squeeze.13
$region0: #{squeeze.13}
  %s0 = inlined_call_operand.vmem [shape: f32[16,8], index: 0, kind: input, shape index: {}]
  %s1 = inlined_call_operand.vmem [shape: f32[2,8,8], index: 1, kind: output, shape index: {}]
  $region1: #{squeeze.13} parent=0
    #allocation0 [shape = 'u8[32768]{0}', space=vmem, size = 0x8000, scoped, tag = 'scoped mem for output reshape']
    %v2 = vld [vmem:[%s0] sm:$0xff]
    %vm3 = vcmask 64512
    %4 = vst.msk [vmem:[#allocation0] ss:$8 sm:$0xf] %vm3, %v2
    %5 = vst.msk [vmem:[#allocation0] ss:$8 sm:$0xf0] %vm3, %v2
    %v6 = vld [vmem:[%s0] sm:$0xff]
    %7 = vrot.lane.b32.xlu0 %v6, 120
    %v8 = vpop.permute.xlu0 %7
    %vm9 = vcmask 64512
    %s10 = scalar_lea.vmem [#allocation0], 1
    %11 = vst.msk [vmem:[%s10] ss:$8 sm:$0xf] %vm9, %v8
    %s12 = scalar_lea.vmem [#allocation0], 1
    %13 = vst.msk [vmem:[%s12] ss:$8 sm:$0xf0] %vm9, %v8
    %s15 = sshllo.u32 0, 2
    %v17 = vld [vmem:[#allocation0] sm:%s15]
    %s18 = sshllo.u32 0, 2
    %19 = vst [vmem:[%s1] sm:%s18] %v17
    %s20 = scalar_lea.vmem [#allocation0], 8
    %v21 = vld [vmem:[%s20] sm:%s15]
    %s22 = sshllo.u32 0, 2
    %s23 = scalar_lea.vmem %s1, 2
    %24 = vst [vmem:[%s23] sm:%s22] %v21
    %s25 = scalar_lea.vmem [#allocation0], 16
    %v26 = vld [vmem:[%s25] sm:%s15]
    %s27 = sshllo.u32 0, 2
    %s28 = smul.addr 2, 2
    %s29 = scalar_lea.vmem %s1, %s28
    %30 = vst [vmem:[%s29] sm:%s27] %v26
    %s31 = scalar_lea.vmem [#allocation0], 24
    %v32 = vld [vmem:[%s31] sm:%s15]
    %s33 = sshllo.u32 0, 2
    %s34 = smul.addr 2, 3
    %s35 = scalar_lea.vmem %s1, %s34
    %36 = vst [vmem:[%s35] sm:%s33] %v32
    %s37 = scalar_lea.vmem [#allocation0], 32
    %v38 = vld [vmem:[%s37] sm:%s15]
    %s39 = sshllo.u32 0, 2
    %s40 = smul.addr 2, 4
    %s41 = scalar_lea.vmem %s1, %s40
    %42 = vst [vmem:[%s41] sm:%s39] %v38
    %s43 = scalar_lea.vmem [#allocation0], 40
    %v44 = vld [vmem:[%s43] sm:%s15]
    %s45 = sshllo.u32 0, 2
    %s46 = smul.addr 2, 5
    %s47 = scalar_lea.vmem %s1, %s46
    %48 = vst [vmem:[%s47] sm:%s45] %v44
    %s49 = scalar_lea.vmem [#allocation0], 48
    %v50 = vld [vmem:[%s49] sm:%s15]
    %s51 = sshllo.u32 0, 2
    %s52 = smul.addr 2, 6
    %s53 = scalar_lea.vmem %s1, %s52
    %54 = vst [vmem:[%s53] sm:%s51] %v50
    %s55 = scalar_lea.vmem [#allocation0], 56
    %v56 = vld [vmem:[%s55] sm:%s15]
    %s57 = sshllo.u32 0, 2
    %s58 = smul.addr 2, 7
    %s59 = scalar_lea.vmem %s1, %s58
    %60 = vst [vmem:[%s59] sm:%s57] %v56

// kernel: dsampling_pallas.1
$region0: #{dsampling_pallas.1}
  #allocation0 [shape = 'u32[]', space=smem, size = 0x4, offset = 0x4, fixed_abs, tag = 'smem constant byte address 0x4 - core index']
  #allocation1 [shape = 'u32[144,128]{1,0:T(1,128)}', space=vmem, size = 0x12000, scoped, tag = 'internal scratch']
  %s0 = inlined_call_operand.vmem [shape: f32[8,9,9,16], index: 0, kind: input, shape index: {}]
  %s1 = inlined_call_operand.vmem [shape: f32[4,9,9,16], index: 1, kind: input, shape index: {}]
  %s2 = inlined_call_operand.vmem [shape: f32[2,9,16], index: 2, kind: input, shape index: {}]
  %s3 = inlined_call_operand.vmem [shape: f32[3,16,16], index: 3, kind: input, shape index: {}]
  %s4 = inlined_call_operand.vmem [shape: f32[10,16], index: 4, kind: input, shape index: {}]
  %s5 = inlined_call_operand.vmem [shape: f32[2,8,8,16], index: 5, kind: output, shape index: {0}]
  %s6 = inlined_call_operand.vmem [shape: f32[2,8,8,16], index: 6, kind: output, shape index: {1}]
  %7 = xla_tuple %s5, %s6
  %s8 = sld [smem:[#allocation0]]
  $region61: #{dsampling_pallas.1} parent=0
    _
  %s10 = ssub.s32 1, %s8
  %s11 = scalar_select 0, %s10, %s8
  loop: start=0, step=1, limit=4
  $region2: #{dsampling_pallas.1} parent=0 // loop_pre_header
    _
  $region3: #{dsampling_pallas.1} parent=0 // loop_header
    %s13 = sphi 0, %s17
    %p14 = scmp.ge.s32.totalorder %s13, 4
    %s23 = sphi 0, %s25
    %s26 = sphi 0, %s23
    %s27 = sphi 0, %s26
    %s43 = sphi 0, %s27
    %s47 = sphi 0, %s47
    %s49 = sphi 0, %s47
    %s50 = sphi 0, %s49
    %s64 = sphi 0, %s50
    %s68 = sphi 0, %s68
    %s70 = sphi 0, %s68
    %s71 = sphi 0, %s70
    %s85 = sphi 0, %s71
    %s89 = sphi 0, %s89
    %s91 = sphi 0, %s89
    %s92 = sphi 0, %s91
    %s106 = sphi 0, %s92
    %s110 = sphi 0, %s110
    %s112 = sphi 0, %s110
    %s113 = sphi 0, %s112
    %s127 = sphi 0, %s113
    %s133 = sphi 0, %s135
    %s136 = sphi 0, %s133
    %s137 = sphi 0, %s136
    %s153 = sphi 0, %s137
    %s159 = sphi 0, %s161
    %s162 = sphi 0, %s159
    %s163 = sphi 0, %s162
    %s179 = sphi 0, %s163
  $region4: #{dsampling_pallas.1} parent=0 // loop_header_branch
    %16 = sbr.rel (%p14) target = $region8
  $region5: #{dsampling_pallas.1} parent=0 // loop_body
    %s18 = ssub.s32 %s13, 1
    %s19 = ssub.s32 %s13, 2
    %s20 = sadd.s32 %s13, 1
    %s21 = ssub.s32 %s13, %s20
    %p22 = scmp.eq.s32.totalorder %s21, 0
    %s24 = sadd.s32 %s23, 1
    %s25 = scalar_select %p22, %s23, %s24
    %p28 = pneg %p22
    %p29 = scmp.eq.s32.totalorder %s13, 1
    %p30 = por %p28, %p29
    %p31 = scmp.ne.s32.totalorder %s23, %s26
    %p32 = scmp.eq.s32.totalorder %s13, 0
    %p33 = por %p31, %p32
    %p34 = scmp.ne.s32.totalorder %s23, %s26
    %p35 = scmp.eq.s32.totalorder %s18, 1
    %p36 = por %p34, %p35
    %p37 = scmp.ne.s32.totalorder %s26, %s27
    %p38 = scmp.eq.s32.totalorder %s18, 0
    %p39 = por %p37, %p38
    %p40 = scmp.ne.s32.totalorder %s26, %s27
    %p41 = scmp.eq.s32.totalorder %s19, 1
    %p42 = por %p40, %p41
    %p44 = scmp.ne.s32.totalorder %s27, %s43
    %p45 = scmp.eq.s32.totalorder %s19, 0
    %p46 = por %p44, %p45
    %s48 = sadd.s32 %s47, 1
    %p51 = scmp.eq.s32.totalorder %s13, 1
    %p52 = scmp.ne.s32.totalorder %s47, %s49
    %p53 = scmp.eq.s32.totalorder %s13, 0
    %p54 = por %p52, %p53
    %p55 = scmp.ne.s32.totalorder %s47, %s49
    %p56 = scmp.eq.s32.totalorder %s18, 1
    %p57 = por %p55, %p56
    %p58 = scmp.ne.s32.totalorder %s49, %s50
    %p59 = scmp.eq.s32.totalorder %s18, 0
    %p60 = por %p58, %p59
    %p61 = scmp.ne.s32.totalorder %s49, %s50
    %p62 = scmp.eq.s32.totalorder %s19, 1
    %p63 = por %p61, %p62
    %p65 = scmp.ne.s32.totalorder %s50, %s64
    %p66 = scmp.eq.s32.totalorder %s19, 0
    %p67 = por %p65, %p66
    %s69 = sadd.s32 %s68, 1
    %p72 = scmp.eq.s32.totalorder %s13, 1
    %p73 = scmp.ne.s32.totalorder %s68, %s70
    %p74 = scmp.eq.s32.totalorder %s13, 0
    %p75 = por %p73, %p74
    %p76 = scmp.ne.s32.totalorder %s68, %s70
    %p77 = scmp.eq.s32.totalorder %s18, 1
    %p78 = por %p76, %p77
    %p79 = scmp.ne.s32.totalorder %s70, %s71
    %p80 = scmp.eq.s32.totalorder %s18, 0
    %p81 = por %p79, %p80
    %p82 = scmp.ne.s32.totalorder %s70, %s71
    %p83 = scmp.eq.s32.totalorder %s19, 1
    %p84 = por %p82, %p83
    %p86 = scmp.ne.s32.totalorder %s71, %s85
    %p87 = scmp.eq.s32.totalorder %s19, 0
    %p88 = por %p86, %p87
    %s90 = sadd.s32 %s89, 1
    %p93 = scmp.eq.s32.totalorder %s13, 1
    %p94 = scmp.ne.s32.totalorder %s89, %s91
    %p95 = scmp.eq.s32.totalorder %s13, 0
    %p96 = por %p94, %p95
    %p97 = scmp.ne.s32.totalorder %s89, %s91
    %p98 = scmp.eq.s32.totalorder %s18, 1
    %p99 = por %p97, %p98
    %p100 = scmp.ne.s32.totalorder %s91, %s92
    %p101 = scmp.eq.s32.totalorder %s18, 0
    %p102 = por %p100, %p101
    %p103 = scmp.ne.s32.totalorder %s91, %s92
    %p104 = scmp.eq.s32.totalorder %s19, 1
    %p105 = por %p103, %p104
    %p107 = scmp.ne.s32.totalorder %s92, %s106
    %p108 = scmp.eq.s32.totalorder %s19, 0
    %p109 = por %p107, %p108
    %s111 = sadd.s32 %s110, 1
    %p114 = scmp.eq.s32.totalorder %s13, 1
    %p115 = scmp.ne.s32.totalorder %s110, %s112
    %p116 = scmp.eq.s32.totalorder %s13, 0
    %p117 = por %p115, %p116
    %p118 = scmp.ne.s32.totalorder %s110, %s112
    %p119 = scmp.eq.s32.totalorder %s18, 1
    %p120 = por %p118, %p119
    %p121 = scmp.ne.s32.totalorder %s112, %s113
    %p122 = scmp.eq.s32.totalorder %s18, 0
    %p123 = por %p121, %p122
    %p124 = scmp.ne.s32.totalorder %s112, %s113
    %p125 = scmp.eq.s32.totalorder %s19, 1
    %p126 = por %p124, %p125
    %p128 = scmp.ne.s32.totalorder %s113, %s127
    %p129 = scmp.eq.s32.totalorder %s19, 0
    %p130 = por %p128, %p129
    %s131 = ssub.s32 %s13, %s20
    %p132 = scmp.eq.s32.totalorder %s131, 0
    %s134 = sadd.s32 %s133, 1
    %s135 = scalar_select %p132, %s133, %s134
    %p138 = pneg %p132
    %p139 = scmp.eq.s32.totalorder %s13, 1
    %p140 = por %p138, %p139
    %p141 = scmp.ne.s32.totalorder %s133, %s136
    %p142 = scmp.eq.s32.totalorder %s13, 0
    %p143 = por %p141, %p142
    %p144 = scmp.ne.s32.totalorder %s133, %s136
    %p145 = scmp.eq.s32.totalorder %s18, 1
    %p146 = por %p144, %p145
    %p147 = scmp.ne.s32.totalorder %s136, %s137
    %p148 = scmp.eq.s32.totalorder %s18, 0
    %p149 = por %p147, %p148
    %p150 = scmp.ne.s32.totalorder %s136, %s137
    %p151 = scmp.eq.s32.totalorder %s19, 1
    %p152 = por %p150, %p151
    %p154 = scmp.ne.s32.totalorder %s137, %s153
    %p155 = scmp.eq.s32.totalorder %s19, 0
    %p156 = por %p154, %p155
    %s157 = ssub.s32 %s13, %s20
    %p158 = scmp.eq.s32.totalorder %s157, 0
    %s160 = sadd.s32 %s159, 1
    %s161 = scalar_select %p158, %s159, %s160
    %p164 = pneg %p158
    %p165 = scmp.eq.s32.totalorder %s13, 1
    %p166 = por %p164, %p165
    %p167 = scmp.ne.s32.totalorder %s159, %s162
    %p168 = scmp.eq.s32.totalorder %s13, 0
    %p169 = por %p167, %p168
    %p170 = scmp.ne.s32.totalorder %s159, %s162
    %p171 = scmp.eq.s32.totalorder %s18, 1
    %p172 = por %p170, %p171
    %p173 = scmp.ne.s32.totalorder %s162, %s163
    %p174 = scmp.eq.s32.totalorder %s18, 0
    %p175 = por %p173, %p174
    %p176 = scmp.ne.s32.totalorder %s162, %s163
    %p177 = scmp.eq.s32.totalorder %s19, 1
    %p178 = por %p176, %p177
    %p180 = scmp.ne.s32.totalorder %s163, %s179
    %p181 = scmp.eq.s32.totalorder %s19, 0
    %p182 = por %p180, %p181
    %p183 = scmp.le.s32.totalorder 1, %s13
    %p184 = scmp.lt.s32.totalorder %s13, 3
    %p185 = pnand %p183, %p184
    %p186 = pneg %p185
    // Predicated region
    $region9: #{dsampling_pallas.1} parent=5 // pred_check
      _
    $region10: #{dsampling_pallas.1} parent=5 // pred_check_branch
      %188 = sbr.rel (%p185) target = $region12
    $region11: #{dsampling_pallas.1} parent=5 // pred_region
      %s189 = ssub.s32 %s13, 1
      // Predicated region
      $region13: #{dsampling_pallas.1} parent=11 // pred_check
        %p190 = pneg %p60
      $region14: #{dsampling_pallas.1} parent=11 // pred_check_branch
        %192 = sbr.rel (%p190) target = $region16
      $region15: #{dsampling_pallas.1} parent=11 // pred_region
        _
      $region16: #{dsampling_pallas.1} parent=11 // pred_fallthru
        _
      // Predicated region
      $region17: #{dsampling_pallas.1} parent=11 // pred_check
        %p193 = pneg %p81
      $region18: #{dsampling_pallas.1} parent=11 // pred_check_branch
        %195 = sbr.rel (%p193) target = $region20
      $region19: #{dsampling_pallas.1} parent=11 // pred_region
        _
      $region20: #{dsampling_pallas.1} parent=11 // pred_fallthru
        _
      // Predicated region
      $region21: #{dsampling_pallas.1} parent=11 // pred_check
        %p196 = pneg %p102
      $region22: #{dsampling_pallas.1} parent=11 // pred_check_branch
        %198 = sbr.rel (%p196) target = $region24
      $region23: #{dsampling_pallas.1} parent=11 // pred_region
        _
      $region24: #{dsampling_pallas.1} parent=11 // pred_fallthru
        _
      // Predicated region
      $region25: #{dsampling_pallas.1} parent=11 // pred_check
        %p199 = pneg %p123
      $region26: #{dsampling_pallas.1} parent=11 // pred_check_branch
        %201 = sbr.rel (%p199) target = $region28
      $region27: #{dsampling_pallas.1} parent=11 // pred_region
        _
      $region28: #{dsampling_pallas.1} parent=11 // pred_fallthru
        _
    $region12: #{dsampling_pallas.1} parent=5 // pred_fallthru
      _
    %p202 = scmp.lt.s32.totalorder %s13, 2
    // Predicated region
    $region29: #{dsampling_pallas.1} parent=5 // pred_check
      %p203 = pneg %p202
    $region30: #{dsampling_pallas.1} parent=5 // pred_check_branch
      %205 = sbr.rel (%p203) target = $region32
    $region31: #{dsampling_pallas.1} parent=5 // pred_region
      // Predicated region
      $region33: #{dsampling_pallas.1} parent=31 // pred_check
        %p206 = pneg %p33
      $region34: #{dsampling_pallas.1} parent=31 // pred_check_branch
        %208 = sbr.rel (%p206) target = $region36
      $region35: #{dsampling_pallas.1} parent=31 // pred_region
        %s209 = smul.u32 4, %s13
        %p210 = scmp.lt.s32.totalorder %s209, 7
        %s211 = scalar_select %p210, %s209, 7
        %s212 = smul.addr %s211, 18
        %s213 = smul.addr %s212, 8
        %s214 = scalar_lea.vmem %s0, %s213
        %s215 = smul.u32 4, %s13
      $region36: #{dsampling_pallas.1} parent=31 // pred_fallthru
        _
    $region32: #{dsampling_pallas.1} parent=5 // pred_fallthru
      _
    %p216 = scmp.le.s32.totalorder 1, %s13
    %p217 = scmp.lt.s32.totalorder %s13, 3
    %p218 = pnand %p216, %p217
    %p219 = pneg %p218
    // Predicated region
    $region37: #{dsampling_pallas.1} parent=5 // pred_check
      _
    $region38: #{dsampling_pallas.1} parent=5 // pred_check_branch
      %221 = sbr.rel (%p218) target = $region40
    $region39: #{dsampling_pallas.1} parent=5 // pred_region
      %s222 = ssub.s32 %s13, 1
      %s223 = smul.u32 4, %s18
      %p224 = scmp.lt.s32.totalorder %s223, 7
      %s225 = scalar_select %p224, %s223, 7
      %s226 = smul.addr %s225, 18
      %s227 = smul.addr %s226, 8
      %s228 = scalar_lea.vmem %s0, %s227
      %p229 = pneg %p39
      %p230 = pneg %p36
      %p231 = pneg %p60
      %p232 = pneg %p57
      %p233 = pneg %p81
      %p234 = pneg %p78
      %p235 = pneg %p102
      %p236 = pneg %p99
      %p237 = pneg %p123
      %p238 = pneg %p120
      %p239 = pneg %p149
      %p240 = pneg %p146
      %p241 = scmp.lt.s32.totalorder %s18, 1
      %s242 = scalar_select %p241, %s18, 1
      %s243 = smul.addr %s242, 8
      %s244 = smul.addr %s243, 8
      %s245 = scalar_lea.vmem %s5, %s244
      %p246 = pneg %p175
      %p247 = pneg %p172
      %p248 = scmp.lt.s32.totalorder %s18, 1
      %s249 = scalar_select %p248, %s18, 1
      %s250 = smul.addr %s249, 8
      %s251 = smul.addr %s250, 8
      %s252 = scalar_lea.vmem %s6, %s251
      %s253 = smul.u32 4, %s18
      %p254 = scmp.lt.s32.totalorder %s253, 7
      %s255 = scalar_select %p254, %s253, 7
      %s256 = smul.addr %s255, 18
      %s257 = smul.addr %s256, 8
      %s258 = scalar_lea.vmem %s0, %s257
      %s259 = smul.u32 4, %s18
      %p260 = scmp.lt.s32.totalorder %s18, 1
      %s261 = scalar_select %p260, %s18, 1
      %s262 = smul.addr %s261, 8
      %s263 = smul.addr %s262, 8
      %s264 = scalar_lea.vmem %s5, %s263
      %p265 = scmp.lt.s32.totalorder %s18, 1
      %s266 = scalar_select %p265, %s18, 1
      %s267 = smul.addr %s266, 8
      %s268 = smul.addr %s267, 8
      %s269 = scalar_lea.vmem %s6, %s268
      %v270 = vld [vmem:[%s258] sm:$0xff]
      %v271 = vld [vmem:[%s258 + $0x8] sm:$0x1]
      %v272 = vld [vmem:[%s258 + $0x10] sm:$0xff]
      %v273 = vld [vmem:[%s258 + $0x18] sm:$0x1]
      %v274 = vld [vmem:[%s258 + $0x20] sm:$0xff]
      %v275 = vld [vmem:[%s258 + $0x28] sm:$0x1]
      %v276 = vld [vmem:[%s258 + $0x30] sm:$0xff]
      %v277 = vld [vmem:[%s258 + $0x38] sm:$0x1]
      %v278 = vld [vmem:[%s258 + $0x40] sm:$0xff]
      %v279 = vld [vmem:[%s258 + $0x48] sm:$0x1]
      %v280 = vld [vmem:[%s258 + $0x50] sm:$0xff]
      %v281 = vld [vmem:[%s258 + $0x58] sm:$0x1]
      %v282 = vld [vmem:[%s258 + $0x60] sm:$0xff]
      %v283 = vld [vmem:[%s258 + $0x68] sm:$0x1]
      %v284 = vld [vmem:[%s258 + $0x70] sm:$0xff]
      %v285 = vld [vmem:[%s258 + $0x78] sm:$0x1]
      %v286 = vld [vmem:[%s258 + $0x80] sm:$0xff]
      %v287 = vld [vmem:[%s258 + $0x88] sm:$0x1]
      %v288 = vld [vmem:[%s258 + $0x90] sm:$0xff]
      %v289 = vld [vmem:[%s258 + $0xa0] sm:$0xff]
      %v290 = vld [vmem:[%s258 + $0xb0] sm:$0xff]
      %v291 = vld [vmem:[%s258 + $0xc0] sm:$0xff]
      %v292 = vld [vmem:[%s258 + $0xd0] sm:$0xff]
      %v293 = vld [vmem:[%s258 + $0xe0] sm:$0xff]
      %v294 = vld [vmem:[%s258 + $0xf0] sm:$0xff]
      %v295 = vld [vmem:[%s258 + $0x100] sm:$0xff]
      %v296 = vld [vmem:[%s258 + $0x110] sm:$0xff]
      %v297 = vld [vmem:[%s258 + $0x120] sm:$0xff]
      %v298 = vld [vmem:[%s258 + $0x128] sm:$0x1]
      %v299 = vld [vmem:[%s258 + $0x130] sm:$0xff]
      %v300 = vld [vmem:[%s258 + $0x138] sm:$0x1]
      %v301 = vld [vmem:[%s258 + $0x140] sm:$0xff]
      %v302 = vld [vmem:[%s258 + $0x148] sm:$0x1]
      %v303 = vld [vmem:[%s258 + $0x150] sm:$0xff]
      %v304 = vld [vmem:[%s258 + $0x158] sm:$0x1]
      %v305 = vld [vmem:[%s258 + $0x160] sm:$0xff]
      %v306 = vld [vmem:[%s258 + $0x168] sm:$0x1]
      %v307 = vld [vmem:[%s258 + $0x170] sm:$0xff]
      %v308 = vld [vmem:[%s258 + $0x178] sm:$0x1]
      %v309 = vld [vmem:[%s258 + $0x180] sm:$0xff]
      %v310 = vld [vmem:[%s258 + $0x188] sm:$0x1]
      %v311 = vld [vmem:[%s258 + $0x190] sm:$0xff]
      %v312 = vld [vmem:[%s258 + $0x198] sm:$0x1]
      %v313 = vld [vmem:[%s258 + $0x1b0] sm:$0xff]
      %v314 = vld [vmem:[%s258 + $0x1c0] sm:$0xff]
      %v315 = vld [vmem:[%s258 + $0x1d0] sm:$0xff]
      %v316 = vld [vmem:[%s258 + $0x1e0] sm:$0xff]
      %v317 = vld [vmem:[%s258 + $0x1f0] sm:$0xff]
      %v318 = vld [vmem:[%s258 + $0x200] sm:$0xff]
      %v319 = vld [vmem:[%s258 + $0x210] sm:$0xff]
      %v320 = vld [vmem:[%s258 + $0x220] sm:$0xff]
      %v321 = vld [vmem:[%s1] sm:$0xff]
      %v322 = vld [vmem:[%s1 + $0x8] sm:$0x1]
      %v323 = vld [vmem:[%s1 + $0x10] sm:$0xff]
      %v324 = vld [vmem:[%s1 + $0x18] sm:$0x1]
      %v325 = vld [vmem:[%s1 + $0x20] sm:$0xff]
      %v326 = vld [vmem:[%s1 + $0x28] sm:$0x1]
      %v327 = vld [vmem:[%s1 + $0x30] sm:$0xff]
      %v328 = vld [vmem:[%s1 + $0x38] sm:$0x1]
      %v329 = vld [vmem:[%s1 + $0x40] sm:$0xff]
      %v330 = vld [vmem:[%s1 + $0x48] sm:$0x1]
      %v331 = vld [vmem:[%s1 + $0x50] sm:$0xff]
      %v332 = vld [vmem:[%s1 + $0x58] sm:$0x1]
      %v333 = vld [vmem:[%s1 + $0x60] sm:$0xff]
      %v334 = vld [vmem:[%s1 + $0x68] sm:$0x1]
      %v335 = vld [vmem:[%s1 + $0x70] sm:$0xff]
      %v336 = vld [vmem:[%s1 + $0x78] sm:$0x1]
      %v337 = vld [vmem:[%s1 + $0x80] sm:$0xff]
      %v338 = vld [vmem:[%s1 + $0x88] sm:$0x1]
      %v339 = vld [vmem:[%s1 + $0x90] sm:$0xff]
      %v340 = vld [vmem:[%s1 + $0xa0] sm:$0xff]
      %v341 = vld [vmem:[%s1 + $0xb0] sm:$0xff]
      %v342 = vld [vmem:[%s1 + $0xc0] sm:$0xff]
      %v343 = vld [vmem:[%s1 + $0xd0] sm:$0xff]
      %v344 = vld [vmem:[%s1 + $0xe0] sm:$0xff]
      %v345 = vld [vmem:[%s1 + $0xf0] sm:$0xff]
      %v346 = vld [vmem:[%s1 + $0x100] sm:$0xff]
      %v347 = vld [vmem:[%s1 + $0x110] sm:$0xff]
      %v348 = vld [vmem:[%s1 + $0x120] sm:$0xff]
      %v349 = vld [vmem:[%s1 + $0x128] sm:$0x1]
      %v350 = vld [vmem:[%s1 + $0x130] sm:$0xff]
      %v351 = vld [vmem:[%s1 + $0x138] sm:$0x1]
      %v352 = vld [vmem:[%s1 + $0x140] sm:$0xff]
      %v353 = vld [vmem:[%s1 + $0x148] sm:$0x1]
      %v354 = vld [vmem:[%s1 + $0x150] sm:$0xff]
      %v355 = vld [vmem:[%s1 + $0x158] sm:$0x1]
      %v356 = vld [vmem:[%s1 + $0x160] sm:$0xff]
      %v357 = vld [vmem:[%s1 + $0x168] sm:$0x1]
      %v358 = vld [vmem:[%s1 + $0x170] sm:$0xff]
      %v359 = vld [vmem:[%s1 + $0x178] sm:$0x1]
      %v360 = vld [vmem:[%s1 + $0x180] sm:$0xff]
      %v361 = vld [vmem:[%s1 + $0x188] sm:$0x1]
      %v362 = vld [vmem:[%s1 + $0x190] sm:$0xff]
      %v363 = vld [vmem:[%s1 + $0x198] sm:$0x1]
      %v364 = vld [vmem:[%s1 + $0x1b0] sm:$0xff]
      %v365 = vld [vmem:[%s1 + $0x1c0] sm:$0xff]
      %v366 = vld [vmem:[%s1 + $0x1d0] sm:$0xff]
      %v367 = vld [vmem:[%s1 + $0x1e0] sm:$0xff]
      %v368 = vld [vmem:[%s1 + $0x1f0] sm:$0xff]
      %v369 = vld [vmem:[%s1 + $0x200] sm:$0xff]
      %v370 = vld [vmem:[%s1 + $0x210] sm:$0xff]
      %v371 = vld [vmem:[%s1 + $0x220] sm:$0xff]
      %v372 = vld [vmem:[%s2] sm:$0xff]
      %v373 = vld [vmem:[%s2 + $0x8] sm:$0x1]
      %v374 = vld [vmem:[%s2 + $0x10] sm:$0xff]
      %v375 = vld [vmem:[%s2 + $0x18] sm:$0x1]
      %v376 = vld [vmem:[%s3] sm:$0xff]
      %v377 = vld [vmem:[%s3 + $0x8] sm:$0xff]
      %v378 = vld [vmem:[%s3 + $0x10] sm:$0xff]
      %v379 = vld [vmem:[%s3 + $0x18] sm:$0xff]
      %v380 = vld [vmem:[%s3 + $0x20] sm:$0xff]
      %v381 = vld [vmem:[%s3 + $0x28] sm:$0xff]
      %v382 = vld [vmem:[%s4] sm:$0xff]
      %v383 = vld [vmem:[%s4 + $0x8] sm:$0x3]
      %v384 = vlaneseq
      %v385 = vshrl.u32 %v384, 7
      %v386 = vsub.s32 0, %v385
      %v387 = vrot.slane %v372, %v386
      %v388 = vmul.f32 %v270, %v387
      %v389 = vmul.f32 %v272, %v387
      %v390 = vmul.f32 %v274, %v387
      %v391 = vmul.f32 %v276, %v387
      %v392 = vmul.f32 %v278, %v387
      %v393 = vmul.f32 %v280, %v387
      %v394 = vmul.f32 %v282, %v387
      %v395 = vmul.f32 %v284, %v387
      %v396 = vlaneseq
      %v397 = vshrl.u32 %v396, 7
      %v398 = vsub.s32 1, %v397
      %v399 = vrot.slane %v372, %v398
      %v400 = vmul.f32 %v288, %v399
      %v401 = vmul.f32 %v289, %v399
      %v402 = vmul.f32 %v290, %v399
      %v403 = vmul.f32 %v291, %v399
      %v404 = vmul.f32 %v292, %v399
      %v405 = vmul.f32 %v293, %v399
      %v406 = vmul.f32 %v294, %v399
      %v407 = vmul.f32 %v295, %v399
      %v408 = vadd.f32 %v388, %v400
      %v409 = vadd.f32 %v389, %v401
      %v410 = vadd.f32 %v390, %v402
      %v411 = vadd.f32 %v391, %v403
      %v412 = vadd.f32 %v392, %v404
      %v413 = vadd.f32 %v393, %v405
      %v414 = vadd.f32 %v394, %v406
      %v415 = vadd.f32 %v395, %v407
      %v416 = vlaneseq
      %v417 = vshrl.u32 %v416, 7
      %v418 = vsub.s32 2, %v417
      %v419 = vrot.slane %v372, %v418
      %v420 = vmul.f32 %v270, %v419
      %v421 = vmul.f32 %v271, %v419
      %v422 = vmul.f32 %v272, %v419
      %v423 = vmul.f32 %v273, %v419
      %v424 = vmul.f32 %v274, %v419
      %v425 = vmul.f32 %v275, %v419
      %v426 = vmul.f32 %v276, %v419
      %v427 = vmul.f32 %v277, %v419
      %v428 = vmul.f32 %v278, %v419
      %v429 = vmul.f32 %v279, %v419
      %v430 = vmul.f32 %v280, %v419
      %v431 = vmul.f32 %v281, %v419
      %v432 = vmul.f32 %v282, %v419
      %v433 = vmul.f32 %v283, %v419
      %v434 = vmul.f32 %v284, %v419
      %v435 = vmul.f32 %v285, %v419
      %vm452 = vcmask 1046528
      %v453 = vrot.slane %v420, 1
      %v454 = vrot.slane %v421, 1
      %v455 = vsel %vm452, %v453, %v454
      %v456 = vrot.slane %v422, 1
      %v457 = vrot.slane %v423, 1
      %v458 = vsel %vm452, %v456, %v457
      %v459 = vrot.slane %v424, 1
      %v460 = vrot.slane %v425, 1
      %v461 = vsel %vm452, %v459, %v460
      %v462 = vrot.slane %v426, 1
      %v463 = vrot.slane %v427, 1
      %v464 = vsel %vm452, %v462, %v463
      %v465 = vrot.slane %v428, 1
      %v466 = vrot.slane %v429, 1
      %v467 = vsel %vm452, %v465, %v466
      %v468 = vrot.slane %v430, 1
      %v469 = vrot.slane %v431, 1
      %v470 = vsel %vm452, %v468, %v469
      %v471 = vrot.slane %v432, 1
      %v472 = vrot.slane %v433, 1
      %v473 = vsel %vm452, %v471, %v472
      %v474 = vrot.slane %v434, 1
      %v475 = vrot.slane %v435, 1
      %v476 = vsel %vm452, %v474, %v475
      %v485 = vadd.f32 %v408, %v455
      %v486 = vadd.f32 %v409, %v458
      %v487 = vadd.f32 %v410, %v461
      %v488 = vadd.f32 %v411, %v464
      %v489 = vadd.f32 %v412, %v467
      %v490 = vadd.f32 %v413, %v470
      %v491 = vadd.f32 %v414, %v473
      %v492 = vadd.f32 %v415, %v476
      %v493 = vlaneseq
      %v494 = vshrl.u32 %v493, 7
      %v495 = vsub.s32 3, %v494
      %v496 = vrot.slane %v372, %v495
      %v497 = vmul.f32 %v297, %v496
      %v498 = vmul.f32 %v299, %v496
      %v499 = vmul.f32 %v301, %v496
      %v500 = vmul.f32 %v303, %v496
      %v501 = vmul.f32 %v305, %v496
      %v502 = vmul.f32 %v307, %v496
      %v503 = vmul.f32 %v309, %v496
      %v504 = vmul.f32 %v311, %v496
      %v505 = vadd.f32 %v485, %v497
      %v506 = vadd.f32 %v486, %v498
      %v507 = vadd.f32 %v487, %v499
      %v508 = vadd.f32 %v488, %v500
      %v509 = vadd.f32 %v489, %v501
      %v510 = vadd.f32 %v490, %v502
      %v511 = vadd.f32 %v491, %v503
      %v512 = vadd.f32 %v492, %v504
      %v513 = vlaneseq
      %v514 = vshrl.u32 %v513, 7
      %v515 = vsub.s32 4, %v514
      %v516 = vrot.slane %v372, %v515
      %v517 = vmul.f32 %v313, %v516
      %v518 = vmul.f32 %v314, %v516
      %v519 = vmul.f32 %v315, %v516
      %v520 = vmul.f32 %v316, %v516
      %v521 = vmul.f32 %v317, %v516
      %v522 = vmul.f32 %v318, %v516
      %v523 = vmul.f32 %v319, %v516
      %v524 = vmul.f32 %v320, %v516
      %v525 = vadd.f32 %v505, %v517
      %v526 = vadd.f32 %v506, %v518
      %v527 = vadd.f32 %v507, %v519
      %v528 = vadd.f32 %v508, %v520
      %v529 = vadd.f32 %v509, %v521
      %v530 = vadd.f32 %v510, %v522
      %v531 = vadd.f32 %v511, %v523
      %v532 = vadd.f32 %v512, %v524
      %v533 = vlaneseq
      %v534 = vshrl.u32 %v533, 7
      %v535 = vsub.s32 5, %v534
      %v536 = vrot.slane %v372, %v535
      %v537 = vmul.f32 %v297, %v536
      %v538 = vmul.f32 %v298, %v536
      %v539 = vmul.f32 %v299, %v536
      %v540 = vmul.f32 %v300, %v536
      %v541 = vmul.f32 %v301, %v536
      %v542 = vmul.f32 %v302, %v536
      %v543 = vmul.f32 %v303, %v536
      %v544 = vmul.f32 %v304, %v536
      %v545 = vmul.f32 %v305, %v536
      %v546 = vmul.f32 %v306, %v536
      %v547 = vmul.f32 %v307, %v536
      %v548 = vmul.f32 %v308, %v536
      %v549 = vmul.f32 %v309, %v536
      %v550 = vmul.f32 %v310, %v536
      %v551 = vmul.f32 %v311, %v536
      %v552 = vmul.f32 %v312, %v536
      %v569 = vrot.slane %v537, 1
      %v570 = vrot.slane %v538, 1
      %v571 = vsel %vm452, %v569, %v570
      %v572 = vrot.slane %v539, 1
      %v573 = vrot.slane %v540, 1
      %v574 = vsel %vm452, %v572, %v573
      %v575 = vrot.slane %v541, 1
      %v576 = vrot.slane %v542, 1
      %v577 = vsel %vm452, %v575, %v576
      %v578 = vrot.slane %v543, 1
      %v579 = vrot.slane %v544, 1
      %v580 = vsel %vm452, %v578, %v579
      %v581 = vrot.slane %v545, 1
      %v582 = vrot.slane %v546, 1
      %v583 = vsel %vm452, %v581, %v582
      %v584 = vrot.slane %v547, 1
      %v585 = vrot.slane %v548, 1
      %v586 = vsel %vm452, %v584, %v585
      %v587 = vrot.slane %v549, 1
      %v588 = vrot.slane %v550, 1
      %v589 = vsel %vm452, %v587, %v588
      %v590 = vrot.slane %v551, 1
      %v591 = vrot.slane %v552, 1
      %v592 = vsel %vm452, %v590, %v591
      %v601 = vadd.f32 %v525, %v571
      %v602 = vadd.f32 %v526, %v574
      %v603 = vadd.f32 %v527, %v577
      %v604 = vadd.f32 %v528, %v580
      %v605 = vadd.f32 %v529, %v583
      %v606 = vadd.f32 %v530, %v586
      %v607 = vadd.f32 %v531, %v589
      %v608 = vadd.f32 %v532, %v592
      %v609 = vlaneseq
      %v610 = vshrl.u32 %v609, 7
      %v611 = vsub.s32 6, %v610
      %v612 = vrot.slane %v372, %v611
      %v613 = vmul.f32 %v272, %v612
      %v614 = vmul.f32 %v274, %v612
      %v615 = vmul.f32 %v276, %v612
      %v616 = vmul.f32 %v278, %v612
      %v617 = vmul.f32 %v280, %v612
      %v618 = vmul.f32 %v282, %v612
      %v619 = vmul.f32 %v284, %v612
      %v620 = vmul.f32 %v286, %v612
      %v621 = vadd.f32 %v601, %v613
      %v622 = vadd.f32 %v602, %v614
      %v623 = vadd.f32 %v603, %v615
      %v624 = vadd.f32 %v604, %v616
      %v625 = vadd.f32 %v605, %v617
      %v626 = vadd.f32 %v606, %v618
      %v627 = vadd.f32 %v607, %v619
      %v628 = vadd.f32 %v608, %v620
      %v629 = vlaneseq
      %v630 = vshrl.u32 %v629, 7
      %v631 = vsub.s32 7, %v630
      %v632 = vrot.slane %v372, %v631
      %v633 = vmul.f32 %v289, %v632
      %v634 = vmul.f32 %v290, %v632
      %v635 = vmul.f32 %v291, %v632
      %v636 = vmul.f32 %v292, %v632
      %v637 = vmul.f32 %v293, %v632
      %v638 = vmul.f32 %v294, %v632
      %v639 = vmul.f32 %v295, %v632
      %v640 = vmul.f32 %v296, %v632
      %v641 = vadd.f32 %v621, %v633
      %v642 = vadd.f32 %v622, %v634
      %v643 = vadd.f32 %v623, %v635
      %v644 = vadd.f32 %v624, %v636
      %v645 = vadd.f32 %v625, %v637
      %v646 = vadd.f32 %v626, %v638
      %v647 = vadd.f32 %v627, %v639
      %v648 = vadd.f32 %v628, %v640
      %v649 = vlaneseq
      %v650 = vshrl.u32 %v649, 7
      %v651 = vsub.s32 0, %v650
      %v652 = vrot.slane %v373, %v651
      %v653 = vmul.f32 %v272, %v652
      %v654 = vmul.f32 %v273, %v652
      %v655 = vmul.f32 %v274, %v652
      %v656 = vmul.f32 %v275, %v652
      %v657 = vmul.f32 %v276, %v652
      %v658 = vmul.f32 %v277, %v652
      %v659 = vmul.f32 %v278, %v652
      %v660 = vmul.f32 %v279, %v652
      %v661 = vmul.f32 %v280, %v652
      %v662 = vmul.f32 %v281, %v652
      %v663 = vmul.f32 %v282, %v652
      %v664 = vmul.f32 %v283, %v652
      %v665 = vmul.f32 %v284, %v652
      %v666 = vmul.f32 %v285, %v652
      %v667 = vmul.f32 %v286, %v652
      %v668 = vmul.f32 %v287, %v652
      %v685 = vrot.slane %v653, 1
      %v686 = vrot.slane %v654, 1
      %v687 = vsel %vm452, %v685, %v686
      %v688 = vrot.slane %v655, 1
      %v689 = vrot.slane %v656, 1
      %v690 = vsel %vm452, %v688, %v689
      %v691 = vrot.slane %v657, 1
      %v692 = vrot.slane %v658, 1
      %v693 = vsel %vm452, %v691, %v692
      %v694 = vrot.slane %v659, 1
      %v695 = vrot.slane %v660, 1
      %v696 = vsel %vm452, %v694, %v695
      %v697 = vrot.slane %v661, 1
      %v698 = vrot.slane %v662, 1
      %v699 = vsel %vm452, %v697, %v698
      %v700 = vrot.slane %v663, 1
      %v701 = vrot.slane %v664, 1
      %v702 = vsel %vm452, %v700, %v701
      %v703 = vrot.slane %v665, 1
      %v704 = vrot.slane %v666, 1
      %v705 = vsel %vm452, %v703, %v704
      %v706 = vrot.slane %v667, 1
      %v707 = vrot.slane %v668, 1
      %v708 = vsel %vm452, %v706, %v707
      %v717 = vadd.f32 %v641, %v687
      %v718 = vadd.f32 %v642, %v690
      %v719 = vadd.f32 %v643, %v693
      %v720 = vadd.f32 %v644, %v696
      %v721 = vadd.f32 %v645, %v699
      %v722 = vadd.f32 %v646, %v702
      %v723 = vadd.f32 %v647, %v705
      %v724 = vadd.f32 %v648, %v708
      %v725 = vlaneseq
      %v726 = vshrl.u32 %v725, 7
      %v727 = vsub.s32 0, %v726
      %v728 = vrot.slane %v382, %v727
      %v729 = vmul.f32 %v717, %v728
      %v730 = vmul.f32 %v718, %v728
      %v731 = vmul.f32 %v719, %v728
      %v732 = vmul.f32 %v720, %v728
      %v733 = vmul.f32 %v721, %v728
      %v734 = vmul.f32 %v722, %v728
      %v735 = vmul.f32 %v723, %v728
      %v736 = vmul.f32 %v724, %v728
      %v737 = vlaneseq
      %v738 = vshrl.u32 %v737, 7
      %v739 = vsub.s32 1, %v738
      %v740 = vrot.slane %v382, %v739
      %v741 = vadd.f32 %v729, %v740
      %v742 = vadd.f32 %v730, %v740
      %v743 = vadd.f32 %v731, %v740
      %v744 = vadd.f32 %v732, %v740
      %v745 = vadd.f32 %v733, %v740
      %v746 = vadd.f32 %v734, %v740
      %v747 = vadd.f32 %v735, %v740
      %v748 = vadd.f32 %v736, %v740
      %750 = vset.pattern.permute.xlu0 0
      %751 = vperm.xlu0 %750, %v741
      %v752 = vpop.permute.xlu0 %751
      %755 = vset.pattern.permute.xlu0 0
      %756 = vperm.xlu0 %755, %v742
      %v757 = vpop.permute.xlu0 %756
      %760 = vset.pattern.permute.xlu0 0
      %761 = vperm.xlu0 %760, %v743
      %v762 = vpop.permute.xlu0 %761
      %765 = vset.pattern.permute.xlu0 0
      %766 = vperm.xlu0 %765, %v744
      %v767 = vpop.permute.xlu0 %766
      %770 = vset.pattern.permute.xlu0 0
      %771 = vperm.xlu0 %770, %v745
      %v772 = vpop.permute.xlu0 %771
      %775 = vset.pattern.permute.xlu0 0
      %776 = vperm.xlu0 %775, %v746
      %v777 = vpop.permute.xlu0 %776
      %780 = vset.pattern.permute.xlu0 0
      %781 = vperm.xlu0 %780, %v747
      %v782 = vpop.permute.xlu0 %781
      %785 = vset.pattern.permute.xlu0 0
      %786 = vperm.xlu0 %785, %v748
      %v787 = vpop.permute.xlu0 %786
      %v789 = vlaneseq
      %v790 = vshrl.u32 %v789, 7
      %v791 = vsub.s32 0, %v790
      %v792 = vrot.slane %v378, %v791
      %v793 = vmul.f32 %v752, %v792
      %v794 = vmul.f32 %v757, %v792
      %v795 = vmul.f32 %v762, %v792
      %v796 = vmul.f32 %v767, %v792
      %v797 = vmul.f32 %v772, %v792
      %v798 = vmul.f32 %v777, %v792
      %v799 = vmul.f32 %v782, %v792
      %v800 = vmul.f32 %v787, %v792
      %801 = vset.pattern.permute.xlu0 1
      %802 = vperm.xlu0 %801, %v741
      %v803 = vpop.permute.xlu0 %802
      %805 = vset.pattern.permute.xlu0 1
      %806 = vperm.xlu0 %805, %v742
      %v807 = vpop.permute.xlu0 %806
      %809 = vset.pattern.permute.xlu0 1
      %810 = vperm.xlu0 %809, %v743
      %v811 = vpop.permute.xlu0 %810
      %813 = vset.pattern.permute.xlu0 1
      %814 = vperm.xlu0 %813, %v744
      %v815 = vpop.permute.xlu0 %814
      %817 = vset.pattern.permute.xlu0 1
      %818 = vperm.xlu0 %817, %v745
      %v819 = vpop.permute.xlu0 %818
      %821 = vset.pattern.permute.xlu0 1
      %822 = vperm.xlu0 %821, %v746
      %v823 = vpop.permute.xlu0 %822
      %825 = vset.pattern.permute.xlu0 1
      %826 = vperm.xlu0 %825, %v747
      %v827 = vpop.permute.xlu0 %826
      %829 = vset.pattern.permute.xlu0 1
      %830 = vperm.xlu0 %829, %v748
      %v831 = vpop.permute.xlu0 %830
      %v833 = vlaneseq
      %v834 = vshrl.u32 %v833, 7
      %v835 = vsub.s32 1, %v834
      %v836 = vrot.slane %v378, %v835
      %v837 = vmul.f32 %v803, %v836
      %v838 = vmul.f32 %v807, %v836
      %v839 = vmul.f32 %v811, %v836
      %v840 = vmul.f32 %v815, %v836
      %v841 = vmul.f32 %v819, %v836
      %v842 = vmul.f32 %v823, %v836
      %v843 = vmul.f32 %v827, %v836
      %v844 = vmul.f32 %v831, %v836
      %v845 = vadd.f32 %v793, %v837
      %v846 = vadd.f32 %v794, %v838
      %v847 = vadd.f32 %v795, %v839
      %v848 = vadd.f32 %v796, %v840
      %v849 = vadd.f32 %v797, %v841
      %v850 = vadd.f32 %v798, %v842
      %v851 = vadd.f32 %v799, %v843
      %v852 = vadd.f32 %v800, %v844
      %853 = vset.pattern.permute.xlu0 2
      %854 = vperm.xlu0 %853, %v741
      %v855 = vpop.permute.xlu0 %854
      %857 = vset.pattern.permute.xlu0 2
      %858 = vperm.xlu0 %857, %v742
      %v859 = vpop.permute.xlu0 %858
      %861 = vset.pattern.permute.xlu0 2
      %862 = vperm.xlu0 %861, %v743
      %v863 = vpop.permute.xlu0 %862
      %865 = vset.pattern.permute.xlu0 2
      %866 = vperm.xlu0 %865, %v744
      %v867 = vpop.permute.xlu0 %866
      %869 = vset.pattern.permute.xlu0 2
      %870 = vperm.xlu0 %869, %v745
      %v871 = vpop.permute.xlu0 %870
      %873 = vset.pattern.permute.xlu0 2
      %874 = vperm.xlu0 %873, %v746
      %v875 = vpop.permute.xlu0 %874
      %877 = vset.pattern.permute.xlu0 2
      %878 = vperm.xlu0 %877, %v747
      %v879 = vpop.permute.xlu0 %878
      %881 = vset.pattern.permute.xlu0 2
      %882 = vperm.xlu0 %881, %v748
      %v883 = vpop.permute.xlu0 %882
      %v885 = vlaneseq
      %v886 = vshrl.u32 %v885, 7
      %v887 = vsub.s32 2, %v886
      %v888 = vrot.slane %v378, %v887
      %v889 = vmul.f32 %v855, %v888
      %v890 = vmul.f32 %v859, %v888
      %v891 = vmul.f32 %v863, %v888
      %v892 = vmul.f32 %v867, %v888
      %v893 = vmul.f32 %v871, %v888
      %v894 = vmul.f32 %v875, %v888
      %v895 = vmul.f32 %v879, %v888
      %v896 = vmul.f32 %v883, %v888
      %v897 = vadd.f32 %v845, %v889
      %v898 = vadd.f32 %v846, %v890
      %v899 = vadd.f32 %v847, %v891
      %v900 = vadd.f32 %v848, %v892
      %v901 = vadd.f32 %v849, %v893
      %v902 = vadd.f32 %v850, %v894
      %v903 = vadd.f32 %v851, %v895
      %v904 = vadd.f32 %v852, %v896
      %905 = vset.pattern.permute.xlu0 3
      %906 = vperm.xlu0 %905, %v741
      %v907 = vpop.permute.xlu0 %906
      %909 = vset.pattern.permute.xlu0 3
      %910 = vperm.xlu0 %909, %v742
      %v911 = vpop.permute.xlu0 %910
      %913 = vset.pattern.permute.xlu0 3
      %914 = vperm.xlu0 %913, %v743
      %v915 = vpop.permute.xlu0 %914
      %917 = vset.pattern.permute.xlu0 3
      %918 = vperm.xlu0 %917, %v744
      %v919 = vpop.permute.xlu0 %918
      %921 = vset.pattern.permute.xlu0 3
      %922 = vperm.xlu0 %921, %v745
      %v923 = vpop.permute.xlu0 %922
      %925 = vset.pattern.permute.xlu0 3
      %926 = vperm.xlu0 %925, %v746
      %v927 = vpop.permute.xlu0 %926
      %929 = vset.pattern.permute.xlu0 3
      %930 = vperm.xlu0 %929, %v747
      %v931 = vpop.permute.xlu0 %930
      %933 = vset.pattern.permute.xlu0 3
      %934 = vperm.xlu0 %933, %v748
      %v935 = vpop.permute.xlu0 %934
      %v937 = vlaneseq
      %v938 = vshrl.u32 %v937, 7
      %v939 = vsub.s32 3, %v938
      %v940 = vrot.slane %v378, %v939
      %v941 = vmul.f32 %v907, %v940
      %v942 = vmul.f32 %v911, %v940
      %v943 = vmul.f32 %v915, %v940
      %v944 = vmul.f32 %v919, %v940
      %v945 = vmul.f32 %v923, %v940
      %v946 = vmul.f32 %v927, %v940
      %v947 = vmul.f32 %v931, %v940
      %v948 = vmul.f32 %v935, %v940
      %v949 = vadd.f32 %v897, %v941
      %v950 = vadd.f32 %v898, %v942
      %v951 = vadd.f32 %v899, %v943
      %v952 = vadd.f32 %v900, %v944
      %v953 = vadd.f32 %v901, %v945
      %v954 = vadd.f32 %v902, %v946
      %v955 = vadd.f32 %v903, %v947
      %v956 = vadd.f32 %v904, %v948
      %957 = vset.pattern.permute.xlu0 4
      %958 = vperm.xlu0 %957, %v741
      %v959 = vpop.permute.xlu0 %958
      %961 = vset.pattern.permute.xlu0 4
      %962 = vperm.xlu0 %961, %v742
      %v963 = vpop.permute.xlu0 %962
      %965 = vset.pattern.permute.xlu0 4
      %966 = vperm.xlu0 %965, %v743
      %v967 = vpop.permute.xlu0 %966
      %969 = vset.pattern.permute.xlu0 4
      %970 = vperm.xlu0 %969, %v744
      %v971 = vpop.permute.xlu0 %970
      %973 = vset.pattern.permute.xlu0 4
      %974 = vperm.xlu0 %973, %v745
      %v975 = vpop.permute.xlu0 %974
      %977 = vset.pattern.permute.xlu0 4
      %978 = vperm.xlu0 %977, %v746
      %v979 = vpop.permute.xlu0 %978
      %981 = vset.pattern.permute.xlu0 4
      %982 = vperm.xlu0 %981, %v747
      %v983 = vpop.permute.xlu0 %982
      %985 = vset.pattern.permute.xlu0 4
      %986 = vperm.xlu0 %985, %v748
      %v987 = vpop.permute.xlu0 %986
      %v989 = vlaneseq
      %v990 = vshrl.u32 %v989, 7
      %v991 = vsub.s32 4, %v990
      %v992 = vrot.slane %v378, %v991
      %v993 = vmul.f32 %v959, %v992
      %v994 = vmul.f32 %v963, %v992
      %v995 = vmul.f32 %v967, %v992
      %v996 = vmul.f32 %v971, %v992
      %v997 = vmul.f32 %v975, %v992
      %v998 = vmul.f32 %v979, %v992
      %v999 = vmul.f32 %v983, %v992
      %v1000 = vmul.f32 %v987, %v992
      %v1001 = vadd.f32 %v949, %v993
      %v1002 = vadd.f32 %v950, %v994
      %v1003 = vadd.f32 %v951, %v995
      %v1004 = vadd.f32 %v952, %v996
      %v1005 = vadd.f32 %v953, %v997
      %v1006 = vadd.f32 %v954, %v998
      %v1007 = vadd.f32 %v955, %v999
      %v1008 = vadd.f32 %v956, %v1000
      %1009 = vset.pattern.permute.xlu0 5
      %1010 = vperm.xlu0 %1009, %v741
      %v1011 = vpop.permute.xlu0 %1010
      %1013 = vset.pattern.permute.xlu0 5
      %1014 = vperm.xlu0 %1013, %v742
      %v1015 = vpop.permute.xlu0 %1014
      %1017 = vset.pattern.permute.xlu0 5
      %1018 = vperm.xlu0 %1017, %v743
      %v1019 = vpop.permute.xlu0 %1018
      %1021 = vset.pattern.permute.xlu0 5
      %1022 = vperm.xlu0 %1021, %v744
      %v1023 = vpop.permute.xlu0 %1022
      %1025 = vset.pattern.permute.xlu0 5
      %1026 = vperm.xlu0 %1025, %v745
      %v1027 = vpop.permute.xlu0 %1026
      %1029 = vset.pattern.permute.xlu0 5
      %1030 = vperm.xlu0 %1029, %v746
      %v1031 = vpop.permute.xlu0 %1030
      %1033 = vset.pattern.permute.xlu0 5
      %1034 = vperm.xlu0 %1033, %v747
      %v1035 = vpop.permute.xlu0 %1034
      %1037 = vset.pattern.permute.xlu0 5
      %1038 = vperm.xlu0 %1037, %v748
      %v1039 = vpop.permute.xlu0 %1038
      %v1041 = vlaneseq
      %v1042 = vshrl.u32 %v1041, 7
      %v1043 = vsub.s32 5, %v1042
      %v1044 = vrot.slane %v378, %v1043
      %v1045 = vmul.f32 %v1011, %v1044
      %v1046 = vmul.f32 %v1015, %v1044
      %v1047 = vmul.f32 %v1019, %v1044
      %v1048 = vmul.f32 %v1023, %v1044
      %v1049 = vmul.f32 %v1027, %v1044
      %v1050 = vmul.f32 %v1031, %v1044
      %v1051 = vmul.f32 %v1035, %v1044
      %v1052 = vmul.f32 %v1039, %v1044
      %v1053 = vadd.f32 %v1001, %v1045
      %v1054 = vadd.f32 %v1002, %v1046
      %v1055 = vadd.f32 %v1003, %v1047
      %v1056 = vadd.f32 %v1004, %v1048
      %v1057 = vadd.f32 %v1005, %v1049
      %v1058 = vadd.f32 %v1006, %v1050
      %v1059 = vadd.f32 %v1007, %v1051
      %v1060 = vadd.f32 %v1008, %v1052
      %1061 = vset.pattern.permute.xlu0 6
      %1062 = vperm.xlu0 %1061, %v741
      %v1063 = vpop.permute.xlu0 %1062
      %1065 = vset.pattern.permute.xlu0 6
      %1066 = vperm.xlu0 %1065, %v742
      %v1067 = vpop.permute.xlu0 %1066
      %1069 = vset.pattern.permute.xlu0 6
      %1070 = vperm.xlu0 %1069, %v743
      %v1071 = vpop.permute.xlu0 %1070
      %1073 = vset.pattern.permute.xlu0 6
      %1074 = vperm.xlu0 %1073, %v744
      %v1075 = vpop.permute.xlu0 %1074
      %1077 = vset.pattern.permute.xlu0 6
      %1078 = vperm.xlu0 %1077, %v745
      %v1079 = vpop.permute.xlu0 %1078
      %1081 = vset.pattern.permute.xlu0 6
      %1082 = vperm.xlu0 %1081, %v746
      %v1083 = vpop.permute.xlu0 %1082
      %1085 = vset.pattern.permute.xlu0 6
      %1086 = vperm.xlu0 %1085, %v747
      %v1087 = vpop.permute.xlu0 %1086
      %1089 = vset.pattern.permute.xlu0 6
      %1090 = vperm.xlu0 %1089, %v748
      %v1091 = vpop.permute.xlu0 %1090
      %v1093 = vlaneseq
      %v1094 = vshrl.u32 %v1093, 7
      %v1095 = vsub.s32 6, %v1094
      %v1096 = vrot.slane %v378, %v1095
      %v1097 = vmul.f32 %v1063, %v1096
      %v1098 = vmul.f32 %v1067, %v1096
      %v1099 = vmul.f32 %v1071, %v1096
      %v1100 = vmul.f32 %v1075, %v1096
      %v1101 = vmul.f32 %v1079, %v1096
      %v1102 = vmul.f32 %v1083, %v1096
      %v1103 = vmul.f32 %v1087, %v1096
      %v1104 = vmul.f32 %v1091, %v1096
      %v1105 = vadd.f32 %v1053, %v1097
      %v1106 = vadd.f32 %v1054, %v1098
      %v1107 = vadd.f32 %v1055, %v1099
      %v1108 = vadd.f32 %v1056, %v1100
      %v1109 = vadd.f32 %v1057, %v1101
      %v1110 = vadd.f32 %v1058, %v1102
      %v1111 = vadd.f32 %v1059, %v1103
      %v1112 = vadd.f32 %v1060, %v1104
      %1113 = vset.pattern.permute.xlu0 7
      %1114 = vperm.xlu0 %1113, %v741
      %v1115 = vpop.permute.xlu0 %1114
      %1117 = vset.pattern.permute.xlu0 7
      %1118 = vperm.xlu0 %1117, %v742
      %v1119 = vpop.permute.xlu0 %1118
      %1121 = vset.pattern.permute.xlu0 7
      %1122 = vperm.xlu0 %1121, %v743
      %v1123 = vpop.permute.xlu0 %1122
      %1125 = vset.pattern.permute.xlu0 7
      %1126 = vperm.xlu0 %1125, %v744
      %v1127 = vpop.permute.xlu0 %1126
      %1129 = vset.pattern.permute.xlu0 7
      %1130 = vperm.xlu0 %1129, %v745
      %v1131 = vpop.permute.xlu0 %1130
      %1133 = vset.pattern.permute.xlu0 7
      %1134 = vperm.xlu0 %1133, %v746
      %v1135 = vpop.permute.xlu0 %1134
      %1137 = vset.pattern.permute.xlu0 7
      %1138 = vperm.xlu0 %1137, %v747
      %v1139 = vpop.permute.xlu0 %1138
      %1141 = vset.pattern.permute.xlu0 7
      %1142 = vperm.xlu0 %1141, %v748
      %v1143 = vpop.permute.xlu0 %1142
      %v1145 = vlaneseq
      %v1146 = vshrl.u32 %v1145, 7
      %v1147 = vsub.s32 7, %v1146
      %v1148 = vrot.slane %v378, %v1147
      %v1149 = vmul.f32 %v1115, %v1148
      %v1150 = vmul.f32 %v1119, %v1148
      %v1151 = vmul.f32 %v1123, %v1148
      %v1152 = vmul.f32 %v1127, %v1148
      %v1153 = vmul.f32 %v1131, %v1148
      %v1154 = vmul.f32 %v1135, %v1148
      %v1155 = vmul.f32 %v1139, %v1148
      %v1156 = vmul.f32 %v1143, %v1148
      %v1157 = vadd.f32 %v1105, %v1149
      %v1158 = vadd.f32 %v1106, %v1150
      %v1159 = vadd.f32 %v1107, %v1151
      %v1160 = vadd.f32 %v1108, %v1152
      %v1161 = vadd.f32 %v1109, %v1153
      %v1162 = vadd.f32 %v1110, %v1154
      %v1163 = vadd.f32 %v1111, %v1155
      %v1164 = vadd.f32 %v1112, %v1156
      %1165 = vset.pattern.permute.xlu0 8
      %1166 = vperm.xlu0 %1165, %v741
      %v1167 = vpop.permute.xlu0 %1166
      %1169 = vset.pattern.permute.xlu0 8
      %1170 = vperm.xlu0 %1169, %v742
      %v1171 = vpop.permute.xlu0 %1170
      %1173 = vset.pattern.permute.xlu0 8
      %1174 = vperm.xlu0 %1173, %v743
      %v1175 = vpop.permute.xlu0 %1174
      %1177 = vset.pattern.permute.xlu0 8
      %1178 = vperm.xlu0 %1177, %v744
      %v1179 = vpop.permute.xlu0 %1178
      %1181 = vset.pattern.permute.xlu0 8
      %1182 = vperm.xlu0 %1181, %v745
      %v1183 = vpop.permute.xlu0 %1182
      %1185 = vset.pattern.permute.xlu0 8
      %1186 = vperm.xlu0 %1185, %v746
      %v1187 = vpop.permute.xlu0 %1186
      %1189 = vset.pattern.permute.xlu0 8
      %1190 = vperm.xlu0 %1189, %v747
      %v1191 = vpop.permute.xlu0 %1190
      %1193 = vset.pattern.permute.xlu0 8
      %1194 = vperm.xlu0 %1193, %v748
      %v1195 = vpop.permute.xlu0 %1194
      %v1197 = vlaneseq
      %v1198 = vshrl.u32 %v1197, 7
      %v1199 = vsub.s32 0, %v1198
      %v1200 = vrot.slane %v379, %v1199
      %v1201 = vmul.f32 %v1167, %v1200
      %v1202 = vmul.f32 %v1171, %v1200
      %v1203 = vmul.f32 %v1175, %v1200
      %v1204 = vmul.f32 %v1179, %v1200
      %v1205 = vmul.f32 %v1183, %v1200
      %v1206 = vmul.f32 %v1187, %v1200
      %v1207 = vmul.f32 %v1191, %v1200
      %v1208 = vmul.f32 %v1195, %v1200
      %v1209 = vadd.f32 %v1157, %v1201
      %v1210 = vadd.f32 %v1158, %v1202
      %v1211 = vadd.f32 %v1159, %v1203
      %v1212 = vadd.f32 %v1160, %v1204
      %v1213 = vadd.f32 %v1161, %v1205
      %v1214 = vadd.f32 %v1162, %v1206
      %v1215 = vadd.f32 %v1163, %v1207
      %v1216 = vadd.f32 %v1164, %v1208
      %1217 = vset.pattern.permute.xlu0 9
      %1218 = vperm.xlu0 %1217, %v741
      %v1219 = vpop.permute.xlu0 %1218
      %1221 = vset.pattern.permute.xlu0 9
      %1222 = vperm.xlu0 %1221, %v742
      %v1223 = vpop.permute.xlu0 %1222
      %1225 = vset.pattern.permute.xlu0 9
      %1226 = vperm.xlu0 %1225, %v743
      %v1227 = vpop.permute.xlu0 %1226
      %1229 = vset.pattern.permute.xlu0 9
      %1230 = vperm.xlu0 %1229, %v744
      %v1231 = vpop.permute.xlu0 %1230
      %1233 = vset.pattern.permute.xlu0 9
      %1234 = vperm.xlu0 %1233, %v745
      %v1235 = vpop.permute.xlu0 %1234
      %1237 = vset.pattern.permute.xlu0 9
      %1238 = vperm.xlu0 %1237, %v746
      %v1239 = vpop.permute.xlu0 %1238
      %1241 = vset.pattern.permute.xlu0 9
      %1242 = vperm.xlu0 %1241, %v747
      %v1243 = vpop.permute.xlu0 %1242
      %1245 = vset.pattern.permute.xlu0 9
      %1246 = vperm.xlu0 %1245, %v748
      %v1247 = vpop.permute.xlu0 %1246
      %v1249 = vlaneseq
      %v1250 = vshrl.u32 %v1249, 7
      %v1251 = vsub.s32 1, %v1250
      %v1252 = vrot.slane %v379, %v1251
      %v1253 = vmul.f32 %v1219, %v1252
      %v1254 = vmul.f32 %v1223, %v1252
      %v1255 = vmul.f32 %v1227, %v1252
      %v1256 = vmul.f32 %v1231, %v1252
      %v1257 = vmul.f32 %v1235, %v1252
      %v1258 = vmul.f32 %v1239, %v1252
      %v1259 = vmul.f32 %v1243, %v1252
      %v1260 = vmul.f32 %v1247, %v1252
      %v1261 = vadd.f32 %v1209, %v1253
      %v1262 = vadd.f32 %v1210, %v1254
      %v1263 = vadd.f32 %v1211, %v1255
      %v1264 = vadd.f32 %v1212, %v1256
      %v1265 = vadd.f32 %v1213, %v1257
      %v1266 = vadd.f32 %v1214, %v1258
      %v1267 = vadd.f32 %v1215, %v1259
      %v1268 = vadd.f32 %v1216, %v1260
      %1269 = vset.pattern.permute.xlu0 10
      %1270 = vperm.xlu0 %1269, %v741
      %v1271 = vpop.permute.xlu0 %1270
      %1273 = vset.pattern.permute.xlu0 10
      %1274 = vperm.xlu0 %1273, %v742
      %v1275 = vpop.permute.xlu0 %1274
      %1277 = vset.pattern.permute.xlu0 10
      %1278 = vperm.xlu0 %1277, %v743
      %v1279 = vpop.permute.xlu0 %1278
      %1281 = vset.pattern.permute.xlu0 10
      %1282 = vperm.xlu0 %1281, %v744
      %v1283 = vpop.permute.xlu0 %1282
      %1285 = vset.pattern.permute.xlu0 10
      %1286 = vperm.xlu0 %1285, %v745
      %v1287 = vpop.permute.xlu0 %1286
      %1289 = vset.pattern.permute.xlu0 10
      %1290 = vperm.xlu0 %1289, %v746
      %v1291 = vpop.permute.xlu0 %1290
      %1293 = vset.pattern.permute.xlu0 10
      %1294 = vperm.xlu0 %1293, %v747
      %v1295 = vpop.permute.xlu0 %1294
      %1297 = vset.pattern.permute.xlu0 10
      %1298 = vperm.xlu0 %1297, %v748
      %v1299 = vpop.permute.xlu0 %1298
      %v1301 = vlaneseq
      %v1302 = vshrl.u32 %v1301, 7
      %v1303 = vsub.s32 2, %v1302
      %v1304 = vrot.slane %v379, %v1303
      %v1305 = vmul.f32 %v1271, %v1304
      %v1306 = vmul.f32 %v1275, %v1304
      %v1307 = vmul.f32 %v1279, %v1304
      %v1308 = vmul.f32 %v1283, %v1304
      %v1309 = vmul.f32 %v1287, %v1304
      %v1310 = vmul.f32 %v1291, %v1304
      %v1311 = vmul.f32 %v1295, %v1304
      %v1312 = vmul.f32 %v1299, %v1304
      %v1313 = vadd.f32 %v1261, %v1305
      %v1314 = vadd.f32 %v1262, %v1306
      %v1315 = vadd.f32 %v1263, %v1307
      %v1316 = vadd.f32 %v1264, %v1308
      %v1317 = vadd.f32 %v1265, %v1309
      %v1318 = vadd.f32 %v1266, %v1310
      %v1319 = vadd.f32 %v1267, %v1311
      %v1320 = vadd.f32 %v1268, %v1312
      %1321 = vset.pattern.permute.xlu0 11
      %1322 = vperm.xlu0 %1321, %v741
      %v1323 = vpop.permute.xlu0 %1322
      %1325 = vset.pattern.permute.xlu0 11
      %1326 = vperm.xlu0 %1325, %v742
      %v1327 = vpop.permute.xlu0 %1326
      %1329 = vset.pattern.permute.xlu0 11
      %1330 = vperm.xlu0 %1329, %v743
      %v1331 = vpop.permute.xlu0 %1330
      %1333 = vset.pattern.permute.xlu0 11
      %1334 = vperm.xlu0 %1333, %v744
      %v1335 = vpop.permute.xlu0 %1334
      %1337 = vset.pattern.permute.xlu0 11
      %1338 = vperm.xlu0 %1337, %v745
      %v1339 = vpop.permute.xlu0 %1338
      %1341 = vset.pattern.permute.xlu0 11
      %1342 = vperm.xlu0 %1341, %v746
      %v1343 = vpop.permute.xlu0 %1342
      %1345 = vset.pattern.permute.xlu0 11
      %1346 = vperm.xlu0 %1345, %v747
      %v1347 = vpop.permute.xlu0 %1346
      %1349 = vset.pattern.permute.xlu0 11
      %1350 = vperm.xlu0 %1349, %v748
      %v1351 = vpop.permute.xlu0 %1350
      %v1353 = vlaneseq
      %v1354 = vshrl.u32 %v1353, 7
      %v1355 = vsub.s32 3, %v1354
      %v1356 = vrot.slane %v379, %v1355
      %v1357 = vmul.f32 %v1323, %v1356
      %v1358 = vmul.f32 %v1327, %v1356
      %v1359 = vmul.f32 %v1331, %v1356
      %v1360 = vmul.f32 %v1335, %v1356
      %v1361 = vmul.f32 %v1339, %v1356
      %v1362 = vmul.f32 %v1343, %v1356
      %v1363 = vmul.f32 %v1347, %v1356
      %v1364 = vmul.f32 %v1351, %v1356
      %v1365 = vadd.f32 %v1313, %v1357
      %v1366 = vadd.f32 %v1314, %v1358
      %v1367 = vadd.f32 %v1315, %v1359
      %v1368 = vadd.f32 %v1316, %v1360
      %v1369 = vadd.f32 %v1317, %v1361
      %v1370 = vadd.f32 %v1318, %v1362
      %v1371 = vadd.f32 %v1319, %v1363
      %v1372 = vadd.f32 %v1320, %v1364
      %1373 = vset.pattern.permute.xlu0 12
      %1374 = vperm.xlu0 %1373, %v741
      %v1375 = vpop.permute.xlu0 %1374
      %1377 = vset.pattern.permute.xlu0 12
      %1378 = vperm.xlu0 %1377, %v742
      %v1379 = vpop.permute.xlu0 %1378
      %1381 = vset.pattern.permute.xlu0 12
      %1382 = vperm.xlu0 %1381, %v743
      %v1383 = vpop.permute.xlu0 %1382
      %1385 = vset.pattern.permute.xlu0 12
      %1386 = vperm.xlu0 %1385, %v744
      %v1387 = vpop.permute.xlu0 %1386
      %1389 = vset.pattern.permute.xlu0 12
      %1390 = vperm.xlu0 %1389, %v745
      %v1391 = vpop.permute.xlu0 %1390
      %1393 = vset.pattern.permute.xlu0 12
      %1394 = vperm.xlu0 %1393, %v746
      %v1395 = vpop.permute.xlu0 %1394
      %1397 = vset.pattern.permute.xlu0 12
      %1398 = vperm.xlu0 %1397, %v747
      %v1399 = vpop.permute.xlu0 %1398
      %1401 = vset.pattern.permute.xlu0 12
      %1402 = vperm.xlu0 %1401, %v748
      %v1403 = vpop.permute.xlu0 %1402
      %v1405 = vlaneseq
      %v1406 = vshrl.u32 %v1405, 7
      %v1407 = vsub.s32 4, %v1406
      %v1408 = vrot.slane %v379, %v1407
      %v1409 = vmul.f32 %v1375, %v1408
      %v1410 = vmul.f32 %v1379, %v1408
      %v1411 = vmul.f32 %v1383, %v1408
      %v1412 = vmul.f32 %v1387, %v1408
      %v1413 = vmul.f32 %v1391, %v1408
      %v1414 = vmul.f32 %v1395, %v1408
      %v1415 = vmul.f32 %v1399, %v1408
      %v1416 = vmul.f32 %v1403, %v1408
      %v1417 = vadd.f32 %v1365, %v1409
      %v1418 = vadd.f32 %v1366, %v1410
      %v1419 = vadd.f32 %v1367, %v1411
      %v1420 = vadd.f32 %v1368, %v1412
      %v1421 = vadd.f32 %v1369, %v1413
      %v1422 = vadd.f32 %v1370, %v1414
      %v1423 = vadd.f32 %v1371, %v1415
      %v1424 = vadd.f32 %v1372, %v1416
      %1425 = vset.pattern.permute.xlu0 13
      %1426 = vperm.xlu0 %1425, %v741
      %v1427 = vpop.permute.xlu0 %1426
      %1429 = vset.pattern.permute.xlu0 13
      %1430 = vperm.xlu0 %1429, %v742
      %v1431 = vpop.permute.xlu0 %1430
      %1433 = vset.pattern.permute.xlu0 13
      %1434 = vperm.xlu0 %1433, %v743
      %v1435 = vpop.permute.xlu0 %1434
      %1437 = vset.pattern.permute.xlu0 13
      %1438 = vperm.xlu0 %1437, %v744
      %v1439 = vpop.permute.xlu0 %1438
      %1441 = vset.pattern.permute.xlu0 13
      %1442 = vperm.xlu0 %1441, %v745
      %v1443 = vpop.permute.xlu0 %1442
      %1445 = vset.pattern.permute.xlu0 13
      %1446 = vperm.xlu0 %1445, %v746
      %v1447 = vpop.permute.xlu0 %1446
      %1449 = vset.pattern.permute.xlu0 13
      %1450 = vperm.xlu0 %1449, %v747
      %v1451 = vpop.permute.xlu0 %1450
      %1453 = vset.pattern.permute.xlu0 13
      %1454 = vperm.xlu0 %1453, %v748
      %v1455 = vpop.permute.xlu0 %1454
      %v1457 = vlaneseq
      %v1458 = vshrl.u32 %v1457, 7
      %v1459 = vsub.s32 5, %v1458
      %v1460 = vrot.slane %v379, %v1459
      %v1461 = vmul.f32 %v1427, %v1460
      %v1462 = vmul.f32 %v1431, %v1460
      %v1463 = vmul.f32 %v1435, %v1460
      %v1464 = vmul.f32 %v1439, %v1460
      %v1465 = vmul.f32 %v1443, %v1460
      %v1466 = vmul.f32 %v1447, %v1460
      %v1467 = vmul.f32 %v1451, %v1460
      %v1468 = vmul.f32 %v1455, %v1460
      %v1469 = vadd.f32 %v1417, %v1461
      %v1470 = vadd.f32 %v1418, %v1462
      %v1471 = vadd.f32 %v1419, %v1463
      %v1472 = vadd.f32 %v1420, %v1464
      %v1473 = vadd.f32 %v1421, %v1465
      %v1474 = vadd.f32 %v1422, %v1466
      %v1475 = vadd.f32 %v1423, %v1467
      %v1476 = vadd.f32 %v1424, %v1468
      %1477 = vset.pattern.permute.xlu0 14
      %1478 = vperm.xlu0 %1477, %v741
      %v1479 = vpop.permute.xlu0 %1478
      %1481 = vset.pattern.permute.xlu0 14
      %1482 = vperm.xlu0 %1481, %v742
      %v1483 = vpop.permute.xlu0 %1482
      %1485 = vset.pattern.permute.xlu0 14
      %1486 = vperm.xlu0 %1485, %v743
      %v1487 = vpop.permute.xlu0 %1486
      %1489 = vset.pattern.permute.xlu0 14
      %1490 = vperm.xlu0 %1489, %v744
      %v1491 = vpop.permute.xlu0 %1490
      %1493 = vset.pattern.permute.xlu0 14
      %1494 = vperm.xlu0 %1493, %v745
      %v1495 = vpop.permute.xlu0 %1494
      %1497 = vset.pattern.permute.xlu0 14
      %1498 = vperm.xlu0 %1497, %v746
      %v1499 = vpop.permute.xlu0 %1498
      %1501 = vset.pattern.permute.xlu0 14
      %1502 = vperm.xlu0 %1501, %v747
      %v1503 = vpop.permute.xlu0 %1502
      %1505 = vset.pattern.permute.xlu0 14
      %1506 = vperm.xlu0 %1505, %v748
      %v1507 = vpop.permute.xlu0 %1506
      %v1509 = vlaneseq
      %v1510 = vshrl.u32 %v1509, 7
      %v1511 = vsub.s32 6, %v1510
      %v1512 = vrot.slane %v379, %v1511
      %v1513 = vmul.f32 %v1479, %v1512
      %v1514 = vmul.f32 %v1483, %v1512
      %v1515 = vmul.f32 %v1487, %v1512
      %v1516 = vmul.f32 %v1491, %v1512
      %v1517 = vmul.f32 %v1495, %v1512
      %v1518 = vmul.f32 %v1499, %v1512
      %v1519 = vmul.f32 %v1503, %v1512
      %v1520 = vmul.f32 %v1507, %v1512
      %v1521 = vadd.f32 %v1469, %v1513
      %v1522 = vadd.f32 %v1470, %v1514
      %v1523 = vadd.f32 %v1471, %v1515
      %v1524 = vadd.f32 %v1472, %v1516
      %v1525 = vadd.f32 %v1473, %v1517
      %v1526 = vadd.f32 %v1474, %v1518
      %v1527 = vadd.f32 %v1475, %v1519
      %v1528 = vadd.f32 %v1476, %v1520
      %1529 = vset.pattern.permute.xlu0 15
      %1530 = vperm.xlu0 %1529, %v741
      %v1531 = vpop.permute.xlu0 %1530
      %1533 = vset.pattern.permute.xlu0 15
      %1534 = vperm.xlu0 %1533, %v742
      %v1535 = vpop.permute.xlu0 %1534
      %1537 = vset.pattern.permute.xlu0 15
      %1538 = vperm.xlu0 %1537, %v743
      %v1539 = vpop.permute.xlu0 %1538
      %1541 = vset.pattern.permute.xlu0 15
      %1542 = vperm.xlu0 %1541, %v744
      %v1543 = vpop.permute.xlu0 %1542
      %1545 = vset.pattern.permute.xlu0 15
      %1546 = vperm.xlu0 %1545, %v745
      %v1547 = vpop.permute.xlu0 %1546
      %1549 = vset.pattern.permute.xlu0 15
      %1550 = vperm.xlu0 %1549, %v746
      %v1551 = vpop.permute.xlu0 %1550
      %1553 = vset.pattern.permute.xlu0 15
      %1554 = vperm.xlu0 %1553, %v747
      %v1555 = vpop.permute.xlu0 %1554
      %1557 = vset.pattern.permute.xlu0 15
      %1558 = vperm.xlu0 %1557, %v748
      %v1559 = vpop.permute.xlu0 %1558
      %v1561 = vlaneseq
      %v1562 = vshrl.u32 %v1561, 7
      %v1563 = vsub.s32 7, %v1562
      %v1564 = vrot.slane %v379, %v1563
      %v1565 = vmul.f32 %v1531, %v1564
      %v1566 = vmul.f32 %v1535, %v1564
      %v1567 = vmul.f32 %v1539, %v1564
      %v1568 = vmul.f32 %v1543, %v1564
      %v1569 = vmul.f32 %v1547, %v1564
      %v1570 = vmul.f32 %v1551, %v1564
      %v1571 = vmul.f32 %v1555, %v1564
      %v1572 = vmul.f32 %v1559, %v1564
      %v1573 = vadd.f32 %v1521, %v1565
      %v1574 = vadd.f32 %v1522, %v1566
      %v1575 = vadd.f32 %v1523, %v1567
      %v1576 = vadd.f32 %v1524, %v1568
      %v1577 = vadd.f32 %v1525, %v1569
      %v1578 = vadd.f32 %v1526, %v1570
      %v1579 = vadd.f32 %v1527, %v1571
      %v1580 = vadd.f32 %v1528, %v1572
      %v1581 = vlaneseq
      %v1582 = vshrl.u32 %v1581, 7
      %v1583 = vsub.s32 2, %v1582
      %v1584 = vrot.slane %v382, %v1583
      %v1585 = vmul.f32 %v1573, %v1584
      %v1586 = vmul.f32 %v1574, %v1584
      %v1587 = vmul.f32 %v1575, %v1584
      %v1588 = vmul.f32 %v1576, %v1584
      %v1589 = vmul.f32 %v1577, %v1584
      %v1590 = vmul.f32 %v1578, %v1584
      %v1591 = vmul.f32 %v1579, %v1584
      %v1592 = vmul.f32 %v1580, %v1584
      %v1593 = vlaneseq
      %v1594 = vshrl.u32 %v1593, 7
      %v1595 = vsub.s32 3, %v1594
      %v1596 = vrot.slane %v382, %v1595
      %v1597 = vadd.f32 %v1585, %v1596
      %v1598 = vadd.f32 %v1586, %v1596
      %v1599 = vadd.f32 %v1587, %v1596
      %v1600 = vadd.f32 %v1588, %v1596
      %v1601 = vadd.f32 %v1589, %v1596
      %v1602 = vadd.f32 %v1590, %v1596
      %v1603 = vadd.f32 %v1591, %v1596
      %v1604 = vadd.f32 %v1592, %v1596
      %v1605 = vmax.f32 %v1597, 0.0
      %v1606 = vmax.f32 %v1598, 0.0
      %v1607 = vmax.f32 %v1599, 0.0
      %v1608 = vmax.f32 %v1600, 0.0
      %v1609 = vmax.f32 %v1601, 0.0
      %v1610 = vmax.f32 %v1602, 0.0
      %v1611 = vmax.f32 %v1603, 0.0
      %v1612 = vmax.f32 %v1604, 0.0
      %vm1613 = vcmask 130048
      %1614 = vst.msk [vmem:[%s264] sm:$0xff] %vm1613, %v1605
      %1615 = vst.msk [vmem:[%s264 + $0x8] sm:$0xff] %vm1613, %v1606
      %1616 = vst.msk [vmem:[%s264 + $0x10] sm:$0xff] %vm1613, %v1607
      %1617 = vst.msk [vmem:[%s264 + $0x18] sm:$0xff] %vm1613, %v1608
      %1618 = vst.msk [vmem:[%s264 + $0x20] sm:$0xff] %vm1613, %v1609
      %1619 = vst.msk [vmem:[%s264 + $0x28] sm:$0xff] %vm1613, %v1610
      %1620 = vst.msk [vmem:[%s264 + $0x30] sm:$0xff] %vm1613, %v1611
      %1621 = vst.msk [vmem:[%s264 + $0x38] sm:$0xff] %vm1613, %v1612
      %1623 = vset.pattern.permute.xlu0 0
      %1624 = vperm.xlu0 %1623, %v270
      %v1625 = vpop.permute.xlu0 %1624
      %1628 = vset.pattern.permute.xlu0 0
      %1629 = vperm.xlu0 %1628, %v271
      %v1630 = vpop.permute.xlu0 %1629
      %1633 = vset.pattern.permute.xlu0 0
      %1634 = vperm.xlu0 %1633, %v272
      %v1635 = vpop.permute.xlu0 %1634
      %1638 = vset.pattern.permute.xlu0 0
      %1639 = vperm.xlu0 %1638, %v273
      %v1640 = vpop.permute.xlu0 %1639
      %1643 = vset.pattern.permute.xlu0 0
      %1644 = vperm.xlu0 %1643, %v274
      %v1645 = vpop.permute.xlu0 %1644
      %1648 = vset.pattern.permute.xlu0 0
      %1649 = vperm.xlu0 %1648, %v275
      %v1650 = vpop.permute.xlu0 %1649
      %1653 = vset.pattern.permute.xlu0 0
      %1654 = vperm.xlu0 %1653, %v276
      %v1655 = vpop.permute.xlu0 %1654
      %1658 = vset.pattern.permute.xlu0 0
      %1659 = vperm.xlu0 %1658, %v277
      %v1660 = vpop.permute.xlu0 %1659
      %1663 = vset.pattern.permute.xlu0 0
      %1664 = vperm.xlu0 %1663, %v278
      %v1665 = vpop.permute.xlu0 %1664
      %1668 = vset.pattern.permute.xlu0 0
      %1669 = vperm.xlu0 %1668, %v279
      %v1670 = vpop.permute.xlu0 %1669
      %1673 = vset.pattern.permute.xlu0 0
      %1674 = vperm.xlu0 %1673, %v280
      %v1675 = vpop.permute.xlu0 %1674
      %1678 = vset.pattern.permute.xlu0 0
      %1679 = vperm.xlu0 %1678, %v281
      %v1680 = vpop.permute.xlu0 %1679
      %1683 = vset.pattern.permute.xlu0 0
      %1684 = vperm.xlu0 %1683, %v282
      %v1685 = vpop.permute.xlu0 %1684
      %1688 = vset.pattern.permute.xlu0 0
      %1689 = vperm.xlu0 %1688, %v283
      %v1690 = vpop.permute.xlu0 %1689
      %1693 = vset.pattern.permute.xlu0 0
      %1694 = vperm.xlu0 %1693, %v284
      %v1695 = vpop.permute.xlu0 %1694
      %1698 = vset.pattern.permute.xlu0 0
      %1699 = vperm.xlu0 %1698, %v285
      %v1700 = vpop.permute.xlu0 %1699
      %1703 = vset.pattern.permute.xlu0 0
      %1704 = vperm.xlu0 %1703, %v286
      %v1705 = vpop.permute.xlu0 %1704
      %1708 = vset.pattern.permute.xlu0 0
      %1709 = vperm.xlu0 %1708, %v287
      %v1710 = vpop.permute.xlu0 %1709
      %1713 = vset.pattern.permute.xlu0 0
      %1714 = vperm.xlu0 %1713, %v288
      %v1715 = vpop.permute.xlu0 %1714
      %1718 = vset.pattern.permute.xlu0 0
      %1719 = vperm.xlu0 %1718, %v289
      %v1720 = vpop.permute.xlu0 %1719
      %1723 = vset.pattern.permute.xlu0 0
      %1724 = vperm.xlu0 %1723, %v290
      %v1725 = vpop.permute.xlu0 %1724
      %1728 = vset.pattern.permute.xlu0 0
      %1729 = vperm.xlu0 %1728, %v291
      %v1730 = vpop.permute.xlu0 %1729
      %1733 = vset.pattern.permute.xlu0 0
      %1734 = vperm.xlu0 %1733, %v292
      %v1735 = vpop.permute.xlu0 %1734
      %1738 = vset.pattern.permute.xlu0 0
      %1739 = vperm.xlu0 %1738, %v293
      %v1740 = vpop.permute.xlu0 %1739
      %1743 = vset.pattern.permute.xlu0 0
      %1744 = vperm.xlu0 %1743, %v294
      %v1745 = vpop.permute.xlu0 %1744
      %1748 = vset.pattern.permute.xlu0 0
      %1749 = vperm.xlu0 %1748, %v295
      %v1750 = vpop.permute.xlu0 %1749
      %1753 = vset.pattern.permute.xlu0 0
      %1754 = vperm.xlu0 %1753, %v296
      %v1755 = vpop.permute.xlu0 %1754
      %1758 = vset.pattern.permute.xlu0 0
      %1759 = vperm.xlu0 %1758, %v297
      %v1760 = vpop.permute.xlu0 %1759
      %1763 = vset.pattern.permute.xlu0 0
      %1764 = vperm.xlu0 %1763, %v298
      %v1765 = vpop.permute.xlu0 %1764
      %1768 = vset.pattern.permute.xlu0 0
      %1769 = vperm.xlu0 %1768, %v299
      %v1770 = vpop.permute.xlu0 %1769
      %1773 = vset.pattern.permute.xlu0 0
      %1774 = vperm.xlu0 %1773, %v300
      %v1775 = vpop.permute.xlu0 %1774
      %1778 = vset.pattern.permute.xlu0 0
      %1779 = vperm.xlu0 %1778, %v301
      %v1780 = vpop.permute.xlu0 %1779
      %1783 = vset.pattern.permute.xlu0 0
      %1784 = vperm.xlu0 %1783, %v302
      %v1785 = vpop.permute.xlu0 %1784
      %1788 = vset.pattern.permute.xlu0 0
      %1789 = vperm.xlu0 %1788, %v303
      %v1790 = vpop.permute.xlu0 %1789
      %1793 = vset.pattern.permute.xlu0 0
      %1794 = vperm.xlu0 %1793, %v304
      %v1795 = vpop.permute.xlu0 %1794
      %1798 = vset.pattern.permute.xlu0 0
      %1799 = vperm.xlu0 %1798, %v305
      %v1800 = vpop.permute.xlu0 %1799
      %1803 = vset.pattern.permute.xlu0 0
      %1804 = vperm.xlu0 %1803, %v306
      %v1805 = vpop.permute.xlu0 %1804
      %1808 = vset.pattern.permute.xlu0 0
      %1809 = vperm.xlu0 %1808, %v307
      %v1810 = vpop.permute.xlu0 %1809
      %1813 = vset.pattern.permute.xlu0 0
      %1814 = vperm.xlu0 %1813, %v308
      %v1815 = vpop.permute.xlu0 %1814
      %1818 = vset.pattern.permute.xlu0 0
      %1819 = vperm.xlu0 %1818, %v309
      %v1820 = vpop.permute.xlu0 %1819
      %1823 = vset.pattern.permute.xlu0 0
      %1824 = vperm.xlu0 %1823, %v310
      %v1825 = vpop.permute.xlu0 %1824
      %1828 = vset.pattern.permute.xlu0 0
      %1829 = vperm.xlu0 %1828, %v311
      %v1830 = vpop.permute.xlu0 %1829
      %1833 = vset.pattern.permute.xlu0 0
      %1834 = vperm.xlu0 %1833, %v312
      %v1835 = vpop.permute.xlu0 %1834
      %1838 = vset.pattern.permute.xlu0 0
      %1839 = vperm.xlu0 %1838, %v313
      %v1840 = vpop.permute.xlu0 %1839
      %1843 = vset.pattern.permute.xlu0 0
      %1844 = vperm.xlu0 %1843, %v314
      %v1845 = vpop.permute.xlu0 %1844
      %1848 = vset.pattern.permute.xlu0 0
      %1849 = vperm.xlu0 %1848, %v315
      %v1850 = vpop.permute.xlu0 %1849
      %1853 = vset.pattern.permute.xlu0 0
      %1854 = vperm.xlu0 %1853, %v316
      %v1855 = vpop.permute.xlu0 %1854
      %1858 = vset.pattern.permute.xlu0 0
      %1859 = vperm.xlu0 %1858, %v317
      %v1860 = vpop.permute.xlu0 %1859
      %1863 = vset.pattern.permute.xlu0 0
      %1864 = vperm.xlu0 %1863, %v318
      %v1865 = vpop.permute.xlu0 %1864
      %1868 = vset.pattern.permute.xlu0 0
      %1869 = vperm.xlu0 %1868, %v319
      %v1870 = vpop.permute.xlu0 %1869
      %1873 = vset.pattern.permute.xlu0 0
      %1874 = vperm.xlu0 %1873, %v320
      %v1875 = vpop.permute.xlu0 %1874
      %v1877 = vlaneseq
      %v1878 = vshrl.u32 %v1877, 7
      %v1879 = vsub.s32 0, %v1878
      %v1880 = vrot.slane %v376, %v1879
      %v1881 = vmul.f32 %v1625, %v1880
      %v1882 = vmul.f32 %v1630, %v1880
      %v1883 = vmul.f32 %v1635, %v1880
      %v1884 = vmul.f32 %v1640, %v1880
      %v1885 = vmul.f32 %v1645, %v1880
      %v1886 = vmul.f32 %v1650, %v1880
      %v1887 = vmul.f32 %v1655, %v1880
      %v1888 = vmul.f32 %v1660, %v1880
      %v1889 = vmul.f32 %v1665, %v1880
      %v1890 = vmul.f32 %v1670, %v1880
      %v1891 = vmul.f32 %v1675, %v1880
      %v1892 = vmul.f32 %v1680, %v1880
      %v1893 = vmul.f32 %v1685, %v1880
      %v1894 = vmul.f32 %v1690, %v1880
      %v1895 = vmul.f32 %v1695, %v1880
      %v1896 = vmul.f32 %v1700, %v1880
      %v1897 = vmul.f32 %v1705, %v1880
      %v1898 = vmul.f32 %v1710, %v1880
      %v1899 = vmul.f32 %v1715, %v1880
      %v1900 = vmul.f32 %v1720, %v1880
      %v1901 = vmul.f32 %v1725, %v1880
      %v1902 = vmul.f32 %v1730, %v1880
      %v1903 = vmul.f32 %v1735, %v1880
      %v1904 = vmul.f32 %v1740, %v1880
      %v1905 = vmul.f32 %v1745, %v1880
      %v1906 = vmul.f32 %v1750, %v1880
      %v1907 = vmul.f32 %v1755, %v1880
      %v1908 = vmul.f32 %v1760, %v1880
      %v1909 = vmul.f32 %v1765, %v1880
      %v1910 = vmul.f32 %v1770, %v1880
      %v1911 = vmul.f32 %v1775, %v1880
      %v1912 = vmul.f32 %v1780, %v1880
      %v1913 = vmul.f32 %v1785, %v1880
      %v1914 = vmul.f32 %v1790, %v1880
      %v1915 = vmul.f32 %v1795, %v1880
      %v1916 = vmul.f32 %v1800, %v1880
      %v1917 = vmul.f32 %v1805, %v1880
      %v1918 = vmul.f32 %v1810, %v1880
      %v1919 = vmul.f32 %v1815, %v1880
      %v1920 = vmul.f32 %v1820, %v1880
      %v1921 = vmul.f32 %v1825, %v1880
      %v1922 = vmul.f32 %v1830, %v1880
      %v1923 = vmul.f32 %v1835, %v1880
      %v1924 = vmul.f32 %v1840, %v1880
      %v1925 = vmul.f32 %v1845, %v1880
      %v1926 = vmul.f32 %v1850, %v1880
      %v1927 = vmul.f32 %v1855, %v1880
      %v1928 = vmul.f32 %v1860, %v1880
      %v1929 = vmul.f32 %v1865, %v1880
      %v1930 = vmul.f32 %v1870, %v1880
      %v1931 = vmul.f32 %v1875, %v1880
      %1932 = vset.pattern.permute.xlu0 1
      %1933 = vperm.xlu0 %1932, %v270
      %v1934 = vpop.permute.xlu0 %1933
      %1936 = vset.pattern.permute.xlu0 1
      %1937 = vperm.xlu0 %1936, %v271
      %v1938 = vpop.permute.xlu0 %1937
      %1940 = vset.pattern.permute.xlu0 1
      %1941 = vperm.xlu0 %1940, %v272
      %v1942 = vpop.permute.xlu0 %1941
      %1944 = vset.pattern.permute.xlu0 1
      %1945 = vperm.xlu0 %1944, %v273
      %v1946 = vpop.permute.xlu0 %1945
      %1948 = vset.pattern.permute.xlu0 1
      %1949 = vperm.xlu0 %1948, %v274
      %v1950 = vpop.permute.xlu0 %1949
      %1952 = vset.pattern.permute.xlu0 1
      %1953 = vperm.xlu0 %1952, %v275
      %v1954 = vpop.permute.xlu0 %1953
      %1956 = vset.pattern.permute.xlu0 1
      %1957 = vperm.xlu0 %1956, %v276
      %v1958 = vpop.permute.xlu0 %1957
      %1960 = vset.pattern.permute.xlu0 1
      %1961 = vperm.xlu0 %1960, %v277
      %v1962 = vpop.permute.xlu0 %1961
      %1964 = vset.pattern.permute.xlu0 1
      %1965 = vperm.xlu0 %1964, %v278
      %v1966 = vpop.permute.xlu0 %1965
      %1968 = vset.pattern.permute.xlu0 1
      %1969 = vperm.xlu0 %1968, %v279
      %v1970 = vpop.permute.xlu0 %1969
      %1972 = vset.pattern.permute.xlu0 1
      %1973 = vperm.xlu0 %1972, %v280
      %v1974 = vpop.permute.xlu0 %1973
      %1976 = vset.pattern.permute.xlu0 1
      %1977 = vperm.xlu0 %1976, %v281
      %v1978 = vpop.permute.xlu0 %1977
      %1980 = vset.pattern.permute.xlu0 1
      %1981 = vperm.xlu0 %1980, %v282
      %v1982 = vpop.permute.xlu0 %1981
      %1984 = vset.pattern.permute.xlu0 1
      %1985 = vperm.xlu0 %1984, %v283
      %v1986 = vpop.permute.xlu0 %1985
      %1988 = vset.pattern.permute.xlu0 1
      %1989 = vperm.xlu0 %1988, %v284
      %v1990 = vpop.permute.xlu0 %1989
      %1992 = vset.pattern.permute.xlu0 1
      %1993 = vperm.xlu0 %1992, %v285
      %v1994 = vpop.permute.xlu0 %1993
      %1996 = vset.pattern.permute.xlu0 1
      %1997 = vperm.xlu0 %1996, %v286
      %v1998 = vpop.permute.xlu0 %1997
      %2000 = vset.pattern.permute.xlu0 1
      %2001 = vperm.xlu0 %2000, %v287
      %v2002 = vpop.permute.xlu0 %2001
      %2004 = vset.pattern.permute.xlu0 1
      %2005 = vperm.xlu0 %2004, %v288
      %v2006 = vpop.permute.xlu0 %2005
      %2008 = vset.pattern.permute.xlu0 1
      %2009 = vperm.xlu0 %2008, %v289
      %v2010 = vpop.permute.xlu0 %2009
      %2012 = vset.pattern.permute.xlu0 1
      %2013 = vperm.xlu0 %2012, %v290
      %v2014 = vpop.permute.xlu0 %2013
      %2016 = vset.pattern.permute.xlu0 1
      %2017 = vperm.xlu0 %2016, %v291
      %v2018 = vpop.permute.xlu0 %2017
      %2020 = vset.pattern.permute.xlu0 1
      %2021 = vperm.xlu0 %2020, %v292
      %v2022 = vpop.permute.xlu0 %2021
      %2024 = vset.pattern.permute.xlu0 1
      %2025 = vperm.xlu0 %2024, %v293
      %v2026 = vpop.permute.xlu0 %2025
      %2028 = vset.pattern.permute.xlu0 1
      %2029 = vperm.xlu0 %2028, %v294
      %v2030 = vpop.permute.xlu0 %2029
      %2032 = vset.pattern.permute.xlu0 1
      %2033 = vperm.xlu0 %2032, %v295
      %v2034 = vpop.permute.xlu0 %2033
      %2036 = vset.pattern.permute.xlu0 1
      %2037 = vperm.xlu0 %2036, %v296
      %v2038 = vpop.permute.xlu0 %2037
      %2040 = vset.pattern.permute.xlu0 1
      %2041 = vperm.xlu0 %2040, %v297
      %v2042 = vpop.permute.xlu0 %2041
      %2044 = vset.pattern.permute.xlu0 1
      %2045 = vperm.xlu0 %2044, %v298
      %v2046 = vpop.permute.xlu0 %2045
      %2048 = vset.pattern.permute.xlu0 1
      %2049 = vperm.xlu0 %2048, %v299
      %v2050 = vpop.permute.xlu0 %2049
      %2052 = vset.pattern.permute.xlu0 1
      %2053 = vperm.xlu0 %2052, %v300
      %v2054 = vpop.permute.xlu0 %2053
      %2056 = vset.pattern.permute.xlu0 1
      %2057 = vperm.xlu0 %2056, %v301
      %v2058 = vpop.permute.xlu0 %2057
      %2060 = vset.pattern.permute.xlu0 1
      %2061 = vperm.xlu0 %2060, %v302
      %v2062 = vpop.permute.xlu0 %2061
      %2064 = vset.pattern.permute.xlu0 1
      %2065 = vperm.xlu0 %2064, %v303
      %v2066 = vpop.permute.xlu0 %2065
      %2068 = vset.pattern.permute.xlu0 1
      %2069 = vperm.xlu0 %2068, %v304
      %v2070 = vpop.permute.xlu0 %2069
      %2072 = vset.pattern.permute.xlu0 1
      %2073 = vperm.xlu0 %2072, %v305
      %v2074 = vpop.permute.xlu0 %2073
      %2076 = vset.pattern.permute.xlu0 1
      %2077 = vperm.xlu0 %2076, %v306
      %v2078 = vpop.permute.xlu0 %2077
      %2080 = vset.pattern.permute.xlu0 1
      %2081 = vperm.xlu0 %2080, %v307
      %v2082 = vpop.permute.xlu0 %2081
      %2084 = vset.pattern.permute.xlu0 1
      %2085 = vperm.xlu0 %2084, %v308
      %v2086 = vpop.permute.xlu0 %2085
      %2088 = vset.pattern.permute.xlu0 1
      %2089 = vperm.xlu0 %2088, %v309
      %v2090 = vpop.permute.xlu0 %2089
      %2092 = vset.pattern.permute.xlu0 1
      %2093 = vperm.xlu0 %2092, %v310
      %v2094 = vpop.permute.xlu0 %2093
      %2096 = vset.pattern.permute.xlu0 1
      %2097 = vperm.xlu0 %2096, %v311
      %v2098 = vpop.permute.xlu0 %2097
      %2100 = vset.pattern.permute.xlu0 1
      %2101 = vperm.xlu0 %2100, %v312
      %v2102 = vpop.permute.xlu0 %2101
      %2104 = vset.pattern.permute.xlu0 1
      %2105 = vperm.xlu0 %2104, %v313
      %v2106 = vpop.permute.xlu0 %2105
      %2108 = vset.pattern.permute.xlu0 1
      %2109 = vperm.xlu0 %2108, %v314
      %v2110 = vpop.permute.xlu0 %2109
      %2112 = vset.pattern.permute.xlu0 1
      %2113 = vperm.xlu0 %2112, %v315
      %v2114 = vpop.permute.xlu0 %2113
      %2116 = vset.pattern.permute.xlu0 1
      %2117 = vperm.xlu0 %2116, %v316
      %v2118 = vpop.permute.xlu0 %2117
      %2120 = vset.pattern.permute.xlu0 1
      %2121 = vperm.xlu0 %2120, %v317
      %v2122 = vpop.permute.xlu0 %2121
      %2124 = vset.pattern.permute.xlu0 1
      %2125 = vperm.xlu0 %2124, %v318
      %v2126 = vpop.permute.xlu0 %2125
      %2128 = vset.pattern.permute.xlu0 1
      %2129 = vperm.xlu0 %2128, %v319
      %v2130 = vpop.permute.xlu0 %2129
      %2132 = vset.pattern.permute.xlu0 1
      %2133 = vperm.xlu0 %2132, %v320
      %v2134 = vpop.permute.xlu0 %2133
      %v2136 = vlaneseq
      %v2137 = vshrl.u32 %v2136, 7
      %v2138 = vsub.s32 1, %v2137
      %v2139 = vrot.slane %v376, %v2138
      %v2140 = vmul.f32 %v1934, %v2139
      %v2141 = vmul.f32 %v1938, %v2139
      %v2142 = vmul.f32 %v1942, %v2139
      %v2143 = vmul.f32 %v1946, %v2139
      %v2144 = vmul.f32 %v1950, %v2139
      %v2145 = vmul.f32 %v1954, %v2139
      %v2146 = vmul.f32 %v1958, %v2139
      %v2147 = vmul.f32 %v1962, %v2139
      %v2148 = vmul.f32 %v1966, %v2139
      %v2149 = vmul.f32 %v1970, %v2139
      %v2150 = vmul.f32 %v1974, %v2139
      %v2151 = vmul.f32 %v1978, %v2139
      %v2152 = vmul.f32 %v1982, %v2139
      %v2153 = vmul.f32 %v1986, %v2139
      %v2154 = vmul.f32 %v1990, %v2139
      %v2155 = vmul.f32 %v1994, %v2139
      %v2156 = vmul.f32 %v1998, %v2139
      %v2157 = vmul.f32 %v2002, %v2139
      %v2158 = vmul.f32 %v2006, %v2139
      %v2159 = vmul.f32 %v2010, %v2139
      %v2160 = vmul.f32 %v2014, %v2139
      %v2161 = vmul.f32 %v2018, %v2139
      %v2162 = vmul.f32 %v2022, %v2139
      %v2163 = vmul.f32 %v2026, %v2139
      %v2164 = vmul.f32 %v2030, %v2139
      %v2165 = vmul.f32 %v2034, %v2139
      %v2166 = vmul.f32 %v2038, %v2139
      %v2167 = vmul.f32 %v2042, %v2139
      %v2168 = vmul.f32 %v2046, %v2139
      %v2169 = vmul.f32 %v2050, %v2139
      %v2170 = vmul.f32 %v2054, %v2139
      %v2171 = vmul.f32 %v2058, %v2139
      %v2172 = vmul.f32 %v2062, %v2139
      %v2173 = vmul.f32 %v2066, %v2139
      %v2174 = vmul.f32 %v2070, %v2139
      %v2175 = vmul.f32 %v2074, %v2139
      %v2176 = vmul.f32 %v2078, %v2139
      %v2177 = vmul.f32 %v2082, %v2139
      %v2178 = vmul.f32 %v2086, %v2139
      %v2179 = vmul.f32 %v2090, %v2139
      %v2180 = vmul.f32 %v2094, %v2139
      %v2181 = vmul.f32 %v2098, %v2139
      %v2182 = vmul.f32 %v2102, %v2139
      %v2183 = vmul.f32 %v2106, %v2139
      %v2184 = vmul.f32 %v2110, %v2139
      %v2185 = vmul.f32 %v2114, %v2139
      %v2186 = vmul.f32 %v2118, %v2139
      %v2187 = vmul.f32 %v2122, %v2139
      %v2188 = vmul.f32 %v2126, %v2139
      %v2189 = vmul.f32 %v2130, %v2139
      %v2190 = vmul.f32 %v2134, %v2139
      %v2191 = vadd.f32 %v1881, %v2140
      %v2192 = vadd.f32 %v1882, %v2141
      %v2193 = vadd.f32 %v1883, %v2142
      %v2194 = vadd.f32 %v1884, %v2143
      %v2195 = vadd.f32 %v1885, %v2144
      %v2196 = vadd.f32 %v1886, %v2145
      %v2197 = vadd.f32 %v1887, %v2146
      %v2198 = vadd.f32 %v1888, %v2147
      %v2199 = vadd.f32 %v1889, %v2148
      %v2200 = vadd.f32 %v1890, %v2149
      %v2201 = vadd.f32 %v1891, %v2150
      %v2202 = vadd.f32 %v1892, %v2151
      %v2203 = vadd.f32 %v1893, %v2152
      %v2204 = vadd.f32 %v1894, %v2153
      %v2205 = vadd.f32 %v1895, %v2154
      %v2206 = vadd.f32 %v1896, %v2155
      %v2207 = vadd.f32 %v1897, %v2156
      %v2208 = vadd.f32 %v1898, %v2157
      %v2209 = vadd.f32 %v1899, %v2158
      %v2210 = vadd.f32 %v1900, %v2159
      %v2211 = vadd.f32 %v1901, %v2160
      %v2212 = vadd.f32 %v1902, %v2161
      %v2213 = vadd.f32 %v1903, %v2162
      %v2214 = vadd.f32 %v1904, %v2163
      %v2215 = vadd.f32 %v1905, %v2164
      %v2216 = vadd.f32 %v1906, %v2165
      %v2217 = vadd.f32 %v1907, %v2166
      %v2218 = vadd.f32 %v1908, %v2167
      %v2219 = vadd.f32 %v1909, %v2168
      %v2220 = vadd.f32 %v1910, %v2169
      %v2221 = vadd.f32 %v1911, %v2170
      %v2222 = vadd.f32 %v1912, %v2171
      %v2223 = vadd.f32 %v1913, %v2172
      %v2224 = vadd.f32 %v1914, %v2173
      %v2225 = vadd.f32 %v1915, %v2174
      %v2226 = vadd.f32 %v1916, %v2175
      %v2227 = vadd.f32 %v1917, %v2176
      %v2228 = vadd.f32 %v1918, %v2177
      %v2229 = vadd.f32 %v1919, %v2178
      %v2230 = vadd.f32 %v1920, %v2179
      %v2231 = vadd.f32 %v1921, %v2180
      %v2232 = vadd.f32 %v1922, %v2181
      %v2233 = vadd.f32 %v1923, %v2182
      %v2234 = vadd.f32 %v1924, %v2183
      %v2235 = vadd.f32 %v1925, %v2184
      %v2236 = vadd.f32 %v1926, %v2185
      %v2237 = vadd.f32 %v1927, %v2186
      %v2238 = vadd.f32 %v1928, %v2187
      %v2239 = vadd.f32 %v1929, %v2188
      %v2240 = vadd.f32 %v1930, %v2189
      %v2241 = vadd.f32 %v1931, %v2190
      %2242 = vset.pattern.permute.xlu0 2
      %2243 = vperm.xlu0 %2242, %v270
      %v2244 = vpop.permute.xlu0 %2243
      %2246 = vset.pattern.permute.xlu0 2
      %2247 = vperm.xlu0 %2246, %v271
      %v2248 = vpop.permute.xlu0 %2247
      %2250 = vset.pattern.permute.xlu0 2
      %2251 = vperm.xlu0 %2250, %v272
      %v2252 = vpop.permute.xlu0 %2251
      %2254 = vset.pattern.permute.xlu0 2
      %2255 = vperm.xlu0 %2254, %v273
      %v2256 = vpop.permute.xlu0 %2255
      %2258 = vset.pattern.permute.xlu0 2
      %2259 = vperm.xlu0 %2258, %v274
      %v2260 = vpop.permute.xlu0 %2259
      %2262 = vset.pattern.permute.xlu0 2
      %2263 = vperm.xlu0 %2262, %v275
      %v2264 = vpop.permute.xlu0 %2263
      %2266 = vset.pattern.permute.xlu0 2
      %2267 = vperm.xlu0 %2266, %v276
      %v2268 = vpop.permute.xlu0 %2267
      %2270 = vset.pattern.permute.xlu0 2
      %2271 = vperm.xlu0 %2270, %v277
      %v2272 = vpop.permute.xlu0 %2271
      %2274 = vset.pattern.permute.xlu0 2
      %2275 = vperm.xlu0 %2274, %v278
      %v2276 = vpop.permute.xlu0 %2275
      %2278 = vset.pattern.permute.xlu0 2
      %2279 = vperm.xlu0 %2278, %v279
      %v2280 = vpop.permute.xlu0 %2279
      %2282 = vset.pattern.permute.xlu0 2
      %2283 = vperm.xlu0 %2282, %v280
      %v2284 = vpop.permute.xlu0 %2283
      %2286 = vset.pattern.permute.xlu0 2
      %2287 = vperm.xlu0 %2286, %v281
      %v2288 = vpop.permute.xlu0 %2287
      %2290 = vset.pattern.permute.xlu0 2
      %2291 = vperm.xlu0 %2290, %v282
      %v2292 = vpop.permute.xlu0 %2291
      %2294 = vset.pattern.permute.xlu0 2
      %2295 = vperm.xlu0 %2294, %v283
      %v2296 = vpop.permute.xlu0 %2295
      %2298 = vset.pattern.permute.xlu0 2
      %2299 = vperm.xlu0 %2298, %v284
      %v2300 = vpop.permute.xlu0 %2299
      %2302 = vset.pattern.permute.xlu0 2
      %2303 = vperm.xlu0 %2302, %v285
      %v2304 = vpop.permute.xlu0 %2303
      %2306 = vset.pattern.permute.xlu0 2
      %2307 = vperm.xlu0 %2306, %v286
      %v2308 = vpop.permute.xlu0 %2307
      %2310 = vset.pattern.permute.xlu0 2
      %2311 = vperm.xlu0 %2310, %v287
      %v2312 = vpop.permute.xlu0 %2311
      %2314 = vset.pattern.permute.xlu0 2
      %2315 = vperm.xlu0 %2314, %v288
      %v2316 = vpop.permute.xlu0 %2315
      %2318 = vset.pattern.permute.xlu0 2
      %2319 = vperm.xlu0 %2318, %v289
      %v2320 = vpop.permute.xlu0 %2319
      %2322 = vset.pattern.permute.xlu0 2
      %2323 = vperm.xlu0 %2322, %v290
      %v2324 = vpop.permute.xlu0 %2323
      %2326 = vset.pattern.permute.xlu0 2
      %2327 = vperm.xlu0 %2326, %v291
      %v2328 = vpop.permute.xlu0 %2327
      %2330 = vset.pattern.permute.xlu0 2
      %2331 = vperm.xlu0 %2330, %v292
      %v2332 = vpop.permute.xlu0 %2331
      %2334 = vset.pattern.permute.xlu0 2
      %2335 = vperm.xlu0 %2334, %v293
      %v2336 = vpop.permute.xlu0 %2335
      %2338 = vset.pattern.permute.xlu0 2
      %2339 = vperm.xlu0 %2338, %v294
      %v2340 = vpop.permute.xlu0 %2339
      %2342 = vset.pattern.permute.xlu0 2
      %2343 = vperm.xlu0 %2342, %v295
      %v2344 = vpop.permute.xlu0 %2343
      %2346 = vset.pattern.permute.xlu0 2
      %2347 = vperm.xlu0 %2346, %v296
      %v2348 = vpop.permute.xlu0 %2347
      %2350 = vset.pattern.permute.xlu0 2
      %2351 = vperm.xlu0 %2350, %v297
      %v2352 = vpop.permute.xlu0 %2351
      %2354 = vset.pattern.permute.xlu0 2
      %2355 = vperm.xlu0 %2354, %v298
      %v2356 = vpop.permute.xlu0 %2355
      %2358 = vset.pattern.permute.xlu0 2
      %2359 = vperm.xlu0 %2358, %v299
      %v2360 = vpop.permute.xlu0 %2359
      %2362 = vset.pattern.permute.xlu0 2
      %2363 = vperm.xlu0 %2362, %v300
      %v2364 = vpop.permute.xlu0 %2363
      %2366 = vset.pattern.permute.xlu0 2
      %2367 = vperm.xlu0 %2366, %v301
      %v2368 = vpop.permute.xlu0 %2367
      %2370 = vset.pattern.permute.xlu0 2
      %2371 = vperm.xlu0 %2370, %v302
      %v2372 = vpop.permute.xlu0 %2371
      %2374 = vset.pattern.permute.xlu0 2
      %2375 = vperm.xlu0 %2374, %v303
      %v2376 = vpop.permute.xlu0 %2375
      %2378 = vset.pattern.permute.xlu0 2
      %2379 = vperm.xlu0 %2378, %v304
      %v2380 = vpop.permute.xlu0 %2379
      %2382 = vset.pattern.permute.xlu0 2
      %2383 = vperm.xlu0 %2382, %v305
      %v2384 = vpop.permute.xlu0 %2383
      %2386 = vset.pattern.permute.xlu0 2
      %2387 = vperm.xlu0 %2386, %v306
      %v2388 = vpop.permute.xlu0 %2387
      %2390 = vset.pattern.permute.xlu0 2
      %2391 = vperm.xlu0 %2390, %v307
      %v2392 = vpop.permute.xlu0 %2391
      %2394 = vset.pattern.permute.xlu0 2
      %2395 = vperm.xlu0 %2394, %v308
      %v2396 = vpop.permute.xlu0 %2395
      %2398 = vset.pattern.permute.xlu0 2
      %2399 = vperm.xlu0 %2398, %v309
      %v2400 = vpop.permute.xlu0 %2399
      %2402 = vset.pattern.permute.xlu0 2
      %2403 = vperm.xlu0 %2402, %v310
      %v2404 = vpop.permute.xlu0 %2403
      %2406 = vset.pattern.permute.xlu0 2
      %2407 = vperm.xlu0 %2406, %v311
      %v2408 = vpop.permute.xlu0 %2407
      %2410 = vset.pattern.permute.xlu0 2
      %2411 = vperm.xlu0 %2410, %v312
      %v2412 = vpop.permute.xlu0 %2411
      %2414 = vset.pattern.permute.xlu0 2
      %2415 = vperm.xlu0 %2414, %v313
      %v2416 = vpop.permute.xlu0 %2415
      %2418 = vset.pattern.permute.xlu0 2
      %2419 = vperm.xlu0 %2418, %v314
      %v2420 = vpop.permute.xlu0 %2419
      %2422 = vset.pattern.permute.xlu0 2
      %2423 = vperm.xlu0 %2422, %v315
      %v2424 = vpop.permute.xlu0 %2423
      %2426 = vset.pattern.permute.xlu0 2
      %2427 = vperm.xlu0 %2426, %v316
      %v2428 = vpop.permute.xlu0 %2427
      %2430 = vset.pattern.permute.xlu0 2
      %2431 = vperm.xlu0 %2430, %v317
      %v2432 = vpop.permute.xlu0 %2431
      %2434 = vset.pattern.permute.xlu0 2
      %2435 = vperm.xlu0 %2434, %v318
      %v2436 = vpop.permute.xlu0 %2435
      %2438 = vset.pattern.permute.xlu0 2
      %2439 = vperm.xlu0 %2438, %v319
      %v2440 = vpop.permute.xlu0 %2439
      %2442 = vset.pattern.permute.xlu0 2
      %2443 = vperm.xlu0 %2442, %v320
      %v2444 = vpop.permute.xlu0 %2443
      %v2446 = vlaneseq
      %v2447 = vshrl.u32 %v2446, 7
      %v2448 = vsub.s32 2, %v2447
      %v2449 = vrot.slane %v376, %v2448
      %v2450 = vmul.f32 %v2244, %v2449
      %v2451 = vmul.f32 %v2248, %v2449
      %v2452 = vmul.f32 %v2252, %v2449
      %v2453 = vmul.f32 %v2256, %v2449
      %v2454 = vmul.f32 %v2260, %v2449
      %v2455 = vmul.f32 %v2264, %v2449
      %v2456 = vmul.f32 %v2268, %v2449
      %v2457 = vmul.f32 %v2272, %v2449
      %v2458 = vmul.f32 %v2276, %v2449
      %v2459 = vmul.f32 %v2280, %v2449
      %v2460 = vmul.f32 %v2284, %v2449
      %v2461 = vmul.f32 %v2288, %v2449
      %v2462 = vmul.f32 %v2292, %v2449
      %v2463 = vmul.f32 %v2296, %v2449
      %v2464 = vmul.f32 %v2300, %v2449
      %v2465 = vmul.f32 %v2304, %v2449
      %v2466 = vmul.f32 %v2308, %v2449
      %v2467 = vmul.f32 %v2312, %v2449
      %v2468 = vmul.f32 %v2316, %v2449
      %v2469 = vmul.f32 %v2320, %v2449
      %v2470 = vmul.f32 %v2324, %v2449
      %v2471 = vmul.f32 %v2328, %v2449
      %v2472 = vmul.f32 %v2332, %v2449
      %v2473 = vmul.f32 %v2336, %v2449
      %v2474 = vmul.f32 %v2340, %v2449
      %v2475 = vmul.f32 %v2344, %v2449
      %v2476 = vmul.f32 %v2348, %v2449
      %v2477 = vmul.f32 %v2352, %v2449
      %v2478 = vmul.f32 %v2356, %v2449
      %v2479 = vmul.f32 %v2360, %v2449
      %v2480 = vmul.f32 %v2364, %v2449
      %v2481 = vmul.f32 %v2368, %v2449
      %v2482 = vmul.f32 %v2372, %v2449
      %v2483 = vmul.f32 %v2376, %v2449
      %v2484 = vmul.f32 %v2380, %v2449
      %v2485 = vmul.f32 %v2384, %v2449
      %v2486 = vmul.f32 %v2388, %v2449
      %v2487 = vmul.f32 %v2392, %v2449
      %v2488 = vmul.f32 %v2396, %v2449
      %v2489 = vmul.f32 %v2400, %v2449
      %v2490 = vmul.f32 %v2404, %v2449
      %v2491 = vmul.f32 %v2408, %v2449
      %v2492 = vmul.f32 %v2412, %v2449
      %v2493 = vmul.f32 %v2416, %v2449
      %v2494 = vmul.f32 %v2420, %v2449
      %v2495 = vmul.f32 %v2424, %v2449
      %v2496 = vmul.f32 %v2428, %v2449
      %v2497 = vmul.f32 %v2432, %v2449
      %v2498 = vmul.f32 %v2436, %v2449
      %v2499 = vmul.f32 %v2440, %v2449
      %v2500 = vmul.f32 %v2444, %v2449
      %v2501 = vadd.f32 %v2191, %v2450
      %v2502 = vadd.f32 %v2192, %v2451
      %v2503 = vadd.f32 %v2193, %v2452
      %v2504 = vadd.f32 %v2194, %v2453
      %v2505 = vadd.f32 %v2195, %v2454
      %v2506 = vadd.f32 %v2196, %v2455
      %v2507 = vadd.f32 %v2197, %v2456
      %v2508 = vadd.f32 %v2198, %v2457
      %v2509 = vadd.f32 %v2199, %v2458
      %v2510 = vadd.f32 %v2200, %v2459
      %v2511 = vadd.f32 %v2201, %v2460
      %v2512 = vadd.f32 %v2202, %v2461
      %v2513 = vadd.f32 %v2203, %v2462
      %v2514 = vadd.f32 %v2204, %v2463
      %v2515 = vadd.f32 %v2205, %v2464
      %v2516 = vadd.f32 %v2206, %v2465
      %v2517 = vadd.f32 %v2207, %v2466
      %v2518 = vadd.f32 %v2208, %v2467
      %v2519 = vadd.f32 %v2209, %v2468
      %v2520 = vadd.f32 %v2210, %v2469
      %v2521 = vadd.f32 %v2211, %v2470
      %v2522 = vadd.f32 %v2212, %v2471
      %v2523 = vadd.f32 %v2213, %v2472
      %v2524 = vadd.f32 %v2214, %v2473
      %v2525 = vadd.f32 %v2215, %v2474
      %v2526 = vadd.f32 %v2216, %v2475
      %v2527 = vadd.f32 %v2217, %v2476
      %v2528 = vadd.f32 %v2218, %v2477
      %v2529 = vadd.f32 %v2219, %v2478
      %v2530 = vadd.f32 %v2220, %v2479
      %v2531 = vadd.f32 %v2221, %v2480
      %v2532 = vadd.f32 %v2222, %v2481
      %v2533 = vadd.f32 %v2223, %v2482
      %v2534 = vadd.f32 %v2224, %v2483
      %v2535 = vadd.f32 %v2225, %v2484
      %v2536 = vadd.f32 %v2226, %v2485
      %v2537 = vadd.f32 %v2227, %v2486
      %v2538 = vadd.f32 %v2228, %v2487
      %v2539 = vadd.f32 %v2229, %v2488
      %v2540 = vadd.f32 %v2230, %v2489
      %v2541 = vadd.f32 %v2231, %v2490
      %v2542 = vadd.f32 %v2232, %v2491
      %v2543 = vadd.f32 %v2233, %v2492
      %v2544 = vadd.f32 %v2234, %v2493
      %v2545 = vadd.f32 %v2235, %v2494
      %v2546 = vadd.f32 %v2236, %v2495
      %v2547 = vadd.f32 %v2237, %v2496
      %v2548 = vadd.f32 %v2238, %v2497
      %v2549 = vadd.f32 %v2239, %v2498
      %v2550 = vadd.f32 %v2240, %v2499
      %v2551 = vadd.f32 %v2241, %v2500
      %2552 = vset.pattern.permute.xlu0 3
      %2553 = vperm.xlu0 %2552, %v270
      %v2554 = vpop.permute.xlu0 %2553
      %2556 = vset.pattern.permute.xlu0 3
      %2557 = vperm.xlu0 %2556, %v271
      %v2558 = vpop.permute.xlu0 %2557
      %2560 = vset.pattern.permute.xlu0 3
      %2561 = vperm.xlu0 %2560, %v272
      %v2562 = vpop.permute.xlu0 %2561
      %2564 = vset.pattern.permute.xlu0 3
      %2565 = vperm.xlu0 %2564, %v273
      %v2566 = vpop.permute.xlu0 %2565
      %2568 = vset.pattern.permute.xlu0 3
      %2569 = vperm.xlu0 %2568, %v274
      %v2570 = vpop.permute.xlu0 %2569
      %2572 = vset.pattern.permute.xlu0 3
      %2573 = vperm.xlu0 %2572, %v275
      %v2574 = vpop.permute.xlu0 %2573
      %2576 = vset.pattern.permute.xlu0 3
      %2577 = vperm.xlu0 %2576, %v276
      %v2578 = vpop.permute.xlu0 %2577
      %2580 = vset.pattern.permute.xlu0 3
      %2581 = vperm.xlu0 %2580, %v277
      %v2582 = vpop.permute.xlu0 %2581
      %2584 = vset.pattern.permute.xlu0 3
      %2585 = vperm.xlu0 %2584, %v278
      %v2586 = vpop.permute.xlu0 %2585
      %2588 = vset.pattern.permute.xlu0 3
      %2589 = vperm.xlu0 %2588, %v279
      %v2590 = vpop.permute.xlu0 %2589
      %2592 = vset.pattern.permute.xlu0 3
      %2593 = vperm.xlu0 %2592, %v280
      %v2594 = vpop.permute.xlu0 %2593
      %2596 = vset.pattern.permute.xlu0 3
      %2597 = vperm.xlu0 %2596, %v281
      %v2598 = vpop.permute.xlu0 %2597
      %2600 = vset.pattern.permute.xlu0 3
      %2601 = vperm.xlu0 %2600, %v282
      %v2602 = vpop.permute.xlu0 %2601
      %2604 = vset.pattern.permute.xlu0 3
      %2605 = vperm.xlu0 %2604, %v283
      %v2606 = vpop.permute.xlu0 %2605
      %2608 = vset.pattern.permute.xlu0 3
      %2609 = vperm.xlu0 %2608, %v284
      %v2610 = vpop.permute.xlu0 %2609
      %2612 = vset.pattern.permute.xlu0 3
      %2613 = vperm.xlu0 %2612, %v285
      %v2614 = vpop.permute.xlu0 %2613
      %2616 = vset.pattern.permute.xlu0 3
      %2617 = vperm.xlu0 %2616, %v286
      %v2618 = vpop.permute.xlu0 %2617
      %2620 = vset.pattern.permute.xlu0 3
      %2621 = vperm.xlu0 %2620, %v287
      %v2622 = vpop.permute.xlu0 %2621
      %2624 = vset.pattern.permute.xlu0 3
      %2625 = vperm.xlu0 %2624, %v288
      %v2626 = vpop.permute.xlu0 %2625
      %2628 = vset.pattern.permute.xlu0 3
      %2629 = vperm.xlu0 %2628, %v289
      %v2630 = vpop.permute.xlu0 %2629
      %2632 = vset.pattern.permute.xlu0 3
      %2633 = vperm.xlu0 %2632, %v290
      %v2634 = vpop.permute.xlu0 %2633
      %2636 = vset.pattern.permute.xlu0 3
      %2637 = vperm.xlu0 %2636, %v291
      %v2638 = vpop.permute.xlu0 %2637
      %2640 = vset.pattern.permute.xlu0 3
      %2641 = vperm.xlu0 %2640, %v292
      %v2642 = vpop.permute.xlu0 %2641
      %2644 = vset.pattern.permute.xlu0 3
      %2645 = vperm.xlu0 %2644, %v293
      %v2646 = vpop.permute.xlu0 %2645
      %2648 = vset.pattern.permute.xlu0 3
      %2649 = vperm.xlu0 %2648, %v294
      %v2650 = vpop.permute.xlu0 %2649
      %2652 = vset.pattern.permute.xlu0 3
      %2653 = vperm.xlu0 %2652, %v295
      %v2654 = vpop.permute.xlu0 %2653
      %2656 = vset.pattern.permute.xlu0 3
      %2657 = vperm.xlu0 %2656, %v296
      %v2658 = vpop.permute.xlu0 %2657
      %2660 = vset.pattern.permute.xlu0 3
      %2661 = vperm.xlu0 %2660, %v297
      %v2662 = vpop.permute.xlu0 %2661
      %2664 = vset.pattern.permute.xlu0 3
      %2665 = vperm.xlu0 %2664, %v298
      %v2666 = vpop.permute.xlu0 %2665
      %2668 = vset.pattern.permute.xlu0 3
      %2669 = vperm.xlu0 %2668, %v299
      %v2670 = vpop.permute.xlu0 %2669
      %2672 = vset.pattern.permute.xlu0 3
      %2673 = vperm.xlu0 %2672, %v300
      %v2674 = vpop.permute.xlu0 %2673
      %2676 = vset.pattern.permute.xlu0 3
      %2677 = vperm.xlu0 %2676, %v301
      %v2678 = vpop.permute.xlu0 %2677
      %2680 = vset.pattern.permute.xlu0 3
      %2681 = vperm.xlu0 %2680, %v302
      %v2682 = vpop.permute.xlu0 %2681
      %2684 = vset.pattern.permute.xlu0 3
      %2685 = vperm.xlu0 %2684, %v303
      %v2686 = vpop.permute.xlu0 %2685
      %2688 = vset.pattern.permute.xlu0 3
      %2689 = vperm.xlu0 %2688, %v304
      %v2690 = vpop.permute.xlu0 %2689
      %2692 = vset.pattern.permute.xlu0 3
      %2693 = vperm.xlu0 %2692, %v305
      %v2694 = vpop.permute.xlu0 %2693
      %2696 = vset.pattern.permute.xlu0 3
      %2697 = vperm.xlu0 %2696, %v306
      %v2698 = vpop.permute.xlu0 %2697
      %2700 = vset.pattern.permute.xlu0 3
      %2701 = vperm.xlu0 %2700, %v307
      %v2702 = vpop.permute.xlu0 %2701
      %2704 = vset.pattern.permute.xlu0 3
      %2705 = vperm.xlu0 %2704, %v308
      %v2706 = vpop.permute.xlu0 %2705
      %2708 = vset.pattern.permute.xlu0 3
      %2709 = vperm.xlu0 %2708, %v309
      %v2710 = vpop.permute.xlu0 %2709
      %2712 = vset.pattern.permute.xlu0 3
      %2713 = vperm.xlu0 %2712, %v310
      %v2714 = vpop.permute.xlu0 %2713
      %2716 = vset.pattern.permute.xlu0 3
      %2717 = vperm.xlu0 %2716, %v311
      %v2718 = vpop.permute.xlu0 %2717
      %2720 = vset.pattern.permute.xlu0 3
      %2721 = vperm.xlu0 %2720, %v312
      %v2722 = vpop.permute.xlu0 %2721
      %2724 = vset.pattern.permute.xlu0 3
      %2725 = vperm.xlu0 %2724, %v313
      %v2726 = vpop.permute.xlu0 %2725
      %2728 = vset.pattern.permute.xlu0 3
      %2729 = vperm.xlu0 %2728, %v314
      %v2730 = vpop.permute.xlu0 %2729
      %2732 = vset.pattern.permute.xlu0 3
      %2733 = vperm.xlu0 %2732, %v315
      %v2734 = vpop.permute.xlu0 %2733
      %2736 = vset.pattern.permute.xlu0 3
      %2737 = vperm.xlu0 %2736, %v316
      %v2738 = vpop.permute.xlu0 %2737
      %2740 = vset.pattern.permute.xlu0 3
      %2741 = vperm.xlu0 %2740, %v317
      %v2742 = vpop.permute.xlu0 %2741
      %2744 = vset.pattern.permute.xlu0 3
      %2745 = vperm.xlu0 %2744, %v318
      %v2746 = vpop.permute.xlu0 %2745
      %2748 = vset.pattern.permute.xlu0 3
      %2749 = vperm.xlu0 %2748, %v319
      %v2750 = vpop.permute.xlu0 %2749
      %2752 = vset.pattern.permute.xlu0 3
      %2753 = vperm.xlu0 %2752, %v320
      %v2754 = vpop.permute.xlu0 %2753
      %v2756 = vlaneseq
      %v2757 = vshrl.u32 %v2756, 7
      %v2758 = vsub.s32 3, %v2757
      %v2759 = vrot.slane %v376, %v2758
      %v2760 = vmul.f32 %v2554, %v2759
      %v2761 = vmul.f32 %v2558, %v2759
      %v2762 = vmul.f32 %v2562, %v2759
      %v2763 = vmul.f32 %v2566, %v2759
      %v2764 = vmul.f32 %v2570, %v2759
      %v2765 = vmul.f32 %v2574, %v2759
      %v2766 = vmul.f32 %v2578, %v2759
      %v2767 = vmul.f32 %v2582, %v2759
      %v2768 = vmul.f32 %v2586, %v2759
      %v2769 = vmul.f32 %v2590, %v2759
      %v2770 = vmul.f32 %v2594, %v2759
      %v2771 = vmul.f32 %v2598, %v2759
      %v2772 = vmul.f32 %v2602, %v2759
      %v2773 = vmul.f32 %v2606, %v2759
      %v2774 = vmul.f32 %v2610, %v2759
      %v2775 = vmul.f32 %v2614, %v2759
      %v2776 = vmul.f32 %v2618, %v2759
      %v2777 = vmul.f32 %v2622, %v2759
      %v2778 = vmul.f32 %v2626, %v2759
      %v2779 = vmul.f32 %v2630, %v2759
      %v2780 = vmul.f32 %v2634, %v2759
      %v2781 = vmul.f32 %v2638, %v2759
      %v2782 = vmul.f32 %v2642, %v2759
      %v2783 = vmul.f32 %v2646, %v2759
      %v2784 = vmul.f32 %v2650, %v2759
      %v2785 = vmul.f32 %v2654, %v2759
      %v2786 = vmul.f32 %v2658, %v2759
      %v2787 = vmul.f32 %v2662, %v2759
      %v2788 = vmul.f32 %v2666, %v2759
      %v2789 = vmul.f32 %v2670, %v2759
      %v2790 = vmul.f32 %v2674, %v2759
      %v2791 = vmul.f32 %v2678, %v2759
      %v2792 = vmul.f32 %v2682, %v2759
      %v2793 = vmul.f32 %v2686, %v2759
      %v2794 = vmul.f32 %v2690, %v2759
      %v2795 = vmul.f32 %v2694, %v2759
      %v2796 = vmul.f32 %v2698, %v2759
      %v2797 = vmul.f32 %v2702, %v2759
      %v2798 = vmul.f32 %v2706, %v2759
      %v2799 = vmul.f32 %v2710, %v2759
      %v2800 = vmul.f32 %v2714, %v2759
      %v2801 = vmul.f32 %v2718, %v2759
      %v2802 = vmul.f32 %v2722, %v2759
      %v2803 = vmul.f32 %v2726, %v2759
      %v2804 = vmul.f32 %v2730, %v2759
      %v2805 = vmul.f32 %v2734, %v2759
      %v2806 = vmul.f32 %v2738, %v2759
      %v2807 = vmul.f32 %v2742, %v2759
      %v2808 = vmul.f32 %v2746, %v2759
      %v2809 = vmul.f32 %v2750, %v2759
      %v2810 = vmul.f32 %v2754, %v2759
      %v2811 = vadd.f32 %v2501, %v2760
      %v2812 = vadd.f32 %v2502, %v2761
      %v2813 = vadd.f32 %v2503, %v2762
      %v2814 = vadd.f32 %v2504, %v2763
      %v2815 = vadd.f32 %v2505, %v2764
      %v2816 = vadd.f32 %v2506, %v2765
      %v2817 = vadd.f32 %v2507, %v2766
      %v2818 = vadd.f32 %v2508, %v2767
      %v2819 = vadd.f32 %v2509, %v2768
      %v2820 = vadd.f32 %v2510, %v2769
      %v2821 = vadd.f32 %v2511, %v2770
      %v2822 = vadd.f32 %v2512, %v2771
      %v2823 = vadd.f32 %v2513, %v2772
      %v2824 = vadd.f32 %v2514, %v2773
      %v2825 = vadd.f32 %v2515, %v2774
      %v2826 = vadd.f32 %v2516, %v2775
      %v2827 = vadd.f32 %v2517, %v2776
      %v2828 = vadd.f32 %v2518, %v2777
      %v2829 = vadd.f32 %v2519, %v2778
      %v2830 = vadd.f32 %v2520, %v2779
      %v2831 = vadd.f32 %v2521, %v2780
      %v2832 = vadd.f32 %v2522, %v2781
      %v2833 = vadd.f32 %v2523, %v2782
      %v2834 = vadd.f32 %v2524, %v2783
      %v2835 = vadd.f32 %v2525, %v2784
      %v2836 = vadd.f32 %v2526, %v2785
      %v2837 = vadd.f32 %v2527, %v2786
      %v2838 = vadd.f32 %v2528, %v2787
      %v2839 = vadd.f32 %v2529, %v2788
      %v2840 = vadd.f32 %v2530, %v2789
      %v2841 = vadd.f32 %v2531, %v2790
      %v2842 = vadd.f32 %v2532, %v2791
      %v2843 = vadd.f32 %v2533, %v2792
      %v2844 = vadd.f32 %v2534, %v2793
      %v2845 = vadd.f32 %v2535, %v2794
      %v2846 = vadd.f32 %v2536, %v2795
      %v2847 = vadd.f32 %v2537, %v2796
      %v2848 = vadd.f32 %v2538, %v2797
      %v2849 = vadd.f32 %v2539, %v2798
      %v2850 = vadd.f32 %v2540, %v2799
      %v2851 = vadd.f32 %v2541, %v2800
      %v2852 = vadd.f32 %v2542, %v2801
      %v2853 = vadd.f32 %v2543, %v2802
      %v2854 = vadd.f32 %v2544, %v2803
      %v2855 = vadd.f32 %v2545, %v2804
      %v2856 = vadd.f32 %v2546, %v2805
      %v2857 = vadd.f32 %v2547, %v2806
      %v2858 = vadd.f32 %v2548, %v2807
      %v2859 = vadd.f32 %v2549, %v2808
      %v2860 = vadd.f32 %v2550, %v2809
      %v2861 = vadd.f32 %v2551, %v2810
      %2862 = vset.pattern.permute.xlu0 4
      %2863 = vperm.xlu0 %2862, %v270
      %v2864 = vpop.permute.xlu0 %2863
      %2866 = vset.pattern.permute.xlu0 4
      %2867 = vperm.xlu0 %2866, %v271
      %v2868 = vpop.permute.xlu0 %2867
      %2870 = vset.pattern.permute.xlu0 4
      %2871 = vperm.xlu0 %2870, %v272
      %v2872 = vpop.permute.xlu0 %2871
      %2874 = vset.pattern.permute.xlu0 4
      %2875 = vperm.xlu0 %2874, %v273
      %v2876 = vpop.permute.xlu0 %2875
      %2878 = vset.pattern.permute.xlu0 4
      %2879 = vperm.xlu0 %2878, %v274
      %v2880 = vpop.permute.xlu0 %2879
      %2882 = vset.pattern.permute.xlu0 4
      %2883 = vperm.xlu0 %2882, %v275
      %v2884 = vpop.permute.xlu0 %2883
      %2886 = vset.pattern.permute.xlu0 4
      %2887 = vperm.xlu0 %2886, %v276
      %v2888 = vpop.permute.xlu0 %2887
      %2890 = vset.pattern.permute.xlu0 4
      %2891 = vperm.xlu0 %2890, %v277
      %v2892 = vpop.permute.xlu0 %2891
      %2894 = vset.pattern.permute.xlu0 4
      %2895 = vperm.xlu0 %2894, %v278
      %v2896 = vpop.permute.xlu0 %2895
      %2898 = vset.pattern.permute.xlu0 4
      %2899 = vperm.xlu0 %2898, %v279
      %v2900 = vpop.permute.xlu0 %2899
      %2902 = vset.pattern.permute.xlu0 4
      %2903 = vperm.xlu0 %2902, %v280
      %v2904 = vpop.permute.xlu0 %2903
      %2906 = vset.pattern.permute.xlu0 4
      %2907 = vperm.xlu0 %2906, %v281
      %v2908 = vpop.permute.xlu0 %2907
      %2910 = vset.pattern.permute.xlu0 4
      %2911 = vperm.xlu0 %2910, %v282
      %v2912 = vpop.permute.xlu0 %2911
      %2914 = vset.pattern.permute.xlu0 4
      %2915 = vperm.xlu0 %2914, %v283
      %v2916 = vpop.permute.xlu0 %2915
      %2918 = vset.pattern.permute.xlu0 4
      %2919 = vperm.xlu0 %2918, %v284
      %v2920 = vpop.permute.xlu0 %2919
      %2922 = vset.pattern.permute.xlu0 4
      %2923 = vperm.xlu0 %2922, %v285
      %v2924 = vpop.permute.xlu0 %2923
      %2926 = vset.pattern.permute.xlu0 4
      %2927 = vperm.xlu0 %2926, %v286
      %v2928 = vpop.permute.xlu0 %2927
      %2930 = vset.pattern.permute.xlu0 4
      %2931 = vperm.xlu0 %2930, %v287
      %v2932 = vpop.permute.xlu0 %2931
      %2934 = vset.pattern.permute.xlu0 4
      %2935 = vperm.xlu0 %2934, %v288
      %v2936 = vpop.permute.xlu0 %2935
      %2938 = vset.pattern.permute.xlu0 4
      %2939 = vperm.xlu0 %2938, %v289
      %v2940 = vpop.permute.xlu0 %2939
      %2942 = vset.pattern.permute.xlu0 4
      %2943 = vperm.xlu0 %2942, %v290
      %v2944 = vpop.permute.xlu0 %2943
      %2946 = vset.pattern.permute.xlu0 4
      %2947 = vperm.xlu0 %2946, %v291
      %v2948 = vpop.permute.xlu0 %2947
      %2950 = vset.pattern.permute.xlu0 4
      %2951 = vperm.xlu0 %2950, %v292
      %v2952 = vpop.permute.xlu0 %2951
      %2954 = vset.pattern.permute.xlu0 4
      %2955 = vperm.xlu0 %2954, %v293
      %v2956 = vpop.permute.xlu0 %2955
      %2958 = vset.pattern.permute.xlu0 4
      %2959 = vperm.xlu0 %2958, %v294
      %v2960 = vpop.permute.xlu0 %2959
      %2962 = vset.pattern.permute.xlu0 4
      %2963 = vperm.xlu0 %2962, %v295
      %v2964 = vpop.permute.xlu0 %2963
      %2966 = vset.pattern.permute.xlu0 4
      %2967 = vperm.xlu0 %2966, %v296
      %v2968 = vpop.permute.xlu0 %2967
      %2970 = vset.pattern.permute.xlu0 4
      %2971 = vperm.xlu0 %2970, %v297
      %v2972 = vpop.permute.xlu0 %2971
      %2974 = vset.pattern.permute.xlu0 4
      %2975 = vperm.xlu0 %2974, %v298
      %v2976 = vpop.permute.xlu0 %2975
      %2978 = vset.pattern.permute.xlu0 4
      %2979 = vperm.xlu0 %2978, %v299
      %v2980 = vpop.permute.xlu0 %2979
      %2982 = vset.pattern.permute.xlu0 4
      %2983 = vperm.xlu0 %2982, %v300
      %v2984 = vpop.permute.xlu0 %2983
      %2986 = vset.pattern.permute.xlu0 4
      %2987 = vperm.xlu0 %2986, %v301
      %v2988 = vpop.permute.xlu0 %2987
      %2990 = vset.pattern.permute.xlu0 4
      %2991 = vperm.xlu0 %2990, %v302
      %v2992 = vpop.permute.xlu0 %2991
      %2994 = vset.pattern.permute.xlu0 4
      %2995 = vperm.xlu0 %2994, %v303
      %v2996 = vpop.permute.xlu0 %2995
      %2998 = vset.pattern.permute.xlu0 4
      %2999 = vperm.xlu0 %2998, %v304
      %v3000 = vpop.permute.xlu0 %2999
      %3002 = vset.pattern.permute.xlu0 4
      %3003 = vperm.xlu0 %3002, %v305
      %v3004 = vpop.permute.xlu0 %3003
      %3006 = vset.pattern.permute.xlu0 4
      %3007 = vperm.xlu0 %3006, %v306
      %v3008 = vpop.permute.xlu0 %3007
      %3010 = vset.pattern.permute.xlu0 4
      %3011 = vperm.xlu0 %3010, %v307
      %v3012 = vpop.permute.xlu0 %3011
      %3014 = vset.pattern.permute.xlu0 4
      %3015 = vperm.xlu0 %3014, %v308
      %v3016 = vpop.permute.xlu0 %3015
      %3018 = vset.pattern.permute.xlu0 4
      %3019 = vperm.xlu0 %3018, %v309
      %v3020 = vpop.permute.xlu0 %3019
      %3022 = vset.pattern.permute.xlu0 4
      %3023 = vperm.xlu0 %3022, %v310
      %v3024 = vpop.permute.xlu0 %3023
      %3026 = vset.pattern.permute.xlu0 4
      %3027 = vperm.xlu0 %3026, %v311
      %v3028 = vpop.permute.xlu0 %3027
      %3030 = vset.pattern.permute.xlu0 4
      %3031 = vperm.xlu0 %3030, %v312
      %v3032 = vpop.permute.xlu0 %3031
      %3034 = vset.pattern.permute.xlu0 4
      %3035 = vperm.xlu0 %3034, %v313
      %v3036 = vpop.permute.xlu0 %3035
      %3038 = vset.pattern.permute.xlu0 4
      %3039 = vperm.xlu0 %3038, %v314
      %v3040 = vpop.permute.xlu0 %3039
      %3042 = vset.pattern.permute.xlu0 4
      %3043 = vperm.xlu0 %3042, %v315
      %v3044 = vpop.permute.xlu0 %3043
      %3046 = vset.pattern.permute.xlu0 4
      %3047 = vperm.xlu0 %3046, %v316
      %v3048 = vpop.permute.xlu0 %3047
      %3050 = vset.pattern.permute.xlu0 4
      %3051 = vperm.xlu0 %3050, %v317
      %v3052 = vpop.permute.xlu0 %3051
      %3054 = vset.pattern.permute.xlu0 4
      %3055 = vperm.xlu0 %3054, %v318
      %v3056 = vpop.permute.xlu0 %3055
      %3058 = vset.pattern.permute.xlu0 4
      %3059 = vperm.xlu0 %3058, %v319
      %v3060 = vpop.permute.xlu0 %3059
      %3062 = vset.pattern.permute.xlu0 4
      %3063 = vperm.xlu0 %3062, %v320
      %v3064 = vpop.permute.xlu0 %3063
      %v3066 = vlaneseq
      %v3067 = vshrl.u32 %v3066, 7
      %v3068 = vsub.s32 4, %v3067
      %v3069 = vrot.slane %v376, %v3068
      %v3070 = vmul.f32 %v2864, %v3069
      %v3071 = vmul.f32 %v2868, %v3069
      %v3072 = vmul.f32 %v2872, %v3069
      %v3073 = vmul.f32 %v2876, %v3069
      %v3074 = vmul.f32 %v2880, %v3069
      %v3075 = vmul.f32 %v2884, %v3069
      %v3076 = vmul.f32 %v2888, %v3069
      %v3077 = vmul.f32 %v2892, %v3069
      %v3078 = vmul.f32 %v2896, %v3069
      %v3079 = vmul.f32 %v2900, %v3069
      %v3080 = vmul.f32 %v2904, %v3069
      %v3081 = vmul.f32 %v2908, %v3069
      %v3082 = vmul.f32 %v2912, %v3069
      %v3083 = vmul.f32 %v2916, %v3069
      %v3084 = vmul.f32 %v2920, %v3069
      %v3085 = vmul.f32 %v2924, %v3069
      %v3086 = vmul.f32 %v2928, %v3069
      %v3087 = vmul.f32 %v2932, %v3069
      %v3088 = vmul.f32 %v2936, %v3069
      %v3089 = vmul.f32 %v2940, %v3069
      %v3090 = vmul.f32 %v2944, %v3069
      %v3091 = vmul.f32 %v2948, %v3069
      %v3092 = vmul.f32 %v2952, %v3069
      %v3093 = vmul.f32 %v2956, %v3069
      %v3094 = vmul.f32 %v2960, %v3069
      %v3095 = vmul.f32 %v2964, %v3069
      %v3096 = vmul.f32 %v2968, %v3069
      %v3097 = vmul.f32 %v2972, %v3069
      %v3098 = vmul.f32 %v2976, %v3069
      %v3099 = vmul.f32 %v2980, %v3069
      %v3100 = vmul.f32 %v2984, %v3069
      %v3101 = vmul.f32 %v2988, %v3069
      %v3102 = vmul.f32 %v2992, %v3069
      %v3103 = vmul.f32 %v2996, %v3069
      %v3104 = vmul.f32 %v3000, %v3069
      %v3105 = vmul.f32 %v3004, %v3069
      %v3106 = vmul.f32 %v3008, %v3069
      %v3107 = vmul.f32 %v3012, %v3069
      %v3108 = vmul.f32 %v3016, %v3069
      %v3109 = vmul.f32 %v3020, %v3069
      %v3110 = vmul.f32 %v3024, %v3069
      %v3111 = vmul.f32 %v3028, %v3069
      %v3112 = vmul.f32 %v3032, %v3069
      %v3113 = vmul.f32 %v3036, %v3069
      %v3114 = vmul.f32 %v3040, %v3069
      %v3115 = vmul.f32 %v3044, %v3069
      %v3116 = vmul.f32 %v3048, %v3069
      %v3117 = vmul.f32 %v3052, %v3069
      %v3118 = vmul.f32 %v3056, %v3069
      %v3119 = vmul.f32 %v3060, %v3069
      %v3120 = vmul.f32 %v3064, %v3069
      %v3121 = vadd.f32 %v2811, %v3070
      %v3122 = vadd.f32 %v2812, %v3071
      %v3123 = vadd.f32 %v2813, %v3072
      %v3124 = vadd.f32 %v2814, %v3073
      %v3125 = vadd.f32 %v2815, %v3074
      %v3126 = vadd.f32 %v2816, %v3075
      %v3127 = vadd.f32 %v2817, %v3076
      %v3128 = vadd.f32 %v2818, %v3077
      %v3129 = vadd.f32 %v2819, %v3078
      %v3130 = vadd.f32 %v2820, %v3079
      %v3131 = vadd.f32 %v2821, %v3080
      %v3132 = vadd.f32 %v2822, %v3081
      %v3133 = vadd.f32 %v2823, %v3082
      %v3134 = vadd.f32 %v2824, %v3083
      %v3135 = vadd.f32 %v2825, %v3084
      %v3136 = vadd.f32 %v2826, %v3085
      %v3137 = vadd.f32 %v2827, %v3086
      %v3138 = vadd.f32 %v2828, %v3087
      %v3139 = vadd.f32 %v2829, %v3088
      %v3140 = vadd.f32 %v2830, %v3089
      %v3141 = vadd.f32 %v2831, %v3090
      %v3142 = vadd.f32 %v2832, %v3091
      %v3143 = vadd.f32 %v2833, %v3092
      %v3144 = vadd.f32 %v2834, %v3093
      %v3145 = vadd.f32 %v2835, %v3094
      %v3146 = vadd.f32 %v2836, %v3095
      %v3147 = vadd.f32 %v2837, %v3096
      %v3148 = vadd.f32 %v2838, %v3097
      %v3149 = vadd.f32 %v2839, %v3098
      %v3150 = vadd.f32 %v2840, %v3099
      %v3151 = vadd.f32 %v2841, %v3100
      %v3152 = vadd.f32 %v2842, %v3101
      %v3153 = vadd.f32 %v2843, %v3102
      %v3154 = vadd.f32 %v2844, %v3103
      %v3155 = vadd.f32 %v2845, %v3104
      %v3156 = vadd.f32 %v2846, %v3105
      %v3157 = vadd.f32 %v2847, %v3106
      %v3158 = vadd.f32 %v2848, %v3107
      %v3159 = vadd.f32 %v2849, %v3108
      %v3160 = vadd.f32 %v2850, %v3109
      %v3161 = vadd.f32 %v2851, %v3110
      %v3162 = vadd.f32 %v2852, %v3111
      %v3163 = vadd.f32 %v2853, %v3112
      %v3164 = vadd.f32 %v2854, %v3113
      %v3165 = vadd.f32 %v2855, %v3114
      %v3166 = vadd.f32 %v2856, %v3115
      %v3167 = vadd.f32 %v2857, %v3116
      %v3168 = vadd.f32 %v2858, %v3117
      %v3169 = vadd.f32 %v2859, %v3118
      %v3170 = vadd.f32 %v2860, %v3119
      %v3171 = vadd.f32 %v2861, %v3120
      %3172 = vset.pattern.permute.xlu0 5
      %3173 = vperm.xlu0 %3172, %v270
      %v3174 = vpop.permute.xlu0 %3173
      %3176 = vset.pattern.permute.xlu0 5
      %3177 = vperm.xlu0 %3176, %v271
      %v3178 = vpop.permute.xlu0 %3177
      %3180 = vset.pattern.permute.xlu0 5
      %3181 = vperm.xlu0 %3180, %v272
      %v3182 = vpop.permute.xlu0 %3181
      %3184 = vset.pattern.permute.xlu0 5
      %3185 = vperm.xlu0 %3184, %v273
      %v3186 = vpop.permute.xlu0 %3185
      %3188 = vset.pattern.permute.xlu0 5
      %3189 = vperm.xlu0 %3188, %v274
      %v3190 = vpop.permute.xlu0 %3189
      %3192 = vset.pattern.permute.xlu0 5
      %3193 = vperm.xlu0 %3192, %v275
      %v3194 = vpop.permute.xlu0 %3193
      %3196 = vset.pattern.permute.xlu0 5
      %3197 = vperm.xlu0 %3196, %v276
      %v3198 = vpop.permute.xlu0 %3197
      %3200 = vset.pattern.permute.xlu0 5
      %3201 = vperm.xlu0 %3200, %v277
      %v3202 = vpop.permute.xlu0 %3201
      %3204 = vset.pattern.permute.xlu0 5
      %3205 = vperm.xlu0 %3204, %v278
      %v3206 = vpop.permute.xlu0 %3205
      %3208 = vset.pattern.permute.xlu0 5
      %3209 = vperm.xlu0 %3208, %v279
      %v3210 = vpop.permute.xlu0 %3209
      %3212 = vset.pattern.permute.xlu0 5
      %3213 = vperm.xlu0 %3212, %v280
      %v3214 = vpop.permute.xlu0 %3213
      %3216 = vset.pattern.permute.xlu0 5
      %3217 = vperm.xlu0 %3216, %v281
      %v3218 = vpop.permute.xlu0 %3217
      %3220 = vset.pattern.permute.xlu0 5
      %3221 = vperm.xlu0 %3220, %v282
      %v3222 = vpop.permute.xlu0 %3221
      %3224 = vset.pattern.permute.xlu0 5
      %3225 = vperm.xlu0 %3224, %v283
      %v3226 = vpop.permute.xlu0 %3225
      %3228 = vset.pattern.permute.xlu0 5
      %3229 = vperm.xlu0 %3228, %v284
      %v3230 = vpop.permute.xlu0 %3229
      %3232 = vset.pattern.permute.xlu0 5
      %3233 = vperm.xlu0 %3232, %v285
      %v3234 = vpop.permute.xlu0 %3233
      %3236 = vset.pattern.permute.xlu0 5
      %3237 = vperm.xlu0 %3236, %v286
      %v3238 = vpop.permute.xlu0 %3237
      %3240 = vset.pattern.permute.xlu0 5
      %3241 = vperm.xlu0 %3240, %v287
      %v3242 = vpop.permute.xlu0 %3241
      %3244 = vset.pattern.permute.xlu0 5
      %3245 = vperm.xlu0 %3244, %v288
      %v3246 = vpop.permute.xlu0 %3245
      %3248 = vset.pattern.permute.xlu0 5
      %3249 = vperm.xlu0 %3248, %v289
      %v3250 = vpop.permute.xlu0 %3249
      %3252 = vset.pattern.permute.xlu0 5
      %3253 = vperm.xlu0 %3252, %v290
      %v3254 = vpop.permute.xlu0 %3253
      %3256 = vset.pattern.permute.xlu0 5
      %3257 = vperm.xlu0 %3256, %v291
      %v3258 = vpop.permute.xlu0 %3257
      %3260 = vset.pattern.permute.xlu0 5
      %3261 = vperm.xlu0 %3260, %v292
      %v3262 = vpop.permute.xlu0 %3261
      %3264 = vset.pattern.permute.xlu0 5
      %3265 = vperm.xlu0 %3264, %v293
      %v3266 = vpop.permute.xlu0 %3265
      %3268 = vset.pattern.permute.xlu0 5
      %3269 = vperm.xlu0 %3268, %v294
      %v3270 = vpop.permute.xlu0 %3269
      %3272 = vset.pattern.permute.xlu0 5
      %3273 = vperm.xlu0 %3272, %v295
      %v3274 = vpop.permute.xlu0 %3273
      %3276 = vset.pattern.permute.xlu0 5
      %3277 = vperm.xlu0 %3276, %v296
      %v3278 = vpop.permute.xlu0 %3277
      %3280 = vset.pattern.permute.xlu0 5
      %3281 = vperm.xlu0 %3280, %v297
      %v3282 = vpop.permute.xlu0 %3281
      %3284 = vset.pattern.permute.xlu0 5
      %3285 = vperm.xlu0 %3284, %v298
      %v3286 = vpop.permute.xlu0 %3285
      %3288 = vset.pattern.permute.xlu0 5
      %3289 = vperm.xlu0 %3288, %v299
      %v3290 = vpop.permute.xlu0 %3289
      %3292 = vset.pattern.permute.xlu0 5
      %3293 = vperm.xlu0 %3292, %v300
      %v3294 = vpop.permute.xlu0 %3293
      %3296 = vset.pattern.permute.xlu0 5
      %3297 = vperm.xlu0 %3296, %v301
      %v3298 = vpop.permute.xlu0 %3297
      %3300 = vset.pattern.permute.xlu0 5
      %3301 = vperm.xlu0 %3300, %v302
      %v3302 = vpop.permute.xlu0 %3301
      %3304 = vset.pattern.permute.xlu0 5
      %3305 = vperm.xlu0 %3304, %v303
      %v3306 = vpop.permute.xlu0 %3305
      %3308 = vset.pattern.permute.xlu0 5
      %3309 = vperm.xlu0 %3308, %v304
      %v3310 = vpop.permute.xlu0 %3309
      %3312 = vset.pattern.permute.xlu0 5
      %3313 = vperm.xlu0 %3312, %v305
      %v3314 = vpop.permute.xlu0 %3313
      %3316 = vset.pattern.permute.xlu0 5
      %3317 = vperm.xlu0 %3316, %v306
      %v3318 = vpop.permute.xlu0 %3317
      %3320 = vset.pattern.permute.xlu0 5
      %3321 = vperm.xlu0 %3320, %v307
      %v3322 = vpop.permute.xlu0 %3321
      %3324 = vset.pattern.permute.xlu0 5
      %3325 = vperm.xlu0 %3324, %v308
      %v3326 = vpop.permute.xlu0 %3325
      %3328 = vset.pattern.permute.xlu0 5
      %3329 = vperm.xlu0 %3328, %v309
      %v3330 = vpop.permute.xlu0 %3329
      %3332 = vset.pattern.permute.xlu0 5
      %3333 = vperm.xlu0 %3332, %v310
      %v3334 = vpop.permute.xlu0 %3333
      %3336 = vset.pattern.permute.xlu0 5
      %3337 = vperm.xlu0 %3336, %v311
      %v3338 = vpop.permute.xlu0 %3337
      %3340 = vset.pattern.permute.xlu0 5
      %3341 = vperm.xlu0 %3340, %v312
      %v3342 = vpop.permute.xlu0 %3341
      %3344 = vset.pattern.permute.xlu0 5
      %3345 = vperm.xlu0 %3344, %v313
      %v3346 = vpop.permute.xlu0 %3345
      %3348 = vset.pattern.permute.xlu0 5
      %3349 = vperm.xlu0 %3348, %v314
      %v3350 = vpop.permute.xlu0 %3349
      %3352 = vset.pattern.permute.xlu0 5
      %3353 = vperm.xlu0 %3352, %v315
      %v3354 = vpop.permute.xlu0 %3353
      %3356 = vset.pattern.permute.xlu0 5
      %3357 = vperm.xlu0 %3356, %v316
      %v3358 = vpop.permute.xlu0 %3357
      %3360 = vset.pattern.permute.xlu0 5
      %3361 = vperm.xlu0 %3360, %v317
      %v3362 = vpop.permute.xlu0 %3361
      %3364 = vset.pattern.permute.xlu0 5
      %3365 = vperm.xlu0 %3364, %v318
      %v3366 = vpop.permute.xlu0 %3365
      %3368 = vset.pattern.permute.xlu0 5
      %3369 = vperm.xlu0 %3368, %v319
      %v3370 = vpop.permute.xlu0 %3369
      %3372 = vset.pattern.permute.xlu0 5
      %3373 = vperm.xlu0 %3372, %v320
      %v3374 = vpop.permute.xlu0 %3373
      %v3376 = vlaneseq
      %v3377 = vshrl.u32 %v3376, 7
      %v3378 = vsub.s32 5, %v3377
      %v3379 = vrot.slane %v376, %v3378
      %v3380 = vmul.f32 %v3174, %v3379
      %v3381 = vmul.f32 %v3178, %v3379
      %v3382 = vmul.f32 %v3182, %v3379
      %v3383 = vmul.f32 %v3186, %v3379
      %v3384 = vmul.f32 %v3190, %v3379
      %v3385 = vmul.f32 %v3194, %v3379
      %v3386 = vmul.f32 %v3198, %v3379
      %v3387 = vmul.f32 %v3202, %v3379
      %v3388 = vmul.f32 %v3206, %v3379
      %v3389 = vmul.f32 %v3210, %v3379
      %v3390 = vmul.f32 %v3214, %v3379
      %v3391 = vmul.f32 %v3218, %v3379
      %v3392 = vmul.f32 %v3222, %v3379
      %v3393 = vmul.f32 %v3226, %v3379
      %v3394 = vmul.f32 %v3230, %v3379
      %v3395 = vmul.f32 %v3234, %v3379
      %v3396 = vmul.f32 %v3238, %v3379
      %v3397 = vmul.f32 %v3242, %v3379
      %v3398 = vmul.f32 %v3246, %v3379
      %v3399 = vmul.f32 %v3250, %v3379
      %v3400 = vmul.f32 %v3254, %v3379
      %v3401 = vmul.f32 %v3258, %v3379
      %v3402 = vmul.f32 %v3262, %v3379
      %v3403 = vmul.f32 %v3266, %v3379
      %v3404 = vmul.f32 %v3270, %v3379
      %v3405 = vmul.f32 %v3274, %v3379
      %v3406 = vmul.f32 %v3278, %v3379
      %v3407 = vmul.f32 %v3282, %v3379
      %v3408 = vmul.f32 %v3286, %v3379
      %v3409 = vmul.f32 %v3290, %v3379
      %v3410 = vmul.f32 %v3294, %v3379
      %v3411 = vmul.f32 %v3298, %v3379
      %v3412 = vmul.f32 %v3302, %v3379
      %v3413 = vmul.f32 %v3306, %v3379
      %v3414 = vmul.f32 %v3310, %v3379
      %v3415 = vmul.f32 %v3314, %v3379
      %v3416 = vmul.f32 %v3318, %v3379
      %v3417 = vmul.f32 %v3322, %v3379
      %v3418 = vmul.f32 %v3326, %v3379
      %v3419 = vmul.f32 %v3330, %v3379
      %v3420 = vmul.f32 %v3334, %v3379
      %v3421 = vmul.f32 %v3338, %v3379
      %v3422 = vmul.f32 %v3342, %v3379
      %v3423 = vmul.f32 %v3346, %v3379
      %v3424 = vmul.f32 %v3350, %v3379
      %v3425 = vmul.f32 %v3354, %v3379
      %v3426 = vmul.f32 %v3358, %v3379
      %v3427 = vmul.f32 %v3362, %v3379
      %v3428 = vmul.f32 %v3366, %v3379
      %v3429 = vmul.f32 %v3370, %v3379
      %v3430 = vmul.f32 %v3374, %v3379
      %v3431 = vadd.f32 %v3121, %v3380
      %v3432 = vadd.f32 %v3122, %v3381
      %v3433 = vadd.f32 %v3123, %v3382
      %v3434 = vadd.f32 %v3124, %v3383
      %v3435 = vadd.f32 %v3125, %v3384
      %v3436 = vadd.f32 %v3126, %v3385
      %v3437 = vadd.f32 %v3127, %v3386
      %v3438 = vadd.f32 %v3128, %v3387
      %v3439 = vadd.f32 %v3129, %v3388
      %v3440 = vadd.f32 %v3130, %v3389
      %v3441 = vadd.f32 %v3131, %v3390
      %v3442 = vadd.f32 %v3132, %v3391
      %v3443 = vadd.f32 %v3133, %v3392
      %v3444 = vadd.f32 %v3134, %v3393
      %v3445 = vadd.f32 %v3135, %v3394
      %v3446 = vadd.f32 %v3136, %v3395
      %v3447 = vadd.f32 %v3137, %v3396
      %v3448 = vadd.f32 %v3138, %v3397
      %v3449 = vadd.f32 %v3139, %v3398
      %v3450 = vadd.f32 %v3140, %v3399
      %v3451 = vadd.f32 %v3141, %v3400
      %v3452 = vadd.f32 %v3142, %v3401
      %v3453 = vadd.f32 %v3143, %v3402
      %v3454 = vadd.f32 %v3144, %v3403
      %v3455 = vadd.f32 %v3145, %v3404
      %v3456 = vadd.f32 %v3146, %v3405
      %v3457 = vadd.f32 %v3147, %v3406
      %v3458 = vadd.f32 %v3148, %v3407
      %v3459 = vadd.f32 %v3149, %v3408
      %v3460 = vadd.f32 %v3150, %v3409
      %v3461 = vadd.f32 %v3151, %v3410
      %v3462 = vadd.f32 %v3152, %v3411
      %v3463 = vadd.f32 %v3153, %v3412
      %v3464 = vadd.f32 %v3154, %v3413
      %v3465 = vadd.f32 %v3155, %v3414
      %v3466 = vadd.f32 %v3156, %v3415
      %v3467 = vadd.f32 %v3157, %v3416
      %v3468 = vadd.f32 %v3158, %v3417
      %v3469 = vadd.f32 %v3159, %v3418
      %v3470 = vadd.f32 %v3160, %v3419
      %v3471 = vadd.f32 %v3161, %v3420
      %v3472 = vadd.f32 %v3162, %v3421
      %v3473 = vadd.f32 %v3163, %v3422
      %v3474 = vadd.f32 %v3164, %v3423
      %v3475 = vadd.f32 %v3165, %v3424
      %v3476 = vadd.f32 %v3166, %v3425
      %v3477 = vadd.f32 %v3167, %v3426
      %v3478 = vadd.f32 %v3168, %v3427
      %v3479 = vadd.f32 %v3169, %v3428
      %v3480 = vadd.f32 %v3170, %v3429
      %v3481 = vadd.f32 %v3171, %v3430
      %3482 = vset.pattern.permute.xlu0 6
      %3483 = vperm.xlu0 %3482, %v270
      %v3484 = vpop.permute.xlu0 %3483
      %3486 = vset.pattern.permute.xlu0 6
      %3487 = vperm.xlu0 %3486, %v271
      %v3488 = vpop.permute.xlu0 %3487
      %3490 = vset.pattern.permute.xlu0 6
      %3491 = vperm.xlu0 %3490, %v272
      %v3492 = vpop.permute.xlu0 %3491
      %3494 = vset.pattern.permute.xlu0 6
      %3495 = vperm.xlu0 %3494, %v273
      %v3496 = vpop.permute.xlu0 %3495
      %3498 = vset.pattern.permute.xlu0 6
      %3499 = vperm.xlu0 %3498, %v274
      %v3500 = vpop.permute.xlu0 %3499
      %3502 = vset.pattern.permute.xlu0 6
      %3503 = vperm.xlu0 %3502, %v275
      %v3504 = vpop.permute.xlu0 %3503
      %3506 = vset.pattern.permute.xlu0 6
      %3507 = vperm.xlu0 %3506, %v276
      %v3508 = vpop.permute.xlu0 %3507
      %3510 = vset.pattern.permute.xlu0 6
      %3511 = vperm.xlu0 %3510, %v277
      %v3512 = vpop.permute.xlu0 %3511
      %3514 = vset.pattern.permute.xlu0 6
      %3515 = vperm.xlu0 %3514, %v278
      %v3516 = vpop.permute.xlu0 %3515
      %3518 = vset.pattern.permute.xlu0 6
      %3519 = vperm.xlu0 %3518, %v279
      %v3520 = vpop.permute.xlu0 %3519
      %3522 = vset.pattern.permute.xlu0 6
      %3523 = vperm.xlu0 %3522, %v280
      %v3524 = vpop.permute.xlu0 %3523
      %3526 = vset.pattern.permute.xlu0 6
      %3527 = vperm.xlu0 %3526, %v281
      %v3528 = vpop.permute.xlu0 %3527
      %3530 = vset.pattern.permute.xlu0 6
      %3531 = vperm.xlu0 %3530, %v282
      %v3532 = vpop.permute.xlu0 %3531
      %3534 = vset.pattern.permute.xlu0 6
      %3535 = vperm.xlu0 %3534, %v283
      %v3536 = vpop.permute.xlu0 %3535
      %3538 = vset.pattern.permute.xlu0 6
      %3539 = vperm.xlu0 %3538, %v284
      %v3540 = vpop.permute.xlu0 %3539
      %3542 = vset.pattern.permute.xlu0 6
      %3543 = vperm.xlu0 %3542, %v285
      %v3544 = vpop.permute.xlu0 %3543
      %3546 = vset.pattern.permute.xlu0 6
      %3547 = vperm.xlu0 %3546, %v286
      %v3548 = vpop.permute.xlu0 %3547
      %3550 = vset.pattern.permute.xlu0 6
      %3551 = vperm.xlu0 %3550, %v287
      %v3552 = vpop.permute.xlu0 %3551
      %3554 = vset.pattern.permute.xlu0 6
      %3555 = vperm.xlu0 %3554, %v288
      %v3556 = vpop.permute.xlu0 %3555
      %3558 = vset.pattern.permute.xlu0 6
      %3559 = vperm.xlu0 %3558, %v289
      %v3560 = vpop.permute.xlu0 %3559
      %3562 = vset.pattern.permute.xlu0 6
      %3563 = vperm.xlu0 %3562, %v290
      %v3564 = vpop.permute.xlu0 %3563
      %3566 = vset.pattern.permute.xlu0 6
      %3567 = vperm.xlu0 %3566, %v291
      %v3568 = vpop.permute.xlu0 %3567
      %3570 = vset.pattern.permute.xlu0 6
      %3571 = vperm.xlu0 %3570, %v292
      %v3572 = vpop.permute.xlu0 %3571
      %3574 = vset.pattern.permute.xlu0 6
      %3575 = vperm.xlu0 %3574, %v293
      %v3576 = vpop.permute.xlu0 %3575
      %3578 = vset.pattern.permute.xlu0 6
      %3579 = vperm.xlu0 %3578, %v294
      %v3580 = vpop.permute.xlu0 %3579
      %3582 = vset.pattern.permute.xlu0 6
      %3583 = vperm.xlu0 %3582, %v295
      %v3584 = vpop.permute.xlu0 %3583
      %3586 = vset.pattern.permute.xlu0 6
      %3587 = vperm.xlu0 %3586, %v296
      %v3588 = vpop.permute.xlu0 %3587
      %3590 = vset.pattern.permute.xlu0 6
      %3591 = vperm.xlu0 %3590, %v297
      %v3592 = vpop.permute.xlu0 %3591
      %3594 = vset.pattern.permute.xlu0 6
      %3595 = vperm.xlu0 %3594, %v298
      %v3596 = vpop.permute.xlu0 %3595
      %3598 = vset.pattern.permute.xlu0 6
      %3599 = vperm.xlu0 %3598, %v299
      %v3600 = vpop.permute.xlu0 %3599
      %3602 = vset.pattern.permute.xlu0 6
      %3603 = vperm.xlu0 %3602, %v300
      %v3604 = vpop.permute.xlu0 %3603
      %3606 = vset.pattern.permute.xlu0 6
      %3607 = vperm.xlu0 %3606, %v301
      %v3608 = vpop.permute.xlu0 %3607
      %3610 = vset.pattern.permute.xlu0 6
      %3611 = vperm.xlu0 %3610, %v302
      %v3612 = vpop.permute.xlu0 %3611
      %3614 = vset.pattern.permute.xlu0 6
      %3615 = vperm.xlu0 %3614, %v303
      %v3616 = vpop.permute.xlu0 %3615
      %3618 = vset.pattern.permute.xlu0 6
      %3619 = vperm.xlu0 %3618, %v304
      %v3620 = vpop.permute.xlu0 %3619
      %3622 = vset.pattern.permute.xlu0 6
      %3623 = vperm.xlu0 %3622, %v305
      %v3624 = vpop.permute.xlu0 %3623
      %3626 = vset.pattern.permute.xlu0 6
      %3627 = vperm.xlu0 %3626, %v306
      %v3628 = vpop.permute.xlu0 %3627
      %3630 = vset.pattern.permute.xlu0 6
      %3631 = vperm.xlu0 %3630, %v307
      %v3632 = vpop.permute.xlu0 %3631
      %3634 = vset.pattern.permute.xlu0 6
      %3635 = vperm.xlu0 %3634, %v308
      %v3636 = vpop.permute.xlu0 %3635
      %3638 = vset.pattern.permute.xlu0 6
      %3639 = vperm.xlu0 %3638, %v309
      %v3640 = vpop.permute.xlu0 %3639
      %3642 = vset.pattern.permute.xlu0 6
      %3643 = vperm.xlu0 %3642, %v310
      %v3644 = vpop.permute.xlu0 %3643
      %3646 = vset.pattern.permute.xlu0 6
      %3647 = vperm.xlu0 %3646, %v311
      %v3648 = vpop.permute.xlu0 %3647
      %3650 = vset.pattern.permute.xlu0 6
      %3651 = vperm.xlu0 %3650, %v312
      %v3652 = vpop.permute.xlu0 %3651
      %3654 = vset.pattern.permute.xlu0 6
      %3655 = vperm.xlu0 %3654, %v313
      %v3656 = vpop.permute.xlu0 %3655
      %3658 = vset.pattern.permute.xlu0 6
      %3659 = vperm.xlu0 %3658, %v314
      %v3660 = vpop.permute.xlu0 %3659
      %3662 = vset.pattern.permute.xlu0 6
      %3663 = vperm.xlu0 %3662, %v315
      %v3664 = vpop.permute.xlu0 %3663
      %3666 = vset.pattern.permute.xlu0 6
      %3667 = vperm.xlu0 %3666, %v316
      %v3668 = vpop.permute.xlu0 %3667
      %3670 = vset.pattern.permute.xlu0 6
      %3671 = vperm.xlu0 %3670, %v317
      %v3672 = vpop.permute.xlu0 %3671
      %3674 = vset.pattern.permute.xlu0 6
      %3675 = vperm.xlu0 %3674, %v318
      %v3676 = vpop.permute.xlu0 %3675
      %3678 = vset.pattern.permute.xlu0 6
      %3679 = vperm.xlu0 %3678, %v319
      %v3680 = vpop.permute.xlu0 %3679
      %3682 = vset.pattern.permute.xlu0 6
      %3683 = vperm.xlu0 %3682, %v320
      %v3684 = vpop.permute.xlu0 %3683
      %v3686 = vlaneseq
      %v3687 = vshrl.u32 %v3686, 7
      %v3688 = vsub.s32 6, %v3687
      %v3689 = vrot.slane %v376, %v3688
      %v3690 = vmul.f32 %v3484, %v3689
      %v3691 = vmul.f32 %v3488, %v3689
      %v3692 = vmul.f32 %v3492, %v3689
      %v3693 = vmul.f32 %v3496, %v3689
      %v3694 = vmul.f32 %v3500, %v3689
      %v3695 = vmul.f32 %v3504, %v3689
      %v3696 = vmul.f32 %v3508, %v3689
      %v3697 = vmul.f32 %v3512, %v3689
      %v3698 = vmul.f32 %v3516, %v3689
      %v3699 = vmul.f32 %v3520, %v3689
      %v3700 = vmul.f32 %v3524, %v3689
      %v3701 = vmul.f32 %v3528, %v3689
      %v3702 = vmul.f32 %v3532, %v3689
      %v3703 = vmul.f32 %v3536, %v3689
      %v3704 = vmul.f32 %v3540, %v3689
      %v3705 = vmul.f32 %v3544, %v3689
      %v3706 = vmul.f32 %v3548, %v3689
      %v3707 = vmul.f32 %v3552, %v3689
      %v3708 = vmul.f32 %v3556, %v3689
      %v3709 = vmul.f32 %v3560, %v3689
      %v3710 = vmul.f32 %v3564, %v3689
      %v3711 = vmul.f32 %v3568, %v3689
      %v3712 = vmul.f32 %v3572, %v3689
      %v3713 = vmul.f32 %v3576, %v3689
      %v3714 = vmul.f32 %v3580, %v3689
      %v3715 = vmul.f32 %v3584, %v3689
      %v3716 = vmul.f32 %v3588, %v3689
      %v3717 = vmul.f32 %v3592, %v3689
      %v3718 = vmul.f32 %v3596, %v3689
      %v3719 = vmul.f32 %v3600, %v3689
      %v3720 = vmul.f32 %v3604, %v3689
      %v3721 = vmul.f32 %v3608, %v3689
      %v3722 = vmul.f32 %v3612, %v3689
      %v3723 = vmul.f32 %v3616, %v3689
      %v3724 = vmul.f32 %v3620, %v3689
      %v3725 = vmul.f32 %v3624, %v3689
      %v3726 = vmul.f32 %v3628, %v3689
      %v3727 = vmul.f32 %v3632, %v3689
      %v3728 = vmul.f32 %v3636, %v3689
      %v3729 = vmul.f32 %v3640, %v3689
      %v3730 = vmul.f32 %v3644, %v3689
      %v3731 = vmul.f32 %v3648, %v3689
      %v3732 = vmul.f32 %v3652, %v3689
      %v3733 = vmul.f32 %v3656, %v3689
      %v3734 = vmul.f32 %v3660, %v3689
      %v3735 = vmul.f32 %v3664, %v3689
      %v3736 = vmul.f32 %v3668, %v3689
      %v3737 = vmul.f32 %v3672, %v3689
      %v3738 = vmul.f32 %v3676, %v3689
      %v3739 = vmul.f32 %v3680, %v3689
      %v3740 = vmul.f32 %v3684, %v3689
      %v3741 = vadd.f32 %v3431, %v3690
      %v3742 = vadd.f32 %v3432, %v3691
      %v3743 = vadd.f32 %v3433, %v3692
      %v3744 = vadd.f32 %v3434, %v3693
      %v3745 = vadd.f32 %v3435, %v3694
      %v3746 = vadd.f32 %v3436, %v3695
      %v3747 = vadd.f32 %v3437, %v3696
      %v3748 = vadd.f32 %v3438, %v3697
      %v3749 = vadd.f32 %v3439, %v3698
      %v3750 = vadd.f32 %v3440, %v3699
      %v3751 = vadd.f32 %v3441, %v3700
      %v3752 = vadd.f32 %v3442, %v3701
      %v3753 = vadd.f32 %v3443, %v3702
      %v3754 = vadd.f32 %v3444, %v3703
      %v3755 = vadd.f32 %v3445, %v3704
      %v3756 = vadd.f32 %v3446, %v3705
      %v3757 = vadd.f32 %v3447, %v3706
      %v3758 = vadd.f32 %v3448, %v3707
      %v3759 = vadd.f32 %v3449, %v3708
      %v3760 = vadd.f32 %v3450, %v3709
      %v3761 = vadd.f32 %v3451, %v3710
      %v3762 = vadd.f32 %v3452, %v3711
      %v3763 = vadd.f32 %v3453, %v3712
      %v3764 = vadd.f32 %v3454, %v3713
      %v3765 = vadd.f32 %v3455, %v3714
      %v3766 = vadd.f32 %v3456, %v3715
      %v3767 = vadd.f32 %v3457, %v3716
      %v3768 = vadd.f32 %v3458, %v3717
      %v3769 = vadd.f32 %v3459, %v3718
      %v3770 = vadd.f32 %v3460, %v3719
      %v3771 = vadd.f32 %v3461, %v3720
      %v3772 = vadd.f32 %v3462, %v3721
      %v3773 = vadd.f32 %v3463, %v3722
      %v3774 = vadd.f32 %v3464, %v3723
      %v3775 = vadd.f32 %v3465, %v3724
      %v3776 = vadd.f32 %v3466, %v3725
      %v3777 = vadd.f32 %v3467, %v3726
      %v3778 = vadd.f32 %v3468, %v3727
      %v3779 = vadd.f32 %v3469, %v3728
      %v3780 = vadd.f32 %v3470, %v3729
      %v3781 = vadd.f32 %v3471, %v3730
      %v3782 = vadd.f32 %v3472, %v3731
      %v3783 = vadd.f32 %v3473, %v3732
      %v3784 = vadd.f32 %v3474, %v3733
      %v3785 = vadd.f32 %v3475, %v3734
      %v3786 = vadd.f32 %v3476, %v3735
      %v3787 = vadd.f32 %v3477, %v3736
      %v3788 = vadd.f32 %v3478, %v3737
      %v3789 = vadd.f32 %v3479, %v3738
      %v3790 = vadd.f32 %v3480, %v3739
      %v3791 = vadd.f32 %v3481, %v3740
      %3792 = vset.pattern.permute.xlu0 7
      %3793 = vperm.xlu0 %3792, %v270
      %v3794 = vpop.permute.xlu0 %3793
      %3796 = vset.pattern.permute.xlu0 7
      %3797 = vperm.xlu0 %3796, %v271
      %v3798 = vpop.permute.xlu0 %3797
      %3800 = vset.pattern.permute.xlu0 7
      %3801 = vperm.xlu0 %3800, %v272
      %v3802 = vpop.permute.xlu0 %3801
      %3804 = vset.pattern.permute.xlu0 7
      %3805 = vperm.xlu0 %3804, %v273
      %v3806 = vpop.permute.xlu0 %3805
      %3808 = vset.pattern.permute.xlu0 7
      %3809 = vperm.xlu0 %3808, %v274
      %v3810 = vpop.permute.xlu0 %3809
      %3812 = vset.pattern.permute.xlu0 7
      %3813 = vperm.xlu0 %3812, %v275
      %v3814 = vpop.permute.xlu0 %3813
      %3816 = vset.pattern.permute.xlu0 7
      %3817 = vperm.xlu0 %3816, %v276
      %v3818 = vpop.permute.xlu0 %3817
      %3820 = vset.pattern.permute.xlu0 7
      %3821 = vperm.xlu0 %3820, %v277
      %v3822 = vpop.permute.xlu0 %3821
      %3824 = vset.pattern.permute.xlu0 7
      %3825 = vperm.xlu0 %3824, %v278
      %v3826 = vpop.permute.xlu0 %3825
      %3828 = vset.pattern.permute.xlu0 7
      %3829 = vperm.xlu0 %3828, %v279
      %v3830 = vpop.permute.xlu0 %3829
      %3832 = vset.pattern.permute.xlu0 7
      %3833 = vperm.xlu0 %3832, %v280
      %v3834 = vpop.permute.xlu0 %3833
      %3836 = vset.pattern.permute.xlu0 7
      %3837 = vperm.xlu0 %3836, %v281
      %v3838 = vpop.permute.xlu0 %3837
      %3840 = vset.pattern.permute.xlu0 7
      %3841 = vperm.xlu0 %3840, %v282
      %v3842 = vpop.permute.xlu0 %3841
      %3844 = vset.pattern.permute.xlu0 7
      %3845 = vperm.xlu0 %3844, %v283
      %v3846 = vpop.permute.xlu0 %3845
      %3848 = vset.pattern.permute.xlu0 7
      %3849 = vperm.xlu0 %3848, %v284
      %v3850 = vpop.permute.xlu0 %3849
      %3852 = vset.pattern.permute.xlu0 7
      %3853 = vperm.xlu0 %3852, %v285
      %v3854 = vpop.permute.xlu0 %3853
      %3856 = vset.pattern.permute.xlu0 7
      %3857 = vperm.xlu0 %3856, %v286
      %v3858 = vpop.permute.xlu0 %3857
      %3860 = vset.pattern.permute.xlu0 7
      %3861 = vperm.xlu0 %3860, %v287
      %v3862 = vpop.permute.xlu0 %3861
      %3864 = vset.pattern.permute.xlu0 7
      %3865 = vperm.xlu0 %3864, %v288
      %v3866 = vpop.permute.xlu0 %3865
      %3868 = vset.pattern.permute.xlu0 7
      %3869 = vperm.xlu0 %3868, %v289
      %v3870 = vpop.permute.xlu0 %3869
      %3872 = vset.pattern.permute.xlu0 7
      %3873 = vperm.xlu0 %3872, %v290
      %v3874 = vpop.permute.xlu0 %3873
      %3876 = vset.pattern.permute.xlu0 7
      %3877 = vperm.xlu0 %3876, %v291
      %v3878 = vpop.permute.xlu0 %3877
      %3880 = vset.pattern.permute.xlu0 7
      %3881 = vperm.xlu0 %3880, %v292
      %v3882 = vpop.permute.xlu0 %3881
      %3884 = vset.pattern.permute.xlu0 7
      %3885 = vperm.xlu0 %3884, %v293
      %v3886 = vpop.permute.xlu0 %3885
      %3888 = vset.pattern.permute.xlu0 7
      %3889 = vperm.xlu0 %3888, %v294
      %v3890 = vpop.permute.xlu0 %3889
      %3892 = vset.pattern.permute.xlu0 7
      %3893 = vperm.xlu0 %3892, %v295
      %v3894 = vpop.permute.xlu0 %3893
      %3896 = vset.pattern.permute.xlu0 7
      %3897 = vperm.xlu0 %3896, %v296
      %v3898 = vpop.permute.xlu0 %3897
      %3900 = vset.pattern.permute.xlu0 7
      %3901 = vperm.xlu0 %3900, %v297
      %v3902 = vpop.permute.xlu0 %3901
      %3904 = vset.pattern.permute.xlu0 7
      %3905 = vperm.xlu0 %3904, %v298
      %v3906 = vpop.permute.xlu0 %3905
      %3908 = vset.pattern.permute.xlu0 7
      %3909 = vperm.xlu0 %3908, %v299
      %v3910 = vpop.permute.xlu0 %3909
      %3912 = vset.pattern.permute.xlu0 7
      %3913 = vperm.xlu0 %3912, %v300
      %v3914 = vpop.permute.xlu0 %3913
      %3916 = vset.pattern.permute.xlu0 7
      %3917 = vperm.xlu0 %3916, %v301
      %v3918 = vpop.permute.xlu0 %3917
      %3920 = vset.pattern.permute.xlu0 7
      %3921 = vperm.xlu0 %3920, %v302
      %v3922 = vpop.permute.xlu0 %3921
      %3924 = vset.pattern.permute.xlu0 7
      %3925 = vperm.xlu0 %3924, %v303
      %v3926 = vpop.permute.xlu0 %3925
      %3928 = vset.pattern.permute.xlu0 7
      %3929 = vperm.xlu0 %3928, %v304
      %v3930 = vpop.permute.xlu0 %3929
      %3932 = vset.pattern.permute.xlu0 7
      %3933 = vperm.xlu0 %3932, %v305
      %v3934 = vpop.permute.xlu0 %3933
      %3936 = vset.pattern.permute.xlu0 7
      %3937 = vperm.xlu0 %3936, %v306
      %v3938 = vpop.permute.xlu0 %3937
      %3940 = vset.pattern.permute.xlu0 7
      %3941 = vperm.xlu0 %3940, %v307
      %v3942 = vpop.permute.xlu0 %3941
      %3944 = vset.pattern.permute.xlu0 7
      %3945 = vperm.xlu0 %3944, %v308
      %v3946 = vpop.permute.xlu0 %3945
      %3948 = vset.pattern.permute.xlu0 7
      %3949 = vperm.xlu0 %3948, %v309
      %v3950 = vpop.permute.xlu0 %3949
      %3952 = vset.pattern.permute.xlu0 7
      %3953 = vperm.xlu0 %3952, %v310
      %v3954 = vpop.permute.xlu0 %3953
      %3956 = vset.pattern.permute.xlu0 7
      %3957 = vperm.xlu0 %3956, %v311
      %v3958 = vpop.permute.xlu0 %3957
      %3960 = vset.pattern.permute.xlu0 7
      %3961 = vperm.xlu0 %3960, %v312
      %v3962 = vpop.permute.xlu0 %3961
      %3964 = vset.pattern.permute.xlu0 7
      %3965 = vperm.xlu0 %3964, %v313
      %v3966 = vpop.permute.xlu0 %3965
      %3968 = vset.pattern.permute.xlu0 7
      %3969 = vperm.xlu0 %3968, %v314
      %v3970 = vpop.permute.xlu0 %3969
      %3972 = vset.pattern.permute.xlu0 7
      %3973 = vperm.xlu0 %3972, %v315
      %v3974 = vpop.permute.xlu0 %3973
      %3976 = vset.pattern.permute.xlu0 7
      %3977 = vperm.xlu0 %3976, %v316
      %v3978 = vpop.permute.xlu0 %3977
      %3980 = vset.pattern.permute.xlu0 7
      %3981 = vperm.xlu0 %3980, %v317
      %v3982 = vpop.permute.xlu0 %3981
      %3984 = vset.pattern.permute.xlu0 7
      %3985 = vperm.xlu0 %3984, %v318
      %v3986 = vpop.permute.xlu0 %3985
      %3988 = vset.pattern.permute.xlu0 7
      %3989 = vperm.xlu0 %3988, %v319
      %v3990 = vpop.permute.xlu0 %3989
      %3992 = vset.pattern.permute.xlu0 7
      %3993 = vperm.xlu0 %3992, %v320
      %v3994 = vpop.permute.xlu0 %3993
      %v3996 = vlaneseq
      %v3997 = vshrl.u32 %v3996, 7
      %v3998 = vsub.s32 7, %v3997
      %v3999 = vrot.slane %v376, %v3998
      %v4000 = vmul.f32 %v3794, %v3999
      %v4001 = vmul.f32 %v3798, %v3999
      %v4002 = vmul.f32 %v3802, %v3999
      %v4003 = vmul.f32 %v3806, %v3999
      %v4004 = vmul.f32 %v3810, %v3999
      %v4005 = vmul.f32 %v3814, %v3999
      %v4006 = vmul.f32 %v3818, %v3999
      %v4007 = vmul.f32 %v3822, %v3999
      %v4008 = vmul.f32 %v3826, %v3999
      %v4009 = vmul.f32 %v3830, %v3999
      %v4010 = vmul.f32 %v3834, %v3999
      %v4011 = vmul.f32 %v3838, %v3999
      %v4012 = vmul.f32 %v3842, %v3999
      %v4013 = vmul.f32 %v3846, %v3999
      %v4014 = vmul.f32 %v3850, %v3999
      %v4015 = vmul.f32 %v3854, %v3999
      %v4016 = vmul.f32 %v3858, %v3999
      %v4017 = vmul.f32 %v3862, %v3999
      %v4018 = vmul.f32 %v3866, %v3999
      %v4019 = vmul.f32 %v3870, %v3999
      %v4020 = vmul.f32 %v3874, %v3999
      %v4021 = vmul.f32 %v3878, %v3999
      %v4022 = vmul.f32 %v3882, %v3999
      %v4023 = vmul.f32 %v3886, %v3999
      %v4024 = vmul.f32 %v3890, %v3999
      %v4025 = vmul.f32 %v3894, %v3999
      %v4026 = vmul.f32 %v3898, %v3999
      %v4027 = vmul.f32 %v3902, %v3999
      %v4028 = vmul.f32 %v3906, %v3999
      %v4029 = vmul.f32 %v3910, %v3999
      %v4030 = vmul.f32 %v3914, %v3999
      %v4031 = vmul.f32 %v3918, %v3999
      %v4032 = vmul.f32 %v3922, %v3999
      %v4033 = vmul.f32 %v3926, %v3999
      %v4034 = vmul.f32 %v3930, %v3999
      %v4035 = vmul.f32 %v3934, %v3999
      %v4036 = vmul.f32 %v3938, %v3999
      %v4037 = vmul.f32 %v3942, %v3999
      %v4038 = vmul.f32 %v3946, %v3999
      %v4039 = vmul.f32 %v3950, %v3999
      %v4040 = vmul.f32 %v3954, %v3999
      %v4041 = vmul.f32 %v3958, %v3999
      %v4042 = vmul.f32 %v3962, %v3999
      %v4043 = vmul.f32 %v3966, %v3999
      %v4044 = vmul.f32 %v3970, %v3999
      %v4045 = vmul.f32 %v3974, %v3999
      %v4046 = vmul.f32 %v3978, %v3999
      %v4047 = vmul.f32 %v3982, %v3999
      %v4048 = vmul.f32 %v3986, %v3999
      %v4049 = vmul.f32 %v3990, %v3999
      %v4050 = vmul.f32 %v3994, %v3999
      %v4051 = vadd.f32 %v3741, %v4000
      %v4052 = vadd.f32 %v3742, %v4001
      %v4053 = vadd.f32 %v3743, %v4002
      %v4054 = vadd.f32 %v3744, %v4003
      %v4055 = vadd.f32 %v3745, %v4004
      %v4056 = vadd.f32 %v3746, %v4005
      %v4057 = vadd.f32 %v3747, %v4006
      %v4058 = vadd.f32 %v3748, %v4007
      %v4059 = vadd.f32 %v3749, %v4008
      %v4060 = vadd.f32 %v3750, %v4009
      %v4061 = vadd.f32 %v3751, %v4010
      %v4062 = vadd.f32 %v3752, %v4011
      %v4063 = vadd.f32 %v3753, %v4012
      %v4064 = vadd.f32 %v3754, %v4013
      %v4065 = vadd.f32 %v3755, %v4014
      %v4066 = vadd.f32 %v3756, %v4015
      %v4067 = vadd.f32 %v3757, %v4016
      %v4068 = vadd.f32 %v3758, %v4017
      %v4069 = vadd.f32 %v3759, %v4018
      %v4070 = vadd.f32 %v3760, %v4019
      %v4071 = vadd.f32 %v3761, %v4020
      %v4072 = vadd.f32 %v3762, %v4021
      %v4073 = vadd.f32 %v3763, %v4022
      %v4074 = vadd.f32 %v3764, %v4023
      %v4075 = vadd.f32 %v3765, %v4024
      %v4076 = vadd.f32 %v3766, %v4025
      %v4077 = vadd.f32 %v3767, %v4026
      %v4078 = vadd.f32 %v3768, %v4027
      %v4079 = vadd.f32 %v3769, %v4028
      %v4080 = vadd.f32 %v3770, %v4029
      %v4081 = vadd.f32 %v3771, %v4030
      %v4082 = vadd.f32 %v3772, %v4031
      %v4083 = vadd.f32 %v3773, %v4032
      %v4084 = vadd.f32 %v3774, %v4033
      %v4085 = vadd.f32 %v3775, %v4034
      %v4086 = vadd.f32 %v3776, %v4035
      %v4087 = vadd.f32 %v3777, %v4036
      %v4088 = vadd.f32 %v3778, %v4037
      %v4089 = vadd.f32 %v3779, %v4038
      %v4090 = vadd.f32 %v3780, %v4039
      %v4091 = vadd.f32 %v3781, %v4040
      %v4092 = vadd.f32 %v3782, %v4041
      %v4093 = vadd.f32 %v3783, %v4042
      %v4094 = vadd.f32 %v3784, %v4043
      %v4095 = vadd.f32 %v3785, %v4044
      %v4096 = vadd.f32 %v3786, %v4045
      %v4097 = vadd.f32 %v3787, %v4046
      %v4098 = vadd.f32 %v3788, %v4047
      %v4099 = vadd.f32 %v3789, %v4048
      %v4100 = vadd.f32 %v3790, %v4049
      %v4101 = vadd.f32 %v3791, %v4050
      %4102 = vset.pattern.permute.xlu0 8
      %4103 = vperm.xlu0 %4102, %v270
      %v4104 = vpop.permute.xlu0 %4103
      %4106 = vset.pattern.permute.xlu0 8
      %4107 = vperm.xlu0 %4106, %v271
      %v4108 = vpop.permute.xlu0 %4107
      %4110 = vset.pattern.permute.xlu0 8
      %4111 = vperm.xlu0 %4110, %v272
      %v4112 = vpop.permute.xlu0 %4111
      %4114 = vset.pattern.permute.xlu0 8
      %4115 = vperm.xlu0 %4114, %v273
      %v4116 = vpop.permute.xlu0 %4115
      %4118 = vset.pattern.permute.xlu0 8
      %4119 = vperm.xlu0 %4118, %v274
      %v4120 = vpop.permute.xlu0 %4119
      %4122 = vset.pattern.permute.xlu0 8
      %4123 = vperm.xlu0 %4122, %v275
      %v4124 = vpop.permute.xlu0 %4123
      %4126 = vset.pattern.permute.xlu0 8
      %4127 = vperm.xlu0 %4126, %v276
      %v4128 = vpop.permute.xlu0 %4127
      %4130 = vset.pattern.permute.xlu0 8
      %4131 = vperm.xlu0 %4130, %v277
      %v4132 = vpop.permute.xlu0 %4131
      %4134 = vset.pattern.permute.xlu0 8
      %4135 = vperm.xlu0 %4134, %v278
      %v4136 = vpop.permute.xlu0 %4135
      %4138 = vset.pattern.permute.xlu0 8
      %4139 = vperm.xlu0 %4138, %v279
      %v4140 = vpop.permute.xlu0 %4139
      %4142 = vset.pattern.permute.xlu0 8
      %4143 = vperm.xlu0 %4142, %v280
      %v4144 = vpop.permute.xlu0 %4143
      %4146 = vset.pattern.permute.xlu0 8
      %4147 = vperm.xlu0 %4146, %v281
      %v4148 = vpop.permute.xlu0 %4147
      %4150 = vset.pattern.permute.xlu0 8
      %4151 = vperm.xlu0 %4150, %v282
      %v4152 = vpop.permute.xlu0 %4151
      %4154 = vset.pattern.permute.xlu0 8
      %4155 = vperm.xlu0 %4154, %v283
      %v4156 = vpop.permute.xlu0 %4155
      %4158 = vset.pattern.permute.xlu0 8
      %4159 = vperm.xlu0 %4158, %v284
      %v4160 = vpop.permute.xlu0 %4159
      %4162 = vset.pattern.permute.xlu0 8
      %4163 = vperm.xlu0 %4162, %v285
      %v4164 = vpop.permute.xlu0 %4163
      %4166 = vset.pattern.permute.xlu0 8
      %4167 = vperm.xlu0 %4166, %v286
      %v4168 = vpop.permute.xlu0 %4167
      %4170 = vset.pattern.permute.xlu0 8
      %4171 = vperm.xlu0 %4170, %v287
      %v4172 = vpop.permute.xlu0 %4171
      %4174 = vset.pattern.permute.xlu0 8
      %4175 = vperm.xlu0 %4174, %v288
      %v4176 = vpop.permute.xlu0 %4175
      %4178 = vset.pattern.permute.xlu0 8
      %4179 = vperm.xlu0 %4178, %v289
      %v4180 = vpop.permute.xlu0 %4179
      %4182 = vset.pattern.permute.xlu0 8
      %4183 = vperm.xlu0 %4182, %v290
      %v4184 = vpop.permute.xlu0 %4183
      %4186 = vset.pattern.permute.xlu0 8
      %4187 = vperm.xlu0 %4186, %v291
      %v4188 = vpop.permute.xlu0 %4187
      %4190 = vset.pattern.permute.xlu0 8
      %4191 = vperm.xlu0 %4190, %v292
      %v4192 = vpop.permute.xlu0 %4191
      %4194 = vset.pattern.permute.xlu0 8
      %4195 = vperm.xlu0 %4194, %v293
      %v4196 = vpop.permute.xlu0 %4195
      %4198 = vset.pattern.permute.xlu0 8
      %4199 = vperm.xlu0 %4198, %v294
      %v4200 = vpop.permute.xlu0 %4199
      %4202 = vset.pattern.permute.xlu0 8
      %4203 = vperm.xlu0 %4202, %v295
      %v4204 = vpop.permute.xlu0 %4203
      %4206 = vset.pattern.permute.xlu0 8
      %4207 = vperm.xlu0 %4206, %v296
      %v4208 = vpop.permute.xlu0 %4207
      %4210 = vset.pattern.permute.xlu0 8
      %4211 = vperm.xlu0 %4210, %v297
      %v4212 = vpop.permute.xlu0 %4211
      %4214 = vset.pattern.permute.xlu0 8
      %4215 = vperm.xlu0 %4214, %v298
      %v4216 = vpop.permute.xlu0 %4215
      %4218 = vset.pattern.permute.xlu0 8
      %4219 = vperm.xlu0 %4218, %v299
      %v4220 = vpop.permute.xlu0 %4219
      %4222 = vset.pattern.permute.xlu0 8
      %4223 = vperm.xlu0 %4222, %v300
      %v4224 = vpop.permute.xlu0 %4223
      %4226 = vset.pattern.permute.xlu0 8
      %4227 = vperm.xlu0 %4226, %v301
      %v4228 = vpop.permute.xlu0 %4227
      %4230 = vset.pattern.permute.xlu0 8
      %4231 = vperm.xlu0 %4230, %v302
      %v4232 = vpop.permute.xlu0 %4231
      %4234 = vset.pattern.permute.xlu0 8
      %4235 = vperm.xlu0 %4234, %v303
      %v4236 = vpop.permute.xlu0 %4235
      %4238 = vset.pattern.permute.xlu0 8
      %4239 = vperm.xlu0 %4238, %v304
      %v4240 = vpop.permute.xlu0 %4239
      %4242 = vset.pattern.permute.xlu0 8
      %4243 = vperm.xlu0 %4242, %v305
      %v4244 = vpop.permute.xlu0 %4243
      %4246 = vset.pattern.permute.xlu0 8
      %4247 = vperm.xlu0 %4246, %v306
      %v4248 = vpop.permute.xlu0 %4247
      %4250 = vset.pattern.permute.xlu0 8
      %4251 = vperm.xlu0 %4250, %v307
      %v4252 = vpop.permute.xlu0 %4251
      %4254 = vset.pattern.permute.xlu0 8
      %4255 = vperm.xlu0 %4254, %v308
      %v4256 = vpop.permute.xlu0 %4255
      %4258 = vset.pattern.permute.xlu0 8
      %4259 = vperm.xlu0 %4258, %v309
      %v4260 = vpop.permute.xlu0 %4259
      %4262 = vset.pattern.permute.xlu0 8
      %4263 = vperm.xlu0 %4262, %v310
      %v4264 = vpop.permute.xlu0 %4263
      %4266 = vset.pattern.permute.xlu0 8
      %4267 = vperm.xlu0 %4266, %v311
      %v4268 = vpop.permute.xlu0 %4267
      %4270 = vset.pattern.permute.xlu0 8
      %4271 = vperm.xlu0 %4270, %v312
      %v4272 = vpop.permute.xlu0 %4271
      %4274 = vset.pattern.permute.xlu0 8
      %4275 = vperm.xlu0 %4274, %v313
      %v4276 = vpop.permute.xlu0 %4275
      %4278 = vset.pattern.permute.xlu0 8
      %4279 = vperm.xlu0 %4278, %v314
      %v4280 = vpop.permute.xlu0 %4279
      %4282 = vset.pattern.permute.xlu0 8
      %4283 = vperm.xlu0 %4282, %v315
      %v4284 = vpop.permute.xlu0 %4283
      %4286 = vset.pattern.permute.xlu0 8
      %4287 = vperm.xlu0 %4286, %v316
      %v4288 = vpop.permute.xlu0 %4287
      %4290 = vset.pattern.permute.xlu0 8
      %4291 = vperm.xlu0 %4290, %v317
      %v4292 = vpop.permute.xlu0 %4291
      %4294 = vset.pattern.permute.xlu0 8
      %4295 = vperm.xlu0 %4294, %v318
      %v4296 = vpop.permute.xlu0 %4295
      %4298 = vset.pattern.permute.xlu0 8
      %4299 = vperm.xlu0 %4298, %v319
      %v4300 = vpop.permute.xlu0 %4299
      %4302 = vset.pattern.permute.xlu0 8
      %4303 = vperm.xlu0 %4302, %v320
      %v4304 = vpop.permute.xlu0 %4303
      %v4306 = vlaneseq
      %v4307 = vshrl.u32 %v4306, 7
      %v4308 = vsub.s32 0, %v4307
      %v4309 = vrot.slane %v377, %v4308
      %v4310 = vmul.f32 %v4104, %v4309
      %v4311 = vmul.f32 %v4108, %v4309
      %v4312 = vmul.f32 %v4112, %v4309
      %v4313 = vmul.f32 %v4116, %v4309
      %v4314 = vmul.f32 %v4120, %v4309
      %v4315 = vmul.f32 %v4124, %v4309
      %v4316 = vmul.f32 %v4128, %v4309
      %v4317 = vmul.f32 %v4132, %v4309
      %v4318 = vmul.f32 %v4136, %v4309
      %v4319 = vmul.f32 %v4140, %v4309
      %v4320 = vmul.f32 %v4144, %v4309
      %v4321 = vmul.f32 %v4148, %v4309
      %v4322 = vmul.f32 %v4152, %v4309
      %v4323 = vmul.f32 %v4156, %v4309
      %v4324 = vmul.f32 %v4160, %v4309
      %v4325 = vmul.f32 %v4164, %v4309
      %v4326 = vmul.f32 %v4168, %v4309
      %v4327 = vmul.f32 %v4172, %v4309
      %v4328 = vmul.f32 %v4176, %v4309
      %v4329 = vmul.f32 %v4180, %v4309
      %v4330 = vmul.f32 %v4184, %v4309
      %v4331 = vmul.f32 %v4188, %v4309
      %v4332 = vmul.f32 %v4192, %v4309
      %v4333 = vmul.f32 %v4196, %v4309
      %v4334 = vmul.f32 %v4200, %v4309
      %v4335 = vmul.f32 %v4204, %v4309
      %v4336 = vmul.f32 %v4208, %v4309
      %v4337 = vmul.f32 %v4212, %v4309
      %v4338 = vmul.f32 %v4216, %v4309
      %v4339 = vmul.f32 %v4220, %v4309
      %v4340 = vmul.f32 %v4224, %v4309
      %v4341 = vmul.f32 %v4228, %v4309
      %v4342 = vmul.f32 %v4232, %v4309
      %v4343 = vmul.f32 %v4236, %v4309
      %v4344 = vmul.f32 %v4240, %v4309
      %v4345 = vmul.f32 %v4244, %v4309
      %v4346 = vmul.f32 %v4248, %v4309
      %v4347 = vmul.f32 %v4252, %v4309
      %v4348 = vmul.f32 %v4256, %v4309
      %v4349 = vmul.f32 %v4260, %v4309
      %v4350 = vmul.f32 %v4264, %v4309
      %v4351 = vmul.f32 %v4268, %v4309
      %v4352 = vmul.f32 %v4272, %v4309
      %v4353 = vmul.f32 %v4276, %v4309
      %v4354 = vmul.f32 %v4280, %v4309
      %v4355 = vmul.f32 %v4284, %v4309
      %v4356 = vmul.f32 %v4288, %v4309
      %v4357 = vmul.f32 %v4292, %v4309
      %v4358 = vmul.f32 %v4296, %v4309
      %v4359 = vmul.f32 %v4300, %v4309
      %v4360 = vmul.f32 %v4304, %v4309
      %v4361 = vadd.f32 %v4051, %v4310
      %v4362 = vadd.f32 %v4052, %v4311
      %v4363 = vadd.f32 %v4053, %v4312
      %v4364 = vadd.f32 %v4054, %v4313
      %v4365 = vadd.f32 %v4055, %v4314
      %v4366 = vadd.f32 %v4056, %v4315
      %v4367 = vadd.f32 %v4057, %v4316
      %v4368 = vadd.f32 %v4058, %v4317
      %v4369 = vadd.f32 %v4059, %v4318
      %v4370 = vadd.f32 %v4060, %v4319
      %v4371 = vadd.f32 %v4061, %v4320
      %v4372 = vadd.f32 %v4062, %v4321
      %v4373 = vadd.f32 %v4063, %v4322
      %v4374 = vadd.f32 %v4064, %v4323
      %v4375 = vadd.f32 %v4065, %v4324
      %v4376 = vadd.f32 %v4066, %v4325
      %v4377 = vadd.f32 %v4067, %v4326
      %v4378 = vadd.f32 %v4068, %v4327
      %v4379 = vadd.f32 %v4069, %v4328
      %v4380 = vadd.f32 %v4070, %v4329
      %v4381 = vadd.f32 %v4071, %v4330
      %v4382 = vadd.f32 %v4072, %v4331
      %v4383 = vadd.f32 %v4073, %v4332
      %v4384 = vadd.f32 %v4074, %v4333
      %v4385 = vadd.f32 %v4075, %v4334
      %v4386 = vadd.f32 %v4076, %v4335
      %v4387 = vadd.f32 %v4077, %v4336
      %v4388 = vadd.f32 %v4078, %v4337
      %v4389 = vadd.f32 %v4079, %v4338
      %v4390 = vadd.f32 %v4080, %v4339
      %v4391 = vadd.f32 %v4081, %v4340
      %v4392 = vadd.f32 %v4082, %v4341
      %v4393 = vadd.f32 %v4083, %v4342
      %v4394 = vadd.f32 %v4084, %v4343
      %v4395 = vadd.f32 %v4085, %v4344
      %v4396 = vadd.f32 %v4086, %v4345
      %v4397 = vadd.f32 %v4087, %v4346
      %v4398 = vadd.f32 %v4088, %v4347
      %v4399 = vadd.f32 %v4089, %v4348
      %v4400 = vadd.f32 %v4090, %v4349
      %v4401 = vadd.f32 %v4091, %v4350
      %v4402 = vadd.f32 %v4092, %v4351
      %v4403 = vadd.f32 %v4093, %v4352
      %v4404 = vadd.f32 %v4094, %v4353
      %v4405 = vadd.f32 %v4095, %v4354
      %v4406 = vadd.f32 %v4096, %v4355
      %v4407 = vadd.f32 %v4097, %v4356
      %v4408 = vadd.f32 %v4098, %v4357
      %v4409 = vadd.f32 %v4099, %v4358
      %v4410 = vadd.f32 %v4100, %v4359
      %v4411 = vadd.f32 %v4101, %v4360
      %4412 = vset.pattern.permute.xlu0 9
      %4413 = vperm.xlu0 %4412, %v270
      %v4414 = vpop.permute.xlu0 %4413
      %4416 = vset.pattern.permute.xlu0 9
      %4417 = vperm.xlu0 %4416, %v271
      %v4418 = vpop.permute.xlu0 %4417
      %4420 = vset.pattern.permute.xlu0 9
      %4421 = vperm.xlu0 %4420, %v272
      %v4422 = vpop.permute.xlu0 %4421
      %4424 = vset.pattern.permute.xlu0 9
      %4425 = vperm.xlu0 %4424, %v273
      %v4426 = vpop.permute.xlu0 %4425
      %4428 = vset.pattern.permute.xlu0 9
      %4429 = vperm.xlu0 %4428, %v274
      %v4430 = vpop.permute.xlu0 %4429
      %4432 = vset.pattern.permute.xlu0 9
      %4433 = vperm.xlu0 %4432, %v275
      %v4434 = vpop.permute.xlu0 %4433
      %4436 = vset.pattern.permute.xlu0 9
      %4437 = vperm.xlu0 %4436, %v276
      %v4438 = vpop.permute.xlu0 %4437
      %4440 = vset.pattern.permute.xlu0 9
      %4441 = vperm.xlu0 %4440, %v277
      %v4442 = vpop.permute.xlu0 %4441
      %4444 = vset.pattern.permute.xlu0 9
      %4445 = vperm.xlu0 %4444, %v278
      %v4446 = vpop.permute.xlu0 %4445
      %4448 = vset.pattern.permute.xlu0 9
      %4449 = vperm.xlu0 %4448, %v279
      %v4450 = vpop.permute.xlu0 %4449
      %4452 = vset.pattern.permute.xlu0 9
      %4453 = vperm.xlu0 %4452, %v280
      %v4454 = vpop.permute.xlu0 %4453
      %4456 = vset.pattern.permute.xlu0 9
      %4457 = vperm.xlu0 %4456, %v281
      %v4458 = vpop.permute.xlu0 %4457
      %4460 = vset.pattern.permute.xlu0 9
      %4461 = vperm.xlu0 %4460, %v282
      %v4462 = vpop.permute.xlu0 %4461
      %4464 = vset.pattern.permute.xlu0 9
      %4465 = vperm.xlu0 %4464, %v283
      %v4466 = vpop.permute.xlu0 %4465
      %4468 = vset.pattern.permute.xlu0 9
      %4469 = vperm.xlu0 %4468, %v284
      %v4470 = vpop.permute.xlu0 %4469
      %4472 = vset.pattern.permute.xlu0 9
      %4473 = vperm.xlu0 %4472, %v285
      %v4474 = vpop.permute.xlu0 %4473
      %4476 = vset.pattern.permute.xlu0 9
      %4477 = vperm.xlu0 %4476, %v286
      %v4478 = vpop.permute.xlu0 %4477
      %4480 = vset.pattern.permute.xlu0 9
      %4481 = vperm.xlu0 %4480, %v287
      %v4482 = vpop.permute.xlu0 %4481
      %4484 = vset.pattern.permute.xlu0 9
      %4485 = vperm.xlu0 %4484, %v288
      %v4486 = vpop.permute.xlu0 %4485
      %4488 = vset.pattern.permute.xlu0 9
      %4489 = vperm.xlu0 %4488, %v289
      %v4490 = vpop.permute.xlu0 %4489
      %4492 = vset.pattern.permute.xlu0 9
      %4493 = vperm.xlu0 %4492, %v290
      %v4494 = vpop.permute.xlu0 %4493
      %4496 = vset.pattern.permute.xlu0 9
      %4497 = vperm.xlu0 %4496, %v291
      %v4498 = vpop.permute.xlu0 %4497
      %4500 = vset.pattern.permute.xlu0 9
      %4501 = vperm.xlu0 %4500, %v292
      %v4502 = vpop.permute.xlu0 %4501
      %4504 = vset.pattern.permute.xlu0 9
      %4505 = vperm.xlu0 %4504, %v293
      %v4506 = vpop.permute.xlu0 %4505
      %4508 = vset.pattern.permute.xlu0 9
      %4509 = vperm.xlu0 %4508, %v294
      %v4510 = vpop.permute.xlu0 %4509
      %4512 = vset.pattern.permute.xlu0 9
      %4513 = vperm.xlu0 %4512, %v295
      %v4514 = vpop.permute.xlu0 %4513
      %4516 = vset.pattern.permute.xlu0 9
      %4517 = vperm.xlu0 %4516, %v296
      %v4518 = vpop.permute.xlu0 %4517
      %4520 = vset.pattern.permute.xlu0 9
      %4521 = vperm.xlu0 %4520, %v297
      %v4522 = vpop.permute.xlu0 %4521
      %4524 = vset.pattern.permute.xlu0 9
      %4525 = vperm.xlu0 %4524, %v298
      %v4526 = vpop.permute.xlu0 %4525
      %4528 = vset.pattern.permute.xlu0 9
      %4529 = vperm.xlu0 %4528, %v299
      %v4530 = vpop.permute.xlu0 %4529
      %4532 = vset.pattern.permute.xlu0 9
      %4533 = vperm.xlu0 %4532, %v300
      %v4534 = vpop.permute.xlu0 %4533
      %4536 = vset.pattern.permute.xlu0 9
      %4537 = vperm.xlu0 %4536, %v301
      %v4538 = vpop.permute.xlu0 %4537
      %4540 = vset.pattern.permute.xlu0 9
      %4541 = vperm.xlu0 %4540, %v302
      %v4542 = vpop.permute.xlu0 %4541
      %4544 = vset.pattern.permute.xlu0 9
      %4545 = vperm.xlu0 %4544, %v303
      %v4546 = vpop.permute.xlu0 %4545
      %4548 = vset.pattern.permute.xlu0 9
      %4549 = vperm.xlu0 %4548, %v304
      %v4550 = vpop.permute.xlu0 %4549
      %4552 = vset.pattern.permute.xlu0 9
      %4553 = vperm.xlu0 %4552, %v305
      %v4554 = vpop.permute.xlu0 %4553
      %4556 = vset.pattern.permute.xlu0 9
      %4557 = vperm.xlu0 %4556, %v306
      %v4558 = vpop.permute.xlu0 %4557
      %4560 = vset.pattern.permute.xlu0 9
      %4561 = vperm.xlu0 %4560, %v307
      %v4562 = vpop.permute.xlu0 %4561
      %4564 = vset.pattern.permute.xlu0 9
      %4565 = vperm.xlu0 %4564, %v308
      %v4566 = vpop.permute.xlu0 %4565
      %4568 = vset.pattern.permute.xlu0 9
      %4569 = vperm.xlu0 %4568, %v309
      %v4570 = vpop.permute.xlu0 %4569
      %4572 = vset.pattern.permute.xlu0 9
      %4573 = vperm.xlu0 %4572, %v310
      %v4574 = vpop.permute.xlu0 %4573
      %4576 = vset.pattern.permute.xlu0 9
      %4577 = vperm.xlu0 %4576, %v311
      %v4578 = vpop.permute.xlu0 %4577
      %4580 = vset.pattern.permute.xlu0 9
      %4581 = vperm.xlu0 %4580, %v312
      %v4582 = vpop.permute.xlu0 %4581
      %4584 = vset.pattern.permute.xlu0 9
      %4585 = vperm.xlu0 %4584, %v313
      %v4586 = vpop.permute.xlu0 %4585
      %4588 = vset.pattern.permute.xlu0 9
      %4589 = vperm.xlu0 %4588, %v314
      %v4590 = vpop.permute.xlu0 %4589
      %4592 = vset.pattern.permute.xlu0 9
      %4593 = vperm.xlu0 %4592, %v315
      %v4594 = vpop.permute.xlu0 %4593
      %4596 = vset.pattern.permute.xlu0 9
      %4597 = vperm.xlu0 %4596, %v316
      %v4598 = vpop.permute.xlu0 %4597
      %4600 = vset.pattern.permute.xlu0 9
      %4601 = vperm.xlu0 %4600, %v317
      %v4602 = vpop.permute.xlu0 %4601
      %4604 = vset.pattern.permute.xlu0 9
      %4605 = vperm.xlu0 %4604, %v318
      %v4606 = vpop.permute.xlu0 %4605
      %4608 = vset.pattern.permute.xlu0 9
      %4609 = vperm.xlu0 %4608, %v319
      %v4610 = vpop.permute.xlu0 %4609
      %4612 = vset.pattern.permute.xlu0 9
      %4613 = vperm.xlu0 %4612, %v320
      %v4614 = vpop.permute.xlu0 %4613
      %v4616 = vlaneseq
      %v4617 = vshrl.u32 %v4616, 7
      %v4618 = vsub.s32 1, %v4617
      %v4619 = vrot.slane %v377, %v4618
      %v4620 = vmul.f32 %v4414, %v4619
      %v4621 = vmul.f32 %v4418, %v4619
      %v4622 = vmul.f32 %v4422, %v4619
      %v4623 = vmul.f32 %v4426, %v4619
      %v4624 = vmul.f32 %v4430, %v4619
      %v4625 = vmul.f32 %v4434, %v4619
      %v4626 = vmul.f32 %v4438, %v4619
      %v4627 = vmul.f32 %v4442, %v4619
      %v4628 = vmul.f32 %v4446, %v4619
      %v4629 = vmul.f32 %v4450, %v4619
      %v4630 = vmul.f32 %v4454, %v4619
      %v4631 = vmul.f32 %v4458, %v4619
      %v4632 = vmul.f32 %v4462, %v4619
      %v4633 = vmul.f32 %v4466, %v4619
      %v4634 = vmul.f32 %v4470, %v4619
      %v4635 = vmul.f32 %v4474, %v4619
      %v4636 = vmul.f32 %v4478, %v4619
      %v4637 = vmul.f32 %v4482, %v4619
      %v4638 = vmul.f32 %v4486, %v4619
      %v4639 = vmul.f32 %v4490, %v4619
      %v4640 = vmul.f32 %v4494, %v4619
      %v4641 = vmul.f32 %v4498, %v4619
      %v4642 = vmul.f32 %v4502, %v4619
      %v4643 = vmul.f32 %v4506, %v4619
      %v4644 = vmul.f32 %v4510, %v4619
      %v4645 = vmul.f32 %v4514, %v4619
      %v4646 = vmul.f32 %v4518, %v4619
      %v4647 = vmul.f32 %v4522, %v4619
      %v4648 = vmul.f32 %v4526, %v4619
      %v4649 = vmul.f32 %v4530, %v4619
      %v4650 = vmul.f32 %v4534, %v4619
      %v4651 = vmul.f32 %v4538, %v4619
      %v4652 = vmul.f32 %v4542, %v4619
      %v4653 = vmul.f32 %v4546, %v4619
      %v4654 = vmul.f32 %v4550, %v4619
      %v4655 = vmul.f32 %v4554, %v4619
      %v4656 = vmul.f32 %v4558, %v4619
      %v4657 = vmul.f32 %v4562, %v4619
      %v4658 = vmul.f32 %v4566, %v4619
      %v4659 = vmul.f32 %v4570, %v4619
      %v4660 = vmul.f32 %v4574, %v4619
      %v4661 = vmul.f32 %v4578, %v4619
      %v4662 = vmul.f32 %v4582, %v4619
      %v4663 = vmul.f32 %v4586, %v4619
      %v4664 = vmul.f32 %v4590, %v4619
      %v4665 = vmul.f32 %v4594, %v4619
      %v4666 = vmul.f32 %v4598, %v4619
      %v4667 = vmul.f32 %v4602, %v4619
      %v4668 = vmul.f32 %v4606, %v4619
      %v4669 = vmul.f32 %v4610, %v4619
      %v4670 = vmul.f32 %v4614, %v4619
      %v4671 = vadd.f32 %v4361, %v4620
      %v4672 = vadd.f32 %v4362, %v4621
      %v4673 = vadd.f32 %v4363, %v4622
      %v4674 = vadd.f32 %v4364, %v4623
      %v4675 = vadd.f32 %v4365, %v4624
      %v4676 = vadd.f32 %v4366, %v4625
      %v4677 = vadd.f32 %v4367, %v4626
      %v4678 = vadd.f32 %v4368, %v4627
      %v4679 = vadd.f32 %v4369, %v4628
      %v4680 = vadd.f32 %v4370, %v4629
      %v4681 = vadd.f32 %v4371, %v4630
      %v4682 = vadd.f32 %v4372, %v4631
      %v4683 = vadd.f32 %v4373, %v4632
      %v4684 = vadd.f32 %v4374, %v4633
      %v4685 = vadd.f32 %v4375, %v4634
      %v4686 = vadd.f32 %v4376, %v4635
      %v4687 = vadd.f32 %v4377, %v4636
      %v4688 = vadd.f32 %v4378, %v4637
      %v4689 = vadd.f32 %v4379, %v4638
      %v4690 = vadd.f32 %v4380, %v4639
      %v4691 = vadd.f32 %v4381, %v4640
      %v4692 = vadd.f32 %v4382, %v4641
      %v4693 = vadd.f32 %v4383, %v4642
      %v4694 = vadd.f32 %v4384, %v4643
      %v4695 = vadd.f32 %v4385, %v4644
      %v4696 = vadd.f32 %v4386, %v4645
      %v4697 = vadd.f32 %v4387, %v4646
      %v4698 = vadd.f32 %v4388, %v4647
      %v4699 = vadd.f32 %v4389, %v4648
      %v4700 = vadd.f32 %v4390, %v4649
      %v4701 = vadd.f32 %v4391, %v4650
      %v4702 = vadd.f32 %v4392, %v4651
      %v4703 = vadd.f32 %v4393, %v4652
      %v4704 = vadd.f32 %v4394, %v4653
      %v4705 = vadd.f32 %v4395, %v4654
      %v4706 = vadd.f32 %v4396, %v4655
      %v4707 = vadd.f32 %v4397, %v4656
      %v4708 = vadd.f32 %v4398, %v4657
      %v4709 = vadd.f32 %v4399, %v4658
      %v4710 = vadd.f32 %v4400, %v4659
      %v4711 = vadd.f32 %v4401, %v4660
      %v4712 = vadd.f32 %v4402, %v4661
      %v4713 = vadd.f32 %v4403, %v4662
      %v4714 = vadd.f32 %v4404, %v4663
      %v4715 = vadd.f32 %v4405, %v4664
      %v4716 = vadd.f32 %v4406, %v4665
      %v4717 = vadd.f32 %v4407, %v4666
      %v4718 = vadd.f32 %v4408, %v4667
      %v4719 = vadd.f32 %v4409, %v4668
      %v4720 = vadd.f32 %v4410, %v4669
      %v4721 = vadd.f32 %v4411, %v4670
      %4722 = vset.pattern.permute.xlu0 10
      %4723 = vperm.xlu0 %4722, %v270
      %v4724 = vpop.permute.xlu0 %4723
      %4726 = vset.pattern.permute.xlu0 10
      %4727 = vperm.xlu0 %4726, %v271
      %v4728 = vpop.permute.xlu0 %4727
      %4730 = vset.pattern.permute.xlu0 10
      %4731 = vperm.xlu0 %4730, %v272
      %v4732 = vpop.permute.xlu0 %4731
      %4734 = vset.pattern.permute.xlu0 10
      %4735 = vperm.xlu0 %4734, %v273
      %v4736 = vpop.permute.xlu0 %4735
      %4738 = vset.pattern.permute.xlu0 10
      %4739 = vperm.xlu0 %4738, %v274
      %v4740 = vpop.permute.xlu0 %4739
      %4742 = vset.pattern.permute.xlu0 10
      %4743 = vperm.xlu0 %4742, %v275
      %v4744 = vpop.permute.xlu0 %4743
      %4746 = vset.pattern.permute.xlu0 10
      %4747 = vperm.xlu0 %4746, %v276
      %v4748 = vpop.permute.xlu0 %4747
      %4750 = vset.pattern.permute.xlu0 10
      %4751 = vperm.xlu0 %4750, %v277
      %v4752 = vpop.permute.xlu0 %4751
      %4754 = vset.pattern.permute.xlu0 10
      %4755 = vperm.xlu0 %4754, %v278
      %v4756 = vpop.permute.xlu0 %4755
      %4758 = vset.pattern.permute.xlu0 10
      %4759 = vperm.xlu0 %4758, %v279
      %v4760 = vpop.permute.xlu0 %4759
      %4762 = vset.pattern.permute.xlu0 10
      %4763 = vperm.xlu0 %4762, %v280
      %v4764 = vpop.permute.xlu0 %4763
      %4766 = vset.pattern.permute.xlu0 10
      %4767 = vperm.xlu0 %4766, %v281
      %v4768 = vpop.permute.xlu0 %4767
      %4770 = vset.pattern.permute.xlu0 10
      %4771 = vperm.xlu0 %4770, %v282
      %v4772 = vpop.permute.xlu0 %4771
      %4774 = vset.pattern.permute.xlu0 10
      %4775 = vperm.xlu0 %4774, %v283
      %v4776 = vpop.permute.xlu0 %4775
      %4778 = vset.pattern.permute.xlu0 10
      %4779 = vperm.xlu0 %4778, %v284
      %v4780 = vpop.permute.xlu0 %4779
      %4782 = vset.pattern.permute.xlu0 10
      %4783 = vperm.xlu0 %4782, %v285
      %v4784 = vpop.permute.xlu0 %4783
      %4786 = vset.pattern.permute.xlu0 10
      %4787 = vperm.xlu0 %4786, %v286
      %v4788 = vpop.permute.xlu0 %4787
      %4790 = vset.pattern.permute.xlu0 10
      %4791 = vperm.xlu0 %4790, %v287
      %v4792 = vpop.permute.xlu0 %4791
      %4794 = vset.pattern.permute.xlu0 10
      %4795 = vperm.xlu0 %4794, %v288
      %v4796 = vpop.permute.xlu0 %4795
      %4798 = vset.pattern.permute.xlu0 10
      %4799 = vperm.xlu0 %4798, %v289
      %v4800 = vpop.permute.xlu0 %4799
      %4802 = vset.pattern.permute.xlu0 10
      %4803 = vperm.xlu0 %4802, %v290
      %v4804 = vpop.permute.xlu0 %4803
      %4806 = vset.pattern.permute.xlu0 10
      %4807 = vperm.xlu0 %4806, %v291
      %v4808 = vpop.permute.xlu0 %4807
      %4810 = vset.pattern.permute.xlu0 10
      %4811 = vperm.xlu0 %4810, %v292
      %v4812 = vpop.permute.xlu0 %4811
      %4814 = vset.pattern.permute.xlu0 10
      %4815 = vperm.xlu0 %4814, %v293
      %v4816 = vpop.permute.xlu0 %4815
      %4818 = vset.pattern.permute.xlu0 10
      %4819 = vperm.xlu0 %4818, %v294
      %v4820 = vpop.permute.xlu0 %4819
      %4822 = vset.pattern.permute.xlu0 10
      %4823 = vperm.xlu0 %4822, %v295
      %v4824 = vpop.permute.xlu0 %4823
      %4826 = vset.pattern.permute.xlu0 10
      %4827 = vperm.xlu0 %4826, %v296
      %v4828 = vpop.permute.xlu0 %4827
      %4830 = vset.pattern.permute.xlu0 10
      %4831 = vperm.xlu0 %4830, %v297
      %v4832 = vpop.permute.xlu0 %4831
      %4834 = vset.pattern.permute.xlu0 10
      %4835 = vperm.xlu0 %4834, %v298
      %v4836 = vpop.permute.xlu0 %4835
      %4838 = vset.pattern.permute.xlu0 10
      %4839 = vperm.xlu0 %4838, %v299
      %v4840 = vpop.permute.xlu0 %4839
      %4842 = vset.pattern.permute.xlu0 10
      %4843 = vperm.xlu0 %4842, %v300
      %v4844 = vpop.permute.xlu0 %4843
      %4846 = vset.pattern.permute.xlu0 10
      %4847 = vperm.xlu0 %4846, %v301
      %v4848 = vpop.permute.xlu0 %4847
      %4850 = vset.pattern.permute.xlu0 10
      %4851 = vperm.xlu0 %4850, %v302
      %v4852 = vpop.permute.xlu0 %4851
      %4854 = vset.pattern.permute.xlu0 10
      %4855 = vperm.xlu0 %4854, %v303
      %v4856 = vpop.permute.xlu0 %4855
      %4858 = vset.pattern.permute.xlu0 10
      %4859 = vperm.xlu0 %4858, %v304
      %v4860 = vpop.permute.xlu0 %4859
      %4862 = vset.pattern.permute.xlu0 10
      %4863 = vperm.xlu0 %4862, %v305
      %v4864 = vpop.permute.xlu0 %4863
      %4866 = vset.pattern.permute.xlu0 10
      %4867 = vperm.xlu0 %4866, %v306
      %v4868 = vpop.permute.xlu0 %4867
      %4870 = vset.pattern.permute.xlu0 10
      %4871 = vperm.xlu0 %4870, %v307
      %v4872 = vpop.permute.xlu0 %4871
      %4874 = vset.pattern.permute.xlu0 10
      %4875 = vperm.xlu0 %4874, %v308
      %v4876 = vpop.permute.xlu0 %4875
      %4878 = vset.pattern.permute.xlu0 10
      %4879 = vperm.xlu0 %4878, %v309
      %v4880 = vpop.permute.xlu0 %4879
      %4882 = vset.pattern.permute.xlu0 10
      %4883 = vperm.xlu0 %4882, %v310
      %v4884 = vpop.permute.xlu0 %4883
      %4886 = vset.pattern.permute.xlu0 10
      %4887 = vperm.xlu0 %4886, %v311
      %v4888 = vpop.permute.xlu0 %4887
      %4890 = vset.pattern.permute.xlu0 10
      %4891 = vperm.xlu0 %4890, %v312
      %v4892 = vpop.permute.xlu0 %4891
      %4894 = vset.pattern.permute.xlu0 10
      %4895 = vperm.xlu0 %4894, %v313
      %v4896 = vpop.permute.xlu0 %4895
      %4898 = vset.pattern.permute.xlu0 10
      %4899 = vperm.xlu0 %4898, %v314
      %v4900 = vpop.permute.xlu0 %4899
      %4902 = vset.pattern.permute.xlu0 10
      %4903 = vperm.xlu0 %4902, %v315
      %v4904 = vpop.permute.xlu0 %4903
      %4906 = vset.pattern.permute.xlu0 10
      %4907 = vperm.xlu0 %4906, %v316
      %v4908 = vpop.permute.xlu0 %4907
      %4910 = vset.pattern.permute.xlu0 10
      %4911 = vperm.xlu0 %4910, %v317
      %v4912 = vpop.permute.xlu0 %4911
      %4914 = vset.pattern.permute.xlu0 10
      %4915 = vperm.xlu0 %4914, %v318
      %v4916 = vpop.permute.xlu0 %4915
      %4918 = vset.pattern.permute.xlu0 10
      %4919 = vperm.xlu0 %4918, %v319
      %v4920 = vpop.permute.xlu0 %4919
      %4922 = vset.pattern.permute.xlu0 10
      %4923 = vperm.xlu0 %4922, %v320
      %v4924 = vpop.permute.xlu0 %4923
      %v4926 = vlaneseq
      %v4927 = vshrl.u32 %v4926, 7
      %v4928 = vsub.s32 2, %v4927
      %v4929 = vrot.slane %v377, %v4928
      %v4930 = vmul.f32 %v4724, %v4929
      %v4931 = vmul.f32 %v4728, %v4929
      %v4932 = vmul.f32 %v4732, %v4929
      %v4933 = vmul.f32 %v4736, %v4929
      %v4934 = vmul.f32 %v4740, %v4929
      %v4935 = vmul.f32 %v4744, %v4929
      %v4936 = vmul.f32 %v4748, %v4929
      %v4937 = vmul.f32 %v4752, %v4929
      %v4938 = vmul.f32 %v4756, %v4929
      %v4939 = vmul.f32 %v4760, %v4929
      %v4940 = vmul.f32 %v4764, %v4929
      %v4941 = vmul.f32 %v4768, %v4929
      %v4942 = vmul.f32 %v4772, %v4929
      %v4943 = vmul.f32 %v4776, %v4929
      %v4944 = vmul.f32 %v4780, %v4929
      %v4945 = vmul.f32 %v4784, %v4929
      %v4946 = vmul.f32 %v4788, %v4929
      %v4947 = vmul.f32 %v4792, %v4929
      %v4948 = vmul.f32 %v4796, %v4929
      %v4949 = vmul.f32 %v4800, %v4929
      %v4950 = vmul.f32 %v4804, %v4929
      %v4951 = vmul.f32 %v4808, %v4929
      %v4952 = vmul.f32 %v4812, %v4929
      %v4953 = vmul.f32 %v4816, %v4929
      %v4954 = vmul.f32 %v4820, %v4929
      %v4955 = vmul.f32 %v4824, %v4929
      %v4956 = vmul.f32 %v4828, %v4929
      %v4957 = vmul.f32 %v4832, %v4929
      %v4958 = vmul.f32 %v4836, %v4929
      %v4959 = vmul.f32 %v4840, %v4929
      %v4960 = vmul.f32 %v4844, %v4929
      %v4961 = vmul.f32 %v4848, %v4929
      %v4962 = vmul.f32 %v4852, %v4929
      %v4963 = vmul.f32 %v4856, %v4929
      %v4964 = vmul.f32 %v4860, %v4929
      %v4965 = vmul.f32 %v4864, %v4929
      %v4966 = vmul.f32 %v4868, %v4929
      %v4967 = vmul.f32 %v4872, %v4929
      %v4968 = vmul.f32 %v4876, %v4929
      %v4969 = vmul.f32 %v4880, %v4929
      %v4970 = vmul.f32 %v4884, %v4929
      %v4971 = vmul.f32 %v4888, %v4929
      %v4972 = vmul.f32 %v4892, %v4929
      %v4973 = vmul.f32 %v4896, %v4929
      %v4974 = vmul.f32 %v4900, %v4929
      %v4975 = vmul.f32 %v4904, %v4929
      %v4976 = vmul.f32 %v4908, %v4929
      %v4977 = vmul.f32 %v4912, %v4929
      %v4978 = vmul.f32 %v4916, %v4929
      %v4979 = vmul.f32 %v4920, %v4929
      %v4980 = vmul.f32 %v4924, %v4929
      %v4981 = vadd.f32 %v4671, %v4930
      %v4982 = vadd.f32 %v4672, %v4931
      %v4983 = vadd.f32 %v4673, %v4932
      %v4984 = vadd.f32 %v4674, %v4933
      %v4985 = vadd.f32 %v4675, %v4934
      %v4986 = vadd.f32 %v4676, %v4935
      %v4987 = vadd.f32 %v4677, %v4936
      %v4988 = vadd.f32 %v4678, %v4937
      %v4989 = vadd.f32 %v4679, %v4938
      %v4990 = vadd.f32 %v4680, %v4939
      %v4991 = vadd.f32 %v4681, %v4940
      %v4992 = vadd.f32 %v4682, %v4941
      %v4993 = vadd.f32 %v4683, %v4942
      %v4994 = vadd.f32 %v4684, %v4943
      %v4995 = vadd.f32 %v4685, %v4944
      %v4996 = vadd.f32 %v4686, %v4945
      %v4997 = vadd.f32 %v4687, %v4946
      %v4998 = vadd.f32 %v4688, %v4947
      %v4999 = vadd.f32 %v4689, %v4948
      %v5000 = vadd.f32 %v4690, %v4949
      %v5001 = vadd.f32 %v4691, %v4950
      %v5002 = vadd.f32 %v4692, %v4951
      %v5003 = vadd.f32 %v4693, %v4952
      %v5004 = vadd.f32 %v4694, %v4953
      %v5005 = vadd.f32 %v4695, %v4954
      %v5006 = vadd.f32 %v4696, %v4955
      %v5007 = vadd.f32 %v4697, %v4956
      %v5008 = vadd.f32 %v4698, %v4957
      %v5009 = vadd.f32 %v4699, %v4958
      %v5010 = vadd.f32 %v4700, %v4959
      %v5011 = vadd.f32 %v4701, %v4960
      %v5012 = vadd.f32 %v4702, %v4961
      %v5013 = vadd.f32 %v4703, %v4962
      %v5014 = vadd.f32 %v4704, %v4963
      %v5015 = vadd.f32 %v4705, %v4964
      %v5016 = vadd.f32 %v4706, %v4965
      %v5017 = vadd.f32 %v4707, %v4966
      %v5018 = vadd.f32 %v4708, %v4967
      %v5019 = vadd.f32 %v4709, %v4968
      %v5020 = vadd.f32 %v4710, %v4969
      %v5021 = vadd.f32 %v4711, %v4970
      %v5022 = vadd.f32 %v4712, %v4971
      %v5023 = vadd.f32 %v4713, %v4972
      %v5024 = vadd.f32 %v4714, %v4973
      %v5025 = vadd.f32 %v4715, %v4974
      %v5026 = vadd.f32 %v4716, %v4975
      %v5027 = vadd.f32 %v4717, %v4976
      %v5028 = vadd.f32 %v4718, %v4977
      %v5029 = vadd.f32 %v4719, %v4978
      %v5030 = vadd.f32 %v4720, %v4979
      %v5031 = vadd.f32 %v4721, %v4980
      %5032 = vset.pattern.permute.xlu0 11
      %5033 = vperm.xlu0 %5032, %v270
      %v5034 = vpop.permute.xlu0 %5033
      %5036 = vset.pattern.permute.xlu0 11
      %5037 = vperm.xlu0 %5036, %v271
      %v5038 = vpop.permute.xlu0 %5037
      %5040 = vset.pattern.permute.xlu0 11
      %5041 = vperm.xlu0 %5040, %v272
      %v5042 = vpop.permute.xlu0 %5041
      %5044 = vset.pattern.permute.xlu0 11
      %5045 = vperm.xlu0 %5044, %v273
      %v5046 = vpop.permute.xlu0 %5045
      %5048 = vset.pattern.permute.xlu0 11
      %5049 = vperm.xlu0 %5048, %v274
      %v5050 = vpop.permute.xlu0 %5049
      %5052 = vset.pattern.permute.xlu0 11
      %5053 = vperm.xlu0 %5052, %v275
      %v5054 = vpop.permute.xlu0 %5053
      %5056 = vset.pattern.permute.xlu0 11
      %5057 = vperm.xlu0 %5056, %v276
      %v5058 = vpop.permute.xlu0 %5057
      %5060 = vset.pattern.permute.xlu0 11
      %5061 = vperm.xlu0 %5060, %v277
      %v5062 = vpop.permute.xlu0 %5061
      %5064 = vset.pattern.permute.xlu0 11
      %5065 = vperm.xlu0 %5064, %v278
      %v5066 = vpop.permute.xlu0 %5065
      %5068 = vset.pattern.permute.xlu0 11
      %5069 = vperm.xlu0 %5068, %v279
      %v5070 = vpop.permute.xlu0 %5069
      %5072 = vset.pattern.permute.xlu0 11
      %5073 = vperm.xlu0 %5072, %v280
      %v5074 = vpop.permute.xlu0 %5073
      %5076 = vset.pattern.permute.xlu0 11
      %5077 = vperm.xlu0 %5076, %v281
      %v5078 = vpop.permute.xlu0 %5077
      %5080 = vset.pattern.permute.xlu0 11
      %5081 = vperm.xlu0 %5080, %v282
      %v5082 = vpop.permute.xlu0 %5081
      %5084 = vset.pattern.permute.xlu0 11
      %5085 = vperm.xlu0 %5084, %v283
      %v5086 = vpop.permute.xlu0 %5085
      %5088 = vset.pattern.permute.xlu0 11
      %5089 = vperm.xlu0 %5088, %v284
      %v5090 = vpop.permute.xlu0 %5089
      %5092 = vset.pattern.permute.xlu0 11
      %5093 = vperm.xlu0 %5092, %v285
      %v5094 = vpop.permute.xlu0 %5093
      %5096 = vset.pattern.permute.xlu0 11
      %5097 = vperm.xlu0 %5096, %v286
      %v5098 = vpop.permute.xlu0 %5097
      %5100 = vset.pattern.permute.xlu0 11
      %5101 = vperm.xlu0 %5100, %v287
      %v5102 = vpop.permute.xlu0 %5101
      %5104 = vset.pattern.permute.xlu0 11
      %5105 = vperm.xlu0 %5104, %v288
      %v5106 = vpop.permute.xlu0 %5105
      %5108 = vset.pattern.permute.xlu0 11
      %5109 = vperm.xlu0 %5108, %v289
      %v5110 = vpop.permute.xlu0 %5109
      %5112 = vset.pattern.permute.xlu0 11
      %5113 = vperm.xlu0 %5112, %v290
      %v5114 = vpop.permute.xlu0 %5113
      %5116 = vset.pattern.permute.xlu0 11
      %5117 = vperm.xlu0 %5116, %v291
      %v5118 = vpop.permute.xlu0 %5117
      %5120 = vset.pattern.permute.xlu0 11
      %5121 = vperm.xlu0 %5120, %v292
      %v5122 = vpop.permute.xlu0 %5121
      %5124 = vset.pattern.permute.xlu0 11
      %5125 = vperm.xlu0 %5124, %v293
      %v5126 = vpop.permute.xlu0 %5125
      %5128 = vset.pattern.permute.xlu0 11
      %5129 = vperm.xlu0 %5128, %v294
      %v5130 = vpop.permute.xlu0 %5129
      %5132 = vset.pattern.permute.xlu0 11
      %5133 = vperm.xlu0 %5132, %v295
      %v5134 = vpop.permute.xlu0 %5133
      %5136 = vset.pattern.permute.xlu0 11
      %5137 = vperm.xlu0 %5136, %v296
      %v5138 = vpop.permute.xlu0 %5137
      %5140 = vset.pattern.permute.xlu0 11
      %5141 = vperm.xlu0 %5140, %v297
      %v5142 = vpop.permute.xlu0 %5141
      %5144 = vset.pattern.permute.xlu0 11
      %5145 = vperm.xlu0 %5144, %v298
      %v5146 = vpop.permute.xlu0 %5145
      %5148 = vset.pattern.permute.xlu0 11
      %5149 = vperm.xlu0 %5148, %v299
      %v5150 = vpop.permute.xlu0 %5149
      %5152 = vset.pattern.permute.xlu0 11
      %5153 = vperm.xlu0 %5152, %v300
      %v5154 = vpop.permute.xlu0 %5153
      %5156 = vset.pattern.permute.xlu0 11
      %5157 = vperm.xlu0 %5156, %v301
      %v5158 = vpop.permute.xlu0 %5157
      %5160 = vset.pattern.permute.xlu0 11
      %5161 = vperm.xlu0 %5160, %v302
      %v5162 = vpop.permute.xlu0 %5161
      %5164 = vset.pattern.permute.xlu0 11
      %5165 = vperm.xlu0 %5164, %v303
      %v5166 = vpop.permute.xlu0 %5165
      %5168 = vset.pattern.permute.xlu0 11
      %5169 = vperm.xlu0 %5168, %v304
      %v5170 = vpop.permute.xlu0 %5169
      %5172 = vset.pattern.permute.xlu0 11
      %5173 = vperm.xlu0 %5172, %v305
      %v5174 = vpop.permute.xlu0 %5173
      %5176 = vset.pattern.permute.xlu0 11
      %5177 = vperm.xlu0 %5176, %v306
      %v5178 = vpop.permute.xlu0 %5177
      %5180 = vset.pattern.permute.xlu0 11
      %5181 = vperm.xlu0 %5180, %v307
      %v5182 = vpop.permute.xlu0 %5181
      %5184 = vset.pattern.permute.xlu0 11
      %5185 = vperm.xlu0 %5184, %v308
      %v5186 = vpop.permute.xlu0 %5185
      %5188 = vset.pattern.permute.xlu0 11
      %5189 = vperm.xlu0 %5188, %v309
      %v5190 = vpop.permute.xlu0 %5189
      %5192 = vset.pattern.permute.xlu0 11
      %5193 = vperm.xlu0 %5192, %v310
      %v5194 = vpop.permute.xlu0 %5193
      %5196 = vset.pattern.permute.xlu0 11
      %5197 = vperm.xlu0 %5196, %v311
      %v5198 = vpop.permute.xlu0 %5197
      %5200 = vset.pattern.permute.xlu0 11
      %5201 = vperm.xlu0 %5200, %v312
      %v5202 = vpop.permute.xlu0 %5201
      %5204 = vset.pattern.permute.xlu0 11
      %5205 = vperm.xlu0 %5204, %v313
      %v5206 = vpop.permute.xlu0 %5205
      %5208 = vset.pattern.permute.xlu0 11
      %5209 = vperm.xlu0 %5208, %v314
      %v5210 = vpop.permute.xlu0 %5209
      %5212 = vset.pattern.permute.xlu0 11
      %5213 = vperm.xlu0 %5212, %v315
      %v5214 = vpop.permute.xlu0 %5213
      %5216 = vset.pattern.permute.xlu0 11
      %5217 = vperm.xlu0 %5216, %v316
      %v5218 = vpop.permute.xlu0 %5217
      %5220 = vset.pattern.permute.xlu0 11
      %5221 = vperm.xlu0 %5220, %v317
      %v5222 = vpop.permute.xlu0 %5221
      %5224 = vset.pattern.permute.xlu0 11
      %5225 = vperm.xlu0 %5224, %v318
      %v5226 = vpop.permute.xlu0 %5225
      %5228 = vset.pattern.permute.xlu0 11
      %5229 = vperm.xlu0 %5228, %v319
      %v5230 = vpop.permute.xlu0 %5229
      %5232 = vset.pattern.permute.xlu0 11
      %5233 = vperm.xlu0 %5232, %v320
      %v5234 = vpop.permute.xlu0 %5233
      %v5236 = vlaneseq
      %v5237 = vshrl.u32 %v5236, 7
      %v5238 = vsub.s32 3, %v5237
      %v5239 = vrot.slane %v377, %v5238
      %v5240 = vmul.f32 %v5034, %v5239
      %v5241 = vmul.f32 %v5038, %v5239
      %v5242 = vmul.f32 %v5042, %v5239
      %v5243 = vmul.f32 %v5046, %v5239
      %v5244 = vmul.f32 %v5050, %v5239
      %v5245 = vmul.f32 %v5054, %v5239
      %v5246 = vmul.f32 %v5058, %v5239
      %v5247 = vmul.f32 %v5062, %v5239
      %v5248 = vmul.f32 %v5066, %v5239
      %v5249 = vmul.f32 %v5070, %v5239
      %v5250 = vmul.f32 %v5074, %v5239
      %v5251 = vmul.f32 %v5078, %v5239
      %v5252 = vmul.f32 %v5082, %v5239
      %v5253 = vmul.f32 %v5086, %v5239
      %v5254 = vmul.f32 %v5090, %v5239
      %v5255 = vmul.f32 %v5094, %v5239
      %v5256 = vmul.f32 %v5098, %v5239
      %v5257 = vmul.f32 %v5102, %v5239
      %v5258 = vmul.f32 %v5106, %v5239
      %v5259 = vmul.f32 %v5110, %v5239
      %v5260 = vmul.f32 %v5114, %v5239
      %v5261 = vmul.f32 %v5118, %v5239
      %v5262 = vmul.f32 %v5122, %v5239
      %v5263 = vmul.f32 %v5126, %v5239
      %v5264 = vmul.f32 %v5130, %v5239
      %v5265 = vmul.f32 %v5134, %v5239
      %v5266 = vmul.f32 %v5138, %v5239
      %v5267 = vmul.f32 %v5142, %v5239
      %v5268 = vmul.f32 %v5146, %v5239
      %v5269 = vmul.f32 %v5150, %v5239
      %v5270 = vmul.f32 %v5154, %v5239
      %v5271 = vmul.f32 %v5158, %v5239
      %v5272 = vmul.f32 %v5162, %v5239
      %v5273 = vmul.f32 %v5166, %v5239
      %v5274 = vmul.f32 %v5170, %v5239
      %v5275 = vmul.f32 %v5174, %v5239
      %v5276 = vmul.f32 %v5178, %v5239
      %v5277 = vmul.f32 %v5182, %v5239
      %v5278 = vmul.f32 %v5186, %v5239
      %v5279 = vmul.f32 %v5190, %v5239
      %v5280 = vmul.f32 %v5194, %v5239
      %v5281 = vmul.f32 %v5198, %v5239
      %v5282 = vmul.f32 %v5202, %v5239
      %v5283 = vmul.f32 %v5206, %v5239
      %v5284 = vmul.f32 %v5210, %v5239
      %v5285 = vmul.f32 %v5214, %v5239
      %v5286 = vmul.f32 %v5218, %v5239
      %v5287 = vmul.f32 %v5222, %v5239
      %v5288 = vmul.f32 %v5226, %v5239
      %v5289 = vmul.f32 %v5230, %v5239
      %v5290 = vmul.f32 %v5234, %v5239
      %v5291 = vadd.f32 %v4981, %v5240
      %v5292 = vadd.f32 %v4982, %v5241
      %v5293 = vadd.f32 %v4983, %v5242
      %v5294 = vadd.f32 %v4984, %v5243
      %v5295 = vadd.f32 %v4985, %v5244
      %v5296 = vadd.f32 %v4986, %v5245
      %v5297 = vadd.f32 %v4987, %v5246
      %v5298 = vadd.f32 %v4988, %v5247
      %v5299 = vadd.f32 %v4989, %v5248
      %v5300 = vadd.f32 %v4990, %v5249
      %v5301 = vadd.f32 %v4991, %v5250
      %v5302 = vadd.f32 %v4992, %v5251
      %v5303 = vadd.f32 %v4993, %v5252
      %v5304 = vadd.f32 %v4994, %v5253
      %v5305 = vadd.f32 %v4995, %v5254
      %v5306 = vadd.f32 %v4996, %v5255
      %v5307 = vadd.f32 %v4997, %v5256
      %v5308 = vadd.f32 %v4998, %v5257
      %v5309 = vadd.f32 %v4999, %v5258
      %v5310 = vadd.f32 %v5000, %v5259
      %v5311 = vadd.f32 %v5001, %v5260
      %v5312 = vadd.f32 %v5002, %v5261
      %v5313 = vadd.f32 %v5003, %v5262
      %v5314 = vadd.f32 %v5004, %v5263
      %v5315 = vadd.f32 %v5005, %v5264
      %v5316 = vadd.f32 %v5006, %v5265
      %v5317 = vadd.f32 %v5007, %v5266
      %v5318 = vadd.f32 %v5008, %v5267
      %v5319 = vadd.f32 %v5009, %v5268
      %v5320 = vadd.f32 %v5010, %v5269
      %v5321 = vadd.f32 %v5011, %v5270
      %v5322 = vadd.f32 %v5012, %v5271
      %v5323 = vadd.f32 %v5013, %v5272
      %v5324 = vadd.f32 %v5014, %v5273
      %v5325 = vadd.f32 %v5015, %v5274
      %v5326 = vadd.f32 %v5016, %v5275
      %v5327 = vadd.f32 %v5017, %v5276
      %v5328 = vadd.f32 %v5018, %v5277
      %v5329 = vadd.f32 %v5019, %v5278
      %v5330 = vadd.f32 %v5020, %v5279
      %v5331 = vadd.f32 %v5021, %v5280
      %v5332 = vadd.f32 %v5022, %v5281
      %v5333 = vadd.f32 %v5023, %v5282
      %v5334 = vadd.f32 %v5024, %v5283
      %v5335 = vadd.f32 %v5025, %v5284
      %v5336 = vadd.f32 %v5026, %v5285
      %v5337 = vadd.f32 %v5027, %v5286
      %v5338 = vadd.f32 %v5028, %v5287
      %v5339 = vadd.f32 %v5029, %v5288
      %v5340 = vadd.f32 %v5030, %v5289
      %v5341 = vadd.f32 %v5031, %v5290
      %5342 = vset.pattern.permute.xlu0 12
      %5343 = vperm.xlu0 %5342, %v270
      %v5344 = vpop.permute.xlu0 %5343
      %5346 = vset.pattern.permute.xlu0 12
      %5347 = vperm.xlu0 %5346, %v271
      %v5348 = vpop.permute.xlu0 %5347
      %5350 = vset.pattern.permute.xlu0 12
      %5351 = vperm.xlu0 %5350, %v272
      %v5352 = vpop.permute.xlu0 %5351
      %5354 = vset.pattern.permute.xlu0 12
      %5355 = vperm.xlu0 %5354, %v273
      %v5356 = vpop.permute.xlu0 %5355
      %5358 = vset.pattern.permute.xlu0 12
      %5359 = vperm.xlu0 %5358, %v274
      %v5360 = vpop.permute.xlu0 %5359
      %5362 = vset.pattern.permute.xlu0 12
      %5363 = vperm.xlu0 %5362, %v275
      %v5364 = vpop.permute.xlu0 %5363
      %5366 = vset.pattern.permute.xlu0 12
      %5367 = vperm.xlu0 %5366, %v276
      %v5368 = vpop.permute.xlu0 %5367
      %5370 = vset.pattern.permute.xlu0 12
      %5371 = vperm.xlu0 %5370, %v277
      %v5372 = vpop.permute.xlu0 %5371
      %5374 = vset.pattern.permute.xlu0 12
      %5375 = vperm.xlu0 %5374, %v278
      %v5376 = vpop.permute.xlu0 %5375
      %5378 = vset.pattern.permute.xlu0 12
      %5379 = vperm.xlu0 %5378, %v279
      %v5380 = vpop.permute.xlu0 %5379
      %5382 = vset.pattern.permute.xlu0 12
      %5383 = vperm.xlu0 %5382, %v280
      %v5384 = vpop.permute.xlu0 %5383
      %5386 = vset.pattern.permute.xlu0 12
      %5387 = vperm.xlu0 %5386, %v281
      %v5388 = vpop.permute.xlu0 %5387
      %5390 = vset.pattern.permute.xlu0 12
      %5391 = vperm.xlu0 %5390, %v282
      %v5392 = vpop.permute.xlu0 %5391
      %5394 = vset.pattern.permute.xlu0 12
      %5395 = vperm.xlu0 %5394, %v283
      %v5396 = vpop.permute.xlu0 %5395
      %5398 = vset.pattern.permute.xlu0 12
      %5399 = vperm.xlu0 %5398, %v284
      %v5400 = vpop.permute.xlu0 %5399
      %5402 = vset.pattern.permute.xlu0 12
      %5403 = vperm.xlu0 %5402, %v285
      %v5404 = vpop.permute.xlu0 %5403
      %5406 = vset.pattern.permute.xlu0 12
      %5407 = vperm.xlu0 %5406, %v286
      %v5408 = vpop.permute.xlu0 %5407
      %5410 = vset.pattern.permute.xlu0 12
      %5411 = vperm.xlu0 %5410, %v287
      %v5412 = vpop.permute.xlu0 %5411
      %5414 = vset.pattern.permute.xlu0 12
      %5415 = vperm.xlu0 %5414, %v288
      %v5416 = vpop.permute.xlu0 %5415
      %5418 = vset.pattern.permute.xlu0 12
      %5419 = vperm.xlu0 %5418, %v289
      %v5420 = vpop.permute.xlu0 %5419
      %5422 = vset.pattern.permute.xlu0 12
      %5423 = vperm.xlu0 %5422, %v290
      %v5424 = vpop.permute.xlu0 %5423
      %5426 = vset.pattern.permute.xlu0 12
      %5427 = vperm.xlu0 %5426, %v291
      %v5428 = vpop.permute.xlu0 %5427
      %5430 = vset.pattern.permute.xlu0 12
      %5431 = vperm.xlu0 %5430, %v292
      %v5432 = vpop.permute.xlu0 %5431
      %5434 = vset.pattern.permute.xlu0 12
      %5435 = vperm.xlu0 %5434, %v293
      %v5436 = vpop.permute.xlu0 %5435
      %5438 = vset.pattern.permute.xlu0 12
      %5439 = vperm.xlu0 %5438, %v294
      %v5440 = vpop.permute.xlu0 %5439
      %5442 = vset.pattern.permute.xlu0 12
      %5443 = vperm.xlu0 %5442, %v295
      %v5444 = vpop.permute.xlu0 %5443
      %5446 = vset.pattern.permute.xlu0 12
      %5447 = vperm.xlu0 %5446, %v296
      %v5448 = vpop.permute.xlu0 %5447
      %5450 = vset.pattern.permute.xlu0 12
      %5451 = vperm.xlu0 %5450, %v297
      %v5452 = vpop.permute.xlu0 %5451
      %5454 = vset.pattern.permute.xlu0 12
      %5455 = vperm.xlu0 %5454, %v298
      %v5456 = vpop.permute.xlu0 %5455
      %5458 = vset.pattern.permute.xlu0 12
      %5459 = vperm.xlu0 %5458, %v299
      %v5460 = vpop.permute.xlu0 %5459
      %5462 = vset.pattern.permute.xlu0 12
      %5463 = vperm.xlu0 %5462, %v300
      %v5464 = vpop.permute.xlu0 %5463
      %5466 = vset.pattern.permute.xlu0 12
      %5467 = vperm.xlu0 %5466, %v301
      %v5468 = vpop.permute.xlu0 %5467
      %5470 = vset.pattern.permute.xlu0 12
      %5471 = vperm.xlu0 %5470, %v302
      %v5472 = vpop.permute.xlu0 %5471
      %5474 = vset.pattern.permute.xlu0 12
      %5475 = vperm.xlu0 %5474, %v303
      %v5476 = vpop.permute.xlu0 %5475
      %5478 = vset.pattern.permute.xlu0 12
      %5479 = vperm.xlu0 %5478, %v304
      %v5480 = vpop.permute.xlu0 %5479
      %5482 = vset.pattern.permute.xlu0 12
      %5483 = vperm.xlu0 %5482, %v305
      %v5484 = vpop.permute.xlu0 %5483
      %5486 = vset.pattern.permute.xlu0 12
      %5487 = vperm.xlu0 %5486, %v306
      %v5488 = vpop.permute.xlu0 %5487
      %5490 = vset.pattern.permute.xlu0 12
      %5491 = vperm.xlu0 %5490, %v307
      %v5492 = vpop.permute.xlu0 %5491
      %5494 = vset.pattern.permute.xlu0 12
      %5495 = vperm.xlu0 %5494, %v308
      %v5496 = vpop.permute.xlu0 %5495
      %5498 = vset.pattern.permute.xlu0 12
      %5499 = vperm.xlu0 %5498, %v309
      %v5500 = vpop.permute.xlu0 %5499
      %5502 = vset.pattern.permute.xlu0 12
      %5503 = vperm.xlu0 %5502, %v310
      %v5504 = vpop.permute.xlu0 %5503
      %5506 = vset.pattern.permute.xlu0 12
      %5507 = vperm.xlu0 %5506, %v311
      %v5508 = vpop.permute.xlu0 %5507
      %5510 = vset.pattern.permute.xlu0 12
      %5511 = vperm.xlu0 %5510, %v312
      %v5512 = vpop.permute.xlu0 %5511
      %5514 = vset.pattern.permute.xlu0 12
      %5515 = vperm.xlu0 %5514, %v313
      %v5516 = vpop.permute.xlu0 %5515
      %5518 = vset.pattern.permute.xlu0 12
      %5519 = vperm.xlu0 %5518, %v314
      %v5520 = vpop.permute.xlu0 %5519
      %5522 = vset.pattern.permute.xlu0 12
      %5523 = vperm.xlu0 %5522, %v315
      %v5524 = vpop.permute.xlu0 %5523
      %5526 = vset.pattern.permute.xlu0 12
      %5527 = vperm.xlu0 %5526, %v316
      %v5528 = vpop.permute.xlu0 %5527
      %5530 = vset.pattern.permute.xlu0 12
      %5531 = vperm.xlu0 %5530, %v317
      %v5532 = vpop.permute.xlu0 %5531
      %5534 = vset.pattern.permute.xlu0 12
      %5535 = vperm.xlu0 %5534, %v318
      %v5536 = vpop.permute.xlu0 %5535
      %5538 = vset.pattern.permute.xlu0 12
      %5539 = vperm.xlu0 %5538, %v319
      %v5540 = vpop.permute.xlu0 %5539
      %5542 = vset.pattern.permute.xlu0 12
      %5543 = vperm.xlu0 %5542, %v320
      %v5544 = vpop.permute.xlu0 %5543
      %v5546 = vlaneseq
      %v5547 = vshrl.u32 %v5546, 7
      %v5548 = vsub.s32 4, %v5547
      %v5549 = vrot.slane %v377, %v5548
      %v5550 = vmul.f32 %v5344, %v5549
      %v5551 = vmul.f32 %v5348, %v5549
      %v5552 = vmul.f32 %v5352, %v5549
      %v5553 = vmul.f32 %v5356, %v5549
      %v5554 = vmul.f32 %v5360, %v5549
      %v5555 = vmul.f32 %v5364, %v5549
      %v5556 = vmul.f32 %v5368, %v5549
      %v5557 = vmul.f32 %v5372, %v5549
      %v5558 = vmul.f32 %v5376, %v5549
      %v5559 = vmul.f32 %v5380, %v5549
      %v5560 = vmul.f32 %v5384, %v5549
      %v5561 = vmul.f32 %v5388, %v5549
      %v5562 = vmul.f32 %v5392, %v5549
      %v5563 = vmul.f32 %v5396, %v5549
      %v5564 = vmul.f32 %v5400, %v5549
      %v5565 = vmul.f32 %v5404, %v5549
      %v5566 = vmul.f32 %v5408, %v5549
      %v5567 = vmul.f32 %v5412, %v5549
      %v5568 = vmul.f32 %v5416, %v5549
      %v5569 = vmul.f32 %v5420, %v5549
      %v5570 = vmul.f32 %v5424, %v5549
      %v5571 = vmul.f32 %v5428, %v5549
      %v5572 = vmul.f32 %v5432, %v5549
      %v5573 = vmul.f32 %v5436, %v5549
      %v5574 = vmul.f32 %v5440, %v5549
      %v5575 = vmul.f32 %v5444, %v5549
      %v5576 = vmul.f32 %v5448, %v5549
      %v5577 = vmul.f32 %v5452, %v5549
      %v5578 = vmul.f32 %v5456, %v5549
      %v5579 = vmul.f32 %v5460, %v5549
      %v5580 = vmul.f32 %v5464, %v5549
      %v5581 = vmul.f32 %v5468, %v5549
      %v5582 = vmul.f32 %v5472, %v5549
      %v5583 = vmul.f32 %v5476, %v5549
      %v5584 = vmul.f32 %v5480, %v5549
      %v5585 = vmul.f32 %v5484, %v5549
      %v5586 = vmul.f32 %v5488, %v5549
      %v5587 = vmul.f32 %v5492, %v5549
      %v5588 = vmul.f32 %v5496, %v5549
      %v5589 = vmul.f32 %v5500, %v5549
      %v5590 = vmul.f32 %v5504, %v5549
      %v5591 = vmul.f32 %v5508, %v5549
      %v5592 = vmul.f32 %v5512, %v5549
      %v5593 = vmul.f32 %v5516, %v5549
      %v5594 = vmul.f32 %v5520, %v5549
      %v5595 = vmul.f32 %v5524, %v5549
      %v5596 = vmul.f32 %v5528, %v5549
      %v5597 = vmul.f32 %v5532, %v5549
      %v5598 = vmul.f32 %v5536, %v5549
      %v5599 = vmul.f32 %v5540, %v5549
      %v5600 = vmul.f32 %v5544, %v5549
      %v5601 = vadd.f32 %v5291, %v5550
      %v5602 = vadd.f32 %v5292, %v5551
      %v5603 = vadd.f32 %v5293, %v5552
      %v5604 = vadd.f32 %v5294, %v5553
      %v5605 = vadd.f32 %v5295, %v5554
      %v5606 = vadd.f32 %v5296, %v5555
      %v5607 = vadd.f32 %v5297, %v5556
      %v5608 = vadd.f32 %v5298, %v5557
      %v5609 = vadd.f32 %v5299, %v5558
      %v5610 = vadd.f32 %v5300, %v5559
      %v5611 = vadd.f32 %v5301, %v5560
      %v5612 = vadd.f32 %v5302, %v5561
      %v5613 = vadd.f32 %v5303, %v5562
      %v5614 = vadd.f32 %v5304, %v5563
      %v5615 = vadd.f32 %v5305, %v5564
      %v5616 = vadd.f32 %v5306, %v5565
      %v5617 = vadd.f32 %v5307, %v5566
      %v5618 = vadd.f32 %v5308, %v5567
      %v5619 = vadd.f32 %v5309, %v5568
      %v5620 = vadd.f32 %v5310, %v5569
      %v5621 = vadd.f32 %v5311, %v5570
      %v5622 = vadd.f32 %v5312, %v5571
      %v5623 = vadd.f32 %v5313, %v5572
      %v5624 = vadd.f32 %v5314, %v5573
      %v5625 = vadd.f32 %v5315, %v5574
      %v5626 = vadd.f32 %v5316, %v5575
      %v5627 = vadd.f32 %v5317, %v5576
      %v5628 = vadd.f32 %v5318, %v5577
      %v5629 = vadd.f32 %v5319, %v5578
      %v5630 = vadd.f32 %v5320, %v5579
      %v5631 = vadd.f32 %v5321, %v5580
      %v5632 = vadd.f32 %v5322, %v5581
      %v5633 = vadd.f32 %v5323, %v5582
      %v5634 = vadd.f32 %v5324, %v5583
      %v5635 = vadd.f32 %v5325, %v5584
      %v5636 = vadd.f32 %v5326, %v5585
      %v5637 = vadd.f32 %v5327, %v5586
      %v5638 = vadd.f32 %v5328, %v5587
      %v5639 = vadd.f32 %v5329, %v5588
      %v5640 = vadd.f32 %v5330, %v5589
      %v5641 = vadd.f32 %v5331, %v5590
      %v5642 = vadd.f32 %v5332, %v5591
      %v5643 = vadd.f32 %v5333, %v5592
      %v5644 = vadd.f32 %v5334, %v5593
      %v5645 = vadd.f32 %v5335, %v5594
      %v5646 = vadd.f32 %v5336, %v5595
      %v5647 = vadd.f32 %v5337, %v5596
      %v5648 = vadd.f32 %v5338, %v5597
      %v5649 = vadd.f32 %v5339, %v5598
      %v5650 = vadd.f32 %v5340, %v5599
      %v5651 = vadd.f32 %v5341, %v5600
      %5652 = vset.pattern.permute.xlu0 13
      %5653 = vperm.xlu0 %5652, %v270
      %v5654 = vpop.permute.xlu0 %5653
      %5656 = vset.pattern.permute.xlu0 13
      %5657 = vperm.xlu0 %5656, %v271
      %v5658 = vpop.permute.xlu0 %5657
      %5660 = vset.pattern.permute.xlu0 13
      %5661 = vperm.xlu0 %5660, %v272
      %v5662 = vpop.permute.xlu0 %5661
      %5664 = vset.pattern.permute.xlu0 13
      %5665 = vperm.xlu0 %5664, %v273
      %v5666 = vpop.permute.xlu0 %5665
      %5668 = vset.pattern.permute.xlu0 13
      %5669 = vperm.xlu0 %5668, %v274
      %v5670 = vpop.permute.xlu0 %5669
      %5672 = vset.pattern.permute.xlu0 13
      %5673 = vperm.xlu0 %5672, %v275
      %v5674 = vpop.permute.xlu0 %5673
      %5676 = vset.pattern.permute.xlu0 13
      %5677 = vperm.xlu0 %5676, %v276
      %v5678 = vpop.permute.xlu0 %5677
      %5680 = vset.pattern.permute.xlu0 13
      %5681 = vperm.xlu0 %5680, %v277
      %v5682 = vpop.permute.xlu0 %5681
      %5684 = vset.pattern.permute.xlu0 13
      %5685 = vperm.xlu0 %5684, %v278
      %v5686 = vpop.permute.xlu0 %5685
      %5688 = vset.pattern.permute.xlu0 13
      %5689 = vperm.xlu0 %5688, %v279
      %v5690 = vpop.permute.xlu0 %5689
      %5692 = vset.pattern.permute.xlu0 13
      %5693 = vperm.xlu0 %5692, %v280
      %v5694 = vpop.permute.xlu0 %5693
      %5696 = vset.pattern.permute.xlu0 13
      %5697 = vperm.xlu0 %5696, %v281
      %v5698 = vpop.permute.xlu0 %5697
      %5700 = vset.pattern.permute.xlu0 13
      %5701 = vperm.xlu0 %5700, %v282
      %v5702 = vpop.permute.xlu0 %5701
      %5704 = vset.pattern.permute.xlu0 13
      %5705 = vperm.xlu0 %5704, %v283
      %v5706 = vpop.permute.xlu0 %5705
      %5708 = vset.pattern.permute.xlu0 13
      %5709 = vperm.xlu0 %5708, %v284
      %v5710 = vpop.permute.xlu0 %5709
      %5712 = vset.pattern.permute.xlu0 13
      %5713 = vperm.xlu0 %5712, %v285
      %v5714 = vpop.permute.xlu0 %5713
      %5716 = vset.pattern.permute.xlu0 13
      %5717 = vperm.xlu0 %5716, %v286
      %v5718 = vpop.permute.xlu0 %5717
      %5720 = vset.pattern.permute.xlu0 13
      %5721 = vperm.xlu0 %5720, %v287
      %v5722 = vpop.permute.xlu0 %5721
      %5724 = vset.pattern.permute.xlu0 13
      %5725 = vperm.xlu0 %5724, %v288
      %v5726 = vpop.permute.xlu0 %5725
      %5728 = vset.pattern.permute.xlu0 13
      %5729 = vperm.xlu0 %5728, %v289
      %v5730 = vpop.permute.xlu0 %5729
      %5732 = vset.pattern.permute.xlu0 13
      %5733 = vperm.xlu0 %5732, %v290
      %v5734 = vpop.permute.xlu0 %5733
      %5736 = vset.pattern.permute.xlu0 13
      %5737 = vperm.xlu0 %5736, %v291
      %v5738 = vpop.permute.xlu0 %5737
      %5740 = vset.pattern.permute.xlu0 13
      %5741 = vperm.xlu0 %5740, %v292
      %v5742 = vpop.permute.xlu0 %5741
      %5744 = vset.pattern.permute.xlu0 13
      %5745 = vperm.xlu0 %5744, %v293
      %v5746 = vpop.permute.xlu0 %5745
      %5748 = vset.pattern.permute.xlu0 13
      %5749 = vperm.xlu0 %5748, %v294
      %v5750 = vpop.permute.xlu0 %5749
      %5752 = vset.pattern.permute.xlu0 13
      %5753 = vperm.xlu0 %5752, %v295
      %v5754 = vpop.permute.xlu0 %5753
      %5756 = vset.pattern.permute.xlu0 13
      %5757 = vperm.xlu0 %5756, %v296
      %v5758 = vpop.permute.xlu0 %5757
      %5760 = vset.pattern.permute.xlu0 13
      %5761 = vperm.xlu0 %5760, %v297
      %v5762 = vpop.permute.xlu0 %5761
      %5764 = vset.pattern.permute.xlu0 13
      %5765 = vperm.xlu0 %5764, %v298
      %v5766 = vpop.permute.xlu0 %5765
      %5768 = vset.pattern.permute.xlu0 13
      %5769 = vperm.xlu0 %5768, %v299
      %v5770 = vpop.permute.xlu0 %5769
      %5772 = vset.pattern.permute.xlu0 13
      %5773 = vperm.xlu0 %5772, %v300
      %v5774 = vpop.permute.xlu0 %5773
      %5776 = vset.pattern.permute.xlu0 13
      %5777 = vperm.xlu0 %5776, %v301
      %v5778 = vpop.permute.xlu0 %5777
      %5780 = vset.pattern.permute.xlu0 13
      %5781 = vperm.xlu0 %5780, %v302
      %v5782 = vpop.permute.xlu0 %5781
      %5784 = vset.pattern.permute.xlu0 13
      %5785 = vperm.xlu0 %5784, %v303
      %v5786 = vpop.permute.xlu0 %5785
      %5788 = vset.pattern.permute.xlu0 13
      %5789 = vperm.xlu0 %5788, %v304
      %v5790 = vpop.permute.xlu0 %5789
      %5792 = vset.pattern.permute.xlu0 13
      %5793 = vperm.xlu0 %5792, %v305
      %v5794 = vpop.permute.xlu0 %5793
      %5796 = vset.pattern.permute.xlu0 13
      %5797 = vperm.xlu0 %5796, %v306
      %v5798 = vpop.permute.xlu0 %5797
      %5800 = vset.pattern.permute.xlu0 13
      %5801 = vperm.xlu0 %5800, %v307
      %v5802 = vpop.permute.xlu0 %5801
      %5804 = vset.pattern.permute.xlu0 13
      %5805 = vperm.xlu0 %5804, %v308
      %v5806 = vpop.permute.xlu0 %5805
      %5808 = vset.pattern.permute.xlu0 13
      %5809 = vperm.xlu0 %5808, %v309
      %v5810 = vpop.permute.xlu0 %5809
      %5812 = vset.pattern.permute.xlu0 13
      %5813 = vperm.xlu0 %5812, %v310
      %v5814 = vpop.permute.xlu0 %5813
      %5816 = vset.pattern.permute.xlu0 13
      %5817 = vperm.xlu0 %5816, %v311
      %v5818 = vpop.permute.xlu0 %5817
      %5820 = vset.pattern.permute.xlu0 13
      %5821 = vperm.xlu0 %5820, %v312
      %v5822 = vpop.permute.xlu0 %5821
      %5824 = vset.pattern.permute.xlu0 13
      %5825 = vperm.xlu0 %5824, %v313
      %v5826 = vpop.permute.xlu0 %5825
      %5828 = vset.pattern.permute.xlu0 13
      %5829 = vperm.xlu0 %5828, %v314
      %v5830 = vpop.permute.xlu0 %5829
      %5832 = vset.pattern.permute.xlu0 13
      %5833 = vperm.xlu0 %5832, %v315
      %v5834 = vpop.permute.xlu0 %5833
      %5836 = vset.pattern.permute.xlu0 13
      %5837 = vperm.xlu0 %5836, %v316
      %v5838 = vpop.permute.xlu0 %5837
      %5840 = vset.pattern.permute.xlu0 13
      %5841 = vperm.xlu0 %5840, %v317
      %v5842 = vpop.permute.xlu0 %5841
      %5844 = vset.pattern.permute.xlu0 13
      %5845 = vperm.xlu0 %5844, %v318
      %v5846 = vpop.permute.xlu0 %5845
      %5848 = vset.pattern.permute.xlu0 13
      %5849 = vperm.xlu0 %5848, %v319
      %v5850 = vpop.permute.xlu0 %5849
      %5852 = vset.pattern.permute.xlu0 13
      %5853 = vperm.xlu0 %5852, %v320
      %v5854 = vpop.permute.xlu0 %5853
      %v5856 = vlaneseq
      %v5857 = vshrl.u32 %v5856, 7
      %v5858 = vsub.s32 5, %v5857
      %v5859 = vrot.slane %v377, %v5858
      %v5860 = vmul.f32 %v5654, %v5859
      %v5861 = vmul.f32 %v5658, %v5859
      %v5862 = vmul.f32 %v5662, %v5859
      %v5863 = vmul.f32 %v5666, %v5859
      %v5864 = vmul.f32 %v5670, %v5859
      %v5865 = vmul.f32 %v5674, %v5859
      %v5866 = vmul.f32 %v5678, %v5859
      %v5867 = vmul.f32 %v5682, %v5859
      %v5868 = vmul.f32 %v5686, %v5859
      %v5869 = vmul.f32 %v5690, %v5859
      %v5870 = vmul.f32 %v5694, %v5859
      %v5871 = vmul.f32 %v5698, %v5859
      %v5872 = vmul.f32 %v5702, %v5859
      %v5873 = vmul.f32 %v5706, %v5859
      %v5874 = vmul.f32 %v5710, %v5859
      %v5875 = vmul.f32 %v5714, %v5859
      %v5876 = vmul.f32 %v5718, %v5859
      %v5877 = vmul.f32 %v5722, %v5859
      %v5878 = vmul.f32 %v5726, %v5859
      %v5879 = vmul.f32 %v5730, %v5859
      %v5880 = vmul.f32 %v5734, %v5859
      %v5881 = vmul.f32 %v5738, %v5859
      %v5882 = vmul.f32 %v5742, %v5859
      %v5883 = vmul.f32 %v5746, %v5859
      %v5884 = vmul.f32 %v5750, %v5859
      %v5885 = vmul.f32 %v5754, %v5859
      %v5886 = vmul.f32 %v5758, %v5859
      %v5887 = vmul.f32 %v5762, %v5859
      %v5888 = vmul.f32 %v5766, %v5859
      %v5889 = vmul.f32 %v5770, %v5859
      %v5890 = vmul.f32 %v5774, %v5859
      %v5891 = vmul.f32 %v5778, %v5859
      %v5892 = vmul.f32 %v5782, %v5859
      %v5893 = vmul.f32 %v5786, %v5859
      %v5894 = vmul.f32 %v5790, %v5859
      %v5895 = vmul.f32 %v5794, %v5859
      %v5896 = vmul.f32 %v5798, %v5859
      %v5897 = vmul.f32 %v5802, %v5859
      %v5898 = vmul.f32 %v5806, %v5859
      %v5899 = vmul.f32 %v5810, %v5859
      %v5900 = vmul.f32 %v5814, %v5859
      %v5901 = vmul.f32 %v5818, %v5859
      %v5902 = vmul.f32 %v5822, %v5859
      %v5903 = vmul.f32 %v5826, %v5859
      %v5904 = vmul.f32 %v5830, %v5859
      %v5905 = vmul.f32 %v5834, %v5859
      %v5906 = vmul.f32 %v5838, %v5859
      %v5907 = vmul.f32 %v5842, %v5859
      %v5908 = vmul.f32 %v5846, %v5859
      %v5909 = vmul.f32 %v5850, %v5859
      %v5910 = vmul.f32 %v5854, %v5859
      %v5911 = vadd.f32 %v5601, %v5860
      %v5912 = vadd.f32 %v5602, %v5861
      %v5913 = vadd.f32 %v5603, %v5862
      %v5914 = vadd.f32 %v5604, %v5863
      %v5915 = vadd.f32 %v5605, %v5864
      %v5916 = vadd.f32 %v5606, %v5865
      %v5917 = vadd.f32 %v5607, %v5866
      %v5918 = vadd.f32 %v5608, %v5867
      %v5919 = vadd.f32 %v5609, %v5868
      %v5920 = vadd.f32 %v5610, %v5869
      %v5921 = vadd.f32 %v5611, %v5870
      %v5922 = vadd.f32 %v5612, %v5871
      %v5923 = vadd.f32 %v5613, %v5872
      %v5924 = vadd.f32 %v5614, %v5873
      %v5925 = vadd.f32 %v5615, %v5874
      %v5926 = vadd.f32 %v5616, %v5875
      %v5927 = vadd.f32 %v5617, %v5876
      %v5928 = vadd.f32 %v5618, %v5877
      %v5929 = vadd.f32 %v5619, %v5878
      %v5930 = vadd.f32 %v5620, %v5879
      %v5931 = vadd.f32 %v5621, %v5880
      %v5932 = vadd.f32 %v5622, %v5881
      %v5933 = vadd.f32 %v5623, %v5882
      %v5934 = vadd.f32 %v5624, %v5883
      %v5935 = vadd.f32 %v5625, %v5884
      %v5936 = vadd.f32 %v5626, %v5885
      %v5937 = vadd.f32 %v5627, %v5886
      %v5938 = vadd.f32 %v5628, %v5887
      %v5939 = vadd.f32 %v5629, %v5888
      %v5940 = vadd.f32 %v5630, %v5889
      %v5941 = vadd.f32 %v5631, %v5890
      %v5942 = vadd.f32 %v5632, %v5891
      %v5943 = vadd.f32 %v5633, %v5892
      %v5944 = vadd.f32 %v5634, %v5893
      %v5945 = vadd.f32 %v5635, %v5894
      %v5946 = vadd.f32 %v5636, %v5895
      %v5947 = vadd.f32 %v5637, %v5896
      %v5948 = vadd.f32 %v5638, %v5897
      %v5949 = vadd.f32 %v5639, %v5898
      %v5950 = vadd.f32 %v5640, %v5899
      %v5951 = vadd.f32 %v5641, %v5900
      %v5952 = vadd.f32 %v5642, %v5901
      %v5953 = vadd.f32 %v5643, %v5902
      %v5954 = vadd.f32 %v5644, %v5903
      %v5955 = vadd.f32 %v5645, %v5904
      %v5956 = vadd.f32 %v5646, %v5905
      %v5957 = vadd.f32 %v5647, %v5906
      %v5958 = vadd.f32 %v5648, %v5907
      %v5959 = vadd.f32 %v5649, %v5908
      %v5960 = vadd.f32 %v5650, %v5909
      %v5961 = vadd.f32 %v5651, %v5910
      %5962 = vset.pattern.permute.xlu0 14
      %5963 = vperm.xlu0 %5962, %v270
      %v5964 = vpop.permute.xlu0 %5963
      %5966 = vset.pattern.permute.xlu0 14
      %5967 = vperm.xlu0 %5966, %v271
      %v5968 = vpop.permute.xlu0 %5967
      %5970 = vset.pattern.permute.xlu0 14
      %5971 = vperm.xlu0 %5970, %v272
      %v5972 = vpop.permute.xlu0 %5971
      %5974 = vset.pattern.permute.xlu0 14
      %5975 = vperm.xlu0 %5974, %v273
      %v5976 = vpop.permute.xlu0 %5975
      %5978 = vset.pattern.permute.xlu0 14
      %5979 = vperm.xlu0 %5978, %v274
      %v5980 = vpop.permute.xlu0 %5979
      %5982 = vset.pattern.permute.xlu0 14
      %5983 = vperm.xlu0 %5982, %v275
      %v5984 = vpop.permute.xlu0 %5983
      %5986 = vset.pattern.permute.xlu0 14
      %5987 = vperm.xlu0 %5986, %v276
      %v5988 = vpop.permute.xlu0 %5987
      %5990 = vset.pattern.permute.xlu0 14
      %5991 = vperm.xlu0 %5990, %v277
      %v5992 = vpop.permute.xlu0 %5991
      %5994 = vset.pattern.permute.xlu0 14
      %5995 = vperm.xlu0 %5994, %v278
      %v5996 = vpop.permute.xlu0 %5995
      %5998 = vset.pattern.permute.xlu0 14
      %5999 = vperm.xlu0 %5998, %v279
      %v6000 = vpop.permute.xlu0 %5999
      %6002 = vset.pattern.permute.xlu0 14
      %6003 = vperm.xlu0 %6002, %v280
      %v6004 = vpop.permute.xlu0 %6003
      %6006 = vset.pattern.permute.xlu0 14
      %6007 = vperm.xlu0 %6006, %v281
      %v6008 = vpop.permute.xlu0 %6007
      %6010 = vset.pattern.permute.xlu0 14
      %6011 = vperm.xlu0 %6010, %v282
      %v6012 = vpop.permute.xlu0 %6011
      %6014 = vset.pattern.permute.xlu0 14
      %6015 = vperm.xlu0 %6014, %v283
      %v6016 = vpop.permute.xlu0 %6015
      %6018 = vset.pattern.permute.xlu0 14
      %6019 = vperm.xlu0 %6018, %v284
      %v6020 = vpop.permute.xlu0 %6019
      %6022 = vset.pattern.permute.xlu0 14
      %6023 = vperm.xlu0 %6022, %v285
      %v6024 = vpop.permute.xlu0 %6023
      %6026 = vset.pattern.permute.xlu0 14
      %6027 = vperm.xlu0 %6026, %v286
      %v6028 = vpop.permute.xlu0 %6027
      %6030 = vset.pattern.permute.xlu0 14
      %6031 = vperm.xlu0 %6030, %v287
      %v6032 = vpop.permute.xlu0 %6031
      %6034 = vset.pattern.permute.xlu0 14
      %6035 = vperm.xlu0 %6034, %v288
      %v6036 = vpop.permute.xlu0 %6035
      %6038 = vset.pattern.permute.xlu0 14
      %6039 = vperm.xlu0 %6038, %v289
      %v6040 = vpop.permute.xlu0 %6039
      %6042 = vset.pattern.permute.xlu0 14
      %6043 = vperm.xlu0 %6042, %v290
      %v6044 = vpop.permute.xlu0 %6043
      %6046 = vset.pattern.permute.xlu0 14
      %6047 = vperm.xlu0 %6046, %v291
      %v6048 = vpop.permute.xlu0 %6047
      %6050 = vset.pattern.permute.xlu0 14
      %6051 = vperm.xlu0 %6050, %v292
      %v6052 = vpop.permute.xlu0 %6051
      %6054 = vset.pattern.permute.xlu0 14
      %6055 = vperm.xlu0 %6054, %v293
      %v6056 = vpop.permute.xlu0 %6055
      %6058 = vset.pattern.permute.xlu0 14
      %6059 = vperm.xlu0 %6058, %v294
      %v6060 = vpop.permute.xlu0 %6059
      %6062 = vset.pattern.permute.xlu0 14
      %6063 = vperm.xlu0 %6062, %v295
      %v6064 = vpop.permute.xlu0 %6063
      %6066 = vset.pattern.permute.xlu0 14
      %6067 = vperm.xlu0 %6066, %v296
      %v6068 = vpop.permute.xlu0 %6067
      %6070 = vset.pattern.permute.xlu0 14
      %6071 = vperm.xlu0 %6070, %v297
      %v6072 = vpop.permute.xlu0 %6071
      %6074 = vset.pattern.permute.xlu0 14
      %6075 = vperm.xlu0 %6074, %v298
      %v6076 = vpop.permute.xlu0 %6075
      %6078 = vset.pattern.permute.xlu0 14
      %6079 = vperm.xlu0 %6078, %v299
      %v6080 = vpop.permute.xlu0 %6079
      %6082 = vset.pattern.permute.xlu0 14
      %6083 = vperm.xlu0 %6082, %v300
      %v6084 = vpop.permute.xlu0 %6083
      %6086 = vset.pattern.permute.xlu0 14
      %6087 = vperm.xlu0 %6086, %v301
      %v6088 = vpop.permute.xlu0 %6087
      %6090 = vset.pattern.permute.xlu0 14
      %6091 = vperm.xlu0 %6090, %v302
      %v6092 = vpop.permute.xlu0 %6091
      %6094 = vset.pattern.permute.xlu0 14
      %6095 = vperm.xlu0 %6094, %v303
      %v6096 = vpop.permute.xlu0 %6095
      %6098 = vset.pattern.permute.xlu0 14
      %6099 = vperm.xlu0 %6098, %v304
      %v6100 = vpop.permute.xlu0 %6099
      %6102 = vset.pattern.permute.xlu0 14
      %6103 = vperm.xlu0 %6102, %v305
      %v6104 = vpop.permute.xlu0 %6103
      %6106 = vset.pattern.permute.xlu0 14
      %6107 = vperm.xlu0 %6106, %v306
      %v6108 = vpop.permute.xlu0 %6107
      %6110 = vset.pattern.permute.xlu0 14
      %6111 = vperm.xlu0 %6110, %v307
      %v6112 = vpop.permute.xlu0 %6111
      %6114 = vset.pattern.permute.xlu0 14
      %6115 = vperm.xlu0 %6114, %v308
      %v6116 = vpop.permute.xlu0 %6115
      %6118 = vset.pattern.permute.xlu0 14
      %6119 = vperm.xlu0 %6118, %v309
      %v6120 = vpop.permute.xlu0 %6119
      %6122 = vset.pattern.permute.xlu0 14
      %6123 = vperm.xlu0 %6122, %v310
      %v6124 = vpop.permute.xlu0 %6123
      %6126 = vset.pattern.permute.xlu0 14
      %6127 = vperm.xlu0 %6126, %v311
      %v6128 = vpop.permute.xlu0 %6127
      %6130 = vset.pattern.permute.xlu0 14
      %6131 = vperm.xlu0 %6130, %v312
      %v6132 = vpop.permute.xlu0 %6131
      %6134 = vset.pattern.permute.xlu0 14
      %6135 = vperm.xlu0 %6134, %v313
      %v6136 = vpop.permute.xlu0 %6135
      %6138 = vset.pattern.permute.xlu0 14
      %6139 = vperm.xlu0 %6138, %v314
      %v6140 = vpop.permute.xlu0 %6139
      %6142 = vset.pattern.permute.xlu0 14
      %6143 = vperm.xlu0 %6142, %v315
      %v6144 = vpop.permute.xlu0 %6143
      %6146 = vset.pattern.permute.xlu0 14
      %6147 = vperm.xlu0 %6146, %v316
      %v6148 = vpop.permute.xlu0 %6147
      %6150 = vset.pattern.permute.xlu0 14
      %6151 = vperm.xlu0 %6150, %v317
      %v6152 = vpop.permute.xlu0 %6151
      %6154 = vset.pattern.permute.xlu0 14
      %6155 = vperm.xlu0 %6154, %v318
      %v6156 = vpop.permute.xlu0 %6155
      %6158 = vset.pattern.permute.xlu0 14
      %6159 = vperm.xlu0 %6158, %v319
      %v6160 = vpop.permute.xlu0 %6159
      %6162 = vset.pattern.permute.xlu0 14
      %6163 = vperm.xlu0 %6162, %v320
      %v6164 = vpop.permute.xlu0 %6163
      %v6166 = vlaneseq
      %v6167 = vshrl.u32 %v6166, 7
      %v6168 = vsub.s32 6, %v6167
      %v6169 = vrot.slane %v377, %v6168
      %v6170 = vmul.f32 %v5964, %v6169
      %v6171 = vmul.f32 %v5968, %v6169
      %v6172 = vmul.f32 %v5972, %v6169
      %v6173 = vmul.f32 %v5976, %v6169
      %v6174 = vmul.f32 %v5980, %v6169
      %v6175 = vmul.f32 %v5984, %v6169
      %v6176 = vmul.f32 %v5988, %v6169
      %v6177 = vmul.f32 %v5992, %v6169
      %v6178 = vmul.f32 %v5996, %v6169
      %v6179 = vmul.f32 %v6000, %v6169
      %v6180 = vmul.f32 %v6004, %v6169
      %v6181 = vmul.f32 %v6008, %v6169
      %v6182 = vmul.f32 %v6012, %v6169
      %v6183 = vmul.f32 %v6016, %v6169
      %v6184 = vmul.f32 %v6020, %v6169
      %v6185 = vmul.f32 %v6024, %v6169
      %v6186 = vmul.f32 %v6028, %v6169
      %v6187 = vmul.f32 %v6032, %v6169
      %v6188 = vmul.f32 %v6036, %v6169
      %v6189 = vmul.f32 %v6040, %v6169
      %v6190 = vmul.f32 %v6044, %v6169
      %v6191 = vmul.f32 %v6048, %v6169
      %v6192 = vmul.f32 %v6052, %v6169
      %v6193 = vmul.f32 %v6056, %v6169
      %v6194 = vmul.f32 %v6060, %v6169
      %v6195 = vmul.f32 %v6064, %v6169
      %v6196 = vmul.f32 %v6068, %v6169
      %v6197 = vmul.f32 %v6072, %v6169
      %v6198 = vmul.f32 %v6076, %v6169
      %v6199 = vmul.f32 %v6080, %v6169
      %v6200 = vmul.f32 %v6084, %v6169
      %v6201 = vmul.f32 %v6088, %v6169
      %v6202 = vmul.f32 %v6092, %v6169
      %v6203 = vmul.f32 %v6096, %v6169
      %v6204 = vmul.f32 %v6100, %v6169
      %v6205 = vmul.f32 %v6104, %v6169
      %v6206 = vmul.f32 %v6108, %v6169
      %v6207 = vmul.f32 %v6112, %v6169
      %v6208 = vmul.f32 %v6116, %v6169
      %v6209 = vmul.f32 %v6120, %v6169
      %v6210 = vmul.f32 %v6124, %v6169
      %v6211 = vmul.f32 %v6128, %v6169
      %v6212 = vmul.f32 %v6132, %v6169
      %v6213 = vmul.f32 %v6136, %v6169
      %v6214 = vmul.f32 %v6140, %v6169
      %v6215 = vmul.f32 %v6144, %v6169
      %v6216 = vmul.f32 %v6148, %v6169
      %v6217 = vmul.f32 %v6152, %v6169
      %v6218 = vmul.f32 %v6156, %v6169
      %v6219 = vmul.f32 %v6160, %v6169
      %v6220 = vmul.f32 %v6164, %v6169
      %v6221 = vadd.f32 %v5911, %v6170
      %v6222 = vadd.f32 %v5912, %v6171
      %v6223 = vadd.f32 %v5913, %v6172
      %v6224 = vadd.f32 %v5914, %v6173
      %v6225 = vadd.f32 %v5915, %v6174
      %v6226 = vadd.f32 %v5916, %v6175
      %v6227 = vadd.f32 %v5917, %v6176
      %v6228 = vadd.f32 %v5918, %v6177
      %v6229 = vadd.f32 %v5919, %v6178
      %v6230 = vadd.f32 %v5920, %v6179
      %v6231 = vadd.f32 %v5921, %v6180
      %v6232 = vadd.f32 %v5922, %v6181
      %v6233 = vadd.f32 %v5923, %v6182
      %v6234 = vadd.f32 %v5924, %v6183
      %v6235 = vadd.f32 %v5925, %v6184
      %v6236 = vadd.f32 %v5926, %v6185
      %v6237 = vadd.f32 %v5927, %v6186
      %v6238 = vadd.f32 %v5928, %v6187
      %v6239 = vadd.f32 %v5929, %v6188
      %v6240 = vadd.f32 %v5930, %v6189
      %v6241 = vadd.f32 %v5931, %v6190
      %v6242 = vadd.f32 %v5932, %v6191
      %v6243 = vadd.f32 %v5933, %v6192
      %v6244 = vadd.f32 %v5934, %v6193
      %v6245 = vadd.f32 %v5935, %v6194
      %v6246 = vadd.f32 %v5936, %v6195
      %v6247 = vadd.f32 %v5937, %v6196
      %v6248 = vadd.f32 %v5938, %v6197
      %v6249 = vadd.f32 %v5939, %v6198
      %v6250 = vadd.f32 %v5940, %v6199
      %v6251 = vadd.f32 %v5941, %v6200
      %v6252 = vadd.f32 %v5942, %v6201
      %v6253 = vadd.f32 %v5943, %v6202
      %v6254 = vadd.f32 %v5944, %v6203
      %v6255 = vadd.f32 %v5945, %v6204
      %v6256 = vadd.f32 %v5946, %v6205
      %v6257 = vadd.f32 %v5947, %v6206
      %v6258 = vadd.f32 %v5948, %v6207
      %v6259 = vadd.f32 %v5949, %v6208
      %v6260 = vadd.f32 %v5950, %v6209
      %v6261 = vadd.f32 %v5951, %v6210
      %v6262 = vadd.f32 %v5952, %v6211
      %v6263 = vadd.f32 %v5953, %v6212
      %v6264 = vadd.f32 %v5954, %v6213
      %v6265 = vadd.f32 %v5955, %v6214
      %v6266 = vadd.f32 %v5956, %v6215
      %v6267 = vadd.f32 %v5957, %v6216
      %v6268 = vadd.f32 %v5958, %v6217
      %v6269 = vadd.f32 %v5959, %v6218
      %v6270 = vadd.f32 %v5960, %v6219
      %v6271 = vadd.f32 %v5961, %v6220
      %6272 = vset.pattern.permute.xlu0 15
      %6273 = vperm.xlu0 %6272, %v270
      %v6274 = vpop.permute.xlu0 %6273
      %6276 = vset.pattern.permute.xlu0 15
      %6277 = vperm.xlu0 %6276, %v271
      %v6278 = vpop.permute.xlu0 %6277
      %6280 = vset.pattern.permute.xlu0 15
      %6281 = vperm.xlu0 %6280, %v272
      %v6282 = vpop.permute.xlu0 %6281
      %6284 = vset.pattern.permute.xlu0 15
      %6285 = vperm.xlu0 %6284, %v273
      %v6286 = vpop.permute.xlu0 %6285
      %6288 = vset.pattern.permute.xlu0 15
      %6289 = vperm.xlu0 %6288, %v274
      %v6290 = vpop.permute.xlu0 %6289
      %6292 = vset.pattern.permute.xlu0 15
      %6293 = vperm.xlu0 %6292, %v275
      %v6294 = vpop.permute.xlu0 %6293
      %6296 = vset.pattern.permute.xlu0 15
      %6297 = vperm.xlu0 %6296, %v276
      %v6298 = vpop.permute.xlu0 %6297
      %6300 = vset.pattern.permute.xlu0 15
      %6301 = vperm.xlu0 %6300, %v277
      %v6302 = vpop.permute.xlu0 %6301
      %6304 = vset.pattern.permute.xlu0 15
      %6305 = vperm.xlu0 %6304, %v278
      %v6306 = vpop.permute.xlu0 %6305
      %6308 = vset.pattern.permute.xlu0 15
      %6309 = vperm.xlu0 %6308, %v279
      %v6310 = vpop.permute.xlu0 %6309
      %6312 = vset.pattern.permute.xlu0 15
      %6313 = vperm.xlu0 %6312, %v280
      %v6314 = vpop.permute.xlu0 %6313
      %6316 = vset.pattern.permute.xlu0 15
      %6317 = vperm.xlu0 %6316, %v281
      %v6318 = vpop.permute.xlu0 %6317
      %6320 = vset.pattern.permute.xlu0 15
      %6321 = vperm.xlu0 %6320, %v282
      %v6322 = vpop.permute.xlu0 %6321
      %6324 = vset.pattern.permute.xlu0 15
      %6325 = vperm.xlu0 %6324, %v283
      %v6326 = vpop.permute.xlu0 %6325
      %6328 = vset.pattern.permute.xlu0 15
      %6329 = vperm.xlu0 %6328, %v284
      %v6330 = vpop.permute.xlu0 %6329
      %6332 = vset.pattern.permute.xlu0 15
      %6333 = vperm.xlu0 %6332, %v285
      %v6334 = vpop.permute.xlu0 %6333
      %6336 = vset.pattern.permute.xlu0 15
      %6337 = vperm.xlu0 %6336, %v286
      %v6338 = vpop.permute.xlu0 %6337
      %6340 = vset.pattern.permute.xlu0 15
      %6341 = vperm.xlu0 %6340, %v287
      %v6342 = vpop.permute.xlu0 %6341
      %6344 = vset.pattern.permute.xlu0 15
      %6345 = vperm.xlu0 %6344, %v288
      %v6346 = vpop.permute.xlu0 %6345
      %6348 = vset.pattern.permute.xlu0 15
      %6349 = vperm.xlu0 %6348, %v289
      %v6350 = vpop.permute.xlu0 %6349
      %6352 = vset.pattern.permute.xlu0 15
      %6353 = vperm.xlu0 %6352, %v290
      %v6354 = vpop.permute.xlu0 %6353
      %6356 = vset.pattern.permute.xlu0 15
      %6357 = vperm.xlu0 %6356, %v291
      %v6358 = vpop.permute.xlu0 %6357
      %6360 = vset.pattern.permute.xlu0 15
      %6361 = vperm.xlu0 %6360, %v292
      %v6362 = vpop.permute.xlu0 %6361
      %6364 = vset.pattern.permute.xlu0 15
      %6365 = vperm.xlu0 %6364, %v293
      %v6366 = vpop.permute.xlu0 %6365
      %6368 = vset.pattern.permute.xlu0 15
      %6369 = vperm.xlu0 %6368, %v294
      %v6370 = vpop.permute.xlu0 %6369
      %6372 = vset.pattern.permute.xlu0 15
      %6373 = vperm.xlu0 %6372, %v295
      %v6374 = vpop.permute.xlu0 %6373
      %6376 = vset.pattern.permute.xlu0 15
      %6377 = vperm.xlu0 %6376, %v296
      %v6378 = vpop.permute.xlu0 %6377
      %6380 = vset.pattern.permute.xlu0 15
      %6381 = vperm.xlu0 %6380, %v297
      %v6382 = vpop.permute.xlu0 %6381
      %6384 = vset.pattern.permute.xlu0 15
      %6385 = vperm.xlu0 %6384, %v298
      %v6386 = vpop.permute.xlu0 %6385
      %6388 = vset.pattern.permute.xlu0 15
      %6389 = vperm.xlu0 %6388, %v299
      %v6390 = vpop.permute.xlu0 %6389
      %6392 = vset.pattern.permute.xlu0 15
      %6393 = vperm.xlu0 %6392, %v300
      %v6394 = vpop.permute.xlu0 %6393
      %6396 = vset.pattern.permute.xlu0 15
      %6397 = vperm.xlu0 %6396, %v301
      %v6398 = vpop.permute.xlu0 %6397
      %6400 = vset.pattern.permute.xlu0 15
      %6401 = vperm.xlu0 %6400, %v302
      %v6402 = vpop.permute.xlu0 %6401
      %6404 = vset.pattern.permute.xlu0 15
      %6405 = vperm.xlu0 %6404, %v303
      %v6406 = vpop.permute.xlu0 %6405
      %6408 = vset.pattern.permute.xlu0 15
      %6409 = vperm.xlu0 %6408, %v304
      %v6410 = vpop.permute.xlu0 %6409
      %6412 = vset.pattern.permute.xlu0 15
      %6413 = vperm.xlu0 %6412, %v305
      %v6414 = vpop.permute.xlu0 %6413
      %6416 = vset.pattern.permute.xlu0 15
      %6417 = vperm.xlu0 %6416, %v306
      %v6418 = vpop.permute.xlu0 %6417
      %6420 = vset.pattern.permute.xlu0 15
      %6421 = vperm.xlu0 %6420, %v307
      %v6422 = vpop.permute.xlu0 %6421
      %6424 = vset.pattern.permute.xlu0 15
      %6425 = vperm.xlu0 %6424, %v308
      %v6426 = vpop.permute.xlu0 %6425
      %6428 = vset.pattern.permute.xlu0 15
      %6429 = vperm.xlu0 %6428, %v309
      %v6430 = vpop.permute.xlu0 %6429
      %6432 = vset.pattern.permute.xlu0 15
      %6433 = vperm.xlu0 %6432, %v310
      %v6434 = vpop.permute.xlu0 %6433
      %6436 = vset.pattern.permute.xlu0 15
      %6437 = vperm.xlu0 %6436, %v311
      %v6438 = vpop.permute.xlu0 %6437
      %6440 = vset.pattern.permute.xlu0 15
      %6441 = vperm.xlu0 %6440, %v312
      %v6442 = vpop.permute.xlu0 %6441
      %6444 = vset.pattern.permute.xlu0 15
      %6445 = vperm.xlu0 %6444, %v313
      %v6446 = vpop.permute.xlu0 %6445
      %6448 = vset.pattern.permute.xlu0 15
      %6449 = vperm.xlu0 %6448, %v314
      %v6450 = vpop.permute.xlu0 %6449
      %6452 = vset.pattern.permute.xlu0 15
      %6453 = vperm.xlu0 %6452, %v315
      %v6454 = vpop.permute.xlu0 %6453
      %6456 = vset.pattern.permute.xlu0 15
      %6457 = vperm.xlu0 %6456, %v316
      %v6458 = vpop.permute.xlu0 %6457
      %6460 = vset.pattern.permute.xlu0 15
      %6461 = vperm.xlu0 %6460, %v317
      %v6462 = vpop.permute.xlu0 %6461
      %6464 = vset.pattern.permute.xlu0 15
      %6465 = vperm.xlu0 %6464, %v318
      %v6466 = vpop.permute.xlu0 %6465
      %6468 = vset.pattern.permute.xlu0 15
      %6469 = vperm.xlu0 %6468, %v319
      %v6470 = vpop.permute.xlu0 %6469
      %6472 = vset.pattern.permute.xlu0 15
      %6473 = vperm.xlu0 %6472, %v320
      %v6474 = vpop.permute.xlu0 %6473
      %v6476 = vlaneseq
      %v6477 = vshrl.u32 %v6476, 7
      %v6478 = vsub.s32 7, %v6477
      %v6479 = vrot.slane %v377, %v6478
      %v6480 = vmul.f32 %v6274, %v6479
      %v6481 = vmul.f32 %v6278, %v6479
      %v6482 = vmul.f32 %v6282, %v6479
      %v6483 = vmul.f32 %v6286, %v6479
      %v6484 = vmul.f32 %v6290, %v6479
      %v6485 = vmul.f32 %v6294, %v6479
      %v6486 = vmul.f32 %v6298, %v6479
      %v6487 = vmul.f32 %v6302, %v6479
      %v6488 = vmul.f32 %v6306, %v6479
      %v6489 = vmul.f32 %v6310, %v6479
      %v6490 = vmul.f32 %v6314, %v6479
      %v6491 = vmul.f32 %v6318, %v6479
      %v6492 = vmul.f32 %v6322, %v6479
      %v6493 = vmul.f32 %v6326, %v6479
      %v6494 = vmul.f32 %v6330, %v6479
      %v6495 = vmul.f32 %v6334, %v6479
      %v6496 = vmul.f32 %v6338, %v6479
      %v6497 = vmul.f32 %v6342, %v6479
      %v6498 = vmul.f32 %v6346, %v6479
      %v6499 = vmul.f32 %v6350, %v6479
      %v6500 = vmul.f32 %v6354, %v6479
      %v6501 = vmul.f32 %v6358, %v6479
      %v6502 = vmul.f32 %v6362, %v6479
      %v6503 = vmul.f32 %v6366, %v6479
      %v6504 = vmul.f32 %v6370, %v6479
      %v6505 = vmul.f32 %v6374, %v6479
      %v6506 = vmul.f32 %v6378, %v6479
      %v6507 = vmul.f32 %v6382, %v6479
      %v6508 = vmul.f32 %v6386, %v6479
      %v6509 = vmul.f32 %v6390, %v6479
      %v6510 = vmul.f32 %v6394, %v6479
      %v6511 = vmul.f32 %v6398, %v6479
      %v6512 = vmul.f32 %v6402, %v6479
      %v6513 = vmul.f32 %v6406, %v6479
      %v6514 = vmul.f32 %v6410, %v6479
      %v6515 = vmul.f32 %v6414, %v6479
      %v6516 = vmul.f32 %v6418, %v6479
      %v6517 = vmul.f32 %v6422, %v6479
      %v6518 = vmul.f32 %v6426, %v6479
      %v6519 = vmul.f32 %v6430, %v6479
      %v6520 = vmul.f32 %v6434, %v6479
      %v6521 = vmul.f32 %v6438, %v6479
      %v6522 = vmul.f32 %v6442, %v6479
      %v6523 = vmul.f32 %v6446, %v6479
      %v6524 = vmul.f32 %v6450, %v6479
      %v6525 = vmul.f32 %v6454, %v6479
      %v6526 = vmul.f32 %v6458, %v6479
      %v6527 = vmul.f32 %v6462, %v6479
      %v6528 = vmul.f32 %v6466, %v6479
      %v6529 = vmul.f32 %v6470, %v6479
      %v6530 = vmul.f32 %v6474, %v6479
      %v6531 = vadd.f32 %v6221, %v6480
      %v6532 = vadd.f32 %v6222, %v6481
      %v6533 = vadd.f32 %v6223, %v6482
      %v6534 = vadd.f32 %v6224, %v6483
      %v6535 = vadd.f32 %v6225, %v6484
      %v6536 = vadd.f32 %v6226, %v6485
      %v6537 = vadd.f32 %v6227, %v6486
      %v6538 = vadd.f32 %v6228, %v6487
      %v6539 = vadd.f32 %v6229, %v6488
      %v6540 = vadd.f32 %v6230, %v6489
      %v6541 = vadd.f32 %v6231, %v6490
      %v6542 = vadd.f32 %v6232, %v6491
      %v6543 = vadd.f32 %v6233, %v6492
      %v6544 = vadd.f32 %v6234, %v6493
      %v6545 = vadd.f32 %v6235, %v6494
      %v6546 = vadd.f32 %v6236, %v6495
      %v6547 = vadd.f32 %v6237, %v6496
      %v6548 = vadd.f32 %v6238, %v6497
      %v6549 = vadd.f32 %v6239, %v6498
      %v6550 = vadd.f32 %v6240, %v6499
      %v6551 = vadd.f32 %v6241, %v6500
      %v6552 = vadd.f32 %v6242, %v6501
      %v6553 = vadd.f32 %v6243, %v6502
      %v6554 = vadd.f32 %v6244, %v6503
      %v6555 = vadd.f32 %v6245, %v6504
      %v6556 = vadd.f32 %v6246, %v6505
      %v6557 = vadd.f32 %v6247, %v6506
      %v6558 = vadd.f32 %v6248, %v6507
      %v6559 = vadd.f32 %v6249, %v6508
      %v6560 = vadd.f32 %v6250, %v6509
      %v6561 = vadd.f32 %v6251, %v6510
      %v6562 = vadd.f32 %v6252, %v6511
      %v6563 = vadd.f32 %v6253, %v6512
      %v6564 = vadd.f32 %v6254, %v6513
      %v6565 = vadd.f32 %v6255, %v6514
      %v6566 = vadd.f32 %v6256, %v6515
      %v6567 = vadd.f32 %v6257, %v6516
      %v6568 = vadd.f32 %v6258, %v6517
      %v6569 = vadd.f32 %v6259, %v6518
      %v6570 = vadd.f32 %v6260, %v6519
      %v6571 = vadd.f32 %v6261, %v6520
      %v6572 = vadd.f32 %v6262, %v6521
      %v6573 = vadd.f32 %v6263, %v6522
      %v6574 = vadd.f32 %v6264, %v6523
      %v6575 = vadd.f32 %v6265, %v6524
      %v6576 = vadd.f32 %v6266, %v6525
      %v6577 = vadd.f32 %v6267, %v6526
      %v6578 = vadd.f32 %v6268, %v6527
      %v6579 = vadd.f32 %v6269, %v6528
      %v6580 = vadd.f32 %v6270, %v6529
      %v6581 = vadd.f32 %v6271, %v6530
      %v6582 = vlaneseq
      %v6583 = vshrl.u32 %v6582, 7
      %v6584 = vsub.s32 4, %v6583
      %v6585 = vrot.slane %v382, %v6584
      %v6586 = vmul.f32 %v6531, %v6585
      %v6587 = vmul.f32 %v6532, %v6585
      %v6588 = vmul.f32 %v6533, %v6585
      %v6589 = vmul.f32 %v6534, %v6585
      %v6590 = vmul.f32 %v6535, %v6585
      %v6591 = vmul.f32 %v6536, %v6585
      %v6592 = vmul.f32 %v6537, %v6585
      %v6593 = vmul.f32 %v6538, %v6585
      %v6594 = vmul.f32 %v6539, %v6585
      %v6595 = vmul.f32 %v6540, %v6585
      %v6596 = vmul.f32 %v6541, %v6585
      %v6597 = vmul.f32 %v6542, %v6585
      %v6598 = vmul.f32 %v6543, %v6585
      %v6599 = vmul.f32 %v6544, %v6585
      %v6600 = vmul.f32 %v6545, %v6585
      %v6601 = vmul.f32 %v6546, %v6585
      %v6602 = vmul.f32 %v6547, %v6585
      %v6603 = vmul.f32 %v6548, %v6585
      %v6604 = vmul.f32 %v6549, %v6585
      %v6605 = vmul.f32 %v6550, %v6585
      %v6606 = vmul.f32 %v6551, %v6585
      %v6607 = vmul.f32 %v6552, %v6585
      %v6608 = vmul.f32 %v6553, %v6585
      %v6609 = vmul.f32 %v6554, %v6585
      %v6610 = vmul.f32 %v6555, %v6585
      %v6611 = vmul.f32 %v6556, %v6585
      %v6612 = vmul.f32 %v6557, %v6585
      %v6613 = vmul.f32 %v6558, %v6585
      %v6614 = vmul.f32 %v6559, %v6585
      %v6615 = vmul.f32 %v6560, %v6585
      %v6616 = vmul.f32 %v6561, %v6585
      %v6617 = vmul.f32 %v6562, %v6585
      %v6618 = vmul.f32 %v6563, %v6585
      %v6619 = vmul.f32 %v6564, %v6585
      %v6620 = vmul.f32 %v6565, %v6585
      %v6621 = vmul.f32 %v6566, %v6585
      %v6622 = vmul.f32 %v6567, %v6585
      %v6623 = vmul.f32 %v6568, %v6585
      %v6624 = vmul.f32 %v6569, %v6585
      %v6625 = vmul.f32 %v6570, %v6585
      %v6626 = vmul.f32 %v6571, %v6585
      %v6627 = vmul.f32 %v6572, %v6585
      %v6628 = vmul.f32 %v6573, %v6585
      %v6629 = vmul.f32 %v6574, %v6585
      %v6630 = vmul.f32 %v6575, %v6585
      %v6631 = vmul.f32 %v6576, %v6585
      %v6632 = vmul.f32 %v6577, %v6585
      %v6633 = vmul.f32 %v6578, %v6585
      %v6634 = vmul.f32 %v6579, %v6585
      %v6635 = vmul.f32 %v6580, %v6585
      %v6636 = vmul.f32 %v6581, %v6585
      %v6637 = vlaneseq
      %v6638 = vshrl.u32 %v6637, 7
      %v6639 = vsub.s32 5, %v6638
      %v6640 = vrot.slane %v382, %v6639
      %v6641 = vadd.f32 %v6586, %v6640
      %v6642 = vadd.f32 %v6587, %v6640
      %v6643 = vadd.f32 %v6588, %v6640
      %v6644 = vadd.f32 %v6589, %v6640
      %v6645 = vadd.f32 %v6590, %v6640
      %v6646 = vadd.f32 %v6591, %v6640
      %v6647 = vadd.f32 %v6592, %v6640
      %v6648 = vadd.f32 %v6593, %v6640
      %v6649 = vadd.f32 %v6594, %v6640
      %v6650 = vadd.f32 %v6595, %v6640
      %v6651 = vadd.f32 %v6596, %v6640
      %v6652 = vadd.f32 %v6597, %v6640
      %v6653 = vadd.f32 %v6598, %v6640
      %v6654 = vadd.f32 %v6599, %v6640
      %v6655 = vadd.f32 %v6600, %v6640
      %v6656 = vadd.f32 %v6601, %v6640
      %v6657 = vadd.f32 %v6602, %v6640
      %v6658 = vadd.f32 %v6603, %v6640
      %v6659 = vadd.f32 %v6604, %v6640
      %v6660 = vadd.f32 %v6605, %v6640
      %v6661 = vadd.f32 %v6606, %v6640
      %v6662 = vadd.f32 %v6607, %v6640
      %v6663 = vadd.f32 %v6608, %v6640
      %v6664 = vadd.f32 %v6609, %v6640
      %v6665 = vadd.f32 %v6610, %v6640
      %v6666 = vadd.f32 %v6611, %v6640
      %v6667 = vadd.f32 %v6612, %v6640
      %v6668 = vadd.f32 %v6613, %v6640
      %v6669 = vadd.f32 %v6614, %v6640
      %v6670 = vadd.f32 %v6615, %v6640
      %v6671 = vadd.f32 %v6616, %v6640
      %v6672 = vadd.f32 %v6617, %v6640
      %v6673 = vadd.f32 %v6618, %v6640
      %v6674 = vadd.f32 %v6619, %v6640
      %v6675 = vadd.f32 %v6620, %v6640
      %v6676 = vadd.f32 %v6621, %v6640
      %v6677 = vadd.f32 %v6622, %v6640
      %v6678 = vadd.f32 %v6623, %v6640
      %v6679 = vadd.f32 %v6624, %v6640
      %v6680 = vadd.f32 %v6625, %v6640
      %v6681 = vadd.f32 %v6626, %v6640
      %v6682 = vadd.f32 %v6627, %v6640
      %v6683 = vadd.f32 %v6628, %v6640
      %v6684 = vadd.f32 %v6629, %v6640
      %v6685 = vadd.f32 %v6630, %v6640
      %v6686 = vadd.f32 %v6631, %v6640
      %v6687 = vadd.f32 %v6632, %v6640
      %v6688 = vadd.f32 %v6633, %v6640
      %v6689 = vadd.f32 %v6634, %v6640
      %v6690 = vadd.f32 %v6635, %v6640
      %v6691 = vadd.f32 %v6636, %v6640
      %v6692 = vmax.f32 %v6641, 0.0
      %v6693 = vmax.f32 %v6642, 0.0
      %v6694 = vmax.f32 %v6643, 0.0
      %v6695 = vmax.f32 %v6644, 0.0
      %v6696 = vmax.f32 %v6645, 0.0
      %v6697 = vmax.f32 %v6646, 0.0
      %v6698 = vmax.f32 %v6647, 0.0
      %v6699 = vmax.f32 %v6648, 0.0
      %v6700 = vmax.f32 %v6649, 0.0
      %v6701 = vmax.f32 %v6650, 0.0
      %v6702 = vmax.f32 %v6651, 0.0
      %v6703 = vmax.f32 %v6652, 0.0
      %v6704 = vmax.f32 %v6653, 0.0
      %v6705 = vmax.f32 %v6654, 0.0
      %v6706 = vmax.f32 %v6655, 0.0
      %v6707 = vmax.f32 %v6656, 0.0
      %v6708 = vmax.f32 %v6657, 0.0
      %v6709 = vmax.f32 %v6658, 0.0
      %v6710 = vmax.f32 %v6659, 0.0
      %v6711 = vmax.f32 %v6660, 0.0
      %v6712 = vmax.f32 %v6661, 0.0
      %v6713 = vmax.f32 %v6662, 0.0
      %v6714 = vmax.f32 %v6663, 0.0
      %v6715 = vmax.f32 %v6664, 0.0
      %v6716 = vmax.f32 %v6665, 0.0
      %v6717 = vmax.f32 %v6666, 0.0
      %v6718 = vmax.f32 %v6667, 0.0
      %v6719 = vmax.f32 %v6668, 0.0
      %v6720 = vmax.f32 %v6669, 0.0
      %v6721 = vmax.f32 %v6670, 0.0
      %v6722 = vmax.f32 %v6671, 0.0
      %v6723 = vmax.f32 %v6672, 0.0
      %v6724 = vmax.f32 %v6673, 0.0
      %v6725 = vmax.f32 %v6674, 0.0
      %v6726 = vmax.f32 %v6675, 0.0
      %v6727 = vmax.f32 %v6676, 0.0
      %v6728 = vmax.f32 %v6677, 0.0
      %v6729 = vmax.f32 %v6678, 0.0
      %v6730 = vmax.f32 %v6679, 0.0
      %v6731 = vmax.f32 %v6680, 0.0
      %v6732 = vmax.f32 %v6681, 0.0
      %v6733 = vmax.f32 %v6682, 0.0
      %v6734 = vmax.f32 %v6683, 0.0
      %v6735 = vmax.f32 %v6684, 0.0
      %v6736 = vmax.f32 %v6685, 0.0
      %v6737 = vmax.f32 %v6686, 0.0
      %v6738 = vmax.f32 %v6687, 0.0
      %v6739 = vmax.f32 %v6688, 0.0
      %v6740 = vmax.f32 %v6689, 0.0
      %v6741 = vmax.f32 %v6690, 0.0
      %v6742 = vmax.f32 %v6691, 0.0
      %v6743 = vmul.f32 %v6692, %v321
      %v6744 = vmul.f32 %v6693, %v322
      %v6745 = vmul.f32 %v6694, %v323
      %v6746 = vmul.f32 %v6695, %v324
      %v6747 = vmul.f32 %v6696, %v325
      %v6748 = vmul.f32 %v6697, %v326
      %v6749 = vmul.f32 %v6698, %v327
      %v6750 = vmul.f32 %v6699, %v328
      %v6751 = vmul.f32 %v6700, %v329
      %v6752 = vmul.f32 %v6701, %v330
      %v6753 = vmul.f32 %v6702, %v331
      %v6754 = vmul.f32 %v6703, %v332
      %v6755 = vmul.f32 %v6704, %v333
      %v6756 = vmul.f32 %v6705, %v334
      %v6757 = vmul.f32 %v6706, %v335
      %v6758 = vmul.f32 %v6707, %v336
      %v6759 = vmul.f32 %v6708, %v337
      %v6760 = vmul.f32 %v6709, %v338
      %v6761 = vmul.f32 %v6710, %v339
      %v6762 = vmul.f32 %v6711, %v340
      %v6763 = vmul.f32 %v6712, %v341
      %v6764 = vmul.f32 %v6713, %v342
      %v6765 = vmul.f32 %v6714, %v343
      %v6766 = vmul.f32 %v6715, %v344
      %v6767 = vmul.f32 %v6716, %v345
      %v6768 = vmul.f32 %v6717, %v346
      %v6769 = vmul.f32 %v6718, %v347
      %v6770 = vmul.f32 %v6719, %v348
      %v6771 = vmul.f32 %v6720, %v349
      %v6772 = vmul.f32 %v6721, %v350
      %v6773 = vmul.f32 %v6722, %v351
      %v6774 = vmul.f32 %v6723, %v352
      %v6775 = vmul.f32 %v6724, %v353
      %v6776 = vmul.f32 %v6725, %v354
      %v6777 = vmul.f32 %v6726, %v355
      %v6778 = vmul.f32 %v6727, %v356
      %v6779 = vmul.f32 %v6728, %v357
      %v6780 = vmul.f32 %v6729, %v358
      %v6781 = vmul.f32 %v6730, %v359
      %v6782 = vmul.f32 %v6731, %v360
      %v6783 = vmul.f32 %v6732, %v361
      %v6784 = vmul.f32 %v6733, %v362
      %v6785 = vmul.f32 %v6734, %v363
      %v6786 = vmul.f32 %v6735, %v364
      %v6787 = vmul.f32 %v6736, %v365
      %v6788 = vmul.f32 %v6737, %v366
      %v6789 = vmul.f32 %v6738, %v367
      %v6790 = vmul.f32 %v6739, %v368
      %v6791 = vmul.f32 %v6740, %v369
      %v6792 = vmul.f32 %v6741, %v370
      %v6793 = vmul.f32 %v6742, %v371
      %v6794 = vlaneseq
      %v6795 = vshrl.u32 %v6794, 7
      %v6796 = vsub.s32 0, %v6795
      %v6797 = vrot.slane %v374, %v6796
      %v6798 = vmul.f32 %v6743, %v6797
      %v6799 = vmul.f32 %v6745, %v6797
      %v6800 = vmul.f32 %v6747, %v6797
      %v6801 = vmul.f32 %v6749, %v6797
      %v6802 = vmul.f32 %v6751, %v6797
      %v6803 = vmul.f32 %v6753, %v6797
      %v6804 = vmul.f32 %v6755, %v6797
      %v6805 = vmul.f32 %v6757, %v6797
      %v6806 = vlaneseq
      %v6807 = vshrl.u32 %v6806, 7
      %v6808 = vsub.s32 1, %v6807
      %v6809 = vrot.slane %v374, %v6808
      %v6810 = vmul.f32 %v6761, %v6809
      %v6811 = vmul.f32 %v6762, %v6809
      %v6812 = vmul.f32 %v6763, %v6809
      %v6813 = vmul.f32 %v6764, %v6809
      %v6814 = vmul.f32 %v6765, %v6809
      %v6815 = vmul.f32 %v6766, %v6809
      %v6816 = vmul.f32 %v6767, %v6809
      %v6817 = vmul.f32 %v6768, %v6809
      %v6818 = vadd.f32 %v6798, %v6810
      %v6819 = vadd.f32 %v6799, %v6811
      %v6820 = vadd.f32 %v6800, %v6812
      %v6821 = vadd.f32 %v6801, %v6813
      %v6822 = vadd.f32 %v6802, %v6814
      %v6823 = vadd.f32 %v6803, %v6815
      %v6824 = vadd.f32 %v6804, %v6816
      %v6825 = vadd.f32 %v6805, %v6817
      %v6826 = vlaneseq
      %v6827 = vshrl.u32 %v6826, 7
      %v6828 = vsub.s32 2, %v6827
      %v6829 = vrot.slane %v374, %v6828
      %v6830 = vmul.f32 %v6743, %v6829
      %v6831 = vmul.f32 %v6744, %v6829
      %v6832 = vmul.f32 %v6745, %v6829
      %v6833 = vmul.f32 %v6746, %v6829
      %v6834 = vmul.f32 %v6747, %v6829
      %v6835 = vmul.f32 %v6748, %v6829
      %v6836 = vmul.f32 %v6749, %v6829
      %v6837 = vmul.f32 %v6750, %v6829
      %v6838 = vmul.f32 %v6751, %v6829
      %v6839 = vmul.f32 %v6752, %v6829
      %v6840 = vmul.f32 %v6753, %v6829
      %v6841 = vmul.f32 %v6754, %v6829
      %v6842 = vmul.f32 %v6755, %v6829
      %v6843 = vmul.f32 %v6756, %v6829
      %v6844 = vmul.f32 %v6757, %v6829
      %v6845 = vmul.f32 %v6758, %v6829
      %v6862 = vrot.slane %v6830, 1
      %v6863 = vrot.slane %v6831, 1
      %v6864 = vsel %vm452, %v6862, %v6863
      %v6865 = vrot.slane %v6832, 1
      %v6866 = vrot.slane %v6833, 1
      %v6867 = vsel %vm452, %v6865, %v6866
      %v6868 = vrot.slane %v6834, 1
      %v6869 = vrot.slane %v6835, 1
      %v6870 = vsel %vm452, %v6868, %v6869
      %v6871 = vrot.slane %v6836, 1
      %v6872 = vrot.slane %v6837, 1
      %v6873 = vsel %vm452, %v6871, %v6872
      %v6874 = vrot.slane %v6838, 1
      %v6875 = vrot.slane %v6839, 1
      %v6876 = vsel %vm452, %v6874, %v6875
      %v6877 = vrot.slane %v6840, 1
      %v6878 = vrot.slane %v6841, 1
      %v6879 = vsel %vm452, %v6877, %v6878
      %v6880 = vrot.slane %v6842, 1
      %v6881 = vrot.slane %v6843, 1
      %v6882 = vsel %vm452, %v6880, %v6881
      %v6883 = vrot.slane %v6844, 1
      %v6884 = vrot.slane %v6845, 1
      %v6885 = vsel %vm452, %v6883, %v6884
      %v6894 = vadd.f32 %v6818, %v6864
      %v6895 = vadd.f32 %v6819, %v6867
      %v6896 = vadd.f32 %v6820, %v6870
      %v6897 = vadd.f32 %v6821, %v6873
      %v6898 = vadd.f32 %v6822, %v6876
      %v6899 = vadd.f32 %v6823, %v6879
      %v6900 = vadd.f32 %v6824, %v6882
      %v6901 = vadd.f32 %v6825, %v6885
      %v6902 = vlaneseq
      %v6903 = vshrl.u32 %v6902, 7
      %v6904 = vsub.s32 3, %v6903
      %v6905 = vrot.slane %v374, %v6904
      %v6906 = vmul.f32 %v6770, %v6905
      %v6907 = vmul.f32 %v6772, %v6905
      %v6908 = vmul.f32 %v6774, %v6905
      %v6909 = vmul.f32 %v6776, %v6905
      %v6910 = vmul.f32 %v6778, %v6905
      %v6911 = vmul.f32 %v6780, %v6905
      %v6912 = vmul.f32 %v6782, %v6905
      %v6913 = vmul.f32 %v6784, %v6905
      %v6914 = vadd.f32 %v6894, %v6906
      %v6915 = vadd.f32 %v6895, %v6907
      %v6916 = vadd.f32 %v6896, %v6908
      %v6917 = vadd.f32 %v6897, %v6909
      %v6918 = vadd.f32 %v6898, %v6910
      %v6919 = vadd.f32 %v6899, %v6911
      %v6920 = vadd.f32 %v6900, %v6912
      %v6921 = vadd.f32 %v6901, %v6913
      %v6922 = vlaneseq
      %v6923 = vshrl.u32 %v6922, 7
      %v6924 = vsub.s32 4, %v6923
      %v6925 = vrot.slane %v374, %v6924
      %v6926 = vmul.f32 %v6786, %v6925
      %v6927 = vmul.f32 %v6787, %v6925
      %v6928 = vmul.f32 %v6788, %v6925
      %v6929 = vmul.f32 %v6789, %v6925
      %v6930 = vmul.f32 %v6790, %v6925
      %v6931 = vmul.f32 %v6791, %v6925
      %v6932 = vmul.f32 %v6792, %v6925
      %v6933 = vmul.f32 %v6793, %v6925
      %v6934 = vadd.f32 %v6914, %v6926
      %v6935 = vadd.f32 %v6915, %v6927
      %v6936 = vadd.f32 %v6916, %v6928
      %v6937 = vadd.f32 %v6917, %v6929
      %v6938 = vadd.f32 %v6918, %v6930
      %v6939 = vadd.f32 %v6919, %v6931
      %v6940 = vadd.f32 %v6920, %v6932
      %v6941 = vadd.f32 %v6921, %v6933
      %v6942 = vlaneseq
      %v6943 = vshrl.u32 %v6942, 7
      %v6944 = vsub.s32 5, %v6943
      %v6945 = vrot.slane %v374, %v6944
      %v6946 = vmul.f32 %v6770, %v6945
      %v6947 = vmul.f32 %v6771, %v6945
      %v6948 = vmul.f32 %v6772, %v6945
      %v6949 = vmul.f32 %v6773, %v6945
      %v6950 = vmul.f32 %v6774, %v6945
      %v6951 = vmul.f32 %v6775, %v6945
      %v6952 = vmul.f32 %v6776, %v6945
      %v6953 = vmul.f32 %v6777, %v6945
      %v6954 = vmul.f32 %v6778, %v6945
      %v6955 = vmul.f32 %v6779, %v6945
      %v6956 = vmul.f32 %v6780, %v6945
      %v6957 = vmul.f32 %v6781, %v6945
      %v6958 = vmul.f32 %v6782, %v6945
      %v6959 = vmul.f32 %v6783, %v6945
      %v6960 = vmul.f32 %v6784, %v6945
      %v6961 = vmul.f32 %v6785, %v6945
      %v6978 = vrot.slane %v6946, 1
      %v6979 = vrot.slane %v6947, 1
      %v6980 = vsel %vm452, %v6978, %v6979
      %v6981 = vrot.slane %v6948, 1
      %v6982 = vrot.slane %v6949, 1
      %v6983 = vsel %vm452, %v6981, %v6982
      %v6984 = vrot.slane %v6950, 1
      %v6985 = vrot.slane %v6951, 1
      %v6986 = vsel %vm452, %v6984, %v6985
      %v6987 = vrot.slane %v6952, 1
      %v6988 = vrot.slane %v6953, 1
      %v6989 = vsel %vm452, %v6987, %v6988
      %v6990 = vrot.slane %v6954, 1
      %v6991 = vrot.slane %v6955, 1
      %v6992 = vsel %vm452, %v6990, %v6991
      %v6993 = vrot.slane %v6956, 1
      %v6994 = vrot.slane %v6957, 1
      %v6995 = vsel %vm452, %v6993, %v6994
      %v6996 = vrot.slane %v6958, 1
      %v6997 = vrot.slane %v6959, 1
      %v6998 = vsel %vm452, %v6996, %v6997
      %v6999 = vrot.slane %v6960, 1
      %v7000 = vrot.slane %v6961, 1
      %v7001 = vsel %vm452, %v6999, %v7000
      %v7010 = vadd.f32 %v6934, %v6980
      %v7011 = vadd.f32 %v6935, %v6983
      %v7012 = vadd.f32 %v6936, %v6986
      %v7013 = vadd.f32 %v6937, %v6989
      %v7014 = vadd.f32 %v6938, %v6992
      %v7015 = vadd.f32 %v6939, %v6995
      %v7016 = vadd.f32 %v6940, %v6998
      %v7017 = vadd.f32 %v6941, %v7001
      %v7018 = vlaneseq
      %v7019 = vshrl.u32 %v7018, 7
      %v7020 = vsub.s32 6, %v7019
      %v7021 = vrot.slane %v374, %v7020
      %v7022 = vmul.f32 %v6745, %v7021
      %v7023 = vmul.f32 %v6747, %v7021
      %v7024 = vmul.f32 %v6749, %v7021
      %v7025 = vmul.f32 %v6751, %v7021
      %v7026 = vmul.f32 %v6753, %v7021
      %v7027 = vmul.f32 %v6755, %v7021
      %v7028 = vmul.f32 %v6757, %v7021
      %v7029 = vmul.f32 %v6759, %v7021
      %v7030 = vadd.f32 %v7010, %v7022
      %v7031 = vadd.f32 %v7011, %v7023
      %v7032 = vadd.f32 %v7012, %v7024
      %v7033 = vadd.f32 %v7013, %v7025
      %v7034 = vadd.f32 %v7014, %v7026
      %v7035 = vadd.f32 %v7015, %v7027
      %v7036 = vadd.f32 %v7016, %v7028
      %v7037 = vadd.f32 %v7017, %v7029
      %v7038 = vlaneseq
      %v7039 = vshrl.u32 %v7038, 7
      %v7040 = vsub.s32 7, %v7039
      %v7041 = vrot.slane %v374, %v7040
      %v7042 = vmul.f32 %v6762, %v7041
      %v7043 = vmul.f32 %v6763, %v7041
      %v7044 = vmul.f32 %v6764, %v7041
      %v7045 = vmul.f32 %v6765, %v7041
      %v7046 = vmul.f32 %v6766, %v7041
      %v7047 = vmul.f32 %v6767, %v7041
      %v7048 = vmul.f32 %v6768, %v7041
      %v7049 = vmul.f32 %v6769, %v7041
      %v7050 = vadd.f32 %v7030, %v7042
      %v7051 = vadd.f32 %v7031, %v7043
      %v7052 = vadd.f32 %v7032, %v7044
      %v7053 = vadd.f32 %v7033, %v7045
      %v7054 = vadd.f32 %v7034, %v7046
      %v7055 = vadd.f32 %v7035, %v7047
      %v7056 = vadd.f32 %v7036, %v7048
      %v7057 = vadd.f32 %v7037, %v7049
      %v7058 = vlaneseq
      %v7059 = vshrl.u32 %v7058, 7
      %v7060 = vsub.s32 0, %v7059
      %v7061 = vrot.slane %v375, %v7060
      %v7062 = vmul.f32 %v6745, %v7061
      %v7063 = vmul.f32 %v6746, %v7061
      %v7064 = vmul.f32 %v6747, %v7061
      %v7065 = vmul.f32 %v6748, %v7061
      %v7066 = vmul.f32 %v6749, %v7061
      %v7067 = vmul.f32 %v6750, %v7061
      %v7068 = vmul.f32 %v6751, %v7061
      %v7069 = vmul.f32 %v6752, %v7061
      %v7070 = vmul.f32 %v6753, %v7061
      %v7071 = vmul.f32 %v6754, %v7061
      %v7072 = vmul.f32 %v6755, %v7061
      %v7073 = vmul.f32 %v6756, %v7061
      %v7074 = vmul.f32 %v6757, %v7061
      %v7075 = vmul.f32 %v6758, %v7061
      %v7076 = vmul.f32 %v6759, %v7061
      %v7077 = vmul.f32 %v6760, %v7061
      %v7094 = vrot.slane %v7062, 1
      %v7095 = vrot.slane %v7063, 1
      %v7096 = vsel %vm452, %v7094, %v7095
      %v7097 = vrot.slane %v7064, 1
      %v7098 = vrot.slane %v7065, 1
      %v7099 = vsel %vm452, %v7097, %v7098
      %v7100 = vrot.slane %v7066, 1
      %v7101 = vrot.slane %v7067, 1
      %v7102 = vsel %vm452, %v7100, %v7101
      %v7103 = vrot.slane %v7068, 1
      %v7104 = vrot.slane %v7069, 1
      %v7105 = vsel %vm452, %v7103, %v7104
      %v7106 = vrot.slane %v7070, 1
      %v7107 = vrot.slane %v7071, 1
      %v7108 = vsel %vm452, %v7106, %v7107
      %v7109 = vrot.slane %v7072, 1
      %v7110 = vrot.slane %v7073, 1
      %v7111 = vsel %vm452, %v7109, %v7110
      %v7112 = vrot.slane %v7074, 1
      %v7113 = vrot.slane %v7075, 1
      %v7114 = vsel %vm452, %v7112, %v7113
      %v7115 = vrot.slane %v7076, 1
      %v7116 = vrot.slane %v7077, 1
      %v7117 = vsel %vm452, %v7115, %v7116
      %v7126 = vadd.f32 %v7050, %v7096
      %v7127 = vadd.f32 %v7051, %v7099
      %v7128 = vadd.f32 %v7052, %v7102
      %v7129 = vadd.f32 %v7053, %v7105
      %v7130 = vadd.f32 %v7054, %v7108
      %v7131 = vadd.f32 %v7055, %v7111
      %v7132 = vadd.f32 %v7056, %v7114
      %v7133 = vadd.f32 %v7057, %v7117
      %v7134 = vlaneseq
      %v7135 = vshrl.u32 %v7134, 7
      %v7136 = vsub.s32 6, %v7135
      %v7137 = vrot.slane %v382, %v7136
      %v7138 = vmul.f32 %v7126, %v7137
      %v7139 = vmul.f32 %v7127, %v7137
      %v7140 = vmul.f32 %v7128, %v7137
      %v7141 = vmul.f32 %v7129, %v7137
      %v7142 = vmul.f32 %v7130, %v7137
      %v7143 = vmul.f32 %v7131, %v7137
      %v7144 = vmul.f32 %v7132, %v7137
      %v7145 = vmul.f32 %v7133, %v7137
      %v7146 = vlaneseq
      %v7147 = vshrl.u32 %v7146, 7
      %v7148 = vsub.s32 7, %v7147
      %v7149 = vrot.slane %v382, %v7148
      %v7150 = vadd.f32 %v7138, %v7149
      %v7151 = vadd.f32 %v7139, %v7149
      %v7152 = vadd.f32 %v7140, %v7149
      %v7153 = vadd.f32 %v7141, %v7149
      %v7154 = vadd.f32 %v7142, %v7149
      %v7155 = vadd.f32 %v7143, %v7149
      %v7156 = vadd.f32 %v7144, %v7149
      %v7157 = vadd.f32 %v7145, %v7149
      %7159 = vset.pattern.permute.xlu0 0
      %7160 = vperm.xlu0 %7159, %v7150
      %v7161 = vpop.permute.xlu0 %7160
      %7164 = vset.pattern.permute.xlu0 0
      %7165 = vperm.xlu0 %7164, %v7151
      %v7166 = vpop.permute.xlu0 %7165
      %7169 = vset.pattern.permute.xlu0 0
      %7170 = vperm.xlu0 %7169, %v7152
      %v7171 = vpop.permute.xlu0 %7170
      %7174 = vset.pattern.permute.xlu0 0
      %7175 = vperm.xlu0 %7174, %v7153
      %v7176 = vpop.permute.xlu0 %7175
      %7179 = vset.pattern.permute.xlu0 0
      %7180 = vperm.xlu0 %7179, %v7154
      %v7181 = vpop.permute.xlu0 %7180
      %7184 = vset.pattern.permute.xlu0 0
      %7185 = vperm.xlu0 %7184, %v7155
      %v7186 = vpop.permute.xlu0 %7185
      %7189 = vset.pattern.permute.xlu0 0
      %7190 = vperm.xlu0 %7189, %v7156
      %v7191 = vpop.permute.xlu0 %7190
      %7194 = vset.pattern.permute.xlu0 0
      %7195 = vperm.xlu0 %7194, %v7157
      %v7196 = vpop.permute.xlu0 %7195
      %v7198 = vlaneseq
      %v7199 = vshrl.u32 %v7198, 7
      %v7200 = vsub.s32 0, %v7199
      %v7201 = vrot.slane %v380, %v7200
      %v7202 = vmul.f32 %v7161, %v7201
      %v7203 = vmul.f32 %v7166, %v7201
      %v7204 = vmul.f32 %v7171, %v7201
      %v7205 = vmul.f32 %v7176, %v7201
      %v7206 = vmul.f32 %v7181, %v7201
      %v7207 = vmul.f32 %v7186, %v7201
      %v7208 = vmul.f32 %v7191, %v7201
      %v7209 = vmul.f32 %v7196, %v7201
      %7210 = vset.pattern.permute.xlu0 1
      %7211 = vperm.xlu0 %7210, %v7150
      %v7212 = vpop.permute.xlu0 %7211
      %7214 = vset.pattern.permute.xlu0 1
      %7215 = vperm.xlu0 %7214, %v7151
      %v7216 = vpop.permute.xlu0 %7215
      %7218 = vset.pattern.permute.xlu0 1
      %7219 = vperm.xlu0 %7218, %v7152
      %v7220 = vpop.permute.xlu0 %7219
      %7222 = vset.pattern.permute.xlu0 1
      %7223 = vperm.xlu0 %7222, %v7153
      %v7224 = vpop.permute.xlu0 %7223
      %7226 = vset.pattern.permute.xlu0 1
      %7227 = vperm.xlu0 %7226, %v7154
      %v7228 = vpop.permute.xlu0 %7227
      %7230 = vset.pattern.permute.xlu0 1
      %7231 = vperm.xlu0 %7230, %v7155
      %v7232 = vpop.permute.xlu0 %7231
      %7234 = vset.pattern.permute.xlu0 1
      %7235 = vperm.xlu0 %7234, %v7156
      %v7236 = vpop.permute.xlu0 %7235
      %7238 = vset.pattern.permute.xlu0 1
      %7239 = vperm.xlu0 %7238, %v7157
      %v7240 = vpop.permute.xlu0 %7239
      %v7242 = vlaneseq
      %v7243 = vshrl.u32 %v7242, 7
      %v7244 = vsub.s32 1, %v7243
      %v7245 = vrot.slane %v380, %v7244
      %v7246 = vmul.f32 %v7212, %v7245
      %v7247 = vmul.f32 %v7216, %v7245
      %v7248 = vmul.f32 %v7220, %v7245
      %v7249 = vmul.f32 %v7224, %v7245
      %v7250 = vmul.f32 %v7228, %v7245
      %v7251 = vmul.f32 %v7232, %v7245
      %v7252 = vmul.f32 %v7236, %v7245
      %v7253 = vmul.f32 %v7240, %v7245
      %v7254 = vadd.f32 %v7202, %v7246
      %v7255 = vadd.f32 %v7203, %v7247
      %v7256 = vadd.f32 %v7204, %v7248
      %v7257 = vadd.f32 %v7205, %v7249
      %v7258 = vadd.f32 %v7206, %v7250
      %v7259 = vadd.f32 %v7207, %v7251
      %v7260 = vadd.f32 %v7208, %v7252
      %v7261 = vadd.f32 %v7209, %v7253
      %7262 = vset.pattern.permute.xlu0 2
      %7263 = vperm.xlu0 %7262, %v7150
      %v7264 = vpop.permute.xlu0 %7263
      %7266 = vset.pattern.permute.xlu0 2
      %7267 = vperm.xlu0 %7266, %v7151
      %v7268 = vpop.permute.xlu0 %7267
      %7270 = vset.pattern.permute.xlu0 2
      %7271 = vperm.xlu0 %7270, %v7152
      %v7272 = vpop.permute.xlu0 %7271
      %7274 = vset.pattern.permute.xlu0 2
      %7275 = vperm.xlu0 %7274, %v7153
      %v7276 = vpop.permute.xlu0 %7275
      %7278 = vset.pattern.permute.xlu0 2
      %7279 = vperm.xlu0 %7278, %v7154
      %v7280 = vpop.permute.xlu0 %7279
      %7282 = vset.pattern.permute.xlu0 2
      %7283 = vperm.xlu0 %7282, %v7155
      %v7284 = vpop.permute.xlu0 %7283
      %7286 = vset.pattern.permute.xlu0 2
      %7287 = vperm.xlu0 %7286, %v7156
      %v7288 = vpop.permute.xlu0 %7287
      %7290 = vset.pattern.permute.xlu0 2
      %7291 = vperm.xlu0 %7290, %v7157
      %v7292 = vpop.permute.xlu0 %7291
      %v7294 = vlaneseq
      %v7295 = vshrl.u32 %v7294, 7
      %v7296 = vsub.s32 2, %v7295
      %v7297 = vrot.slane %v380, %v7296
      %v7298 = vmul.f32 %v7264, %v7297
      %v7299 = vmul.f32 %v7268, %v7297
      %v7300 = vmul.f32 %v7272, %v7297
      %v7301 = vmul.f32 %v7276, %v7297
      %v7302 = vmul.f32 %v7280, %v7297
      %v7303 = vmul.f32 %v7284, %v7297
      %v7304 = vmul.f32 %v7288, %v7297
      %v7305 = vmul.f32 %v7292, %v7297
      %v7306 = vadd.f32 %v7254, %v7298
      %v7307 = vadd.f32 %v7255, %v7299
      %v7308 = vadd.f32 %v7256, %v7300
      %v7309 = vadd.f32 %v7257, %v7301
      %v7310 = vadd.f32 %v7258, %v7302
      %v7311 = vadd.f32 %v7259, %v7303
      %v7312 = vadd.f32 %v7260, %v7304
      %v7313 = vadd.f32 %v7261, %v7305
      %7314 = vset.pattern.permute.xlu0 3
      %7315 = vperm.xlu0 %7314, %v7150
      %v7316 = vpop.permute.xlu0 %7315
      %7318 = vset.pattern.permute.xlu0 3
      %7319 = vperm.xlu0 %7318, %v7151
      %v7320 = vpop.permute.xlu0 %7319
      %7322 = vset.pattern.permute.xlu0 3
      %7323 = vperm.xlu0 %7322, %v7152
      %v7324 = vpop.permute.xlu0 %7323
      %7326 = vset.pattern.permute.xlu0 3
      %7327 = vperm.xlu0 %7326, %v7153
      %v7328 = vpop.permute.xlu0 %7327
      %7330 = vset.pattern.permute.xlu0 3
      %7331 = vperm.xlu0 %7330, %v7154
      %v7332 = vpop.permute.xlu0 %7331
      %7334 = vset.pattern.permute.xlu0 3
      %7335 = vperm.xlu0 %7334, %v7155
      %v7336 = vpop.permute.xlu0 %7335
      %7338 = vset.pattern.permute.xlu0 3
      %7339 = vperm.xlu0 %7338, %v7156
      %v7340 = vpop.permute.xlu0 %7339
      %7342 = vset.pattern.permute.xlu0 3
      %7343 = vperm.xlu0 %7342, %v7157
      %v7344 = vpop.permute.xlu0 %7343
      %v7346 = vlaneseq
      %v7347 = vshrl.u32 %v7346, 7
      %v7348 = vsub.s32 3, %v7347
      %v7349 = vrot.slane %v380, %v7348
      %v7350 = vmul.f32 %v7316, %v7349
      %v7351 = vmul.f32 %v7320, %v7349
      %v7352 = vmul.f32 %v7324, %v7349
      %v7353 = vmul.f32 %v7328, %v7349
      %v7354 = vmul.f32 %v7332, %v7349
      %v7355 = vmul.f32 %v7336, %v7349
      %v7356 = vmul.f32 %v7340, %v7349
      %v7357 = vmul.f32 %v7344, %v7349
      %v7358 = vadd.f32 %v7306, %v7350
      %v7359 = vadd.f32 %v7307, %v7351
      %v7360 = vadd.f32 %v7308, %v7352
      %v7361 = vadd.f32 %v7309, %v7353
      %v7362 = vadd.f32 %v7310, %v7354
      %v7363 = vadd.f32 %v7311, %v7355
      %v7364 = vadd.f32 %v7312, %v7356
      %v7365 = vadd.f32 %v7313, %v7357
      %7366 = vset.pattern.permute.xlu0 4
      %7367 = vperm.xlu0 %7366, %v7150
      %v7368 = vpop.permute.xlu0 %7367
      %7370 = vset.pattern.permute.xlu0 4
      %7371 = vperm.xlu0 %7370, %v7151
      %v7372 = vpop.permute.xlu0 %7371
      %7374 = vset.pattern.permute.xlu0 4
      %7375 = vperm.xlu0 %7374, %v7152
      %v7376 = vpop.permute.xlu0 %7375
      %7378 = vset.pattern.permute.xlu0 4
      %7379 = vperm.xlu0 %7378, %v7153
      %v7380 = vpop.permute.xlu0 %7379
      %7382 = vset.pattern.permute.xlu0 4
      %7383 = vperm.xlu0 %7382, %v7154
      %v7384 = vpop.permute.xlu0 %7383
      %7386 = vset.pattern.permute.xlu0 4
      %7387 = vperm.xlu0 %7386, %v7155
      %v7388 = vpop.permute.xlu0 %7387
      %7390 = vset.pattern.permute.xlu0 4
      %7391 = vperm.xlu0 %7390, %v7156
      %v7392 = vpop.permute.xlu0 %7391
      %7394 = vset.pattern.permute.xlu0 4
      %7395 = vperm.xlu0 %7394, %v7157
      %v7396 = vpop.permute.xlu0 %7395
      %v7398 = vlaneseq
      %v7399 = vshrl.u32 %v7398, 7
      %v7400 = vsub.s32 4, %v7399
      %v7401 = vrot.slane %v380, %v7400
      %v7402 = vmul.f32 %v7368, %v7401
      %v7403 = vmul.f32 %v7372, %v7401
      %v7404 = vmul.f32 %v7376, %v7401
      %v7405 = vmul.f32 %v7380, %v7401
      %v7406 = vmul.f32 %v7384, %v7401
      %v7407 = vmul.f32 %v7388, %v7401
      %v7408 = vmul.f32 %v7392, %v7401
      %v7409 = vmul.f32 %v7396, %v7401
      %v7410 = vadd.f32 %v7358, %v7402
      %v7411 = vadd.f32 %v7359, %v7403
      %v7412 = vadd.f32 %v7360, %v7404
      %v7413 = vadd.f32 %v7361, %v7405
      %v7414 = vadd.f32 %v7362, %v7406
      %v7415 = vadd.f32 %v7363, %v7407
      %v7416 = vadd.f32 %v7364, %v7408
      %v7417 = vadd.f32 %v7365, %v7409
      %7418 = vset.pattern.permute.xlu0 5
      %7419 = vperm.xlu0 %7418, %v7150
      %v7420 = vpop.permute.xlu0 %7419
      %7422 = vset.pattern.permute.xlu0 5
      %7423 = vperm.xlu0 %7422, %v7151
      %v7424 = vpop.permute.xlu0 %7423
      %7426 = vset.pattern.permute.xlu0 5
      %7427 = vperm.xlu0 %7426, %v7152
      %v7428 = vpop.permute.xlu0 %7427
      %7430 = vset.pattern.permute.xlu0 5
      %7431 = vperm.xlu0 %7430, %v7153
      %v7432 = vpop.permute.xlu0 %7431
      %7434 = vset.pattern.permute.xlu0 5
      %7435 = vperm.xlu0 %7434, %v7154
      %v7436 = vpop.permute.xlu0 %7435
      %7438 = vset.pattern.permute.xlu0 5
      %7439 = vperm.xlu0 %7438, %v7155
      %v7440 = vpop.permute.xlu0 %7439
      %7442 = vset.pattern.permute.xlu0 5
      %7443 = vperm.xlu0 %7442, %v7156
      %v7444 = vpop.permute.xlu0 %7443
      %7446 = vset.pattern.permute.xlu0 5
      %7447 = vperm.xlu0 %7446, %v7157
      %v7448 = vpop.permute.xlu0 %7447
      %v7450 = vlaneseq
      %v7451 = vshrl.u32 %v7450, 7
      %v7452 = vsub.s32 5, %v7451
      %v7453 = vrot.slane %v380, %v7452
      %v7454 = vmul.f32 %v7420, %v7453
      %v7455 = vmul.f32 %v7424, %v7453
      %v7456 = vmul.f32 %v7428, %v7453
      %v7457 = vmul.f32 %v7432, %v7453
      %v7458 = vmul.f32 %v7436, %v7453
      %v7459 = vmul.f32 %v7440, %v7453
      %v7460 = vmul.f32 %v7444, %v7453
      %v7461 = vmul.f32 %v7448, %v7453
      %v7462 = vadd.f32 %v7410, %v7454
      %v7463 = vadd.f32 %v7411, %v7455
      %v7464 = vadd.f32 %v7412, %v7456
      %v7465 = vadd.f32 %v7413, %v7457
      %v7466 = vadd.f32 %v7414, %v7458
      %v7467 = vadd.f32 %v7415, %v7459
      %v7468 = vadd.f32 %v7416, %v7460
      %v7469 = vadd.f32 %v7417, %v7461
      %7470 = vset.pattern.permute.xlu0 6
      %7471 = vperm.xlu0 %7470, %v7150
      %v7472 = vpop.permute.xlu0 %7471
      %7474 = vset.pattern.permute.xlu0 6
      %7475 = vperm.xlu0 %7474, %v7151
      %v7476 = vpop.permute.xlu0 %7475
      %7478 = vset.pattern.permute.xlu0 6
      %7479 = vperm.xlu0 %7478, %v7152
      %v7480 = vpop.permute.xlu0 %7479
      %7482 = vset.pattern.permute.xlu0 6
      %7483 = vperm.xlu0 %7482, %v7153
      %v7484 = vpop.permute.xlu0 %7483
      %7486 = vset.pattern.permute.xlu0 6
      %7487 = vperm.xlu0 %7486, %v7154
      %v7488 = vpop.permute.xlu0 %7487
      %7490 = vset.pattern.permute.xlu0 6
      %7491 = vperm.xlu0 %7490, %v7155
      %v7492 = vpop.permute.xlu0 %7491
      %7494 = vset.pattern.permute.xlu0 6
      %7495 = vperm.xlu0 %7494, %v7156
      %v7496 = vpop.permute.xlu0 %7495
      %7498 = vset.pattern.permute.xlu0 6
      %7499 = vperm.xlu0 %7498, %v7157
      %v7500 = vpop.permute.xlu0 %7499
      %v7502 = vlaneseq
      %v7503 = vshrl.u32 %v7502, 7
      %v7504 = vsub.s32 6, %v7503
      %v7505 = vrot.slane %v380, %v7504
      %v7506 = vmul.f32 %v7472, %v7505
      %v7507 = vmul.f32 %v7476, %v7505
      %v7508 = vmul.f32 %v7480, %v7505
      %v7509 = vmul.f32 %v7484, %v7505
      %v7510 = vmul.f32 %v7488, %v7505
      %v7511 = vmul.f32 %v7492, %v7505
      %v7512 = vmul.f32 %v7496, %v7505
      %v7513 = vmul.f32 %v7500, %v7505
      %v7514 = vadd.f32 %v7462, %v7506
      %v7515 = vadd.f32 %v7463, %v7507
      %v7516 = vadd.f32 %v7464, %v7508
      %v7517 = vadd.f32 %v7465, %v7509
      %v7518 = vadd.f32 %v7466, %v7510
      %v7519 = vadd.f32 %v7467, %v7511
      %v7520 = vadd.f32 %v7468, %v7512
      %v7521 = vadd.f32 %v7469, %v7513
      %7522 = vset.pattern.permute.xlu0 7
      %7523 = vperm.xlu0 %7522, %v7150
      %v7524 = vpop.permute.xlu0 %7523
      %7526 = vset.pattern.permute.xlu0 7
      %7527 = vperm.xlu0 %7526, %v7151
      %v7528 = vpop.permute.xlu0 %7527
      %7530 = vset.pattern.permute.xlu0 7
      %7531 = vperm.xlu0 %7530, %v7152
      %v7532 = vpop.permute.xlu0 %7531
      %7534 = vset.pattern.permute.xlu0 7
      %7535 = vperm.xlu0 %7534, %v7153
      %v7536 = vpop.permute.xlu0 %7535
      %7538 = vset.pattern.permute.xlu0 7
      %7539 = vperm.xlu0 %7538, %v7154
      %v7540 = vpop.permute.xlu0 %7539
      %7542 = vset.pattern.permute.xlu0 7
      %7543 = vperm.xlu0 %7542, %v7155
      %v7544 = vpop.permute.xlu0 %7543
      %7546 = vset.pattern.permute.xlu0 7
      %7547 = vperm.xlu0 %7546, %v7156
      %v7548 = vpop.permute.xlu0 %7547
      %7550 = vset.pattern.permute.xlu0 7
      %7551 = vperm.xlu0 %7550, %v7157
      %v7552 = vpop.permute.xlu0 %7551
      %v7554 = vlaneseq
      %v7555 = vshrl.u32 %v7554, 7
      %v7556 = vsub.s32 7, %v7555
      %v7557 = vrot.slane %v380, %v7556
      %v7558 = vmul.f32 %v7524, %v7557
      %v7559 = vmul.f32 %v7528, %v7557
      %v7560 = vmul.f32 %v7532, %v7557
      %v7561 = vmul.f32 %v7536, %v7557
      %v7562 = vmul.f32 %v7540, %v7557
      %v7563 = vmul.f32 %v7544, %v7557
      %v7564 = vmul.f32 %v7548, %v7557
      %v7565 = vmul.f32 %v7552, %v7557
      %v7566 = vadd.f32 %v7514, %v7558
      %v7567 = vadd.f32 %v7515, %v7559
      %v7568 = vadd.f32 %v7516, %v7560
      %v7569 = vadd.f32 %v7517, %v7561
      %v7570 = vadd.f32 %v7518, %v7562
      %v7571 = vadd.f32 %v7519, %v7563
      %v7572 = vadd.f32 %v7520, %v7564
      %v7573 = vadd.f32 %v7521, %v7565
      %7574 = vset.pattern.permute.xlu0 8
      %7575 = vperm.xlu0 %7574, %v7150
      %v7576 = vpop.permute.xlu0 %7575
      %7578 = vset.pattern.permute.xlu0 8
      %7579 = vperm.xlu0 %7578, %v7151
      %v7580 = vpop.permute.xlu0 %7579
      %7582 = vset.pattern.permute.xlu0 8
      %7583 = vperm.xlu0 %7582, %v7152
      %v7584 = vpop.permute.xlu0 %7583
      %7586 = vset.pattern.permute.xlu0 8
      %7587 = vperm.xlu0 %7586, %v7153
      %v7588 = vpop.permute.xlu0 %7587
      %7590 = vset.pattern.permute.xlu0 8
      %7591 = vperm.xlu0 %7590, %v7154
      %v7592 = vpop.permute.xlu0 %7591
      %7594 = vset.pattern.permute.xlu0 8
      %7595 = vperm.xlu0 %7594, %v7155
      %v7596 = vpop.permute.xlu0 %7595
      %7598 = vset.pattern.permute.xlu0 8
      %7599 = vperm.xlu0 %7598, %v7156
      %v7600 = vpop.permute.xlu0 %7599
      %7602 = vset.pattern.permute.xlu0 8
      %7603 = vperm.xlu0 %7602, %v7157
      %v7604 = vpop.permute.xlu0 %7603
      %v7606 = vlaneseq
      %v7607 = vshrl.u32 %v7606, 7
      %v7608 = vsub.s32 0, %v7607
      %v7609 = vrot.slane %v381, %v7608
      %v7610 = vmul.f32 %v7576, %v7609
      %v7611 = vmul.f32 %v7580, %v7609
      %v7612 = vmul.f32 %v7584, %v7609
      %v7613 = vmul.f32 %v7588, %v7609
      %v7614 = vmul.f32 %v7592, %v7609
      %v7615 = vmul.f32 %v7596, %v7609
      %v7616 = vmul.f32 %v7600, %v7609
      %v7617 = vmul.f32 %v7604, %v7609
      %v7618 = vadd.f32 %v7566, %v7610
      %v7619 = vadd.f32 %v7567, %v7611
      %v7620 = vadd.f32 %v7568, %v7612
      %v7621 = vadd.f32 %v7569, %v7613
      %v7622 = vadd.f32 %v7570, %v7614
      %v7623 = vadd.f32 %v7571, %v7615
      %v7624 = vadd.f32 %v7572, %v7616
      %v7625 = vadd.f32 %v7573, %v7617
      %7626 = vset.pattern.permute.xlu0 9
      %7627 = vperm.xlu0 %7626, %v7150
      %v7628 = vpop.permute.xlu0 %7627
      %7630 = vset.pattern.permute.xlu0 9
      %7631 = vperm.xlu0 %7630, %v7151
      %v7632 = vpop.permute.xlu0 %7631
      %7634 = vset.pattern.permute.xlu0 9
      %7635 = vperm.xlu0 %7634, %v7152
      %v7636 = vpop.permute.xlu0 %7635
      %7638 = vset.pattern.permute.xlu0 9
      %7639 = vperm.xlu0 %7638, %v7153
      %v7640 = vpop.permute.xlu0 %7639
      %7642 = vset.pattern.permute.xlu0 9
      %7643 = vperm.xlu0 %7642, %v7154
      %v7644 = vpop.permute.xlu0 %7643
      %7646 = vset.pattern.permute.xlu0 9
      %7647 = vperm.xlu0 %7646, %v7155
      %v7648 = vpop.permute.xlu0 %7647
      %7650 = vset.pattern.permute.xlu0 9
      %7651 = vperm.xlu0 %7650, %v7156
      %v7652 = vpop.permute.xlu0 %7651
      %7654 = vset.pattern.permute.xlu0 9
      %7655 = vperm.xlu0 %7654, %v7157
      %v7656 = vpop.permute.xlu0 %7655
      %v7658 = vlaneseq
      %v7659 = vshrl.u32 %v7658, 7
      %v7660 = vsub.s32 1, %v7659
      %v7661 = vrot.slane %v381, %v7660
      %v7662 = vmul.f32 %v7628, %v7661
      %v7663 = vmul.f32 %v7632, %v7661
      %v7664 = vmul.f32 %v7636, %v7661
      %v7665 = vmul.f32 %v7640, %v7661
      %v7666 = vmul.f32 %v7644, %v7661
      %v7667 = vmul.f32 %v7648, %v7661
      %v7668 = vmul.f32 %v7652, %v7661
      %v7669 = vmul.f32 %v7656, %v7661
      %v7670 = vadd.f32 %v7618, %v7662
      %v7671 = vadd.f32 %v7619, %v7663
      %v7672 = vadd.f32 %v7620, %v7664
      %v7673 = vadd.f32 %v7621, %v7665
      %v7674 = vadd.f32 %v7622, %v7666
      %v7675 = vadd.f32 %v7623, %v7667
      %v7676 = vadd.f32 %v7624, %v7668
      %v7677 = vadd.f32 %v7625, %v7669
      %7678 = vset.pattern.permute.xlu0 10
      %7679 = vperm.xlu0 %7678, %v7150
      %v7680 = vpop.permute.xlu0 %7679
      %7682 = vset.pattern.permute.xlu0 10
      %7683 = vperm.xlu0 %7682, %v7151
      %v7684 = vpop.permute.xlu0 %7683
      %7686 = vset.pattern.permute.xlu0 10
      %7687 = vperm.xlu0 %7686, %v7152
      %v7688 = vpop.permute.xlu0 %7687
      %7690 = vset.pattern.permute.xlu0 10
      %7691 = vperm.xlu0 %7690, %v7153
      %v7692 = vpop.permute.xlu0 %7691
      %7694 = vset.pattern.permute.xlu0 10
      %7695 = vperm.xlu0 %7694, %v7154
      %v7696 = vpop.permute.xlu0 %7695
      %7698 = vset.pattern.permute.xlu0 10
      %7699 = vperm.xlu0 %7698, %v7155
      %v7700 = vpop.permute.xlu0 %7699
      %7702 = vset.pattern.permute.xlu0 10
      %7703 = vperm.xlu0 %7702, %v7156
      %v7704 = vpop.permute.xlu0 %7703
      %7706 = vset.pattern.permute.xlu0 10
      %7707 = vperm.xlu0 %7706, %v7157
      %v7708 = vpop.permute.xlu0 %7707
      %v7710 = vlaneseq
      %v7711 = vshrl.u32 %v7710, 7
      %v7712 = vsub.s32 2, %v7711
      %v7713 = vrot.slane %v381, %v7712
      %v7714 = vmul.f32 %v7680, %v7713
      %v7715 = vmul.f32 %v7684, %v7713
      %v7716 = vmul.f32 %v7688, %v7713
      %v7717 = vmul.f32 %v7692, %v7713
      %v7718 = vmul.f32 %v7696, %v7713
      %v7719 = vmul.f32 %v7700, %v7713
      %v7720 = vmul.f32 %v7704, %v7713
      %v7721 = vmul.f32 %v7708, %v7713
      %v7722 = vadd.f32 %v7670, %v7714
      %v7723 = vadd.f32 %v7671, %v7715
      %v7724 = vadd.f32 %v7672, %v7716
      %v7725 = vadd.f32 %v7673, %v7717
      %v7726 = vadd.f32 %v7674, %v7718
      %v7727 = vadd.f32 %v7675, %v7719
      %v7728 = vadd.f32 %v7676, %v7720
      %v7729 = vadd.f32 %v7677, %v7721
      %7730 = vset.pattern.permute.xlu0 11
      %7731 = vperm.xlu0 %7730, %v7150
      %v7732 = vpop.permute.xlu0 %7731
      %7734 = vset.pattern.permute.xlu0 11
      %7735 = vperm.xlu0 %7734, %v7151
      %v7736 = vpop.permute.xlu0 %7735
      %7738 = vset.pattern.permute.xlu0 11
      %7739 = vperm.xlu0 %7738, %v7152
      %v7740 = vpop.permute.xlu0 %7739
      %7742 = vset.pattern.permute.xlu0 11
      %7743 = vperm.xlu0 %7742, %v7153
      %v7744 = vpop.permute.xlu0 %7743
      %7746 = vset.pattern.permute.xlu0 11
      %7747 = vperm.xlu0 %7746, %v7154
      %v7748 = vpop.permute.xlu0 %7747
      %7750 = vset.pattern.permute.xlu0 11
      %7751 = vperm.xlu0 %7750, %v7155
      %v7752 = vpop.permute.xlu0 %7751
      %7754 = vset.pattern.permute.xlu0 11
      %7755 = vperm.xlu0 %7754, %v7156
      %v7756 = vpop.permute.xlu0 %7755
      %7758 = vset.pattern.permute.xlu0 11
      %7759 = vperm.xlu0 %7758, %v7157
      %v7760 = vpop.permute.xlu0 %7759
      %v7762 = vlaneseq
      %v7763 = vshrl.u32 %v7762, 7
      %v7764 = vsub.s32 3, %v7763
      %v7765 = vrot.slane %v381, %v7764
      %v7766 = vmul.f32 %v7732, %v7765
      %v7767 = vmul.f32 %v7736, %v7765
      %v7768 = vmul.f32 %v7740, %v7765
      %v7769 = vmul.f32 %v7744, %v7765
      %v7770 = vmul.f32 %v7748, %v7765
      %v7771 = vmul.f32 %v7752, %v7765
      %v7772 = vmul.f32 %v7756, %v7765
      %v7773 = vmul.f32 %v7760, %v7765
      %v7774 = vadd.f32 %v7722, %v7766
      %v7775 = vadd.f32 %v7723, %v7767
      %v7776 = vadd.f32 %v7724, %v7768
      %v7777 = vadd.f32 %v7725, %v7769
      %v7778 = vadd.f32 %v7726, %v7770
      %v7779 = vadd.f32 %v7727, %v7771
      %v7780 = vadd.f32 %v7728, %v7772
      %v7781 = vadd.f32 %v7729, %v7773
      %7782 = vset.pattern.permute.xlu0 12
      %7783 = vperm.xlu0 %7782, %v7150
      %v7784 = vpop.permute.xlu0 %7783
      %7786 = vset.pattern.permute.xlu0 12
      %7787 = vperm.xlu0 %7786, %v7151
      %v7788 = vpop.permute.xlu0 %7787
      %7790 = vset.pattern.permute.xlu0 12
      %7791 = vperm.xlu0 %7790, %v7152
      %v7792 = vpop.permute.xlu0 %7791
      %7794 = vset.pattern.permute.xlu0 12
      %7795 = vperm.xlu0 %7794, %v7153
      %v7796 = vpop.permute.xlu0 %7795
      %7798 = vset.pattern.permute.xlu0 12
      %7799 = vperm.xlu0 %7798, %v7154
      %v7800 = vpop.permute.xlu0 %7799
      %7802 = vset.pattern.permute.xlu0 12
      %7803 = vperm.xlu0 %7802, %v7155
      %v7804 = vpop.permute.xlu0 %7803
      %7806 = vset.pattern.permute.xlu0 12
      %7807 = vperm.xlu0 %7806, %v7156
      %v7808 = vpop.permute.xlu0 %7807
      %7810 = vset.pattern.permute.xlu0 12
      %7811 = vperm.xlu0 %7810, %v7157
      %v7812 = vpop.permute.xlu0 %7811
      %v7814 = vlaneseq
      %v7815 = vshrl.u32 %v7814, 7
      %v7816 = vsub.s32 4, %v7815
      %v7817 = vrot.slane %v381, %v7816
      %v7818 = vmul.f32 %v7784, %v7817
      %v7819 = vmul.f32 %v7788, %v7817
      %v7820 = vmul.f32 %v7792, %v7817
      %v7821 = vmul.f32 %v7796, %v7817
      %v7822 = vmul.f32 %v7800, %v7817
      %v7823 = vmul.f32 %v7804, %v7817
      %v7824 = vmul.f32 %v7808, %v7817
      %v7825 = vmul.f32 %v7812, %v7817
      %v7826 = vadd.f32 %v7774, %v7818
      %v7827 = vadd.f32 %v7775, %v7819
      %v7828 = vadd.f32 %v7776, %v7820
      %v7829 = vadd.f32 %v7777, %v7821
      %v7830 = vadd.f32 %v7778, %v7822
      %v7831 = vadd.f32 %v7779, %v7823
      %v7832 = vadd.f32 %v7780, %v7824
      %v7833 = vadd.f32 %v7781, %v7825
      %7834 = vset.pattern.permute.xlu0 13
      %7835 = vperm.xlu0 %7834, %v7150
      %v7836 = vpop.permute.xlu0 %7835
      %7838 = vset.pattern.permute.xlu0 13
      %7839 = vperm.xlu0 %7838, %v7151
      %v7840 = vpop.permute.xlu0 %7839
      %7842 = vset.pattern.permute.xlu0 13
      %7843 = vperm.xlu0 %7842, %v7152
      %v7844 = vpop.permute.xlu0 %7843
      %7846 = vset.pattern.permute.xlu0 13
      %7847 = vperm.xlu0 %7846, %v7153
      %v7848 = vpop.permute.xlu0 %7847
      %7850 = vset.pattern.permute.xlu0 13
      %7851 = vperm.xlu0 %7850, %v7154
      %v7852 = vpop.permute.xlu0 %7851
      %7854 = vset.pattern.permute.xlu0 13
      %7855 = vperm.xlu0 %7854, %v7155
      %v7856 = vpop.permute.xlu0 %7855
      %7858 = vset.pattern.permute.xlu0 13
      %7859 = vperm.xlu0 %7858, %v7156
      %v7860 = vpop.permute.xlu0 %7859
      %7862 = vset.pattern.permute.xlu0 13
      %7863 = vperm.xlu0 %7862, %v7157
      %v7864 = vpop.permute.xlu0 %7863
      %v7866 = vlaneseq
      %v7867 = vshrl.u32 %v7866, 7
      %v7868 = vsub.s32 5, %v7867
      %v7869 = vrot.slane %v381, %v7868
      %v7870 = vmul.f32 %v7836, %v7869
      %v7871 = vmul.f32 %v7840, %v7869
      %v7872 = vmul.f32 %v7844, %v7869
      %v7873 = vmul.f32 %v7848, %v7869
      %v7874 = vmul.f32 %v7852, %v7869
      %v7875 = vmul.f32 %v7856, %v7869
      %v7876 = vmul.f32 %v7860, %v7869
      %v7877 = vmul.f32 %v7864, %v7869
      %v7878 = vadd.f32 %v7826, %v7870
      %v7879 = vadd.f32 %v7827, %v7871
      %v7880 = vadd.f32 %v7828, %v7872
      %v7881 = vadd.f32 %v7829, %v7873
      %v7882 = vadd.f32 %v7830, %v7874
      %v7883 = vadd.f32 %v7831, %v7875
      %v7884 = vadd.f32 %v7832, %v7876
      %v7885 = vadd.f32 %v7833, %v7877
      %7886 = vset.pattern.permute.xlu0 14
      %7887 = vperm.xlu0 %7886, %v7150
      %v7888 = vpop.permute.xlu0 %7887
      %7890 = vset.pattern.permute.xlu0 14
      %7891 = vperm.xlu0 %7890, %v7151
      %v7892 = vpop.permute.xlu0 %7891
      %7894 = vset.pattern.permute.xlu0 14
      %7895 = vperm.xlu0 %7894, %v7152
      %v7896 = vpop.permute.xlu0 %7895
      %7898 = vset.pattern.permute.xlu0 14
      %7899 = vperm.xlu0 %7898, %v7153
      %v7900 = vpop.permute.xlu0 %7899
      %7902 = vset.pattern.permute.xlu0 14
      %7903 = vperm.xlu0 %7902, %v7154
      %v7904 = vpop.permute.xlu0 %7903
      %7906 = vset.pattern.permute.xlu0 14
      %7907 = vperm.xlu0 %7906, %v7155
      %v7908 = vpop.permute.xlu0 %7907
      %7910 = vset.pattern.permute.xlu0 14
      %7911 = vperm.xlu0 %7910, %v7156
      %v7912 = vpop.permute.xlu0 %7911
      %7914 = vset.pattern.permute.xlu0 14
      %7915 = vperm.xlu0 %7914, %v7157
      %v7916 = vpop.permute.xlu0 %7915
      %v7918 = vlaneseq
      %v7919 = vshrl.u32 %v7918, 7
      %v7920 = vsub.s32 6, %v7919
      %v7921 = vrot.slane %v381, %v7920
      %v7922 = vmul.f32 %v7888, %v7921
      %v7923 = vmul.f32 %v7892, %v7921
      %v7924 = vmul.f32 %v7896, %v7921
      %v7925 = vmul.f32 %v7900, %v7921
      %v7926 = vmul.f32 %v7904, %v7921
      %v7927 = vmul.f32 %v7908, %v7921
      %v7928 = vmul.f32 %v7912, %v7921
      %v7929 = vmul.f32 %v7916, %v7921
      %v7930 = vadd.f32 %v7878, %v7922
      %v7931 = vadd.f32 %v7879, %v7923
      %v7932 = vadd.f32 %v7880, %v7924
      %v7933 = vadd.f32 %v7881, %v7925
      %v7934 = vadd.f32 %v7882, %v7926
      %v7935 = vadd.f32 %v7883, %v7927
      %v7936 = vadd.f32 %v7884, %v7928
      %v7937 = vadd.f32 %v7885, %v7929
      %7938 = vset.pattern.permute.xlu0 15
      %7939 = vperm.xlu0 %7938, %v7150
      %v7940 = vpop.permute.xlu0 %7939
      %7942 = vset.pattern.permute.xlu0 15
      %7943 = vperm.xlu0 %7942, %v7151
      %v7944 = vpop.permute.xlu0 %7943
      %7946 = vset.pattern.permute.xlu0 15
      %7947 = vperm.xlu0 %7946, %v7152
      %v7948 = vpop.permute.xlu0 %7947
      %7950 = vset.pattern.permute.xlu0 15
      %7951 = vperm.xlu0 %7950, %v7153
      %v7952 = vpop.permute.xlu0 %7951
      %7954 = vset.pattern.permute.xlu0 15
      %7955 = vperm.xlu0 %7954, %v7154
      %v7956 = vpop.permute.xlu0 %7955
      %7958 = vset.pattern.permute.xlu0 15
      %7959 = vperm.xlu0 %7958, %v7155
      %v7960 = vpop.permute.xlu0 %7959
      %7962 = vset.pattern.permute.xlu0 15
      %7963 = vperm.xlu0 %7962, %v7156
      %v7964 = vpop.permute.xlu0 %7963
      %7966 = vset.pattern.permute.xlu0 15
      %7967 = vperm.xlu0 %7966, %v7157
      %v7968 = vpop.permute.xlu0 %7967
      %v7970 = vlaneseq
      %v7971 = vshrl.u32 %v7970, 7
      %v7972 = vsub.s32 7, %v7971
      %v7973 = vrot.slane %v381, %v7972
      %v7974 = vmul.f32 %v7940, %v7973
      %v7975 = vmul.f32 %v7944, %v7973
      %v7976 = vmul.f32 %v7948, %v7973
      %v7977 = vmul.f32 %v7952, %v7973
      %v7978 = vmul.f32 %v7956, %v7973
      %v7979 = vmul.f32 %v7960, %v7973
      %v7980 = vmul.f32 %v7964, %v7973
      %v7981 = vmul.f32 %v7968, %v7973
      %v7982 = vadd.f32 %v7930, %v7974
      %v7983 = vadd.f32 %v7931, %v7975
      %v7984 = vadd.f32 %v7932, %v7976
      %v7985 = vadd.f32 %v7933, %v7977
      %v7986 = vadd.f32 %v7934, %v7978
      %v7987 = vadd.f32 %v7935, %v7979
      %v7988 = vadd.f32 %v7936, %v7980
      %v7989 = vadd.f32 %v7937, %v7981
      %v7990 = vlaneseq
      %v7991 = vshrl.u32 %v7990, 7
      %v7992 = vsub.s32 0, %v7991
      %v7993 = vrot.slane %v383, %v7992
      %v7994 = vmul.f32 %v7982, %v7993
      %v7995 = vmul.f32 %v7983, %v7993
      %v7996 = vmul.f32 %v7984, %v7993
      %v7997 = vmul.f32 %v7985, %v7993
      %v7998 = vmul.f32 %v7986, %v7993
      %v7999 = vmul.f32 %v7987, %v7993
      %v8000 = vmul.f32 %v7988, %v7993
      %v8001 = vmul.f32 %v7989, %v7993
      %v8002 = vlaneseq
      %v8003 = vshrl.u32 %v8002, 7
      %v8004 = vsub.s32 1, %v8003
      %v8005 = vrot.slane %v383, %v8004
      %v8006 = vadd.f32 %v7994, %v8005
      %v8007 = vadd.f32 %v7995, %v8005
      %v8008 = vadd.f32 %v7996, %v8005
      %v8009 = vadd.f32 %v7997, %v8005
      %v8010 = vadd.f32 %v7998, %v8005
      %v8011 = vadd.f32 %v7999, %v8005
      %v8012 = vadd.f32 %v8000, %v8005
      %v8013 = vadd.f32 %v8001, %v8005
      %v8014 = vmax.f32 %v8006, 0.0
      %v8015 = vmax.f32 %v8007, 0.0
      %v8016 = vmax.f32 %v8008, 0.0
      %v8017 = vmax.f32 %v8009, 0.0
      %v8018 = vmax.f32 %v8010, 0.0
      %v8019 = vmax.f32 %v8011, 0.0
      %v8020 = vmax.f32 %v8012, 0.0
      %v8021 = vmax.f32 %v8013, 0.0
      %8022 = vst.msk [vmem:[%s269] sm:$0xff] %vm1613, %v8014
      %8023 = vst.msk [vmem:[%s269 + $0x8] sm:$0xff] %vm1613, %v8015
      %8024 = vst.msk [vmem:[%s269 + $0x10] sm:$0xff] %vm1613, %v8016
      %8025 = vst.msk [vmem:[%s269 + $0x18] sm:$0xff] %vm1613, %v8017
      %8026 = vst.msk [vmem:[%s269 + $0x20] sm:$0xff] %vm1613, %v8018
      %8027 = vst.msk [vmem:[%s269 + $0x28] sm:$0xff] %vm1613, %v8019
      %8028 = vst.msk [vmem:[%s269 + $0x30] sm:$0xff] %vm1613, %v8020
      %8029 = vst.msk [vmem:[%s269 + $0x38] sm:$0xff] %vm1613, %v8021
      %p8030 = scmp.lt.s32.totalorder %s18, 1
      %s8031 = scalar_select %p8030, %s18, 1
      %s8032 = smul.addr %s8031, 8
      %s8033 = smul.addr %s8032, 8
      %s8034 = scalar_lea.vmem %s5, %s8033
      %p8035 = scmp.lt.s32.totalorder %s18, 1
      %s8036 = scalar_select %p8035, %s18, 1
      %s8037 = smul.addr %s8036, 8
      %s8038 = smul.addr %s8037, 8
      %s8039 = scalar_lea.vmem %s6, %s8038
      // Predicated region
      $region41: #{dsampling_pallas.1} parent=39 // pred_check
        %p8040 = pneg %p146
      $region42: #{dsampling_pallas.1} parent=39 // pred_check_branch
        %8042 = sbr.rel (%p8040) target = $region44
      $region43: #{dsampling_pallas.1} parent=39 // pred_region
        _
      $region44: #{dsampling_pallas.1} parent=39 // pred_fallthru
        _
      // Predicated region
      $region45: #{dsampling_pallas.1} parent=39 // pred_check
        %p8043 = pneg %p172
      $region46: #{dsampling_pallas.1} parent=39 // pred_check_branch
        %8045 = sbr.rel (%p8043) target = $region48
      $region47: #{dsampling_pallas.1} parent=39 // pred_region
        _
      $region48: #{dsampling_pallas.1} parent=39 // pred_fallthru
        _
    $region40: #{dsampling_pallas.1} parent=5 // pred_fallthru
      _
    %p8046 = scmp.le.s32.totalorder 2, %s13
    // Predicated region
    $region49: #{dsampling_pallas.1} parent=5 // pred_check
      %p8047 = pneg %p8046
    $region50: #{dsampling_pallas.1} parent=5 // pred_check_branch
      %8049 = sbr.rel (%p8047) target = $region52
    $region51: #{dsampling_pallas.1} parent=5 // pred_region
      %s8050 = ssub.s32 %s13, 2
      // Predicated region
      $region53: #{dsampling_pallas.1} parent=51 // pred_check
        %p8051 = pneg %p152
      $region54: #{dsampling_pallas.1} parent=51 // pred_check_branch
        %8053 = sbr.rel (%p8051) target = $region56
      $region55: #{dsampling_pallas.1} parent=51 // pred_region
        %p8054 = scmp.lt.s32.totalorder %s19, 1
        %s8055 = scalar_select %p8054, %s19, 1
        %s8056 = smul.addr %s8055, 8
        %s8057 = smul.addr %s8056, 8
        %s8058 = scalar_lea.vmem %s5, %s8057
      $region56: #{dsampling_pallas.1} parent=51 // pred_fallthru
        _
      // Predicated region
      $region57: #{dsampling_pallas.1} parent=51 // pred_check
        %p8059 = pneg %p178
      $region58: #{dsampling_pallas.1} parent=51 // pred_check_branch
        %8061 = sbr.rel (%p8059) target = $region60
      $region59: #{dsampling_pallas.1} parent=51 // pred_region
        %p8062 = scmp.lt.s32.totalorder %s19, 1
        %s8063 = scalar_select %p8062, %s19, 1
        %s8064 = smul.addr %s8063, 8
        %s8065 = smul.addr %s8064, 8
        %s8066 = scalar_lea.vmem %s6, %s8065
      $region60: #{dsampling_pallas.1} parent=51 // pred_fallthru
        _
    $region52: #{dsampling_pallas.1} parent=5 // pred_fallthru
      _
  $region6: #{dsampling_pallas.1} parent=0 // loop_footer
    %s17 = sadd.s32 1, %s13
  $region7: #{dsampling_pallas.1} parent=0 // loop_footer_branch
    %12 = sbr.rel target = $region3
  $region8: #{dsampling_pallas.1} parent=0 // loop_exit
    _

</llo_original>
